<compile_context>
chip_gen: v6e
topology: v6e:2x2x1
jax: 0.10.0
libtpu: 0.0.40
codegen_flags: <defaults>
</compile_context>

<pallas_src>
import functools

import jax
import jax.numpy as jnp
import numpy as np
from jax.experimental import pallas as pl
from jax.experimental.pallas import tpu as pltpu


def _vmem():
    return pl.BlockSpec(memory_space=pltpu.MemorySpace.VMEM)


def _dot(a, w):
    return jnp.dot(a, w, preferred_element_type=jnp.float32)


def _softmax_lastdim(scores):
    m = jnp.max(scores, axis=-1, keepdims=True)
    e = jnp.exp(scores - m)
    denom = jnp.maximum(jnp.sum(e, axis=-1, keepdims=True), 1e-30)  # fully-masked rows stay finite
    return e * pl.reciprocal(denom, approx=True)


# ------------------------------ kernel 1: batch-level state ------------------------------

def _state_kernel(action_ref, feat_ref, h_ref, c_ref, enc_ref, mb_ref,
                  w_ae_ref, b_ae_ref, w_gva_ref,
                  w_ih_e_ref, w_ih_f_ref, w_hh_ref, b_lstm_ref,
                  w_lang_ref, w_pa_ref, w_pb_ref,
                  w_rin_ref, w_rwc_ref, w_rh_ref, w_obj_ref,
                  h_out_ref, c_out_ref, hg_ref, ctx_ref, rel_ref, objt_ref):
    prev_h = h_ref[...]
    B, H = prev_h.shape
    enc = enc_ref[...]                                            # (B, L, H)

    # previous-action embedding (Linear + Tanh)
    pae = jnp.tanh(_dot(action_ref[...], w_ae_ref[...]) + b_ae_ref[...])

    # global visual attention (SoftAttention, no mask)
    feat = feat_ref[...]                                          # (B, Nv, F)
    gt = _dot(prev_h, w_gva_ref[...])                             # (B, F)
    ag = _softmax_lastdim(jnp.sum(feat * gt[:, None, :], axis=-1))
    f_g = jnp.sum(ag[:, :, None] * feat, axis=1)                  # (B, F)

    # LSTMCell on [pae | f_g] with split input weights (no concat)
    gates = (_dot(pae, w_ih_e_ref[...]) + _dot(f_g, w_ih_f_ref[...])
             + _dot(prev_h, w_hh_ref[...]) + b_lstm_ref[...])
    i_g = jax.nn.sigmoid(gates[:, 0 * H:1 * H])
    f_gg = jax.nn.sigmoid(gates[:, 1 * H:2 * H])
    g_g = jnp.tanh(gates[:, 2 * H:3 * H])
    o_g = jax.nn.sigmoid(gates[:, 3 * H:4 * H])
    c_t = f_gg * c_ref[...] + i_g * g_g
    h_t = o_g * jnp.tanh(c_t)
    h_out_ref[...] = h_t
    c_out_ref[...] = c_t

    # three language attentions: one wide (H,3H) projection, batched MXU scores
    proj = _dot(h_t, w_lang_ref[...])                             # (B, 3H)
    p_soa = jnp.stack([proj[:, 0 * H:1 * H],
                       proj[:, 1 * H:2 * H],
                       proj[:, 2 * H:3 * H]], axis=1)             # (B, 3, H)
    sc = jnp.einsum('bkh,blh->bkl', p_soa, enc,
                    preferred_element_type=jnp.float32) + mb_ref[...][:, None, :]
    attn = _softmax_lastdim(sc)                                   # (B, 3, L)
    h_soa = jnp.einsum('bkl,blh->bkh', attn, enc,
                       preferred_element_type=jnp.float32)        # (B, 3, H)  = [hS, hO, hA]
    ctx_ref[...] = h_soa
    hg_ref[...] = jnp.mean(h_soa, axis=1)

    hS = h_soa[:, 0, :]
    hO = h_soa[:, 1, :]
    hA = h_soa[:, 2, :]

    # relational pair projections (split weights, no concat)
    h_as = jnp.tanh(_dot(hA, w_pa_ref[0]) + _dot(hS, w_pb_ref[0]))
    h_so = jnp.tanh(_dot(hS, w_pa_ref[1]) + _dot(hO, w_pb_ref[1]))
    h_oa = jnp.tanh(_dot(hO, w_pa_ref[2]) + _dot(hA, w_pb_ref[2]))

    # relational attentions over enc_out (no mask), batched over the 3 heads
    t_rel = jnp.stack([_dot(h_as, w_rin_ref[0]),
                       _dot(h_so, w_rin_ref[1]),
                       _dot(h_oa, w_rin_ref[2])], axis=1)         # (B, 3, H)
    sc2 = jnp.einsum('bkh,blh->bkl', t_rel, enc, preferred_element_type=jnp.float32)
    attn2 = _softmax_lastdim(sc2)
    wc = jnp.einsum('bkl,blh->bkh', attn2, enc, preferred_element_type=jnp.float32)

    s_as = jnp.tanh(_dot(wc[:, 0, :], w_rwc_ref[0]) + _dot(h_as, w_rh_ref[0]))
    s_so = jnp.tanh(_dot(wc[:, 1, :], w_rwc_ref[1]) + _dot(h_so, w_rh_ref[1]))
    s_oa = jnp.tanh(_dot(wc[:, 2, :], w_rwc_ref[2]) + _dot(h_oa, w_rh_ref[2]))
    rel_ref[...] = jnp.stack([s_as, s_so, s_oa], axis=1)          # (B, 3, H)

    # object-attention target (hO projected to the 300-dim object space)
    objt_ref[...] = _dot(hO, w_obj_ref[...])


# ------------------------------ kernel 2: per-candidate graph ------------------------------

def _candidate_kernel(B, n_cand,
                      img_ref, act_ref, obj_ref, pan_ref, ctx_ref, rel_ref, objt_ref,
                      w_al_ref, w_sc_ref, w_oc_ref, w_ac_p_ref, w_ac_f_ref,
                      w_ni_ref, b_ni_ref, w_m1_ref, w_m2_ref, b_m_ref,
                      w_a1_ref, w_a2_ref, w_fin_ref,
                      logits_ref, ma_ref):
    M = img_ref.shape[0]

    def bcast(x):                                   # (B, D) -> (M, D), candidate-major repeat
        D = x.shape[-1]
        return jnp.broadcast_to(x[:, None, :], (B, n_cand, D)).reshape(M, D)

    ctx = ctx_ref[...]
    rel = rel_ref[...]
    cxt_s = bcast(ctx[:, 0, :])
    cxt_o = bcast(ctx[:, 1, :])
    cxt_a = bcast(ctx[:, 2, :])
    cmas = bcast(rel[:, 0, :])
    cmso = bcast(rel[:, 1, :])
    cmoa = bcast(rel[:, 2, :])
    par = bcast(pan_ref[...])
    ot = bcast(objt_ref[...])                       # (M, OBJ)

    # per-candidate object attention
    obj = obj_ref[...]                              # (M, n_obj, OBJ)
    attn = _softmax_lastdim(jnp.sum(obj * ot[:, None, :], axis=-1))
    owc = jnp.sum(attn[:, :, None] * obj, axis=1)   # (M, OBJ)

    # node initialisation
    af = jnp.tanh(_dot(act_ref[...], w_al_ref[...]))
    s_c = jnp.tanh(_dot(img_ref[...], w_sc_ref[...]))
    o_c = jnp.tanh(_dot(owc, w_oc_ref[...]))
    a_c = jnp.tanh(_dot(par, w_ac_p_ref[...]) + _dot(af, w_ac_f_ref[...]))

    si = jnp.tanh(_dot(cxt_s * s_c, w_ni_ref[0]) + b_ni_ref[0])
    oi = jnp.tanh(_dot(cxt_o * o_c, w_ni_ref[1]) + b_ni_ref[1])
    ai = jnp.tanh(_dot(cxt_a * a_c, w_ni_ref[2]) + b_ni_ref[2])

    def ln(x):
        # BertLayerNorm (TF-style, eps inside sqrt); created fresh inside the torch
        # forward -> weight = 1, bias = 0.  rsqrt uses the EUP slot.
        u = jnp.mean(x, axis=-1, keepdims=True)
        s = jnp.mean((x - u) ** 2, axis=-1, keepdims=True)
        return (x - u) * jax.lax.rsqrt(s + 1e-12)

    def msg(a, b, w1, w2, bias=None):
        y = _dot(a, w1) + _dot(b, w2)               # == concat([a,b]) @ [w1; w2]
        if bias is not None:
            y = y + bias
        return jnp.tanh(y)

    # message weight index: 0 = W_mas, 1 = W_mso, 2 = W_moa (each split into halves)
    m_as = msg(ai, si, w_m1_ref[0], w_m2_ref[0], b_m_ref[0])
    m_os = msg(oi, si, w_m1_ref[1], w_m2_ref[1], b_m_ref[1])
    m_s = msg(ln(m_os) * cmso, ln(m_as) * cmas, w_a1_ref[0], w_a2_ref[0]) + si

    m_so = msg(si, oi, w_m1_ref[1], w_m2_ref[1], b_m_ref[1])
    m_ao = msg(ai, oi, w_m1_ref[2], w_m2_ref[2], b_m_ref[2])
    m_o = msg(ln(m_so) * cmso, ln(m_ao) * cmoa, w_a1_ref[1], w_a2_ref[1]) + oi

    m_oa = msg(oi, ai, w_m1_ref[2], w_m2_ref[2], b_m_ref[2])
    m_sa = msg(si, ai, w_m1_ref[0], w_m2_ref[0], b_m_ref[0])
    m_a = msg(ln(m_oa) * cmoa, ln(m_sa) * cmas, w_a1_ref[2], w_a2_ref[2]) + ai

    # logits: (3H,1) projection folded into elementwise-mul + lane reduce
    logits_ref[...] = jnp.sum(m_s * w_fin_ref[0] + m_o * w_fin_ref[1] + m_a * w_fin_ref[2],
                              axis=-1, keepdims=True)
    ma_ref[...] = m_a


# ------------------------------ forward wrapper ------------------------------

def forward(params, action, feature, full_feat, full_obj_feat,
            prev_h_t, prev_c_t, prev_act_node, enc_out, ctx_mask, *, angle_feat_size):
    p = params
    B, n_cand, F = full_feat.shape
    A = angle_feat_size
    H = prev_h_t.shape[-1]
    E = p['W_act_emb'].shape[1]
    M = B * n_cand
    n_obj, obj_dim = full_obj_feat.shape[2], full_obj_feat.shape[3]

    # TODO(synk): nn.Dropout treated as identity (eval mode); no stochastic dropout in kernel.
    mask_bias = jnp.where(ctx_mask, -1e30, 0.0).astype(jnp.float32)

    # --- weight prep: slices / stacks only (removes all in-kernel concatenations) ---
    W_lang = jnp.concatenate([p['W_ls'], p['W_lo'], p['W_la']], axis=1)            # (H, 3H)
    W_pair_a = jnp.stack([p['W_has'][:H], p['W_hso'][:H], p['W_hoa'][:H]])          # (3, H, H)
    W_pair_b = jnp.stack([p['W_has'][H:], p['W_hso'][H:], p['W_hoa'][H:]])
    W_rin = jnp.stack([p['W_ras_in'], p['W_rso_in'], p['W_roa_in']])
    W_rout_wc = jnp.stack([p['W_ras_out'][:H], p['W_rso_out'][:H], p['W_roa_out'][:H]])
    W_rout_h = jnp.stack([p['W_ras_out'][H:], p['W_rso_out'][H:], p['W_roa_out'][H:]])

    h_t, c_t, h_tilde_G, ctx_soa, rel_soa, obj_t = pl.pallas_call(
        _state_kernel,
        out_shape=(jax.ShapeDtypeStruct((B, H), jnp.float32),
                   jax.ShapeDtypeStruct((B, H), jnp.float32),
                   jax.ShapeDtypeStruct((B, H), jnp.float32),
                   jax.ShapeDtypeStruct((B, 3, H), jnp.float32),
                   jax.ShapeDtypeStruct((B, 3, H), jnp.float32),
                   jax.ShapeDtypeStruct((B, p['W_obj_in'].shape[1]), jnp.float32)),
        in_specs=[_vmem()] * 20,
        out_specs=(_vmem(),) * 6,
    )(action, feature, prev_h_t, prev_c_t, enc_out, mask_bias,
      p['W_act_emb'], p['b_act_emb'].reshape(1, E), p['W_gva_in'],
      p['W_ih'][:E], p['W_ih'][E:], p['W_hh'], p['b_lstm'].reshape(1, 4 * H),
      W_lang, W_pair_a, W_pair_b, W_rin, W_rout_wc, W_rout_h, p['W_obj_in'])

    W_node_i = jnp.stack([p['W_si'], p['W_oi'], p['W_ai']])
    b_node_i = jnp.stack([p['b_si'], p['b_oi'], p['b_ai']])[:, None, :]             # (3, 1, H)
    W_msg_1 = jnp.stack([p['W_mas'][:H], p['W_mso'][:H], p['W_moa'][:H]])
    W_msg_2 = jnp.stack([p['W_mas'][H:], p['W_mso'][H:], p['W_moa'][H:]])
    b_msg = jnp.stack([p['b_mas'], p['b_mso'], p['b_moa']])[:, None, :]
    W_agg_1 = jnp.stack([p['W_ms'][:H], p['W_mo'][:H], p['W_ma'][:H]])
    W_agg_2 = jnp.stack([p['W_ms'][H:], p['W_mo'][H:], p['W_ma'][H:]])
    W_fin = p['W_final'].reshape(3, 1, H)

    img_flat = full_feat[..., :F - A].reshape(M, F - A)
    act_flat = full_feat[..., F - A:].reshape(M, A)
    obj_flat = full_obj_feat.reshape(M, n_obj, obj_dim)

    logits_flat, m_a_flat = pl.pallas_call(
        functools.partial(_candidate_kernel, B, n_cand),
        out_shape=(jax.ShapeDtypeStruct((M, 1), jnp.float32),
                   jax.ShapeDtypeStruct((M, H), jnp.float32)),
        in_specs=[_vmem()] * 20,
        out_specs=(_vmem(), _vmem()),
    )(img_flat, act_flat, obj_flat, prev_act_node, ctx_soa, rel_soa, obj_t,
      p['W_act_layer'], p['W_sc'], p['W_oc'], p['W_ac'][:H], p['W_ac'][H:],
      W_node_i, b_node_i, W_msg_1, W_msg_2, b_msg, W_agg_1, W_agg_2, W_fin)

    logits = logits_flat.reshape(B, n_cand)
    m_a = m_a_flat.reshape(B, n_cand, H)
    return h_t, c_t, logits, h_tilde_G, m_a


# ------------------------------ parameters (deterministic, synthetic) ------------------------------

def init_params(key, E, H, F, A, OBJ=300):
    keys = iter(jax.random.split(key, 64))

    def w(shape, scale=0.05):
        return (scale * jax.random.normal(next(keys), shape)).astype(jnp.float32)

    p = {}
    p['W_act_layer'] = w((A, H))                              # action_layer (no bias)
    p['W_act_emb'] = w((A, E)); p['b_act_emb'] = w((E,))      # action_embedding_layer
    p['W_ih'] = w((E + F, 4 * H)); p['W_hh'] = w((H, 4 * H))  # global_LSTM
    p['b_lstm'] = w((4 * H,))                                 # b_ih + b_hh combined
    p['W_gva_in'] = w((H, F))                                 # global_visual_attn_layer.linear_in
    p['W_ls'] = w((H, H)); p['W_lo'] = w((H, H)); p['W_la'] = w((H, H))   # lang_attn linear_in x3
    p['W_has'] = w((2 * H, H)); p['W_hso'] = w((2 * H, H)); p['W_hoa'] = w((2 * H, H))
    p['W_ras_in'] = w((H, H)); p['W_ras_out'] = w((2 * H, H))
    p['W_rso_in'] = w((H, H)); p['W_rso_out'] = w((2 * H, H))
    p['W_roa_in'] = w((H, H)); p['W_roa_out'] = w((2 * H, H))
    p['W_obj_in'] = w((H, OBJ))                               # full_obj_attn.linear_in
    p['W_sc'] = w((F - A, H))
    p['W_oc'] = w((OBJ, H))
    p['W_ac'] = w((2 * H, H))
    p['W_si'] = w((H, H)); p['b_si'] = w((H,))
    p['W_oi'] = w((H, H)); p['b_oi'] = w((H,))
    p['W_ai'] = w((H, H)); p['b_ai'] = w((H,))
    p['W_mas'] = w((2 * H, H)); p['b_mas'] = w((H,))
    p['W_mso'] = w((2 * H, H)); p['b_mso'] = w((H,))
    p['W_moa'] = w((2 * H, H)); p['b_moa'] = w((H,))
    p['W_ms'] = w((2 * H, H)); p['W_mo'] = w((2 * H, H)); p['W_ma'] = w((2 * H, H))
    p['W_final'] = w((3 * H, 1))
    return p


# ------------------------------ pure-JAX reference (for self-check) ------------------------------

def forward_ref(p, action, feature, full_feat, full_obj_feat,
                prev_h, prev_c, prev_act_node, enc_out, ctx_mask, A, H):
    B, n_cand, F = full_feat.shape
    L = enc_out.shape[1]
    M = B * n_cand
    img = full_feat[..., :F - A]
    act = full_feat[..., F - A:]

    def attn(tgt, ctx, mbias):
        s = jnp.einsum('bld,bd->bl', ctx, tgt) + mbias
        a = jax.nn.softmax(s, axis=-1)
        return jnp.einsum('bl,bld->bd', a, ctx)

    def ln(x):
        u = jnp.mean(x, -1, keepdims=True)
        s = jnp.mean((x - u) ** 2, -1, keepdims=True)
        return (x - u) / jnp.sqrt(s + 1e-12)

    pae = jnp.tanh(action @ p['W_act_emb'] + p['b_act_emb'])
    fgt = attn(prev_h @ p['W_gva_in'], feature, jnp.zeros((B, feature.shape[1])))
    gf = jnp.concatenate([pae, fgt], 1)
    gates = gf @ p['W_ih'] + prev_h @ p['W_hh'] + p['b_lstm']
    ig = jax.nn.sigmoid(gates[:, :H]); fg = jax.nn.sigmoid(gates[:, H:2 * H])
    gg = jnp.tanh(gates[:, 2 * H:3 * H]); og = jax.nn.sigmoid(gates[:, 3 * H:])
    c_t = fg * prev_c + ig * gg
    h_t = og * jnp.tanh(c_t)
    mbias = jnp.where(ctx_mask, -1e30, 0.0)
    hS = attn(h_t @ p['W_ls'], enc_out, mbias)
    hO = attn(h_t @ p['W_lo'], enc_out, mbias)
    hA = attn(h_t @ p['W_la'], enc_out, mbias)
    hG = (hS + hO + hA) / 3.0
    cxt_s = jnp.repeat(hS, n_cand, 0); cxt_o = jnp.repeat(hO, n_cand, 0); cxt_a = jnp.repeat(hA, n_cand, 0)
    has = jnp.tanh(jnp.concatenate([hA, hS], 1) @ p['W_has'])
    hso = jnp.tanh(jnp.concatenate([hS, hO], 1) @ p['W_hso'])
    hoa = jnp.tanh(jnp.concatenate([hO, hA], 1) @ p['W_hoa'])
    zm = jnp.zeros((B, L))

    def rel(h, wi, wo):
        wc = attn(h @ wi, enc_out, zm)
        return jnp.tanh(jnp.concatenate([wc, h], 1) @ wo)

    cmas = jnp.repeat(rel(has, p['W_ras_in'], p['W_ras_out']), n_cand, 0)
    cmso = jnp.repeat(rel(hso, p['W_rso_in'], p['W_rso_out']), n_cand, 0)
    cmoa = jnp.repeat(rel(hoa, p['W_roa_in'], p['W_roa_out']), n_cand, 0)
    n_obj, obj_dim = full_obj_feat.shape[2], full_obj_feat.shape[3]
    ot = jnp.repeat(hO @ p['W_obj_in'], n_cand, 0)
    owc = attn(ot, full_obj_feat.reshape(M, n_obj, obj_dim), jnp.zeros((M, n_obj)))
    par = jnp.repeat(prev_act_node, n_cand, 0)
    af = jnp.tanh(act.reshape(M, A) @ p['W_act_layer'])
    sc = jnp.tanh(img.reshape(M, F - A) @ p['W_sc'])
    oc = jnp.tanh(owc @ p['W_oc'])
    ac = jnp.tanh(jnp.concatenate([par, af], 1) @ p['W_ac'])
    si = jnp.tanh((cxt_s * sc) @ p['W_si'] + p['b_si'])
    oi = jnp.tanh((cxt_o * oc) @ p['W_oi'] + p['b_oi'])
    ai = jnp.tanh((cxt_a * ac) @ p['W_ai'] + p['b_ai'])

    def msg(a, b, w, bias=None):
        y = jnp.concatenate([a, b], 1) @ w
        if bias is not None:
            y = y + bias
        return jnp.tanh(y)

    m_as = msg(ai, si, p['W_mas'], p['b_mas'])
    m_os = msg(oi, si, p['W_mso'], p['b_mso'])
    m_s = msg(ln(m_os) * cmso, ln(m_as) * cmas, p['W_ms']) + si
    m_so = msg(si, oi, p['W_mso'], p['b_mso'])
    m_ao = msg(ai, oi, p['W_moa'], p['b_moa'])
    m_o = msg(ln(m_so) * cmso, ln(m_ao) * cmoa, p['W_mo']) + oi
    m_oa = msg(oi, ai, p['W_moa'], p['b_moa'])
    m_sa = msg(si, ai, p['W_mas'], p['b_mas'])
    m_a = msg(ln(m_oa) * cmoa, ln(m_sa) * cmas, p['W_ma']) + ai
    logits = (jnp.concatenate([m_s, m_o, m_a], 1) @ p['W_final']).reshape(B, n_cand)
    return h_t, c_t, logits, hG, m_a.reshape(B, n_cand, H)


# ------------------------------ main ------------------------------

if __name__ == "__main__":
    B, H, E, A, F = 2, 32, 16, 8, 64          # batch, hidden, embedding, angle_feat, feature_size
    NV, NC, NO, L, OBJ = 6, 4, 5, 8, 300      # views, candidates, objects/cand, seq len, obj raw dim

    key = jax.random.PRNGKey(0)
    kp, kd = jax.random.split(key)
    params = init_params(kp, E, H, F, A, OBJ)

    ks = jax.random.split(kd, 8)
    action = jax.random.normal(ks[0], (B, A), jnp.float32)
    feature = jax.random.normal(ks[1], (B, NV, F), jnp.float32)
    full_feat = jax.random.normal(ks[2], (B, NC, F), jnp.float32)
    full_obj_feat = jax.random.normal(ks[3], (B, NC, NO, OBJ), jnp.float32)
    prev_h_t = 0.1 * jax.random.normal(ks[4], (B, H), jnp.float32)
    prev_c_t = 0.1 * jax.random.normal(ks[5], (B, H), jnp.float32)
    prev_act_node = 0.1 * jax.random.normal(ks[6], (B, H), jnp.float32)
    enc_out = jax.random.normal(ks[7], (B, L, H), jnp.float32)
    # True = masked (as torch masked_fill); batch 1 has its last 3 tokens masked.
    ctx_mask = jnp.arange(L)[None, :] >= jnp.array([[L], [L - 3]])

    fwd = jax.jit(functools.partial(forward, angle_feat_size=A))
    outs = fwd(params, action, feature, full_feat, full_obj_feat,
               prev_h_t, prev_c_t, prev_act_node, enc_out, ctx_mask)
    outs = jax.block_until_ready(outs)

    with jax.default_matmul_precision("highest"):
        ref = forward_ref(params, action, feature, full_feat, full_obj_feat,
                          prev_h_t, prev_c_t, prev_act_node, enc_out, ctx_mask, A, H)

    names = ("h_t", "c_t", "logits", "h_tilde_G", "m_a")
    for name, o, r in zip(names, outs, ref):
        assert o.shape == r.shape, (name, o.shape, r.shape)
        np.testing.assert_allclose(np.asarray(o), np.asarray(r), atol=2e-2, rtol=2e-2)

    print("KERNEL_OK")
</pallas_src>

<mosaic_0001>
module attributes {stable_mosaic.version = 11 : i64} {
  func.func @_state_kernel(%arg0: memref<2x8xf32, #tpu.memory_space<vmem>>, %arg1: memref<2x6x64xf32, #tpu.memory_space<vmem>>, %arg2: memref<2x32xf32, #tpu.memory_space<vmem>>, %arg3: memref<2x32xf32, #tpu.memory_space<vmem>>, %arg4: memref<2x8x32xf32, #tpu.memory_space<vmem>>, %arg5: memref<2x8xf32, #tpu.memory_space<vmem>>, %arg6: memref<8x16xf32, #tpu.memory_space<vmem>>, %arg7: memref<1x16xf32, #tpu.memory_space<vmem>>, %arg8: memref<32x64xf32, #tpu.memory_space<vmem>>, %arg9: memref<16x128xf32, #tpu.memory_space<vmem>>, %arg10: memref<64x128xf32, #tpu.memory_space<vmem>>, %arg11: memref<32x128xf32, #tpu.memory_space<vmem>>, %arg12: memref<1x128xf32, #tpu.memory_space<vmem>>, %arg13: memref<32x96xf32, #tpu.memory_space<vmem>>, %arg14: memref<3x32x32xf32, #tpu.memory_space<vmem>>, %arg15: memref<3x32x32xf32, #tpu.memory_space<vmem>>, %arg16: memref<3x32x32xf32, #tpu.memory_space<vmem>>, %arg17: memref<3x32x32xf32, #tpu.memory_space<vmem>>, %arg18: memref<3x32x32xf32, #tpu.memory_space<vmem>>, %arg19: memref<32x300xf32, #tpu.memory_space<vmem>>, %arg20: memref<2x32xf32, #tpu.memory_space<vmem>>, %arg21: memref<2x32xf32, #tpu.memory_space<vmem>>, %arg22: memref<2x32xf32, #tpu.memory_space<vmem>>, %arg23: memref<2x3x32xf32, #tpu.memory_space<vmem>>, %arg24: memref<2x3x32xf32, #tpu.memory_space<vmem>>, %arg25: memref<2x300xf32, #tpu.memory_space<vmem>>) attributes {dimension_semantics = [], scalar_prefetch = 0 : i64, scratch_operands = 0 : i64, tpu.core_type = #tpu.core_type<tc>} {
    %c0 = arith.constant 0 : index
    %c0_0 = arith.constant 0 : index
    %0 = vector.load %arg2[%c0, %c0_0] : memref<2x32xf32, #tpu.memory_space<vmem>>, vector<2x32xf32>
    %c0_1 = arith.constant 0 : index
    %c0_2 = arith.constant 0 : index
    %c0_3 = arith.constant 0 : index
    %1 = vector.load %arg4[%c0_1, %c0_2, %c0_3] : memref<2x8x32xf32, #tpu.memory_space<vmem>>, vector<2x8x32xf32>
    %c0_4 = arith.constant 0 : index
    %c0_5 = arith.constant 0 : index
    %2 = vector.load %arg0[%c0_4, %c0_5] : memref<2x8xf32, #tpu.memory_space<vmem>>, vector<2x8xf32>
    %c0_6 = arith.constant 0 : index
    %c0_7 = arith.constant 0 : index
    %3 = vector.load %arg6[%c0_6, %c0_7] : memref<8x16xf32, #tpu.memory_space<vmem>>, vector<8x16xf32>
    %cst = arith.constant dense<0.000000e+00> : vector<2x16xf32>
    %4 = tpu.matmul %2, %3, %cst {dimension_numbers = #tpu.dot_dimension_numbers<[1], [0], [0], [1], [0, 0, 1, 1], [], []>} : vector<2x8xf32>, vector<8x16xf32>, vector<2x16xf32> -> vector<2x16xf32>
    %c0_8 = arith.constant 0 : index
    %c0_9 = arith.constant 0 : index
    %5 = vector.load %arg7[%c0_8, %c0_9] : memref<1x16xf32, #tpu.memory_space<vmem>>, vector<1x16xf32>
    %6 = vector.broadcast %5 : vector<1x16xf32> to vector<2x16xf32>
    %7 = arith.addf %4, %6 : vector<2x16xf32>
    %8 = math.tanh %7 : vector<2x16xf32>
    %c0_10 = arith.constant 0 : index
    %c0_11 = arith.constant 0 : index
    %c0_12 = arith.constant 0 : index
    %9 = vector.load %arg1[%c0_10, %c0_11, %c0_12] : memref<2x6x64xf32, #tpu.memory_space<vmem>>, vector<2x6x64xf32>
    %c0_13 = arith.constant 0 : index
    %c0_14 = arith.constant 0 : index
    %10 = vector.load %arg8[%c0_13, %c0_14] : memref<32x64xf32, #tpu.memory_space<vmem>>, vector<32x64xf32>
    %cst_15 = arith.constant dense<0.000000e+00> : vector<2x64xf32>
    %11 = tpu.matmul %0, %10, %cst_15 {dimension_numbers = #tpu.dot_dimension_numbers<[1], [0], [0], [1], [0, 0, 1, 1], [], []>} : vector<2x32xf32>, vector<32x64xf32>, vector<2x64xf32> -> vector<2x64xf32>
    %12 = vector.shape_cast %11 : vector<2x64xf32> to vector<2x1x64xf32>
    %13 = vector.broadcast %12 : vector<2x1x64xf32> to vector<2x6x64xf32>
    %14 = arith.mulf %9, %13 : vector<2x6x64xf32>
    %cst_16 = arith.constant dense<0.000000e+00> : vector<2x6xf32>
    %15 = vector.multi_reduction <add>, %14, %cst_16 [2] : vector<2x6x64xf32> to vector<2x6xf32>
    %cst_17 = arith.constant dense<0xFF800000> : vector<2xf32>
    %16 = vector.multi_reduction <maximumf>, %15, %cst_17 [1] : vector<2x6xf32> to vector<2xf32>
    %17 = vector.shape_cast %16 : vector<2xf32> to vector<2x1xf32>
    %18 = vector.broadcast %17 : vector<2x1xf32> to vector<2x6xf32>
    %19 = arith.subf %15, %18 : vector<2x6xf32>
    %20 = math.exp %19 : vector<2x6xf32>
    %cst_18 = arith.constant dense<0.000000e+00> : vector<2xf32>
    %21 = vector.multi_reduction <add>, %20, %cst_18 [1] : vector<2x6xf32> to vector<2xf32>
    %22 = vector.shape_cast %21 : vector<2xf32> to vector<2x1xf32>
    %cst_19 = arith.constant 1.000000e-30 : f32
    %23 = vector.broadcast %cst_19 : f32 to vector<2x1xf32>
    %24 = arith.maximumf %22, %23 : vector<2x1xf32>
    %25 = tpu.reciprocal %24 {approx = true} : vector<2x1xf32> -> vector<2x1xf32>
    %26 = vector.broadcast %25 : vector<2x1xf32> to vector<2x6xf32>
    %27 = arith.mulf %20, %26 : vector<2x6xf32>
    %28 = vector.shape_cast %27 : vector<2x6xf32> to vector<2x6x1xf32>
    %29 = vector.broadcast %28 : vector<2x6x1xf32> to vector<2x6x64xf32>
    %30 = arith.mulf %29, %9 : vector<2x6x64xf32>
    %cst_20 = arith.constant dense<0.000000e+00> : vector<2x64xf32>
    %31 = vector.multi_reduction <add>, %30, %cst_20 [1] : vector<2x6x64xf32> to vector<2x64xf32>
    %c0_21 = arith.constant 0 : index
    %c0_22 = arith.constant 0 : index
    %32 = vector.load %arg9[%c0_21, %c0_22] : memref<16x128xf32, #tpu.memory_space<vmem>>, vector<16x128xf32>
    %cst_23 = arith.constant dense<0.000000e+00> : vector<2x128xf32>
    %33 = tpu.matmul %8, %32, %cst_23 {dimension_numbers = #tpu.dot_dimension_numbers<[1], [0], [0], [1], [0, 0, 1, 1], [], []>} : vector<2x16xf32>, vector<16x128xf32>, vector<2x128xf32> -> vector<2x128xf32>
    %c0_24 = arith.constant 0 : index
    %c0_25 = arith.constant 0 : index
    %34 = vector.load %arg10[%c0_24, %c0_25] : memref<64x128xf32, #tpu.memory_space<vmem>>, vector<64x128xf32>
    %cst_26 = arith.constant dense<0.000000e+00> : vector<2x128xf32>
    %35 = tpu.matmul %31, %34, %cst_26 {dimension_numbers = #tpu.dot_dimension_numbers<[1], [0], [0], [1], [0, 0, 1, 1], [], []>} : vector<2x64xf32>, vector<64x128xf32>, vector<2x128xf32> -> vector<2x128xf32>
    %36 = arith.addf %33, %35 : vector<2x128xf32>
    %c0_27 = arith.constant 0 : index
    %c0_28 = arith.constant 0 : index
    %37 = vector.load %arg11[%c0_27, %c0_28] : memref<32x128xf32, #tpu.memory_space<vmem>>, vector<32x128xf32>
    %cst_29 = arith.constant dense<0.000000e+00> : vector<2x128xf32>
    %38 = tpu.matmul %0, %37, %cst_29 {dimension_numbers = #tpu.dot_dimension_numbers<[1], [0], [0], [1], [0, 0, 1, 1], [], []>} : vector<2x32xf32>, vector<32x128xf32>, vector<2x128xf32> -> vector<2x128xf32>
    %39 = arith.addf %36, %38 : vector<2x128xf32>
    %c0_30 = arith.constant 0 : index
    %c0_31 = arith.constant 0 : index
    %40 = vector.load %arg12[%c0_30, %c0_31] : memref<1x128xf32, #tpu.memory_space<vmem>>, vector<1x128xf32>
    %41 = vector.broadcast %40 : vector<1x128xf32> to vector<2x128xf32>
    %42 = arith.addf %39, %41 : vector<2x128xf32>
    %43 = vector.extract_strided_slice %42 {offsets = [0, 0], sizes = [2, 32], strides = [1, 1]} : vector<2x128xf32> to vector<2x32xf32>
    %44 = arith.negf %43 : vector<2x32xf32>
    %45 = math.exp %44 : vector<2x32xf32>
    %cst_32 = arith.constant 1.000000e+00 : f32
    %46 = vector.broadcast %cst_32 : f32 to vector<2x32xf32>
    %47 = arith.addf %46, %45 : vector<2x32xf32>
    %48 = arith.divf %46, %47 : vector<2x32xf32>
    %49 = vector.extract_strided_slice %42 {offsets = [0, 32], sizes = [2, 32], strides = [1, 1]} : vector<2x128xf32> to vector<2x32xf32>
    %50 = arith.negf %49 : vector<2x32xf32>
    %51 = math.exp %50 : vector<2x32xf32>
    %cst_33 = arith.constant 1.000000e+00 : f32
    %52 = vector.broadcast %cst_33 : f32 to vector<2x32xf32>
    %53 = arith.addf %52, %51 : vector<2x32xf32>
    %54 = arith.divf %52, %53 : vector<2x32xf32>
    %55 = vector.extract_strided_slice %42 {offsets = [0, 64], sizes = [2, 32], strides = [1, 1]} : vector<2x128xf32> to vector<2x32xf32>
    %56 = math.tanh %55 : vector<2x32xf32>
    %57 = vector.extract_strided_slice %42 {offsets = [0, 96], sizes = [2, 32], strides = [1, 1]} : vector<2x128xf32> to vector<2x32xf32>
    %58 = arith.negf %57 : vector<2x32xf32>
    %59 = math.exp %58 : vector<2x32xf32>
    %cst_34 = arith.constant 1.000000e+00 : f32
    %60 = vector.broadcast %cst_34 : f32 to vector<2x32xf32>
    %61 = arith.addf %60, %59 : vector<2x32xf32>
    %62 = arith.divf %60, %61 : vector<2x32xf32>
    %c0_35 = arith.constant 0 : index
    %c0_36 = arith.constant 0 : index
    %63 = vector.load %arg3[%c0_35, %c0_36] : memref<2x32xf32, #tpu.memory_space<vmem>>, vector<2x32xf32>
    %64 = arith.mulf %54, %63 : vector<2x32xf32>
    %65 = arith.mulf %48, %56 : vector<2x32xf32>
    %66 = arith.addf %64, %65 : vector<2x32xf32>
    %67 = math.tanh %66 : vector<2x32xf32>
    %68 = arith.mulf %62, %67 : vector<2x32xf32>
    %c0_37 = arith.constant 0 : index
    %c0_38 = arith.constant 0 : index
    %69 = vector.load %arg20[%c0_37, %c0_38] : memref<2x32xf32, #tpu.memory_space<vmem>>, vector<2x32xf32>
    tpu.vector_store %arg20[%c0_37, %c0_38], %68 {strides = array<i32>} : memref<2x32xf32, #tpu.memory_space<vmem>>, vector<2x32xf32>,
    %c0_39 = arith.constant 0 : index
    %c0_40 = arith.constant 0 : index
    %70 = vector.load %arg21[%c0_39, %c0_40] : memref<2x32xf32, #tpu.memory_space<vmem>>, vector<2x32xf32>
    tpu.vector_store %arg21[%c0_39, %c0_40], %66 {strides = array<i32>} : memref<2x32xf32, #tpu.memory_space<vmem>>, vector<2x32xf32>,
    %c0_41 = arith.constant 0 : index
    %c0_42 = arith.constant 0 : index
    %71 = vector.load %arg13[%c0_41, %c0_42] : memref<32x96xf32, #tpu.memory_space<vmem>>, vector<32x96xf32>
    %cst_43 = arith.constant dense<0.000000e+00> : vector<2x96xf32>
    %72 = tpu.matmul %68, %71, %cst_43 {dimension_numbers = #tpu.dot_dimension_numbers<[1], [0], [0], [1], [0, 0, 1, 1], [], []>} : vector<2x32xf32>, vector<32x96xf32>, vector<2x96xf32> -> vector<2x96xf32>
    %73 = vector.extract_strided_slice %72 {offsets = [0, 0], sizes = [2, 32], strides = [1, 1]} : vector<2x96xf32> to vector<2x32xf32>
    %74 = vector.extract_strided_slice %72 {offsets = [0, 32], sizes = [2, 32], strides = [1, 1]} : vector<2x96xf32> to vector<2x32xf32>
    %75 = vector.extract_strided_slice %72 {offsets = [0, 64], sizes = [2, 32], strides = [1, 1]} : vector<2x96xf32> to vector<2x32xf32>
    %76 = vector.shape_cast %73 : vector<2x32xf32> to vector<2x1x32xf32>
    %77 = vector.shape_cast %74 : vector<2x32xf32> to vector<2x1x32xf32>
    %78 = vector.shape_cast %75 : vector<2x32xf32> to vector<2x1x32xf32>
    %79 = tpu.concatenate %76, %77, %78 in 1 : vector<2x1x32xf32>, vector<2x1x32xf32>, vector<2x1x32xf32> -> vector<2x3x32xf32>
    "tpu.trace_start"() <{level = 10 : i32, message = "bkh,blh->bkl"}> : () -> ()
    %cst_44 = arith.constant dense<0.000000e+00> : vector<2x3x8xf32>
    %80 = tpu.matmul %79, %1, %cst_44 {dimension_numbers = #tpu.dot_dimension_numbers<[2], [2], [1], [1], [0, 0, 0, 1, 1, 1], [0], [0]>} : vector<2x3x32xf32>, vector<2x8x32xf32>, vector<2x3x8xf32> -> vector<2x3x8xf32>
    "tpu.trace_stop"() : () -> ()
    %c0_45 = arith.constant 0 : index
    %c0_46 = arith.constant 0 : index
    %81 = vector.load %arg5[%c0_45, %c0_46] : memref<2x8xf32, #tpu.memory_space<vmem>>, vector<2x8xf32>
    %82 = vector.shape_cast %81 : vector<2x8xf32> to vector<2x1x8xf32>
    %83 = vector.broadcast %82 : vector<2x1x8xf32> to vector<2x3x8xf32>
    %84 = arith.addf %80, %83 : vector<2x3x8xf32>
    %cst_47 = arith.constant dense<0xFF800000> : vector<2x3xf32>
    %85 = vector.multi_reduction <maximumf>, %84, %cst_47 [2] : vector<2x3x8xf32> to vector<2x3xf32>
    %86 = vector.shape_cast %85 : vector<2x3xf32> to vector<2x3x1xf32>
    %87 = vector.broadcast %86 : vector<2x3x1xf32> to vector<2x3x8xf32>
    %88 = arith.subf %84, %87 : vector<2x3x8xf32>
    %89 = math.exp %88 : vector<2x3x8xf32>
    %cst_48 = arith.constant dense<0.000000e+00> : vector<2x3xf32>
    %90 = vector.multi_reduction <add>, %89, %cst_48 [2] : vector<2x3x8xf32> to vector<2x3xf32>
    %91 = vector.shape_cast %90 : vector<2x3xf32> to vector<2x3x1xf32>
    %cst_49 = arith.constant 1.000000e-30 : f32
    %92 = vector.broadcast %cst_49 : f32 to vector<2x3x1xf32>
    %93 = arith.maximumf %91, %92 : vector<2x3x1xf32>
    %94 = tpu.reciprocal %93 {approx = true} : vector<2x3x1xf32> -> vector<2x3x1xf32>
    %95 = vector.broadcast %94 : vector<2x3x1xf32> to vector<2x3x8xf32>
    %96 = arith.mulf %89, %95 : vector<2x3x8xf32>
    "tpu.trace_start"() <{level = 10 : i32, message = "bkl,blh->bkh"}> : () -> ()
    %cst_50 = arith.constant dense<0.000000e+00> : vector<2x3x32xf32>
    %97 = tpu.matmul %96, %1, %cst_50 {dimension_numbers = #tpu.dot_dimension_numbers<[2], [1], [1], [2], [0, 0, 0, 1, 1, 2], [0], [0]>} : vector<2x3x8xf32>, vector<2x8x32xf32>, vector<2x3x32xf32> -> vector<2x3x32xf32>
    "tpu.trace_stop"() : () -> ()
    %c0_51 = arith.constant 0 : index
    %c0_52 = arith.constant 0 : index
    %c0_53 = arith.constant 0 : index
    %98 = vector.load %arg23[%c0_51, %c0_52, %c0_53] : memref<2x3x32xf32, #tpu.memory_space<vmem>>, vector<2x3x32xf32>
    tpu.vector_store %arg23[%c0_51, %c0_52, %c0_53], %97 {strides = array<i32>} : memref<2x3x32xf32, #tpu.memory_space<vmem>>, vector<2x3x32xf32>,
    %cst_54 = arith.constant dense<0.000000e+00> : vector<2x32xf32>
    %99 = vector.multi_reduction <add>, %97, %cst_54 [1] : vector<2x3x32xf32> to vector<2x32xf32>
    %cst_55 = arith.constant 3.000000e+00 : f32
    %100 = vector.broadcast %cst_55 : f32 to vector<2x32xf32>
    %101 = arith.divf %99, %100 : vector<2x32xf32>
    %c0_56 = arith.constant 0 : index
    %c0_57 = arith.constant 0 : index
    %102 = vector.load %arg22[%c0_56, %c0_57] : memref<2x32xf32, #tpu.memory_space<vmem>>, vector<2x32xf32>
    tpu.vector_store %arg22[%c0_56, %c0_57], %101 {strides = array<i32>} : memref<2x32xf32, #tpu.memory_space<vmem>>, vector<2x32xf32>,
    %103 = vector.extract_strided_slice %97 {offsets = [0, 0, 0], sizes = [2, 1, 32], strides = [1, 1, 1]} : vector<2x3x32xf32> to vector<2x1x32xf32>
    %104 = vector.shape_cast %103 : vector<2x1x32xf32> to vector<2x32xf32>
    %105 = vector.extract_strided_slice %97 {offsets = [0, 1, 0], sizes = [2, 1, 32], strides = [1, 1, 1]} : vector<2x3x32xf32> to vector<2x1x32xf32>
    %106 = vector.shape_cast %105 : vector<2x1x32xf32> to vector<2x32xf32>
    %107 = vector.extract_strided_slice %97 {offsets = [0, 2, 0], sizes = [2, 1, 32], strides = [1, 1, 1]} : vector<2x3x32xf32> to vector<2x1x32xf32>
    %108 = vector.shape_cast %107 : vector<2x1x32xf32> to vector<2x32xf32>
    %c0_58 = arith.constant 0 : index
    %c0_59 = arith.constant 0 : index
    %c0_60 = arith.constant 0 : index
    %109 = vector.load %arg14[%c0_58, %c0_59, %c0_60] : memref<3x32x32xf32, #tpu.memory_space<vmem>>, vector<1x32x32xf32>
    %110 = vector.shape_cast %109 : vector<1x32x32xf32> to vector<32x32xf32>
    %cst_61 = arith.constant dense<0.000000e+00> : vector<2x32xf32>
    %111 = tpu.matmul %108, %110, %cst_61 {dimension_numbers = #tpu.dot_dimension_numbers<[1], [0], [0], [1], [0, 0, 1, 1], [], []>} : vector<2x32xf32>, vector<32x32xf32>, vector<2x32xf32> -> vector<2x32xf32>
    %c0_62 = arith.constant 0 : index
    %c0_63 = arith.constant 0 : index
    %c0_64 = arith.constant 0 : index
    %112 = vector.load %arg15[%c0_62, %c0_63, %c0_64] : memref<3x32x32xf32, #tpu.memory_space<vmem>>, vector<1x32x32xf32>
    %113 = vector.shape_cast %112 : vector<1x32x32xf32> to vector<32x32xf32>
    %cst_65 = arith.constant dense<0.000000e+00> : vector<2x32xf32>
    %114 = tpu.matmul %104, %113, %cst_65 {dimension_numbers = #tpu.dot_dimension_numbers<[1], [0], [0], [1], [0, 0, 1, 1], [], []>} : vector<2x32xf32>, vector<32x32xf32>, vector<2x32xf32> -> vector<2x32xf32>
    %115 = arith.addf %111, %114 : vector<2x32xf32>
    %116 = math.tanh %115 : vector<2x32xf32>
    %c1 = arith.constant 1 : index
    %c0_66 = arith.constant 0 : index
    %c0_67 = arith.constant 0 : index
    %117 = vector.load %arg14[%c1, %c0_66, %c0_67] : memref<3x32x32xf32, #tpu.memory_space<vmem>>, vector<1x32x32xf32>
    %118 = vector.shape_cast %117 : vector<1x32x32xf32> to vector<32x32xf32>
    %cst_68 = arith.constant dense<0.000000e+00> : vector<2x32xf32>
    %119 = tpu.matmul %104, %118, %cst_68 {dimension_numbers = #tpu.dot_dimension_numbers<[1], [0], [0], [1], [0, 0, 1, 1], [], []>} : vector<2x32xf32>, vector<32x32xf32>, vector<2x32xf32> -> vector<2x32xf32>
    %c1_69 = arith.constant 1 : index
    %c0_70 = arith.constant 0 : index
    %c0_71 = arith.constant 0 : index
    %120 = vector.load %arg15[%c1_69, %c0_70, %c0_71] : memref<3x32x32xf32, #tpu.memory_space<vmem>>, vector<1x32x32xf32>
    %121 = vector.shape_cast %120 : vector<1x32x32xf32> to vector<32x32xf32>
    %cst_72 = arith.constant dense<0.000000e+00> : vector<2x32xf32>
    %122 = tpu.matmul %106, %121, %cst_72 {dimension_numbers = #tpu.dot_dimension_numbers<[1], [0], [0], [1], [0, 0, 1, 1], [], []>} : vector<2x32xf32>, vector<32x32xf32>, vector<2x32xf32> -> vector<2x32xf32>
    %123 = arith.addf %119, %122 : vector<2x32xf32>
    %124 = math.tanh %123 : vector<2x32xf32>
    %c2 = arith.constant 2 : index
    %c0_73 = arith.constant 0 : index
    %c0_74 = arith.constant 0 : index
    %125 = vector.load %arg14[%c2, %c0_73, %c0_74] : memref<3x32x32xf32, #tpu.memory_space<vmem>>, vector<1x32x32xf32>
    %126 = vector.shape_cast %125 : vector<1x32x32xf32> to vector<32x32xf32>
    %cst_75 = arith.constant dense<0.000000e+00> : vector<2x32xf32>
    %127 = tpu.matmul %106, %126, %cst_75 {dimension_numbers = #tpu.dot_dimension_numbers<[1], [0], [0], [1], [0, 0, 1, 1], [], []>} : vector<2x32xf32>, vector<32x32xf32>, vector<2x32xf32> -> vector<2x32xf32>
    %c2_76 = arith.constant 2 : index
    %c0_77 = arith.constant 0 : index
    %c0_78 = arith.constant 0 : index
    %128 = vector.load %arg15[%c2_76, %c0_77, %c0_78] : memref<3x32x32xf32, #tpu.memory_space<vmem>>, vector<1x32x32xf32>
    %129 = vector.shape_cast %128 : vector<1x32x32xf32> to vector<32x32xf32>
    %cst_79 = arith.constant dense<0.000000e+00> : vector<2x32xf32>
    %130 = tpu.matmul %108, %129, %cst_79 {dimension_numbers = #tpu.dot_dimension_numbers<[1], [0], [0], [1], [0, 0, 1, 1], [], []>} : vector<2x32xf32>, vector<32x32xf32>, vector<2x32xf32> -> vector<2x32xf32>
    %131 = arith.addf %127, %130 : vector<2x32xf32>
    %132 = math.tanh %131 : vector<2x32xf32>
    %c0_80 = arith.constant 0 : index
    %c0_81 = arith.constant 0 : index
    %c0_82 = arith.constant 0 : index
    %133 = vector.load %arg16[%c0_80, %c0_81, %c0_82] : memref<3x32x32xf32, #tpu.memory_space<vmem>>, vector<1x32x32xf32>
    %134 = vector.shape_cast %133 : vector<1x32x32xf32> to vector<32x32xf32>
    %cst_83 = arith.constant dense<0.000000e+00> : vector<2x32xf32>
    %135 = tpu.matmul %116, %134, %cst_83 {dimension_numbers = #tpu.dot_dimension_numbers<[1], [0], [0], [1], [0, 0, 1, 1], [], []>} : vector<2x32xf32>, vector<32x32xf32>, vector<2x32xf32> -> vector<2x32xf32>
    %c1_84 = arith.constant 1 : index
    %c0_85 = arith.constant 0 : index
    %c0_86 = arith.constant 0 : index
    %136 = vector.load %arg16[%c1_84, %c0_85, %c0_86] : memref<3x32x32xf32, #tpu.memory_space<vmem>>, vector<1x32x32xf32>
    %137 = vector.shape_cast %136 : vector<1x32x32xf32> to vector<32x32xf32>
    %cst_87 = arith.constant dense<0.000000e+00> : vector<2x32xf32>
    %138 = tpu.matmul %124, %137, %cst_87 {dimension_numbers = #tpu.dot_dimension_numbers<[1], [0], [0], [1], [0, 0, 1, 1], [], []>} : vector<2x32xf32>, vector<32x32xf32>, vector<2x32xf32> -> vector<2x32xf32>
    %c2_88 = arith.constant 2 : index
    %c0_89 = arith.constant 0 : index
    %c0_90 = arith.constant 0 : index
    %139 = vector.load %arg16[%c2_88, %c0_89, %c0_90] : memref<3x32x32xf32, #tpu.memory_space<vmem>>, vector<1x32x32xf32>
    %140 = vector.shape_cast %139 : vector<1x32x32xf32> to vector<32x32xf32>
    %cst_91 = arith.constant dense<0.000000e+00> : vector<2x32xf32>
    %141 = tpu.matmul %132, %140, %cst_91 {dimension_numbers = #tpu.dot_dimension_numbers<[1], [0], [0], [1], [0, 0, 1, 1], [], []>} : vector<2x32xf32>, vector<32x32xf32>, vector<2x32xf32> -> vector<2x32xf32>
    %142 = vector.shape_cast %135 : vector<2x32xf32> to vector<2x1x32xf32>
    %143 = vector.shape_cast %138 : vector<2x32xf32> to vector<2x1x32xf32>
    %144 = vector.shape_cast %141 : vector<2x32xf32> to vector<2x1x32xf32>
    %145 = tpu.concatenate %142, %143, %144 in 1 : vector<2x1x32xf32>, vector<2x1x32xf32>, vector<2x1x32xf32> -> vector<2x3x32xf32>
    "tpu.trace_start"() <{level = 10 : i32, message = "bkh,blh->bkl"}> : () -> ()
    %cst_92 = arith.constant dense<0.000000e+00> : vector<2x3x8xf32>
    %146 = tpu.matmul %145, %1, %cst_92 {dimension_numbers = #tpu.dot_dimension_numbers<[2], [2], [1], [1], [0, 0, 0, 1, 1, 1], [0], [0]>} : vector<2x3x32xf32>, vector<2x8x32xf32>, vector<2x3x8xf32> -> vector<2x3x8xf32>
    "tpu.trace_stop"() : () -> ()
    %cst_93 = arith.constant dense<0xFF800000> : vector<2x3xf32>
    %147 = vector.multi_reduction <maximumf>, %146, %cst_93 [2] : vector<2x3x8xf32> to vector<2x3xf32>
    %148 = vector.shape_cast %147 : vector<2x3xf32> to vector<2x3x1xf32>
    %149 = vector.broadcast %148 : vector<2x3x1xf32> to vector<2x3x8xf32>
    %150 = arith.subf %146, %149 : vector<2x3x8xf32>
    %151 = math.exp %150 : vector<2x3x8xf32>
    %cst_94 = arith.constant dense<0.000000e+00> : vector<2x3xf32>
    %152 = vector.multi_reduction <add>, %151, %cst_94 [2] : vector<2x3x8xf32> to vector<2x3xf32>
    %153 = vector.shape_cast %152 : vector<2x3xf32> to vector<2x3x1xf32>
    %cst_95 = arith.constant 1.000000e-30 : f32
    %154 = vector.broadcast %cst_95 : f32 to vector<2x3x1xf32>
    %155 = arith.maximumf %153, %154 : vector<2x3x1xf32>
    %156 = tpu.reciprocal %155 {approx = true} : vector<2x3x1xf32> -> vector<2x3x1xf32>
    %157 = vector.broadcast %156 : vector<2x3x1xf32> to vector<2x3x8xf32>
    %158 = arith.mulf %151, %157 : vector<2x3x8xf32>
    "tpu.trace_start"() <{level = 10 : i32, message = "bkl,blh->bkh"}> : () -> ()
    %cst_96 = arith.constant dense<0.000000e+00> : vector<2x3x32xf32>
    %159 = tpu.matmul %158, %1, %cst_96 {dimension_numbers = #tpu.dot_dimension_numbers<[2], [1], [1], [2], [0, 0, 0, 1, 1, 2], [0], [0]>} : vector<2x3x8xf32>, vector<2x8x32xf32>, vector<2x3x32xf32> -> vector<2x3x32xf32>
    "tpu.trace_stop"() : () -> ()
    %160 = vector.extract_strided_slice %159 {offsets = [0, 0, 0], sizes = [2, 1, 32], strides = [1, 1, 1]} : vector<2x3x32xf32> to vector<2x1x32xf32>
    %161 = vector.shape_cast %160 : vector<2x1x32xf32> to vector<2x32xf32>
    %c0_97 = arith.constant 0 : index
    %c0_98 = arith.constant 0 : index
    %c0_99 = arith.constant 0 : index
    %162 = vector.load %arg17[%c0_97, %c0_98, %c0_99] : memref<3x32x32xf32, #tpu.memory_space<vmem>>, vector<1x32x32xf32>
    %163 = vector.shape_cast %162 : vector<1x32x32xf32> to vector<32x32xf32>
    %cst_100 = arith.constant dense<0.000000e+00> : vector<2x32xf32>
    %164 = tpu.matmul %161, %163, %cst_100 {dimension_numbers = #tpu.dot_dimension_numbers<[1], [0], [0], [1], [0, 0, 1, 1], [], []>} : vector<2x32xf32>, vector<32x32xf32>, vector<2x32xf32> -> vector<2x32xf32>
    %c0_101 = arith.constant 0 : index
    %c0_102 = arith.constant 0 : index
    %c0_103 = arith.constant 0 : index
    %165 = vector.load %arg18[%c0_101, %c0_102, %c0_103] : memref<3x32x32xf32, #tpu.memory_space<vmem>>, vector<1x32x32xf32>
    %166 = vector.shape_cast %165 : vector<1x32x32xf32> to vector<32x32xf32>
    %cst_104 = arith.constant dense<0.000000e+00> : vector<2x32xf32>
    %167 = tpu.matmul %116, %166, %cst_104 {dimension_numbers = #tpu.dot_dimension_numbers<[1], [0], [0], [1], [0, 0, 1, 1], [], []>} : vector<2x32xf32>, vector<32x32xf32>, vector<2x32xf32> -> vector<2x32xf32>
    %168 = arith.addf %164, %167 : vector<2x32xf32>
    %169 = math.tanh %168 : vector<2x32xf32>
    %170 = vector.extract_strided_slice %159 {offsets = [0, 1, 0], sizes = [2, 1, 32], strides = [1, 1, 1]} : vector<2x3x32xf32> to vector<2x1x32xf32>
    %171 = vector.shape_cast %170 : vector<2x1x32xf32> to vector<2x32xf32>
    %c1_105 = arith.constant 1 : index
    %c0_106 = arith.constant 0 : index
    %c0_107 = arith.constant 0 : index
    %172 = vector.load %arg17[%c1_105, %c0_106, %c0_107] : memref<3x32x32xf32, #tpu.memory_space<vmem>>, vector<1x32x32xf32>
    %173 = vector.shape_cast %172 : vector<1x32x32xf32> to vector<32x32xf32>
    %cst_108 = arith.constant dense<0.000000e+00> : vector<2x32xf32>
    %174 = tpu.matmul %171, %173, %cst_108 {dimension_numbers = #tpu.dot_dimension_numbers<[1], [0], [0], [1], [0, 0, 1, 1], [], []>} : vector<2x32xf32>, vector<32x32xf32>, vector<2x32xf32> -> vector<2x32xf32>
    %c1_109 = arith.constant 1 : index
    %c0_110 = arith.constant 0 : index
    %c0_111 = arith.constant 0 : index
    %175 = vector.load %arg18[%c1_109, %c0_110, %c0_111] : memref<3x32x32xf32, #tpu.memory_space<vmem>>, vector<1x32x32xf32>
    %176 = vector.shape_cast %175 : vector<1x32x32xf32> to vector<32x32xf32>
    %cst_112 = arith.constant dense<0.000000e+00> : vector<2x32xf32>
    %177 = tpu.matmul %124, %176, %cst_112 {dimension_numbers = #tpu.dot_dimension_numbers<[1], [0], [0], [1], [0, 0, 1, 1], [], []>} : vector<2x32xf32>, vector<32x32xf32>, vector<2x32xf32> -> vector<2x32xf32>
    %178 = arith.addf %174, %177 : vector<2x32xf32>
    %179 = math.tanh %178 : vector<2x32xf32>
    %180 = vector.extract_strided_slice %159 {offsets = [0, 2, 0], sizes = [2, 1, 32], strides = [1, 1, 1]} : vector<2x3x32xf32> to vector<2x1x32xf32>
    %181 = vector.shape_cast %180 : vector<2x1x32xf32> to vector<2x32xf32>
    %c2_113 = arith.constant 2 : index
    %c0_114 = arith.constant 0 : index
    %c0_115 = arith.constant 0 : index
    %182 = vector.load %arg17[%c2_113, %c0_114, %c0_115] : memref<3x32x32xf32, #tpu.memory_space<vmem>>, vector<1x32x32xf32>
    %183 = vector.shape_cast %182 : vector<1x32x32xf32> to vector<32x32xf32>
    %cst_116 = arith.constant dense<0.000000e+00> : vector<2x32xf32>
    %184 = tpu.matmul %181, %183, %cst_116 {dimension_numbers = #tpu.dot_dimension_numbers<[1], [0], [0], [1], [0, 0, 1, 1], [], []>} : vector<2x32xf32>, vector<32x32xf32>, vector<2x32xf32> -> vector<2x32xf32>
    %c2_117 = arith.constant 2 : index
    %c0_118 = arith.constant 0 : index
    %c0_119 = arith.constant 0 : index
    %185 = vector.load %arg18[%c2_117, %c0_118, %c0_119] : memref<3x32x32xf32, #tpu.memory_space<vmem>>, vector<1x32x32xf32>
    %186 = vector.shape_cast %185 : vector<1x32x32xf32> to vector<32x32xf32>
    %cst_120 = arith.constant dense<0.000000e+00> : vector<2x32xf32>
    %187 = tpu.matmul %132, %186, %cst_120 {dimension_numbers = #tpu.dot_dimension_numbers<[1], [0], [0], [1], [0, 0, 1, 1], [], []>} : vector<2x32xf32>, vector<32x32xf32>, vector<2x32xf32> -> vector<2x32xf32>
    %188 = arith.addf %184, %187 : vector<2x32xf32>
    %189 = math.tanh %188 : vector<2x32xf32>
    %190 = vector.shape_cast %169 : vector<2x32xf32> to vector<2x1x32xf32>
    %191 = vector.shape_cast %179 : vector<2x32xf32> to vector<2x1x32xf32>
    %192 = vector.shape_cast %189 : vector<2x32xf32> to vector<2x1x32xf32>
    %193 = tpu.concatenate %190, %191, %192 in 1 : vector<2x1x32xf32>, vector<2x1x32xf32>, vector<2x1x32xf32> -> vector<2x3x32xf32>
    %c0_121 = arith.constant 0 : index
    %c0_122 = arith.constant 0 : index
    %c0_123 = arith.constant 0 : index
    %194 = vector.load %arg24[%c0_121, %c0_122, %c0_123] : memref<2x3x32xf32, #tpu.memory_space<vmem>>, vector<2x3x32xf32>
    tpu.vector_store %arg24[%c0_121, %c0_122, %c0_123], %193 {strides = array<i32>} : memref<2x3x32xf32, #tpu.memory_space<vmem>>, vector<2x3x32xf32>,
    %c0_124 = arith.constant 0 : index
    %c0_125 = arith.constant 0 : index
    %195 = vector.load %arg19[%c0_124, %c0_125] : memref<32x300xf32, #tpu.memory_space<vmem>>, vector<32x300xf32>
    %cst_126 = arith.constant dense<0.000000e+00> : vector<2x300xf32>
    %196 = tpu.matmul %106, %195, %cst_126 {dimension_numbers = #tpu.dot_dimension_numbers<[1], [0], [0], [1], [0, 0, 1, 1], [], []>} : vector<2x32xf32>, vector<32x300xf32>, vector<2x300xf32> -> vector<2x300xf32>
    %c0_127 = arith.constant 0 : index
    %c0_128 = arith.constant 0 : index
    %197 = vector.load %arg25[%c0_127, %c0_128] : memref<2x300xf32, #tpu.memory_space<vmem>>, vector<2x300xf32>
    tpu.vector_store %arg25[%c0_127, %c0_128], %196 {strides = array<i32>} : memref<2x300xf32, #tpu.memory_space<vmem>>, vector<2x300xf32>,
    return
  }
}

module attributes {stable_mosaic.version = 11 : i64} {
  func.func @_candidate_kernel(%arg0: memref<8x56xf32, #tpu.memory_space<vmem>>, %arg1: memref<8x8xf32, #tpu.memory_space<vmem>>, %arg2: memref<8x5x300xf32, #tpu.memory_space<vmem>>, %arg3: memref<2x32xf32, #tpu.memory_space<vmem>>, %arg4: memref<2x3x32xf32, #tpu.memory_space<vmem>>, %arg5: memref<2x3x32xf32, #tpu.memory_space<vmem>>, %arg6: memref<2x300xf32, #tpu.memory_space<vmem>>, %arg7: memref<8x32xf32, #tpu.memory_space<vmem>>, %arg8: memref<56x32xf32, #tpu.memory_space<vmem>>, %arg9: memref<300x32xf32, #tpu.memory_space<vmem>>, %arg10: memref<32x32xf32, #tpu.memory_space<vmem>>, %arg11: memref<32x32xf32, #tpu.memory_space<vmem>>, %arg12: memref<3x32x32xf32, #tpu.memory_space<vmem>>, %arg13: memref<3x1x32xf32, #tpu.memory_space<vmem>>, %arg14: memref<3x32x32xf32, #tpu.memory_space<vmem>>, %arg15: memref<3x32x32xf32, #tpu.memory_space<vmem>>, %arg16: memref<3x1x32xf32, #tpu.memory_space<vmem>>, %arg17: memref<3x32x32xf32, #tpu.memory_space<vmem>>, %arg18: memref<3x32x32xf32, #tpu.memory_space<vmem>>, %arg19: memref<3x1x32xf32, #tpu.memory_space<vmem>>, %arg20: memref<8x1xf32, #tpu.memory_space<vmem>>, %arg21: memref<8x32xf32, #tpu.memory_space<vmem>>) attributes {dimension_semantics = [], scalar_prefetch = 0 : i64, scratch_operands = 0 : i64, tpu.core_type = #tpu.core_type<tc>} {
    %c0 = arith.constant 0 : index
    %c0_0 = arith.constant 0 : index
    %c0_1 = arith.constant 0 : index
    %0 = vector.load %arg4[%c0, %c0_0, %c0_1] : memref<2x3x32xf32, #tpu.memory_space<vmem>>, vector<2x3x32xf32>
    %c0_2 = arith.constant 0 : index
    %c0_3 = arith.constant 0 : index
    %c0_4 = arith.constant 0 : index
    %1 = vector.load %arg5[%c0_2, %c0_3, %c0_4] : memref<2x3x32xf32, #tpu.memory_space<vmem>>, vector<2x3x32xf32>
    %2 = vector.extract_strided_slice %0 {offsets = [0, 0, 0], sizes = [2, 1, 32], strides = [1, 1, 1]} : vector<2x3x32xf32> to vector<2x1x32xf32>
    %3 = vector.shape_cast %2 : vector<2x1x32xf32> to vector<2x32xf32>
    %4 = vector.shape_cast %3 : vector<2x32xf32> to vector<2x1x32xf32>
    %5 = vector.shape_cast %4 : vector<2x1x32xf32> to vector<2x1x32xf32>
    %6 = vector.broadcast %5 : vector<2x1x32xf32> to vector<2x4x32xf32>
    %7 = vector.shape_cast %6 : vector<2x4x32xf32> to vector<8x32xf32>
    %8 = vector.extract_strided_slice %0 {offsets = [0, 1, 0], sizes = [2, 1, 32], strides = [1, 1, 1]} : vector<2x3x32xf32> to vector<2x1x32xf32>
    %9 = vector.shape_cast %8 : vector<2x1x32xf32> to vector<2x32xf32>
    %10 = vector.shape_cast %9 : vector<2x32xf32> to vector<2x1x32xf32>
    %11 = vector.shape_cast %10 : vector<2x1x32xf32> to vector<2x1x32xf32>
    %12 = vector.broadcast %11 : vector<2x1x32xf32> to vector<2x4x32xf32>
    %13 = vector.shape_cast %12 : vector<2x4x32xf32> to vector<8x32xf32>
    %14 = vector.extract_strided_slice %0 {offsets = [0, 2, 0], sizes = [2, 1, 32], strides = [1, 1, 1]} : vector<2x3x32xf32> to vector<2x1x32xf32>
    %15 = vector.shape_cast %14 : vector<2x1x32xf32> to vector<2x32xf32>
    %16 = vector.shape_cast %15 : vector<2x32xf32> to vector<2x1x32xf32>
    %17 = vector.shape_cast %16 : vector<2x1x32xf32> to vector<2x1x32xf32>
    %18 = vector.broadcast %17 : vector<2x1x32xf32> to vector<2x4x32xf32>
    %19 = vector.shape_cast %18 : vector<2x4x32xf32> to vector<8x32xf32>
    %20 = vector.extract_strided_slice %1 {offsets = [0, 0, 0], sizes = [2, 1, 32], strides = [1, 1, 1]} : vector<2x3x32xf32> to vector<2x1x32xf32>
    %21 = vector.shape_cast %20 : vector<2x1x32xf32> to vector<2x32xf32>
    %22 = vector.shape_cast %21 : vector<2x32xf32> to vector<2x1x32xf32>
    %23 = vector.shape_cast %22 : vector<2x1x32xf32> to vector<2x1x32xf32>
    %24 = vector.broadcast %23 : vector<2x1x32xf32> to vector<2x4x32xf32>
    %25 = vector.shape_cast %24 : vector<2x4x32xf32> to vector<8x32xf32>
    %26 = vector.extract_strided_slice %1 {offsets = [0, 1, 0], sizes = [2, 1, 32], strides = [1, 1, 1]} : vector<2x3x32xf32> to vector<2x1x32xf32>
    %27 = vector.shape_cast %26 : vector<2x1x32xf32> to vector<2x32xf32>
    %28 = vector.shape_cast %27 : vector<2x32xf32> to vector<2x1x32xf32>
    %29 = vector.shape_cast %28 : vector<2x1x32xf32> to vector<2x1x32xf32>
    %30 = vector.broadcast %29 : vector<2x1x32xf32> to vector<2x4x32xf32>
    %31 = vector.shape_cast %30 : vector<2x4x32xf32> to vector<8x32xf32>
    %32 = vector.extract_strided_slice %1 {offsets = [0, 2, 0], sizes = [2, 1, 32], strides = [1, 1, 1]} : vector<2x3x32xf32> to vector<2x1x32xf32>
    %33 = vector.shape_cast %32 : vector<2x1x32xf32> to vector<2x32xf32>
    %34 = vector.shape_cast %33 : vector<2x32xf32> to vector<2x1x32xf32>
    %35 = vector.shape_cast %34 : vector<2x1x32xf32> to vector<2x1x32xf32>
    %36 = vector.broadcast %35 : vector<2x1x32xf32> to vector<2x4x32xf32>
    %37 = vector.shape_cast %36 : vector<2x4x32xf32> to vector<8x32xf32>
    %c0_5 = arith.constant 0 : index
    %c0_6 = arith.constant 0 : index
    %38 = vector.load %arg3[%c0_5, %c0_6] : memref<2x32xf32, #tpu.memory_space<vmem>>, vector<2x32xf32>
    %39 = vector.shape_cast %38 : vector<2x32xf32> to vector<2x1x32xf32>
    %40 = vector.shape_cast %39 : vector<2x1x32xf32> to vector<2x1x32xf32>
    %41 = vector.broadcast %40 : vector<2x1x32xf32> to vector<2x4x32xf32>
    %42 = vector.shape_cast %41 : vector<2x4x32xf32> to vector<8x32xf32>
    %c0_7 = arith.constant 0 : index
    %c0_8 = arith.constant 0 : index
    %43 = vector.load %arg6[%c0_7, %c0_8] : memref<2x300xf32, #tpu.memory_space<vmem>>, vector<2x300xf32>
    %44 = vector.shape_cast %43 : vector<2x300xf32> to vector<2x1x300xf32>
    %45 = vector.shape_cast %44 : vector<2x1x300xf32> to vector<2x1x300xf32>
    %46 = vector.broadcast %45 : vector<2x1x300xf32> to vector<2x4x300xf32>
    %47 = vector.shape_cast %46 : vector<2x4x300xf32> to vector<8x300xf32>
    %c0_9 = arith.constant 0 : index
    %c0_10 = arith.constant 0 : index
    %c0_11 = arith.constant 0 : index
    %48 = vector.load %arg2[%c0_9, %c0_10, %c0_11] : memref<8x5x300xf32, #tpu.memory_space<vmem>>, vector<8x5x300xf32>
    %49 = vector.shape_cast %47 : vector<8x300xf32> to vector<8x1x300xf32>
    %50 = vector.broadcast %49 : vector<8x1x300xf32> to vector<8x5x300xf32>
    %51 = arith.mulf %48, %50 : vector<8x5x300xf32>
    %cst = arith.constant dense<0.000000e+00> : vector<8x5xf32>
    %52 = vector.multi_reduction <add>, %51, %cst [2] : vector<8x5x300xf32> to vector<8x5xf32>
    %cst_12 = arith.constant dense<0xFF800000> : vector<8xf32>
    %53 = vector.multi_reduction <maximumf>, %52, %cst_12 [1] : vector<8x5xf32> to vector<8xf32>
    %54 = vector.shape_cast %53 : vector<8xf32> to vector<8x1xf32>
    %55 = vector.broadcast %54 : vector<8x1xf32> to vector<8x5xf32>
    %56 = arith.subf %52, %55 : vector<8x5xf32>
    %57 = math.exp %56 : vector<8x5xf32>
    %cst_13 = arith.constant dense<0.000000e+00> : vector<8xf32>
    %58 = vector.multi_reduction <add>, %57, %cst_13 [1] : vector<8x5xf32> to vector<8xf32>
    %59 = vector.shape_cast %58 : vector<8xf32> to vector<8x1xf32>
    %cst_14 = arith.constant 1.000000e-30 : f32
    %60 = vector.broadcast %cst_14 : f32 to vector<8x1xf32>
    %61 = arith.maximumf %59, %60 : vector<8x1xf32>
    %62 = tpu.reciprocal %61 {approx = true} : vector<8x1xf32> -> vector<8x1xf32>
    %63 = vector.broadcast %62 : vector<8x1xf32> to vector<8x5xf32>
    %64 = arith.mulf %57, %63 : vector<8x5xf32>
    %65 = vector.shape_cast %64 : vector<8x5xf32> to vector<8x5x1xf32>
    %66 = vector.broadcast %65 : vector<8x5x1xf32> to vector<8x5x300xf32>
    %67 = arith.mulf %66, %48 : vector<8x5x300xf32>
    %cst_15 = arith.constant dense<0.000000e+00> : vector<8x300xf32>
    %68 = vector.multi_reduction <add>, %67, %cst_15 [1] : vector<8x5x300xf32> to vector<8x300xf32>
    %c0_16 = arith.constant 0 : index
    %c0_17 = arith.constant 0 : index
    %69 = vector.load %arg1[%c0_16, %c0_17] : memref<8x8xf32, #tpu.memory_space<vmem>>, vector<8x8xf32>
    %c0_18 = arith.constant 0 : index
    %c0_19 = arith.constant 0 : index
    %70 = vector.load %arg7[%c0_18, %c0_19] : memref<8x32xf32, #tpu.memory_space<vmem>>, vector<8x32xf32>
    %cst_20 = arith.constant dense<0.000000e+00> : vector<8x32xf32>
    %71 = tpu.matmul %69, %70, %cst_20 {dimension_numbers = #tpu.dot_dimension_numbers<[1], [0], [0], [1], [0, 0, 1, 1], [], []>} : vector<8x8xf32>, vector<8x32xf32>, vector<8x32xf32> -> vector<8x32xf32>
    %72 = math.tanh %71 : vector<8x32xf32>
    %c0_21 = arith.constant 0 : index
    %c0_22 = arith.constant 0 : index
    %73 = vector.load %arg0[%c0_21, %c0_22] : memref<8x56xf32, #tpu.memory_space<vmem>>, vector<8x56xf32>
    %c0_23 = arith.constant 0 : index
    %c0_24 = arith.constant 0 : index
    %74 = vector.load %arg8[%c0_23, %c0_24] : memref<56x32xf32, #tpu.memory_space<vmem>>, vector<56x32xf32>
    %cst_25 = arith.constant dense<0.000000e+00> : vector<8x32xf32>
    %75 = tpu.matmul %73, %74, %cst_25 {dimension_numbers = #tpu.dot_dimension_numbers<[1], [0], [0], [1], [0, 0, 1, 1], [], []>} : vector<8x56xf32>, vector<56x32xf32>, vector<8x32xf32> -> vector<8x32xf32>
    %76 = math.tanh %75 : vector<8x32xf32>
    %c0_26 = arith.constant 0 : index
    %c0_27 = arith.constant 0 : index
    %77 = vector.load %arg9[%c0_26, %c0_27] : memref<300x32xf32, #tpu.memory_space<vmem>>, vector<300x32xf32>
    %cst_28 = arith.constant dense<0.000000e+00> : vector<8x32xf32>
    %78 = tpu.matmul %68, %77, %cst_28 {dimension_numbers = #tpu.dot_dimension_numbers<[1], [0], [0], [1], [0, 0, 1, 1], [], []>} : vector<8x300xf32>, vector<300x32xf32>, vector<8x32xf32> -> vector<8x32xf32>
    %79 = math.tanh %78 : vector<8x32xf32>
    %c0_29 = arith.constant 0 : index
    %c0_30 = arith.constant 0 : index
    %80 = vector.load %arg10[%c0_29, %c0_30] : memref<32x32xf32, #tpu.memory_space<vmem>>, vector<32x32xf32>
    %cst_31 = arith.constant dense<0.000000e+00> : vector<8x32xf32>
    %81 = tpu.matmul %42, %80, %cst_31 {dimension_numbers = #tpu.dot_dimension_numbers<[1], [0], [0], [1], [0, 0, 1, 1], [], []>} : vector<8x32xf32>, vector<32x32xf32>, vector<8x32xf32> -> vector<8x32xf32>
    %c0_32 = arith.constant 0 : index
    %c0_33 = arith.constant 0 : index
    %82 = vector.load %arg11[%c0_32, %c0_33] : memref<32x32xf32, #tpu.memory_space<vmem>>, vector<32x32xf32>
    %cst_34 = arith.constant dense<0.000000e+00> : vector<8x32xf32>
    %83 = tpu.matmul %72, %82, %cst_34 {dimension_numbers = #tpu.dot_dimension_numbers<[1], [0], [0], [1], [0, 0, 1, 1], [], []>} : vector<8x32xf32>, vector<32x32xf32>, vector<8x32xf32> -> vector<8x32xf32>
    %84 = arith.addf %81, %83 : vector<8x32xf32>
    %85 = math.tanh %84 : vector<8x32xf32>
    %86 = arith.mulf %7, %76 : vector<8x32xf32>
    %c0_35 = arith.constant 0 : index
    %c0_36 = arith.constant 0 : index
    %c0_37 = arith.constant 0 : index
    %87 = vector.load %arg12[%c0_35, %c0_36, %c0_37] : memref<3x32x32xf32, #tpu.memory_space<vmem>>, vector<1x32x32xf32>
    %88 = vector.shape_cast %87 : vector<1x32x32xf32> to vector<32x32xf32>
    %cst_38 = arith.constant dense<0.000000e+00> : vector<8x32xf32>
    %89 = tpu.matmul %86, %88, %cst_38 {dimension_numbers = #tpu.dot_dimension_numbers<[1], [0], [0], [1], [0, 0, 1, 1], [], []>} : vector<8x32xf32>, vector<32x32xf32>, vector<8x32xf32> -> vector<8x32xf32>
    %c0_39 = arith.constant 0 : index
    %c0_40 = arith.constant 0 : index
    %c0_41 = arith.constant 0 : index
    %90 = vector.load %arg13[%c0_39, %c0_40, %c0_41] : memref<3x1x32xf32, #tpu.memory_space<vmem>>, vector<1x1x32xf32>
    %91 = vector.shape_cast %90 : vector<1x1x32xf32> to vector<1x32xf32>
    %92 = vector.broadcast %91 : vector<1x32xf32> to vector<8x32xf32>
    %93 = arith.addf %89, %92 : vector<8x32xf32>
    %94 = math.tanh %93 : vector<8x32xf32>
    %95 = arith.mulf %13, %79 : vector<8x32xf32>
    %c1 = arith.constant 1 : index
    %c0_42 = arith.constant 0 : index
    %c0_43 = arith.constant 0 : index
    %96 = vector.load %arg12[%c1, %c0_42, %c0_43] : memref<3x32x32xf32, #tpu.memory_space<vmem>>, vector<1x32x32xf32>
    %97 = vector.shape_cast %96 : vector<1x32x32xf32> to vector<32x32xf32>
    %cst_44 = arith.constant dense<0.000000e+00> : vector<8x32xf32>
    %98 = tpu.matmul %95, %97, %cst_44 {dimension_numbers = #tpu.dot_dimension_numbers<[1], [0], [0], [1], [0, 0, 1, 1], [], []>} : vector<8x32xf32>, vector<32x32xf32>, vector<8x32xf32> -> vector<8x32xf32>
    %c1_45 = arith.constant 1 : index
    %c0_46 = arith.constant 0 : index
    %c0_47 = arith.constant 0 : index
    %99 = vector.load %arg13[%c1_45, %c0_46, %c0_47] : memref<3x1x32xf32, #tpu.memory_space<vmem>>, vector<1x1x32xf32>
    %100 = vector.shape_cast %99 : vector<1x1x32xf32> to vector<1x32xf32>
    %101 = vector.broadcast %100 : vector<1x32xf32> to vector<8x32xf32>
    %102 = arith.addf %98, %101 : vector<8x32xf32>
    %103 = math.tanh %102 : vector<8x32xf32>
    %104 = arith.mulf %19, %85 : vector<8x32xf32>
    %c2 = arith.constant 2 : index
    %c0_48 = arith.constant 0 : index
    %c0_49 = arith.constant 0 : index
    %105 = vector.load %arg12[%c2, %c0_48, %c0_49] : memref<3x32x32xf32, #tpu.memory_space<vmem>>, vector<1x32x32xf32>
    %106 = vector.shape_cast %105 : vector<1x32x32xf32> to vector<32x32xf32>
    %cst_50 = arith.constant dense<0.000000e+00> : vector<8x32xf32>
    %107 = tpu.matmul %104, %106, %cst_50 {dimension_numbers = #tpu.dot_dimension_numbers<[1], [0], [0], [1], [0, 0, 1, 1], [], []>} : vector<8x32xf32>, vector<32x32xf32>, vector<8x32xf32> -> vector<8x32xf32>
    %c2_51 = arith.constant 2 : index
    %c0_52 = arith.constant 0 : index
    %c0_53 = arith.constant 0 : index
    %108 = vector.load %arg13[%c2_51, %c0_52, %c0_53] : memref<3x1x32xf32, #tpu.memory_space<vmem>>, vector<1x1x32xf32>
    %109 = vector.shape_cast %108 : vector<1x1x32xf32> to vector<1x32xf32>
    %110 = vector.broadcast %109 : vector<1x32xf32> to vector<8x32xf32>
    %111 = arith.addf %107, %110 : vector<8x32xf32>
    %112 = math.tanh %111 : vector<8x32xf32>
    %c0_54 = arith.constant 0 : index
    %c0_55 = arith.constant 0 : index
    %c0_56 = arith.constant 0 : index
    %113 = vector.load %arg14[%c0_54, %c0_55, %c0_56] : memref<3x32x32xf32, #tpu.memory_space<vmem>>, vector<1x32x32xf32>
    %114 = vector.shape_cast %113 : vector<1x32x32xf32> to vector<32x32xf32>
    %c0_57 = arith.constant 0 : index
    %c0_58 = arith.constant 0 : index
    %c0_59 = arith.constant 0 : index
    %115 = vector.load %arg15[%c0_57, %c0_58, %c0_59] : memref<3x32x32xf32, #tpu.memory_space<vmem>>, vector<1x32x32xf32>
    %116 = vector.shape_cast %115 : vector<1x32x32xf32> to vector<32x32xf32>
    %c0_60 = arith.constant 0 : index
    %c0_61 = arith.constant 0 : index
    %c0_62 = arith.constant 0 : index
    %117 = vector.load %arg16[%c0_60, %c0_61, %c0_62] : memref<3x1x32xf32, #tpu.memory_space<vmem>>, vector<1x1x32xf32>
    %118 = vector.shape_cast %117 : vector<1x1x32xf32> to vector<1x32xf32>
    %cst_63 = arith.constant dense<0.000000e+00> : vector<8x32xf32>
    %119 = tpu.matmul %112, %114, %cst_63 {dimension_numbers = #tpu.dot_dimension_numbers<[1], [0], [0], [1], [0, 0, 1, 1], [], []>} : vector<8x32xf32>, vector<32x32xf32>, vector<8x32xf32> -> vector<8x32xf32>
    %cst_64 = arith.constant dense<0.000000e+00> : vector<8x32xf32>
    %120 = tpu.matmul %94, %116, %cst_64 {dimension_numbers = #tpu.dot_dimension_numbers<[1], [0], [0], [1], [0, 0, 1, 1], [], []>} : vector<8x32xf32>, vector<32x32xf32>, vector<8x32xf32> -> vector<8x32xf32>
    %121 = arith.addf %119, %120 : vector<8x32xf32>
    %122 = vector.broadcast %118 : vector<1x32xf32> to vector<8x32xf32>
    %123 = arith.addf %121, %122 : vector<8x32xf32>
    %124 = math.tanh %123 : vector<8x32xf32>
    %c1_65 = arith.constant 1 : index
    %c0_66 = arith.constant 0 : index
    %c0_67 = arith.constant 0 : index
    %125 = vector.load %arg14[%c1_65, %c0_66, %c0_67] : memref<3x32x32xf32, #tpu.memory_space<vmem>>, vector<1x32x32xf32>
    %126 = vector.shape_cast %125 : vector<1x32x32xf32> to vector<32x32xf32>
    %c1_68 = arith.constant 1 : index
    %c0_69 = arith.constant 0 : index
    %c0_70 = arith.constant 0 : index
    %127 = vector.load %arg15[%c1_68, %c0_69, %c0_70] : memref<3x32x32xf32, #tpu.memory_space<vmem>>, vector<1x32x32xf32>
    %128 = vector.shape_cast %127 : vector<1x32x32xf32> to vector<32x32xf32>
    %c1_71 = arith.constant 1 : index
    %c0_72 = arith.constant 0 : index
    %c0_73 = arith.constant 0 : index
    %129 = vector.load %arg16[%c1_71, %c0_72, %c0_73] : memref<3x1x32xf32, #tpu.memory_space<vmem>>, vector<1x1x32xf32>
    %130 = vector.shape_cast %129 : vector<1x1x32xf32> to vector<1x32xf32>
    %cst_74 = arith.constant dense<0.000000e+00> : vector<8x32xf32>
    %131 = tpu.matmul %103, %126, %cst_74 {dimension_numbers = #tpu.dot_dimension_numbers<[1], [0], [0], [1], [0, 0, 1, 1], [], []>} : vector<8x32xf32>, vector<32x32xf32>, vector<8x32xf32> -> vector<8x32xf32>
    %cst_75 = arith.constant dense<0.000000e+00> : vector<8x32xf32>
    %132 = tpu.matmul %94, %128, %cst_75 {dimension_numbers = #tpu.dot_dimension_numbers<[1], [0], [0], [1], [0, 0, 1, 1], [], []>} : vector<8x32xf32>, vector<32x32xf32>, vector<8x32xf32> -> vector<8x32xf32>
    %133 = arith.addf %131, %132 : vector<8x32xf32>
    %134 = vector.broadcast %130 : vector<1x32xf32> to vector<8x32xf32>
    %135 = arith.addf %133, %134 : vector<8x32xf32>
    %136 = math.tanh %135 : vector<8x32xf32>
    %cst_76 = arith.constant dense<0.000000e+00> : vector<8xf32>
    %137 = vector.multi_reduction <add>, %136, %cst_76 [1] : vector<8x32xf32> to vector<8xf32>
    %138 = vector.shape_cast %137 : vector<8xf32> to vector<8x1xf32>
    %cst_77 = arith.constant 3.200000e+01 : f32
    %139 = vector.broadcast %cst_77 : f32 to vector<8x1xf32>
    %140 = arith.divf %138, %139 : vector<8x1xf32>
    %141 = vector.broadcast %140 : vector<8x1xf32> to vector<8x32xf32>
    %142 = arith.subf %136, %141 : vector<8x32xf32>
    %143 = arith.mulf %142, %142 : vector<8x32xf32>
    %cst_78 = arith.constant dense<0.000000e+00> : vector<8xf32>
    %144 = vector.multi_reduction <add>, %143, %cst_78 [1] : vector<8x32xf32> to vector<8xf32>
    %145 = vector.shape_cast %144 : vector<8xf32> to vector<8x1xf32>
    %cst_79 = arith.constant 3.200000e+01 : f32
    %146 = vector.broadcast %cst_79 : f32 to vector<8x1xf32>
    %147 = arith.divf %145, %146 : vector<8x1xf32>
    %148 = vector.broadcast %140 : vector<8x1xf32> to vector<8x32xf32>
    %149 = arith.subf %136, %148 : vector<8x32xf32>
    %cst_80 = arith.constant 9.99999996E-13 : f32
    %150 = vector.broadcast %cst_80 : f32 to vector<8x1xf32>
    %151 = arith.addf %147, %150 : vector<8x1xf32>
    %152 = math.rsqrt %151 : vector<8x1xf32>
    %153 = vector.broadcast %152 : vector<8x1xf32> to vector<8x32xf32>
    %154 = arith.mulf %149, %153 : vector<8x32xf32>
    %155 = arith.mulf %154, %31 : vector<8x32xf32>
    %cst_81 = arith.constant dense<0.000000e+00> : vector<8xf32>
    %156 = vector.multi_reduction <add>, %124, %cst_81 [1] : vector<8x32xf32> to vector<8xf32>
    %157 = vector.shape_cast %156 : vector<8xf32> to vector<8x1xf32>
    %cst_82 = arith.constant 3.200000e+01 : f32
    %158 = vector.broadcast %cst_82 : f32 to vector<8x1xf32>
    %159 = arith.divf %157, %158 : vector<8x1xf32>
    %160 = vector.broadcast %159 : vector<8x1xf32> to vector<8x32xf32>
    %161 = arith.subf %124, %160 : vector<8x32xf32>
    %162 = arith.mulf %161, %161 : vector<8x32xf32>
    %cst_83 = arith.constant dense<0.000000e+00> : vector<8xf32>
    %163 = vector.multi_reduction <add>, %162, %cst_83 [1] : vector<8x32xf32> to vector<8xf32>
    %164 = vector.shape_cast %163 : vector<8xf32> to vector<8x1xf32>
    %cst_84 = arith.constant 3.200000e+01 : f32
    %165 = vector.broadcast %cst_84 : f32 to vector<8x1xf32>
    %166 = arith.divf %164, %165 : vector<8x1xf32>
    %167 = vector.broadcast %159 : vector<8x1xf32> to vector<8x32xf32>
    %168 = arith.subf %124, %167 : vector<8x32xf32>
    %cst_85 = arith.constant 9.99999996E-13 : f32
    %169 = vector.broadcast %cst_85 : f32 to vector<8x1xf32>
    %170 = arith.addf %166, %169 : vector<8x1xf32>
    %171 = math.rsqrt %170 : vector<8x1xf32>
    %172 = vector.broadcast %171 : vector<8x1xf32> to vector<8x32xf32>
    %173 = arith.mulf %168, %172 : vector<8x32xf32>
    %174 = arith.mulf %173, %25 : vector<8x32xf32>
    %c0_86 = arith.constant 0 : index
    %c0_87 = arith.constant 0 : index
    %c0_88 = arith.constant 0 : index
    %175 = vector.load %arg17[%c0_86, %c0_87, %c0_88] : memref<3x32x32xf32, #tpu.memory_space<vmem>>, vector<1x32x32xf32>
    %176 = vector.shape_cast %175 : vector<1x32x32xf32> to vector<32x32xf32>
    %c0_89 = arith.constant 0 : index
    %c0_90 = arith.constant 0 : index
    %c0_91 = arith.constant 0 : index
    %177 = vector.load %arg18[%c0_89, %c0_90, %c0_91] : memref<3x32x32xf32, #tpu.memory_space<vmem>>, vector<1x32x32xf32>
    %178 = vector.shape_cast %177 : vector<1x32x32xf32> to vector<32x32xf32>
    %cst_92 = arith.constant dense<0.000000e+00> : vector<8x32xf32>
    %179 = tpu.matmul %155, %176, %cst_92 {dimension_numbers = #tpu.dot_dimension_numbers<[1], [0], [0], [1], [0, 0, 1, 1], [], []>} : vector<8x32xf32>, vector<32x32xf32>, vector<8x32xf32> -> vector<8x32xf32>
    %cst_93 = arith.constant dense<0.000000e+00> : vector<8x32xf32>
    %180 = tpu.matmul %174, %178, %cst_93 {dimension_numbers = #tpu.dot_dimension_numbers<[1], [0], [0], [1], [0, 0, 1, 1], [], []>} : vector<8x32xf32>, vector<32x32xf32>, vector<8x32xf32> -> vector<8x32xf32>
    %181 = arith.addf %179, %180 : vector<8x32xf32>
    %182 = math.tanh %181 : vector<8x32xf32>
    %183 = arith.addf %182, %94 : vector<8x32xf32>
    %c1_94 = arith.constant 1 : index
    %c0_95 = arith.constant 0 : index
    %c0_96 = arith.constant 0 : index
    %184 = vector.load %arg14[%c1_94, %c0_95, %c0_96] : memref<3x32x32xf32, #tpu.memory_space<vmem>>, vector<1x32x32xf32>
    %185 = vector.shape_cast %184 : vector<1x32x32xf32> to vector<32x32xf32>
    %c1_97 = arith.constant 1 : index
    %c0_98 = arith.constant 0 : index
    %c0_99 = arith.constant 0 : index
    %186 = vector.load %arg15[%c1_97, %c0_98, %c0_99] : memref<3x32x32xf32, #tpu.memory_space<vmem>>, vector<1x32x32xf32>
    %187 = vector.shape_cast %186 : vector<1x32x32xf32> to vector<32x32xf32>
    %c1_100 = arith.constant 1 : index
    %c0_101 = arith.constant 0 : index
    %c0_102 = arith.constant 0 : index
    %188 = vector.load %arg16[%c1_100, %c0_101, %c0_102] : memref<3x1x32xf32, #tpu.memory_space<vmem>>, vector<1x1x32xf32>
    %189 = vector.shape_cast %188 : vector<1x1x32xf32> to vector<1x32xf32>
    %cst_103 = arith.constant dense<0.000000e+00> : vector<8x32xf32>
    %190 = tpu.matmul %94, %185, %cst_103 {dimension_numbers = #tpu.dot_dimension_numbers<[1], [0], [0], [1], [0, 0, 1, 1], [], []>} : vector<8x32xf32>, vector<32x32xf32>, vector<8x32xf32> -> vector<8x32xf32>
    %cst_104 = arith.constant dense<0.000000e+00> : vector<8x32xf32>
    %191 = tpu.matmul %103, %187, %cst_104 {dimension_numbers = #tpu.dot_dimension_numbers<[1], [0], [0], [1], [0, 0, 1, 1], [], []>} : vector<8x32xf32>, vector<32x32xf32>, vector<8x32xf32> -> vector<8x32xf32>
    %192 = arith.addf %190, %191 : vector<8x32xf32>
    %193 = vector.broadcast %189 : vector<1x32xf32> to vector<8x32xf32>
    %194 = arith.addf %192, %193 : vector<8x32xf32>
    %195 = math.tanh %194 : vector<8x32xf32>
    %c2_105 = arith.constant 2 : index
    %c0_106 = arith.constant 0 : index
    %c0_107 = arith.constant 0 : index
    %196 = vector.load %arg14[%c2_105, %c0_106, %c0_107] : memref<3x32x32xf32, #tpu.memory_space<vmem>>, vector<1x32x32xf32>
    %197 = vector.shape_cast %196 : vector<1x32x32xf32> to vector<32x32xf32>
    %c2_108 = arith.constant 2 : index
    %c0_109 = arith.constant 0 : index
    %c0_110 = arith.constant 0 : index
    %198 = vector.load %arg15[%c2_108, %c0_109, %c0_110] : memref<3x32x32xf32, #tpu.memory_space<vmem>>, vector<1x32x32xf32>
    %199 = vector.shape_cast %198 : vector<1x32x32xf32> to vector<32x32xf32>
    %c2_111 = arith.constant 2 : index
    %c0_112 = arith.constant 0 : index
    %c0_113 = arith.constant 0 : index
    %200 = vector.load %arg16[%c2_111, %c0_112, %c0_113] : memref<3x1x32xf32, #tpu.memory_space<vmem>>, vector<1x1x32xf32>
    %201 = vector.shape_cast %200 : vector<1x1x32xf32> to vector<1x32xf32>
    %cst_114 = arith.constant dense<0.000000e+00> : vector<8x32xf32>
    %202 = tpu.matmul %112, %197, %cst_114 {dimension_numbers = #tpu.dot_dimension_numbers<[1], [0], [0], [1], [0, 0, 1, 1], [], []>} : vector<8x32xf32>, vector<32x32xf32>, vector<8x32xf32> -> vector<8x32xf32>
    %cst_115 = arith.constant dense<0.000000e+00> : vector<8x32xf32>
    %203 = tpu.matmul %103, %199, %cst_115 {dimension_numbers = #tpu.dot_dimension_numbers<[1], [0], [0], [1], [0, 0, 1, 1], [], []>} : vector<8x32xf32>, vector<32x32xf32>, vector<8x32xf32> -> vector<8x32xf32>
    %204 = arith.addf %202, %203 : vector<8x32xf32>
    %205 = vector.broadcast %201 : vector<1x32xf32> to vector<8x32xf32>
    %206 = arith.addf %204, %205 : vector<8x32xf32>
    %207 = math.tanh %206 : vector<8x32xf32>
    %cst_116 = arith.constant dense<0.000000e+00> : vector<8xf32>
    %208 = vector.multi_reduction <add>, %195, %cst_116 [1] : vector<8x32xf32> to vector<8xf32>
    %209 = vector.shape_cast %208 : vector<8xf32> to vector<8x1xf32>
    %cst_117 = arith.constant 3.200000e+01 : f32
    %210 = vector.broadcast %cst_117 : f32 to vector<8x1xf32>
    %211 = arith.divf %209, %210 : vector<8x1xf32>
    %212 = vector.broadcast %211 : vector<8x1xf32> to vector<8x32xf32>
    %213 = arith.subf %195, %212 : vector<8x32xf32>
    %214 = arith.mulf %213, %213 : vector<8x32xf32>
    %cst_118 = arith.constant dense<0.000000e+00> : vector<8xf32>
    %215 = vector.multi_reduction <add>, %214, %cst_118 [1] : vector<8x32xf32> to vector<8xf32>
    %216 = vector.shape_cast %215 : vector<8xf32> to vector<8x1xf32>
    %cst_119 = arith.constant 3.200000e+01 : f32
    %217 = vector.broadcast %cst_119 : f32 to vector<8x1xf32>
    %218 = arith.divf %216, %217 : vector<8x1xf32>
    %219 = vector.broadcast %211 : vector<8x1xf32> to vector<8x32xf32>
    %220 = arith.subf %195, %219 : vector<8x32xf32>
    %cst_120 = arith.constant 9.99999996E-13 : f32
    %221 = vector.broadcast %cst_120 : f32 to vector<8x1xf32>
    %222 = arith.addf %218, %221 : vector<8x1xf32>
    %223 = math.rsqrt %222 : vector<8x1xf32>
    %224 = vector.broadcast %223 : vector<8x1xf32> to vector<8x32xf32>
    %225 = arith.mulf %220, %224 : vector<8x32xf32>
    %226 = arith.mulf %225, %31 : vector<8x32xf32>
    %cst_121 = arith.constant dense<0.000000e+00> : vector<8xf32>
    %227 = vector.multi_reduction <add>, %207, %cst_121 [1] : vector<8x32xf32> to vector<8xf32>
    %228 = vector.shape_cast %227 : vector<8xf32> to vector<8x1xf32>
    %cst_122 = arith.constant 3.200000e+01 : f32
    %229 = vector.broadcast %cst_122 : f32 to vector<8x1xf32>
    %230 = arith.divf %228, %229 : vector<8x1xf32>
    %231 = vector.broadcast %230 : vector<8x1xf32> to vector<8x32xf32>
    %232 = arith.subf %207, %231 : vector<8x32xf32>
    %233 = arith.mulf %232, %232 : vector<8x32xf32>
    %cst_123 = arith.constant dense<0.000000e+00> : vector<8xf32>
    %234 = vector.multi_reduction <add>, %233, %cst_123 [1] : vector<8x32xf32> to vector<8xf32>
    %235 = vector.shape_cast %234 : vector<8xf32> to vector<8x1xf32>
    %cst_124 = arith.constant 3.200000e+01 : f32
    %236 = vector.broadcast %cst_124 : f32 to vector<8x1xf32>
    %237 = arith.divf %235, %236 : vector<8x1xf32>
    %238 = vector.broadcast %230 : vector<8x1xf32> to vector<8x32xf32>
    %239 = arith.subf %207, %238 : vector<8x32xf32>
    %cst_125 = arith.constant 9.99999996E-13 : f32
    %240 = vector.broadcast %cst_125 : f32 to vector<8x1xf32>
    %241 = arith.addf %237, %240 : vector<8x1xf32>
    %242 = math.rsqrt %241 : vector<8x1xf32>
    %243 = vector.broadcast %242 : vector<8x1xf32> to vector<8x32xf32>
    %244 = arith.mulf %239, %243 : vector<8x32xf32>
    %245 = arith.mulf %244, %37 : vector<8x32xf32>
    %c1_126 = arith.constant 1 : index
    %c0_127 = arith.constant 0 : index
    %c0_128 = arith.constant 0 : index
    %246 = vector.load %arg17[%c1_126, %c0_127, %c0_128] : memref<3x32x32xf32, #tpu.memory_space<vmem>>, vector<1x32x32xf32>
    %247 = vector.shape_cast %246 : vector<1x32x32xf32> to vector<32x32xf32>
    %c1_129 = arith.constant 1 : index
    %c0_130 = arith.constant 0 : index
    %c0_131 = arith.constant 0 : index
    %248 = vector.load %arg18[%c1_129, %c0_130, %c0_131] : memref<3x32x32xf32, #tpu.memory_space<vmem>>, vector<1x32x32xf32>
    %249 = vector.shape_cast %248 : vector<1x32x32xf32> to vector<32x32xf32>
    %cst_132 = arith.constant dense<0.000000e+00> : vector<8x32xf32>
    %250 = tpu.matmul %226, %247, %cst_132 {dimension_numbers = #tpu.dot_dimension_numbers<[1], [0], [0], [1], [0, 0, 1, 1], [], []>} : vector<8x32xf32>, vector<32x32xf32>, vector<8x32xf32> -> vector<8x32xf32>
    %cst_133 = arith.constant dense<0.000000e+00> : vector<8x32xf32>
    %251 = tpu.matmul %245, %249, %cst_133 {dimension_numbers = #tpu.dot_dimension_numbers<[1], [0], [0], [1], [0, 0, 1, 1], [], []>} : vector<8x32xf32>, vector<32x32xf32>, vector<8x32xf32> -> vector<8x32xf32>
    %252 = arith.addf %250, %251 : vector<8x32xf32>
    %253 = math.tanh %252 : vector<8x32xf32>
    %254 = arith.addf %253, %103 : vector<8x32xf32>
    %c2_134 = arith.constant 2 : index
    %c0_135 = arith.constant 0 : index
    %c0_136 = arith.constant 0 : index
    %255 = vector.load %arg14[%c2_134, %c0_135, %c0_136] : memref<3x32x32xf32, #tpu.memory_space<vmem>>, vector<1x32x32xf32>
    %256 = vector.shape_cast %255 : vector<1x32x32xf32> to vector<32x32xf32>
    %c2_137 = arith.constant 2 : index
    %c0_138 = arith.constant 0 : index
    %c0_139 = arith.constant 0 : index
    %257 = vector.load %arg15[%c2_137, %c0_138, %c0_139] : memref<3x32x32xf32, #tpu.memory_space<vmem>>, vector<1x32x32xf32>
    %258 = vector.shape_cast %257 : vector<1x32x32xf32> to vector<32x32xf32>
    %c2_140 = arith.constant 2 : index
    %c0_141 = arith.constant 0 : index
    %c0_142 = arith.constant 0 : index
    %259 = vector.load %arg16[%c2_140, %c0_141, %c0_142] : memref<3x1x32xf32, #tpu.memory_space<vmem>>, vector<1x1x32xf32>
    %260 = vector.shape_cast %259 : vector<1x1x32xf32> to vector<1x32xf32>
    %cst_143 = arith.constant dense<0.000000e+00> : vector<8x32xf32>
    %261 = tpu.matmul %103, %256, %cst_143 {dimension_numbers = #tpu.dot_dimension_numbers<[1], [0], [0], [1], [0, 0, 1, 1], [], []>} : vector<8x32xf32>, vector<32x32xf32>, vector<8x32xf32> -> vector<8x32xf32>
    %cst_144 = arith.constant dense<0.000000e+00> : vector<8x32xf32>
    %262 = tpu.matmul %112, %258, %cst_144 {dimension_numbers = #tpu.dot_dimension_numbers<[1], [0], [0], [1], [0, 0, 1, 1], [], []>} : vector<8x32xf32>, vector<32x32xf32>, vector<8x32xf32> -> vector<8x32xf32>
    %263 = arith.addf %261, %262 : vector<8x32xf32>
    %264 = vector.broadcast %260 : vector<1x32xf32> to vector<8x32xf32>
    %265 = arith.addf %263, %264 : vector<8x32xf32>
    %266 = math.tanh %265 : vector<8x32xf32>
    %c0_145 = arith.constant 0 : index
    %c0_146 = arith.constant 0 : index
    %c0_147 = arith.constant 0 : index
    %267 = vector.load %arg14[%c0_145, %c0_146, %c0_147] : memref<3x32x32xf32, #tpu.memory_space<vmem>>, vector<1x32x32xf32>
    %268 = vector.shape_cast %267 : vector<1x32x32xf32> to vector<32x32xf32>
    %c0_148 = arith.constant 0 : index
    %c0_149 = arith.constant 0 : index
    %c0_150 = arith.constant 0 : index
    %269 = vector.load %arg15[%c0_148, %c0_149, %c0_150] : memref<3x32x32xf32, #tpu.memory_space<vmem>>, vector<1x32x32xf32>
    %270 = vector.shape_cast %269 : vector<1x32x32xf32> to vector<32x32xf32>
    %c0_151 = arith.constant 0 : index
    %c0_152 = arith.constant 0 : index
    %c0_153 = arith.constant 0 : index
    %271 = vector.load %arg16[%c0_151, %c0_152, %c0_153] : memref<3x1x32xf32, #tpu.memory_space<vmem>>, vector<1x1x32xf32>
    %272 = vector.shape_cast %271 : vector<1x1x32xf32> to vector<1x32xf32>
    %cst_154 = arith.constant dense<0.000000e+00> : vector<8x32xf32>
    %273 = tpu.matmul %94, %268, %cst_154 {dimension_numbers = #tpu.dot_dimension_numbers<[1], [0], [0], [1], [0, 0, 1, 1], [], []>} : vector<8x32xf32>, vector<32x32xf32>, vector<8x32xf32> -> vector<8x32xf32>
    %cst_155 = arith.constant dense<0.000000e+00> : vector<8x32xf32>
    %274 = tpu.matmul %112, %270, %cst_155 {dimension_numbers = #tpu.dot_dimension_numbers<[1], [0], [0], [1], [0, 0, 1, 1], [], []>} : vector<8x32xf32>, vector<32x32xf32>, vector<8x32xf32> -> vector<8x32xf32>
    %275 = arith.addf %273, %274 : vector<8x32xf32>
    %276 = vector.broadcast %272 : vector<1x32xf32> to vector<8x32xf32>
    %277 = arith.addf %275, %276 : vector<8x32xf32>
    %278 = math.tanh %277 : vector<8x32xf32>
    %cst_156 = arith.constant dense<0.000000e+00> : vector<8xf32>
    %279 = vector.multi_reduction <add>, %266, %cst_156 [1] : vector<8x32xf32> to vector<8xf32>
    %280 = vector.shape_cast %279 : vector<8xf32> to vector<8x1xf32>
    %cst_157 = arith.constant 3.200000e+01 : f32
    %281 = vector.broadcast %cst_157 : f32 to vector<8x1xf32>
    %282 = arith.divf %280, %281 : vector<8x1xf32>
    %283 = vector.broadcast %282 : vector<8x1xf32> to vector<8x32xf32>
    %284 = arith.subf %266, %283 : vector<8x32xf32>
    %285 = arith.mulf %284, %284 : vector<8x32xf32>
    %cst_158 = arith.constant dense<0.000000e+00> : vector<8xf32>
    %286 = vector.multi_reduction <add>, %285, %cst_158 [1] : vector<8x32xf32> to vector<8xf32>
    %287 = vector.shape_cast %286 : vector<8xf32> to vector<8x1xf32>
    %cst_159 = arith.constant 3.200000e+01 : f32
    %288 = vector.broadcast %cst_159 : f32 to vector<8x1xf32>
    %289 = arith.divf %287, %288 : vector<8x1xf32>
    %290 = vector.broadcast %282 : vector<8x1xf32> to vector<8x32xf32>
    %291 = arith.subf %266, %290 : vector<8x32xf32>
    %cst_160 = arith.constant 9.99999996E-13 : f32
    %292 = vector.broadcast %cst_160 : f32 to vector<8x1xf32>
    %293 = arith.addf %289, %292 : vector<8x1xf32>
    %294 = math.rsqrt %293 : vector<8x1xf32>
    %295 = vector.broadcast %294 : vector<8x1xf32> to vector<8x32xf32>
    %296 = arith.mulf %291, %295 : vector<8x32xf32>
    %297 = arith.mulf %296, %37 : vector<8x32xf32>
    %cst_161 = arith.constant dense<0.000000e+00> : vector<8xf32>
    %298 = vector.multi_reduction <add>, %278, %cst_161 [1] : vector<8x32xf32> to vector<8xf32>
    %299 = vector.shape_cast %298 : vector<8xf32> to vector<8x1xf32>
    %cst_162 = arith.constant 3.200000e+01 : f32
    %300 = vector.broadcast %cst_162 : f32 to vector<8x1xf32>
    %301 = arith.divf %299, %300 : vector<8x1xf32>
    %302 = vector.broadcast %301 : vector<8x1xf32> to vector<8x32xf32>
    %303 = arith.subf %278, %302 : vector<8x32xf32>
    %304 = arith.mulf %303, %303 : vector<8x32xf32>
    %cst_163 = arith.constant dense<0.000000e+00> : vector<8xf32>
    %305 = vector.multi_reduction <add>, %304, %cst_163 [1] : vector<8x32xf32> to vector<8xf32>
    %306 = vector.shape_cast %305 : vector<8xf32> to vector<8x1xf32>
    %cst_164 = arith.constant 3.200000e+01 : f32
    %307 = vector.broadcast %cst_164 : f32 to vector<8x1xf32>
    %308 = arith.divf %306, %307 : vector<8x1xf32>
    %309 = vector.broadcast %301 : vector<8x1xf32> to vector<8x32xf32>
    %310 = arith.subf %278, %309 : vector<8x32xf32>
    %cst_165 = arith.constant 9.99999996E-13 : f32
    %311 = vector.broadcast %cst_165 : f32 to vector<8x1xf32>
    %312 = arith.addf %308, %311 : vector<8x1xf32>
    %313 = math.rsqrt %312 : vector<8x1xf32>
    %314 = vector.broadcast %313 : vector<8x1xf32> to vector<8x32xf32>
    %315 = arith.mulf %310, %314 : vector<8x32xf32>
    %316 = arith.mulf %315, %25 : vector<8x32xf32>
    %c2_166 = arith.constant 2 : index
    %c0_167 = arith.constant 0 : index
    %c0_168 = arith.constant 0 : index
    %317 = vector.load %arg17[%c2_166, %c0_167, %c0_168] : memref<3x32x32xf32, #tpu.memory_space<vmem>>, vector<1x32x32xf32>
    %318 = vector.shape_cast %317 : vector<1x32x32xf32> to vector<32x32xf32>
    %c2_169 = arith.constant 2 : index
    %c0_170 = arith.constant 0 : index
    %c0_171 = arith.constant 0 : index
    %319 = vector.load %arg18[%c2_169, %c0_170, %c0_171] : memref<3x32x32xf32, #tpu.memory_space<vmem>>, vector<1x32x32xf32>
    %320 = vector.shape_cast %319 : vector<1x32x32xf32> to vector<32x32xf32>
    %cst_172 = arith.constant dense<0.000000e+00> : vector<8x32xf32>
    %321 = tpu.matmul %297, %318, %cst_172 {dimension_numbers = #tpu.dot_dimension_numbers<[1], [0], [0], [1], [0, 0, 1, 1], [], []>} : vector<8x32xf32>, vector<32x32xf32>, vector<8x32xf32> -> vector<8x32xf32>
    %cst_173 = arith.constant dense<0.000000e+00> : vector<8x32xf32>
    %322 = tpu.matmul %316, %320, %cst_173 {dimension_numbers = #tpu.dot_dimension_numbers<[1], [0], [0], [1], [0, 0, 1, 1], [], []>} : vector<8x32xf32>, vector<32x32xf32>, vector<8x32xf32> -> vector<8x32xf32>
    %323 = arith.addf %321, %322 : vector<8x32xf32>
    %324 = math.tanh %323 : vector<8x32xf32>
    %325 = arith.addf %324, %112 : vector<8x32xf32>
    %c0_174 = arith.constant 0 : index
    %c0_175 = arith.constant 0 : index
    %c0_176 = arith.constant 0 : index
    %326 = vector.load %arg19[%c0_174, %c0_175, %c0_176] : memref<3x1x32xf32, #tpu.memory_space<vmem>>, vector<1x1x32xf32>
    %327 = vector.shape_cast %326 : vector<1x1x32xf32> to vector<1x32xf32>
    %328 = vector.broadcast %327 : vector<1x32xf32> to vector<8x32xf32>
    %329 = arith.mulf %183, %328 : vector<8x32xf32>
    %c1_177 = arith.constant 1 : index
    %c0_178 = arith.constant 0 : index
    %c0_179 = arith.constant 0 : index
    %330 = vector.load %arg19[%c1_177, %c0_178, %c0_179] : memref<3x1x32xf32, #tpu.memory_space<vmem>>, vector<1x1x32xf32>
    %331 = vector.shape_cast %330 : vector<1x1x32xf32> to vector<1x32xf32>
    %332 = vector.broadcast %331 : vector<1x32xf32> to vector<8x32xf32>
    %333 = arith.mulf %254, %332 : vector<8x32xf32>
    %334 = arith.addf %329, %333 : vector<8x32xf32>
    %c2_180 = arith.constant 2 : index
    %c0_181 = arith.constant 0 : index
    %c0_182 = arith.constant 0 : index
    %335 = vector.load %arg19[%c2_180, %c0_181, %c0_182] : memref<3x1x32xf32, #tpu.memory_space<vmem>>, vector<1x1x32xf32>
    %336 = vector.shape_cast %335 : vector<1x1x32xf32> to vector<1x32xf32>
    %337 = vector.broadcast %336 : vector<1x32xf32> to vector<8x32xf32>
    %338 = arith.mulf %325, %337 : vector<8x32xf32>
    %339 = arith.addf %334, %338 : vector<8x32xf32>
    %cst_183 = arith.constant dense<0.000000e+00> : vector<8xf32>
    %340 = vector.multi_reduction <add>, %339, %cst_183 [1] : vector<8x32xf32> to vector<8xf32>
    %341 = vector.shape_cast %340 : vector<8xf32> to vector<8x1xf32>
    %c0_184 = arith.constant 0 : index
    %c0_185 = arith.constant 0 : index
    %342 = vector.load %arg20[%c0_184, %c0_185] : memref<8x1xf32, #tpu.memory_space<vmem>>, vector<8x1xf32>
    tpu.vector_store %arg20[%c0_184, %c0_185], %341 {strides = array<i32>} : memref<8x1xf32, #tpu.memory_space<vmem>>, vector<8x1xf32>,
    %c0_186 = arith.constant 0 : index
    %c0_187 = arith.constant 0 : index
    %343 = vector.load %arg21[%c0_186, %c0_187] : memref<8x32xf32, #tpu.memory_space<vmem>>, vector<8x32xf32>
    tpu.vector_store %arg21[%c0_186, %c0_187], %325 {strides = array<i32>} : memref<8x32xf32, #tpu.memory_space<vmem>>, vector<8x32xf32>,
    return
  }
}

</mosaic_0001>

<llo_original>
// kernel: forward.2
$region0: #{forward.2}
  #allocation0 [shape = 'u32[]', space=smem, size = 0x4, offset = 0x4, fixed_abs, tag = 'smem constant byte address 0x4 - core index']
  #allocation1 [shape = 'u32[144,128]{1,0:T(1,128)}', space=vmem, size = 0x12000, scoped, tag = 'internal scratch']
  %s0 = inlined_call_operand.vmem [shape: f32[2,8], index: 0, kind: input, shape index: {}]
  %s1 = inlined_call_operand.vmem [shape: f32[2,6,64], index: 1, kind: input, shape index: {}]
  %s2 = inlined_call_operand.vmem [shape: f32[2,32], index: 2, kind: input, shape index: {}]
  %s3 = inlined_call_operand.vmem [shape: f32[2,32], index: 3, kind: input, shape index: {}]
  %s4 = inlined_call_operand.vmem [shape: f32[2,8,32], index: 4, kind: input, shape index: {}]
  %s5 = inlined_call_operand.vmem [shape: f32[2,8], index: 5, kind: input, shape index: {}]
  %s6 = inlined_call_operand.vmem [shape: f32[8,16], index: 6, kind: input, shape index: {}]
  %s7 = inlined_call_operand.vmem [shape: f32[1,16], index: 7, kind: input, shape index: {}]
  %s8 = inlined_call_operand.vmem [shape: f32[32,64], index: 8, kind: input, shape index: {}]
  %s9 = inlined_call_operand.vmem [shape: f32[16,128], index: 9, kind: input, shape index: {}]
  %s10 = inlined_call_operand.vmem [shape: f32[64,128], index: 10, kind: input, shape index: {}]
  %s11 = inlined_call_operand.vmem [shape: f32[32,128], index: 11, kind: input, shape index: {}]
  %s12 = inlined_call_operand.vmem [shape: f32[1,128], index: 12, kind: input, shape index: {}]
  %s13 = inlined_call_operand.vmem [shape: f32[32,96], index: 13, kind: input, shape index: {}]
  %s14 = inlined_call_operand.vmem [shape: f32[3,32,32], index: 14, kind: input, shape index: {}]
  %s15 = inlined_call_operand.vmem [shape: f32[3,32,32], index: 15, kind: input, shape index: {}]
  %s16 = inlined_call_operand.vmem [shape: f32[3,32,32], index: 16, kind: input, shape index: {}]
  %s17 = inlined_call_operand.vmem [shape: f32[3,32,32], index: 17, kind: input, shape index: {}]
  %s18 = inlined_call_operand.vmem [shape: f32[3,32,32], index: 18, kind: input, shape index: {}]
  %s19 = inlined_call_operand.vmem [shape: f32[32,300], index: 19, kind: input, shape index: {}]
  %s20 = inlined_call_operand.hbm [shape: f32[2,32], index: 20, kind: output, shape index: {0}]
  %s21 = inlined_call_operand.hbm [shape: f32[2,32], index: 21, kind: output, shape index: {1}]
  %s22 = inlined_call_operand.hbm [shape: f32[2,32], index: 22, kind: output, shape index: {2}]
  %s23 = inlined_call_operand.vmem [shape: f32[2,3,32], index: 23, kind: output, shape index: {3}]
  %s24 = inlined_call_operand.vmem [shape: f32[2,3,32], index: 24, kind: output, shape index: {4}]
  %s25 = inlined_call_operand.vmem [shape: f32[2,300], index: 25, kind: output, shape index: {5}]
  %26 = xla_tuple %s20, %s21, %s22, %s23, %s24, %s25
  %s27 = sld [smem:[#allocation0]]
  $region130: #{forward.2} parent=0
    _
  %s29 = ssub.s32 1, %s27
  %s30 = scalar_select 0, %s29, %s27
  $region1: #{forward.2} parent=0
    #allocation2 [shape = 'u8[1024]{0}', space=vmem, size = 0x400, scoped, tag = 'output window, operand 0, single buffered']
    #allocation3 [shape = 's32[1]{0}', space=sflag, size = 0x4, scoped, tag = 'scoped memory for forward.2']
    #allocation4 [shape = 'u8[1024]{0}', space=vmem, size = 0x400, scoped, tag = 'output window, operand 1, single buffered']
    #allocation5 [shape = 's32[1]{0}', space=sflag, size = 0x4, scoped, tag = 'scoped memory for forward.2']
    #allocation6 [shape = 'u8[1024]{0}', space=vmem, size = 0x400, scoped, tag = 'output window, operand 2, single buffered']
    %31 = vsyncpa [#allocation3], 0
    %32 = vsyncpa [#allocation5], 0
    // Predicated region
    $region2: #{forward.2} parent=1 // pred_check
      _
    $region3: #{forward.2} parent=1 // pred_check_branch
      %34 = sbr.rel (0) target = $region5
    $region4: #{forward.2} parent=1 // pred_region
      _
    $region5: #{forward.2} parent=1 // pred_fallthru
      _
    // Predicated region
    $region6: #{forward.2} parent=1 // pred_check
      _
    $region7: #{forward.2} parent=1 // pred_check_branch
      %36 = sbr.rel (0) target = $region9
    $region8: #{forward.2} parent=1 // pred_region
      _
    $region9: #{forward.2} parent=1 // pred_fallthru
      _
    // Predicated region
    $region10: #{forward.2} parent=1 // pred_check
      _
    $region11: #{forward.2} parent=1 // pred_check_branch
      %38 = sbr.rel (0) target = $region13
    $region12: #{forward.2} parent=1 // pred_region
      _
    $region13: #{forward.2} parent=1 // pred_fallthru
      _
    // Predicated region
    $region14: #{forward.2} parent=1 // pred_check
      _
    $region15: #{forward.2} parent=1 // pred_check_branch
      %40 = sbr.rel (0) target = $region17
    $region16: #{forward.2} parent=1 // pred_region
      _
    $region17: #{forward.2} parent=1 // pred_fallthru
      _
    // Predicated region
    $region18: #{forward.2} parent=1 // pred_check
      _
    $region19: #{forward.2} parent=1 // pred_check_branch
      %42 = sbr.rel (0) target = $region21
    $region20: #{forward.2} parent=1 // pred_region
      _
    $region21: #{forward.2} parent=1 // pred_fallthru
      _
    // Predicated region
    $region22: #{forward.2} parent=1 // pred_check
      _
    $region23: #{forward.2} parent=1 // pred_check_branch
      %44 = sbr.rel (0) target = $region25
    $region24: #{forward.2} parent=1 // pred_region
      _
    $region25: #{forward.2} parent=1 // pred_fallthru
      _
    // Predicated region
    $region26: #{forward.2} parent=1 // pred_check
      _
    $region27: #{forward.2} parent=1 // pred_check_branch
      %46 = sbr.rel (0) target = $region29
    $region28: #{forward.2} parent=1 // pred_region
      _
    $region29: #{forward.2} parent=1 // pred_fallthru
      _
    // Predicated region
    $region30: #{forward.2} parent=1 // pred_check
      _
    $region31: #{forward.2} parent=1 // pred_check_branch
      %48 = sbr.rel (0) target = $region33
    $region32: #{forward.2} parent=1 // pred_region
      _
    $region33: #{forward.2} parent=1 // pred_fallthru
      _
    // Predicated region
    $region34: #{forward.2} parent=1 // pred_check
      _
    $region35: #{forward.2} parent=1 // pred_check_branch
      %50 = sbr.rel (0) target = $region37
    $region36: #{forward.2} parent=1 // pred_region
      _
    $region37: #{forward.2} parent=1 // pred_fallthru
      _
    // Predicated region
    $region38: #{forward.2} parent=1 // pred_check
      _
    $region39: #{forward.2} parent=1 // pred_check_branch
      %52 = sbr.rel (0) target = $region41
    $region40: #{forward.2} parent=1 // pred_region
      _
    $region41: #{forward.2} parent=1 // pred_fallthru
      _
    // Predicated region
    $region42: #{forward.2} parent=1 // pred_check
      _
    $region43: #{forward.2} parent=1 // pred_check_branch
      %54 = sbr.rel (0) target = $region45
    $region44: #{forward.2} parent=1 // pred_region
      _
    $region45: #{forward.2} parent=1 // pred_fallthru
      _
    // Predicated region
    $region46: #{forward.2} parent=1 // pred_check
      _
    $region47: #{forward.2} parent=1 // pred_check_branch
      %56 = sbr.rel (0) target = $region49
    $region48: #{forward.2} parent=1 // pred_region
      _
    $region49: #{forward.2} parent=1 // pred_fallthru
      _
    // Predicated region
    $region50: #{forward.2} parent=1 // pred_check
      _
    $region51: #{forward.2} parent=1 // pred_check_branch
      %58 = sbr.rel (0) target = $region53
    $region52: #{forward.2} parent=1 // pred_region
      _
    $region53: #{forward.2} parent=1 // pred_fallthru
      _
    // Predicated region
    $region54: #{forward.2} parent=1 // pred_check
      _
    $region55: #{forward.2} parent=1 // pred_check_branch
      %60 = sbr.rel (0) target = $region57
    $region56: #{forward.2} parent=1 // pred_region
      _
    $region57: #{forward.2} parent=1 // pred_fallthru
      _
    // Predicated region
    $region58: #{forward.2} parent=1 // pred_check
      _
    $region59: #{forward.2} parent=1 // pred_check_branch
      %62 = sbr.rel (0) target = $region61
    $region60: #{forward.2} parent=1 // pred_region
      _
    $region61: #{forward.2} parent=1 // pred_fallthru
      _
    // Predicated region
    $region62: #{forward.2} parent=1 // pred_check
      _
    $region63: #{forward.2} parent=1 // pred_check_branch
      %64 = sbr.rel (0) target = $region65
    $region64: #{forward.2} parent=1 // pred_region
      _
    $region65: #{forward.2} parent=1 // pred_fallthru
      _
    // Predicated region
    $region66: #{forward.2} parent=1 // pred_check
      _
    $region67: #{forward.2} parent=1 // pred_check_branch
      %66 = sbr.rel (0) target = $region69
    $region68: #{forward.2} parent=1 // pred_region
      _
    $region69: #{forward.2} parent=1 // pred_fallthru
      _
    // Predicated region
    $region70: #{forward.2} parent=1 // pred_check
      _
    $region71: #{forward.2} parent=1 // pred_check_branch
      %68 = sbr.rel (0) target = $region73
    $region72: #{forward.2} parent=1 // pred_region
      _
    $region73: #{forward.2} parent=1 // pred_fallthru
      _
    // Predicated region
    $region74: #{forward.2} parent=1 // pred_check
      _
    $region75: #{forward.2} parent=1 // pred_check_branch
      %70 = sbr.rel (0) target = $region77
    $region76: #{forward.2} parent=1 // pred_region
      _
    $region77: #{forward.2} parent=1 // pred_fallthru
      _
    // Predicated region
    $region78: #{forward.2} parent=1 // pred_check
      _
    $region79: #{forward.2} parent=1 // pred_check_branch
      %72 = sbr.rel (0) target = $region81
    $region80: #{forward.2} parent=1 // pred_region
      _
    $region81: #{forward.2} parent=1 // pred_fallthru
      _
    %v73 = vld [vmem:[%s2] sm:$0x3]
    %v74 = vld [vmem:[%s4] sm:$0xff]
    %v75 = vld [vmem:[%s4 + $0x8] sm:$0xff]
    %v76 = vld [vmem:[%s0] sm:$0x3]
    %v77 = vld [vmem:[%s6] sm:$0xff]
    %v78 = vld [vmem:[%s7] sm:$0x1]
    %v80 = vlaneseq
    %v81 = vshrl.u32 %v80, 7
    %v82 = vsub.s32 0, %v81
    %v83 = vrot.slane %v78, %v82
    %vm85 = vcmask 64512
    %v87 = vsel %vm85, %v76, 0
    %89 = vmatprep.subr.mxu0 0.0
    %90 = vmatpush1.msra.mxu0 0.0
    %91 = vmatprep.subr.mxu0 0.0
    %92 = vmatpush1.msra.mxu0 0.0
    %93 = vmatprep.subr.mxu0 0.0
    %94 = vmatpush1.msra.mxu0 0.0
    %95 = vmatprep.subr.mxu0 0.0
    %96 = vmatpush1.msra.mxu0 0.0
    %97 = vmatprep.subr.mxu0 0.0
    %98 = vmatpush1.msra.mxu0 0.0
    %99 = vmatprep.subr.mxu0 0.0
    %100 = vmatpush1.msra.mxu0 0.0
    %101 = vmatprep.subr.mxu0 0.0
    %102 = vmatpush1.msra.mxu0 0.0
    %103 = vmatprep.subr.mxu0 0.0
    %104 = vmatpush1.msra.mxu0 0.0
    %105 = vmatprep.subr.mxu0 0.0
    %106 = vmatpush1.msra.mxu0 0.0
    %107 = vmatprep.subr.mxu0 0.0
    %108 = vmatpush1.msra.mxu0 0.0
    %109 = vmatprep.subr.mxu0 0.0
    %110 = vmatpush1.msra.mxu0 0.0
    %111 = vmatprep.subr.mxu0 0.0
    %112 = vmatpush1.msra.mxu0 0.0
    %113 = vmatprep.subr.mxu0 0.0
    %114 = vmatpush1.msra.mxu0 0.0
    %115 = vmatprep.subr.mxu0 0.0
    %116 = vmatpush1.msra.mxu0 0.0
    %117 = vmatprep.subr.mxu0 0.0
    %118 = vmatpush1.msra.mxu0 0.0
    %119 = vmatprep.subr.mxu0 0.0
    %120 = vmatpush1.msra.mxu0 %v77
    %121 = vmatprep.subr.mxu0 0.0
    %122 = vmatpush2.msra.mxu0 0.0
    %123 = vmatprep.subr.mxu0 0.0
    %124 = vmatpush2.msra.mxu0 0.0
    %125 = vmatprep.subr.mxu0 0.0
    %126 = vmatpush2.msra.mxu0 0.0
    %127 = vmatprep.subr.mxu0 0.0
    %128 = vmatpush2.msra.mxu0 0.0
    %129 = vmatprep.subr.mxu0 0.0
    %130 = vmatpush2.msra.mxu0 0.0
    %131 = vmatprep.subr.mxu0 0.0
    %132 = vmatpush2.msra.mxu0 0.0
    %133 = vmatprep.subr.mxu0 0.0
    %134 = vmatpush2.msra.mxu0 0.0
    %135 = vmatprep.subr.mxu0 0.0
    %136 = vmatpush2.msra.mxu0 0.0
    %137 = vmatprep.subr.mxu0 0.0
    %138 = vmatpush2.msra.mxu0 0.0
    %139 = vmatprep.subr.mxu0 0.0
    %140 = vmatpush2.msra.mxu0 0.0
    %141 = vmatprep.subr.mxu0 0.0
    %142 = vmatpush2.msra.mxu0 0.0
    %143 = vmatprep.subr.mxu0 0.0
    %144 = vmatpush2.msra.mxu0 0.0
    %145 = vmatprep.subr.mxu0 0.0
    %146 = vmatpush2.msra.mxu0 0.0
    %147 = vmatprep.subr.mxu0 0.0
    %148 = vmatpush2.msra.mxu0 0.0
    %149 = vmatprep.subr.mxu0 0.0
    %150 = vmatpush2.msra.mxu0 0.0
    %151 = vmatprep.subr.mxu0 0.0
    %152 = vmatpush2.msra.mxu0 0.0
    %153 = vmatprep.mubr.f32.mxu0 0.0
    %154 = vmatmul.mubr.f32.gmra.mxu0 %v87
    %v155 = vpop.f32.mrf.mxu0
    %v156 = vadd.f32 %v83, %v155
    %v157 = vpop.f32.mrf.mxu0
    %158 = vdwg.mxu0
    %v159 = vtanh.pop %v156
    %v160 = vld [vmem:[%s1] sm:$0x3f]
    %v161 = vld [vmem:[%s1 + $0x8] sm:$0x3f]
    %v162 = vld [vmem:[%s8] sm:$0xff]
    %v163 = vld [vmem:[%s8 + $0x8] sm:$0xff]
    %v164 = vld [vmem:[%s8 + $0x10] sm:$0xff]
    %v165 = vld [vmem:[%s8 + $0x18] sm:$0xff]
    %vm166 = vcmask 261120
    %v168 = vsel %vm166, %v73, 0
    %170 = vmatprep.subr.mxu0 0.0
    %171 = vmatpush1.msra.mxu0 0.0
    %172 = vmatprep.subr.mxu0 0.0
    %173 = vmatpush1.msra.mxu0 0.0
    %174 = vmatprep.subr.mxu0 0.0
    %175 = vmatpush1.msra.mxu0 0.0
    %176 = vmatprep.subr.mxu0 0.0
    %177 = vmatpush1.msra.mxu0 0.0
    %178 = vmatprep.subr.mxu0 0.0
    %179 = vmatpush1.msra.mxu0 0.0
    %180 = vmatprep.subr.mxu0 0.0
    %181 = vmatpush1.msra.mxu0 0.0
    %182 = vmatprep.subr.mxu0 0.0
    %183 = vmatpush1.msra.mxu0 0.0
    %184 = vmatprep.subr.mxu0 0.0
    %185 = vmatpush1.msra.mxu0 0.0
    %186 = vmatprep.subr.mxu0 0.0
    %187 = vmatpush1.msra.mxu0 0.0
    %188 = vmatprep.subr.mxu0 0.0
    %189 = vmatpush1.msra.mxu0 0.0
    %190 = vmatprep.subr.mxu0 0.0
    %191 = vmatpush1.msra.mxu0 0.0
    %192 = vmatprep.subr.mxu0 0.0
    %193 = vmatpush1.msra.mxu0 0.0
    %194 = vmatprep.subr.mxu0 0.0
    %195 = vmatpush1.msra.mxu0 %v165
    %196 = vmatprep.subr.mxu0 0.0
    %197 = vmatpush1.msra.mxu0 %v164
    %198 = vmatprep.subr.mxu0 0.0
    %199 = vmatpush1.msra.mxu0 %v163
    %200 = vmatprep.subr.mxu0 0.0
    %201 = vmatpush1.msra.mxu0 %v162
    %202 = vmatprep.subr.mxu0 0.0
    %203 = vmatpush2.msra.mxu0 0.0
    %204 = vmatprep.subr.mxu0 0.0
    %205 = vmatpush2.msra.mxu0 0.0
    %206 = vmatprep.subr.mxu0 0.0
    %207 = vmatpush2.msra.mxu0 0.0
    %208 = vmatprep.subr.mxu0 0.0
    %209 = vmatpush2.msra.mxu0 0.0
    %210 = vmatprep.subr.mxu0 0.0
    %211 = vmatpush2.msra.mxu0 0.0
    %212 = vmatprep.subr.mxu0 0.0
    %213 = vmatpush2.msra.mxu0 0.0
    %214 = vmatprep.subr.mxu0 0.0
    %215 = vmatpush2.msra.mxu0 0.0
    %216 = vmatprep.subr.mxu0 0.0
    %217 = vmatpush2.msra.mxu0 0.0
    %218 = vmatprep.subr.mxu0 0.0
    %219 = vmatpush2.msra.mxu0 0.0
    %220 = vmatprep.subr.mxu0 0.0
    %221 = vmatpush2.msra.mxu0 0.0
    %222 = vmatprep.subr.mxu0 0.0
    %223 = vmatpush2.msra.mxu0 0.0
    %224 = vmatprep.subr.mxu0 0.0
    %225 = vmatpush2.msra.mxu0 0.0
    %226 = vmatprep.subr.mxu0 0.0
    %227 = vmatpush2.msra.mxu0 0.0
    %228 = vmatprep.subr.mxu0 0.0
    %229 = vmatpush2.msra.mxu0 0.0
    %230 = vmatprep.subr.mxu0 0.0
    %231 = vmatpush2.msra.mxu0 0.0
    %232 = vmatprep.subr.mxu0 0.0
    %233 = vmatpush2.msra.mxu0 0.0
    %234 = vmatprep.mubr.f32.mxu0 0.0
    %235 = vmatmul.mubr.f32.gmra.mxu0 %v168
    %v236 = vpop.f32.mrf.mxu0
    %v237 = vadd.f32 0.0, %v236
    %v238 = vpop.f32.mrf.mxu0
    %239 = vdwg.mxu0
    %v242 = vunpack.c.l.s4 1966171168
    %v243 = vunpack.c.0.s8 %v242
    %v244 = vlaneseq
    %v245 = vshrl.u32 %v244, 7
    %v246 = vsub.s32 %v243, %v245
    %v247 = vrot.slane %v237, %v246
    %v248 = vcombine.high %v247, %v247
    %v250 = vunpack.c.l.s4 1966171168
    %v251 = vunpack.c.0.s8 %v250
    %v252 = vlaneseq
    %v253 = vshrl.u32 %v252, 7
    %v254 = vsub.s32 %v251, %v253
    %v255 = vrot.slane %v247, %v254
    %v257 = vunpack.c.l.s4 1966171168
    %v258 = vunpack.c.0.s8 %v257
    %v259 = vlaneseq
    %v260 = vshrl.u32 %v259, 7
    %v261 = vsub.s32 %v258, %v260
    %v262 = vrot.slane %v248, %v261
    %v263 = vlaneseq
    %v264 = vshrl.u32 %v263, 7
    %v265 = vsub.s32 0, %v264
    %v266 = vrot.slane %v255, %v265
    %v267 = vlaneseq
    %v268 = vshrl.u32 %v267, 7
    %v269 = vsub.s32 0, %v268
    %v270 = vrot.slane %v262, %v269
    %v273 = vmul.f32 %v160, %v266
    %v274 = vmul.f32 %v161, %v270
    %vm275 = vcmask 521216
    %v276 = vsel %vm275, %v273, 0.0
    %277 = vadd.xlane.f32.xlu0 %v276
    %v278 = vpop.xlane.xlu0 %277
    %v279 = vsel %vm275, %v274, 0.0
    %280 = vadd.xlane.f32.xlu0 %v279
    %v281 = vpop.xlane.xlu0 %280
    %v284 = vlaneseq
    %v285 = vand.u32 %v284, 127
    %v286 = vlaneseq
    %v287 = vshrl.u32 %v286, 7
    %v288 = vsub.s32 %v285, %v287
    %v289 = vrot.slane %v278, %v288
    %v290 = vlaneseq
    %v291 = vshrl.u32 %v290, 7
    %v292 = vsub.s32 %v285, %v291
    %v293 = vrot.slane %v281, %v292
    %vm294 = vcmask 1041409
    %v295 = vsel %vm294, %v293, %v289
    %vm297 = vcmask 41984
    %v298 = vsel %vm297, %v295, -inf
    %299 = vmax.xlane.f32.xlu0 %v298
    %v300 = vpop.xlane.xlu0 %299
    %v302 = vlaneseq
    %v303 = vshrl.u32 %v302, 7
    %v304 = vsub.s32 0, %v303
    %v305 = vrot.slane %v300, %v304
    %v306 = vlaneseq
    %v307 = vshrl.u32 %v306, 7
    %v308 = vsub.s32 1, %v307
    %v309 = vrot.slane %v300, %v308
    %v312 = vsub.f32 %v278, %v305
    %v313 = vsub.f32 %v281, %v309
    %v314 = vmul.f32 %v312, 1.442695
    %v315 = vpow.pop %v314
    %v316 = vmul.f32 %v313, 1.442695
    %v317 = vpow.pop %v316
    %320 = vset.pattern.permute.xlu0 0
    %321 = vperm.xlu0 %320, %v315
    %v322 = vpop.permute.xlu0 %321
    %323 = vset.pattern.permute.xlu0 0
    %324 = vperm.xlu0 %323, %v317
    %v325 = vpop.permute.xlu0 %324
    %v326 = vlaneseq
    %v327 = vshrl.u32 %v326, 7
    %v328 = vsub.s32 %v285, %v327
    %v329 = vrot.slane %v322, %v328
    %v330 = vlaneseq
    %v331 = vshrl.u32 %v330, 7
    %v332 = vsub.s32 %v285, %v331
    %v333 = vrot.slane %v325, %v332
    %v334 = vsel %vm294, %v333, %v329
    %v336 = vsel %vm297, %v334, 0.0
    %337 = vadd.xlane.f32.xlu0 %v336
    %v338 = vpop.xlane.xlu0 %337
    %v339 = vmax.f32 %v338, 1e-30
    %v340 = vrcp.pop %v339
    %v342 = vlaneseq
    %v343 = vshrl.u32 %v342, 7
    %v344 = vsub.s32 0, %v343
    %v345 = vrot.slane %v340, %v344
    %v346 = vlaneseq
    %v347 = vshrl.u32 %v346, 7
    %v348 = vsub.s32 1, %v347
    %v349 = vrot.slane %v340, %v348
    %v352 = vmul.f32 %v315, %v345
    %v353 = vmul.f32 %v317, %v349
    %355 = vset.pattern.permute.xlu0 0
    %356 = vperm.xlu0 %355, %v352
    %v357 = vpop.permute.xlu0 %356
    %360 = vset.pattern.permute.xlu0 0
    %361 = vperm.xlu0 %360, %v353
    %v362 = vpop.permute.xlu0 %361
    %v364 = vmul.f32 %v357, %v160
    %v365 = vmul.f32 %v362, %v161
    %v366 = vsel %vm275, %v364, 0.0
    %v367 = vrot.slane %v366, 4
    %v368 = vadd.f32 %v366, %v367
    %v369 = vrot.slane %v368, 2
    %v370 = vadd.f32 %v368, %v369
    %v371 = vrot.slane %v370, 1
    %v372 = vadd.f32 %v370, %v371
    %v373 = vsel %vm275, %v365, 0.0
    %v374 = vrot.slane %v373, 4
    %v375 = vadd.f32 %v373, %v374
    %v376 = vrot.slane %v375, 2
    %v377 = vadd.f32 %v375, %v376
    %v378 = vrot.slane %v377, 1
    %v379 = vadd.f32 %v377, %v378
    %v380 = vld [vmem:[%s9] sm:$0xff]
    %v381 = vld [vmem:[%s9 + $0x8] sm:$0xff]
    %v382 = vld [vmem:[%s10] sm:$0xff]
    %v383 = vld [vmem:[%s10 + $0x8] sm:$0xff]
    %v384 = vld [vmem:[%s10 + $0x10] sm:$0xff]
    %v385 = vld [vmem:[%s10 + $0x18] sm:$0xff]
    %v386 = vld [vmem:[%s10 + $0x20] sm:$0xff]
    %v387 = vld [vmem:[%s10 + $0x28] sm:$0xff]
    %v388 = vld [vmem:[%s10 + $0x30] sm:$0xff]
    %v389 = vld [vmem:[%s10 + $0x38] sm:$0xff]
    %v392 = vsel %vm294, %v379, %v372
    %vm393 = vcmask 523264
    %v394 = vsel %vm393, %v392, 0
    %396 = vmatprep.subr.mxu0 0.0
    %397 = vmatpush1.msra.mxu0 0.0
    %398 = vmatprep.subr.mxu0 0.0
    %399 = vmatpush1.msra.mxu0 0.0
    %400 = vmatprep.subr.mxu0 0.0
    %401 = vmatpush1.msra.mxu0 0.0
    %402 = vmatprep.subr.mxu0 0.0
    %403 = vmatpush1.msra.mxu0 0.0
    %404 = vmatprep.subr.mxu0 0.0
    %405 = vmatpush1.msra.mxu0 0.0
    %406 = vmatprep.subr.mxu0 0.0
    %407 = vmatpush1.msra.mxu0 0.0
    %408 = vmatprep.subr.mxu0 0.0
    %409 = vmatpush1.msra.mxu0 0.0
    %410 = vmatprep.subr.mxu0 0.0
    %411 = vmatpush1.msra.mxu0 0.0
    %412 = vmatprep.subr.mxu0 0.0
    %413 = vmatpush1.msra.mxu0 %v389
    %414 = vmatprep.subr.mxu0 0.0
    %415 = vmatpush1.msra.mxu0 %v388
    %416 = vmatprep.subr.mxu0 0.0
    %417 = vmatpush1.msra.mxu0 %v387
    %418 = vmatprep.subr.mxu0 0.0
    %419 = vmatpush1.msra.mxu0 %v386
    %420 = vmatprep.subr.mxu0 0.0
    %421 = vmatpush1.msra.mxu0 %v385
    %422 = vmatprep.subr.mxu0 0.0
    %423 = vmatpush1.msra.mxu0 %v384
    %424 = vmatprep.subr.mxu0 0.0
    %425 = vmatpush1.msra.mxu0 %v383
    %426 = vmatprep.subr.mxu0 0.0
    %427 = vmatpush1.msra.mxu0 %v382
    %428 = vmatprep.subr.mxu0 0.0
    %429 = vmatpush2.msra.mxu0 0.0
    %430 = vmatprep.subr.mxu0 0.0
    %431 = vmatpush2.msra.mxu0 0.0
    %432 = vmatprep.subr.mxu0 0.0
    %433 = vmatpush2.msra.mxu0 0.0
    %434 = vmatprep.subr.mxu0 0.0
    %435 = vmatpush2.msra.mxu0 0.0
    %436 = vmatprep.subr.mxu0 0.0
    %437 = vmatpush2.msra.mxu0 0.0
    %438 = vmatprep.subr.mxu0 0.0
    %439 = vmatpush2.msra.mxu0 0.0
    %440 = vmatprep.subr.mxu0 0.0
    %441 = vmatpush2.msra.mxu0 0.0
    %442 = vmatprep.subr.mxu0 0.0
    %443 = vmatpush2.msra.mxu0 0.0
    %444 = vmatprep.subr.mxu0 0.0
    %445 = vmatpush2.msra.mxu0 0.0
    %446 = vmatprep.subr.mxu0 0.0
    %447 = vmatpush2.msra.mxu0 0.0
    %448 = vmatprep.subr.mxu0 0.0
    %449 = vmatpush2.msra.mxu0 0.0
    %450 = vmatprep.subr.mxu0 0.0
    %451 = vmatpush2.msra.mxu0 0.0
    %452 = vmatprep.subr.mxu0 0.0
    %453 = vmatpush2.msra.mxu0 0.0
    %454 = vmatprep.subr.mxu0 0.0
    %455 = vmatpush2.msra.mxu0 0.0
    %456 = vmatprep.subr.mxu0 0.0
    %457 = vmatpush2.msra.mxu0 0.0
    %458 = vmatprep.subr.mxu0 0.0
    %459 = vmatpush2.msra.mxu0 0.0
    %460 = vmatprep.mubr.f32.mxu0 0.0
    %461 = vmatmul.mubr.f32.gmra.mxu0 %v394
    %v462 = vpop.f32.mrf.mxu0
    %v463 = vadd.f32 0.0, %v462
    %v464 = vpop.f32.mrf.mxu0
    %465 = vdwg.mxu0
    %vm466 = vcmask 130048
    %v468 = vsel %vm466, %v159, 0
    %470 = vmatprep.subr.mxu0 0.0
    %471 = vmatpush1.msra.mxu0 0.0
    %472 = vmatprep.subr.mxu0 0.0
    %473 = vmatpush1.msra.mxu0 0.0
    %474 = vmatprep.subr.mxu0 0.0
    %475 = vmatpush1.msra.mxu0 0.0
    %476 = vmatprep.subr.mxu0 0.0
    %477 = vmatpush1.msra.mxu0 0.0
    %478 = vmatprep.subr.mxu0 0.0
    %479 = vmatpush1.msra.mxu0 0.0
    %480 = vmatprep.subr.mxu0 0.0
    %481 = vmatpush1.msra.mxu0 0.0
    %482 = vmatprep.subr.mxu0 0.0
    %483 = vmatpush1.msra.mxu0 0.0
    %484 = vmatprep.subr.mxu0 0.0
    %485 = vmatpush1.msra.mxu0 0.0
    %486 = vmatprep.subr.mxu0 0.0
    %487 = vmatpush1.msra.mxu0 0.0
    %488 = vmatprep.subr.mxu0 0.0
    %489 = vmatpush1.msra.mxu0 0.0
    %490 = vmatprep.subr.mxu0 0.0
    %491 = vmatpush1.msra.mxu0 0.0
    %492 = vmatprep.subr.mxu0 0.0
    %493 = vmatpush1.msra.mxu0 0.0
    %494 = vmatprep.subr.mxu0 0.0
    %495 = vmatpush1.msra.mxu0 0.0
    %496 = vmatprep.subr.mxu0 0.0
    %497 = vmatpush1.msra.mxu0 0.0
    %498 = vmatprep.subr.mxu0 0.0
    %499 = vmatpush1.msra.mxu0 %v381
    %500 = vmatprep.subr.mxu0 0.0
    %501 = vmatpush1.msra.mxu0 %v380
    %502 = vmatprep.subr.mxu0 0.0
    %503 = vmatpush2.msra.mxu0 0.0
    %504 = vmatprep.subr.mxu0 0.0
    %505 = vmatpush2.msra.mxu0 0.0
    %506 = vmatprep.subr.mxu0 0.0
    %507 = vmatpush2.msra.mxu0 0.0
    %508 = vmatprep.subr.mxu0 0.0
    %509 = vmatpush2.msra.mxu0 0.0
    %510 = vmatprep.subr.mxu0 0.0
    %511 = vmatpush2.msra.mxu0 0.0
    %512 = vmatprep.subr.mxu0 0.0
    %513 = vmatpush2.msra.mxu0 0.0
    %514 = vmatprep.subr.mxu0 0.0
    %515 = vmatpush2.msra.mxu0 0.0
    %516 = vmatprep.subr.mxu0 0.0
    %517 = vmatpush2.msra.mxu0 0.0
    %518 = vmatprep.subr.mxu0 0.0
    %519 = vmatpush2.msra.mxu0 0.0
    %520 = vmatprep.subr.mxu0 0.0
    %521 = vmatpush2.msra.mxu0 0.0
    %522 = vmatprep.subr.mxu0 0.0
    %523 = vmatpush2.msra.mxu0 0.0
    %524 = vmatprep.subr.mxu0 0.0
    %525 = vmatpush2.msra.mxu0 0.0
    %526 = vmatprep.subr.mxu0 0.0
    %527 = vmatpush2.msra.mxu0 0.0
    %528 = vmatprep.subr.mxu0 0.0
    %529 = vmatpush2.msra.mxu0 0.0
    %530 = vmatprep.subr.mxu0 0.0
    %531 = vmatpush2.msra.mxu0 0.0
    %532 = vmatprep.subr.mxu0 0.0
    %533 = vmatpush2.msra.mxu0 0.0
    %534 = vmatprep.mubr.f32.mxu0 0.0
    %535 = vmatmul.mubr.f32.gmra.mxu0 %v468
    %v536 = vpop.f32.mrf.mxu0
    %v537 = vadd.f32 %v463, %v536
    %v538 = vpop.f32.mrf.mxu0
    %539 = vdwg.mxu0
    %v540 = vld [vmem:[%s11] sm:$0xff]
    %v541 = vld [vmem:[%s11 + $0x8] sm:$0xff]
    %v542 = vld [vmem:[%s11 + $0x10] sm:$0xff]
    %v543 = vld [vmem:[%s11 + $0x18] sm:$0xff]
    %544 = vmatprep.subr.mxu0 0.0
    %545 = vmatpush1.msra.mxu0 0.0
    %546 = vmatprep.subr.mxu0 0.0
    %547 = vmatpush1.msra.mxu0 0.0
    %548 = vmatprep.subr.mxu0 0.0
    %549 = vmatpush1.msra.mxu0 0.0
    %550 = vmatprep.subr.mxu0 0.0
    %551 = vmatpush1.msra.mxu0 0.0
    %552 = vmatprep.subr.mxu0 0.0
    %553 = vmatpush1.msra.mxu0 0.0
    %554 = vmatprep.subr.mxu0 0.0
    %555 = vmatpush1.msra.mxu0 0.0
    %556 = vmatprep.subr.mxu0 0.0
    %557 = vmatpush1.msra.mxu0 0.0
    %558 = vmatprep.subr.mxu0 0.0
    %559 = vmatpush1.msra.mxu0 0.0
    %560 = vmatprep.subr.mxu0 0.0
    %561 = vmatpush1.msra.mxu0 0.0
    %562 = vmatprep.subr.mxu0 0.0
    %563 = vmatpush1.msra.mxu0 0.0
    %564 = vmatprep.subr.mxu0 0.0
    %565 = vmatpush1.msra.mxu0 0.0
    %566 = vmatprep.subr.mxu0 0.0
    %567 = vmatpush1.msra.mxu0 0.0
    %568 = vmatprep.subr.mxu0 0.0
    %569 = vmatpush1.msra.mxu0 %v543
    %570 = vmatprep.subr.mxu0 0.0
    %571 = vmatpush1.msra.mxu0 %v542
    %572 = vmatprep.subr.mxu0 0.0
    %573 = vmatpush1.msra.mxu0 %v541
    %574 = vmatprep.subr.mxu0 0.0
    %575 = vmatpush1.msra.mxu0 %v540
    %576 = vmatprep.subr.mxu0 0.0
    %577 = vmatpush2.msra.mxu0 0.0
    %578 = vmatprep.subr.mxu0 0.0
    %579 = vmatpush2.msra.mxu0 0.0
    %580 = vmatprep.subr.mxu0 0.0
    %581 = vmatpush2.msra.mxu0 0.0
    %582 = vmatprep.subr.mxu0 0.0
    %583 = vmatpush2.msra.mxu0 0.0
    %584 = vmatprep.subr.mxu0 0.0
    %585 = vmatpush2.msra.mxu0 0.0
    %586 = vmatprep.subr.mxu0 0.0
    %587 = vmatpush2.msra.mxu0 0.0
    %588 = vmatprep.subr.mxu0 0.0
    %589 = vmatpush2.msra.mxu0 0.0
    %590 = vmatprep.subr.mxu0 0.0
    %591 = vmatpush2.msra.mxu0 0.0
    %592 = vmatprep.subr.mxu0 0.0
    %593 = vmatpush2.msra.mxu0 0.0
    %594 = vmatprep.subr.mxu0 0.0
    %595 = vmatpush2.msra.mxu0 0.0
    %596 = vmatprep.subr.mxu0 0.0
    %597 = vmatpush2.msra.mxu0 0.0
    %598 = vmatprep.subr.mxu0 0.0
    %599 = vmatpush2.msra.mxu0 0.0
    %600 = vmatprep.subr.mxu0 0.0
    %601 = vmatpush2.msra.mxu0 0.0
    %602 = vmatprep.subr.mxu0 0.0
    %603 = vmatpush2.msra.mxu0 0.0
    %604 = vmatprep.subr.mxu0 0.0
    %605 = vmatpush2.msra.mxu0 0.0
    %606 = vmatprep.subr.mxu0 0.0
    %607 = vmatpush2.msra.mxu0 0.0
    %608 = vmatprep.mubr.f32.mxu0 0.0
    %609 = vmatmul.mubr.f32.gmra.mxu0 %v168
    %v610 = vpop.f32.mrf.mxu0
    %v611 = vadd.f32 0.0, %v610
    %v612 = vpop.f32.mrf.mxu0
    %613 = vdwg.mxu0
    %v614 = vadd.f32 %v537, %v611
    %v615 = vld [vmem:[%s12] sm:$0x1]
    %v617 = vlaneseq
    %v618 = vshrl.u32 %v617, 7
    %v619 = vsub.s32 0, %v618
    %v620 = vrot.slane %v615, %v619
    %v622 = vadd.f32 %v614, %v620
    %v623 = vxor.u32 %v622, 2147483648
    %v624 = vmul.f32 %v623, 1.442695
    %v625 = vpow.pop %v624
    %v626 = vadd.f32 %v625, 1.0
    %v627 = vrcp.pop %v626
    %v628 = vmul.f32 1.0, %v627
    %v629 = vtanh.pop %v622
    %v630 = vld [vmem:[%s3] sm:$0x3]
    %632 = vrot.lane.b32.xlu0 %v630, 32
    %v633 = vpop.permute.xlu0 %632
    %v635 = vmul.f32 %v628, %v633
    %637 = vrot.lane.b32.xlu0 %v629, 64
    %v638 = vpop.permute.xlu0 %637
    %v640 = vmul.f32 %v628, %v638
    %642 = vrot.lane.b32.xlu0 %v640, 32
    %v643 = vpop.permute.xlu0 %642
    %v645 = vadd.f32 %v635, %v643
    %v646 = vtanh.pop %v645
    %648 = vrot.lane.b32.xlu0 %v646, 64
    %v649 = vpop.permute.xlu0 %648
    %v651 = vmul.f32 %v628, %v649
    %653 = vrot.lane.b32.xlu0 %v651, 32
    %v654 = vpop.permute.xlu0 %653
    %vm656 = vcmask 254976
    %657 = vst.msk [vmem:[#allocation2] sm:$0x3] %vm656, %v654
    %659 = vrot.lane.b32.xlu0 %v645, 96
    %v660 = vpop.permute.xlu0 %659
    %662 = vst.msk [vmem:[#allocation4] sm:$0x3] %vm656, %v660
    %v663 = vld [vmem:[%s13] sm:$0xff]
    %v664 = vld [vmem:[%s13 + $0x8] sm:$0xff]
    %v665 = vld [vmem:[%s13 + $0x10] sm:$0xff]
    %v666 = vld [vmem:[%s13 + $0x18] sm:$0xff]
    %v667 = vsel %vm166, %v654, 0
    %669 = vmatprep.subr.mxu0 0.0
    %670 = vmatpush1.msra.mxu0 0.0
    %671 = vmatprep.subr.mxu0 0.0
    %672 = vmatpush1.msra.mxu0 0.0
    %673 = vmatprep.subr.mxu0 0.0
    %674 = vmatpush1.msra.mxu0 0.0
    %675 = vmatprep.subr.mxu0 0.0
    %676 = vmatpush1.msra.mxu0 0.0
    %677 = vmatprep.subr.mxu0 0.0
    %678 = vmatpush1.msra.mxu0 0.0
    %679 = vmatprep.subr.mxu0 0.0
    %680 = vmatpush1.msra.mxu0 0.0
    %681 = vmatprep.subr.mxu0 0.0
    %682 = vmatpush1.msra.mxu0 0.0
    %683 = vmatprep.subr.mxu0 0.0
    %684 = vmatpush1.msra.mxu0 0.0
    %685 = vmatprep.subr.mxu0 0.0
    %686 = vmatpush1.msra.mxu0 0.0
    %687 = vmatprep.subr.mxu0 0.0
    %688 = vmatpush1.msra.mxu0 0.0
    %689 = vmatprep.subr.mxu0 0.0
    %690 = vmatpush1.msra.mxu0 0.0
    %691 = vmatprep.subr.mxu0 0.0
    %692 = vmatpush1.msra.mxu0 0.0
    %693 = vmatprep.subr.mxu0 0.0
    %694 = vmatpush1.msra.mxu0 %v666
    %695 = vmatprep.subr.mxu0 0.0
    %696 = vmatpush1.msra.mxu0 %v665
    %697 = vmatprep.subr.mxu0 0.0
    %698 = vmatpush1.msra.mxu0 %v664
    %699 = vmatprep.subr.mxu0 0.0
    %700 = vmatpush1.msra.mxu0 %v663
    %701 = vmatprep.subr.mxu0 0.0
    %702 = vmatpush2.msra.mxu0 0.0
    %703 = vmatprep.subr.mxu0 0.0
    %704 = vmatpush2.msra.mxu0 0.0
    %705 = vmatprep.subr.mxu0 0.0
    %706 = vmatpush2.msra.mxu0 0.0
    %707 = vmatprep.subr.mxu0 0.0
    %708 = vmatpush2.msra.mxu0 0.0
    %709 = vmatprep.subr.mxu0 0.0
    %710 = vmatpush2.msra.mxu0 0.0
    %711 = vmatprep.subr.mxu0 0.0
    %712 = vmatpush2.msra.mxu0 0.0
    %713 = vmatprep.subr.mxu0 0.0
    %714 = vmatpush2.msra.mxu0 0.0
    %715 = vmatprep.subr.mxu0 0.0
    %716 = vmatpush2.msra.mxu0 0.0
    %717 = vmatprep.subr.mxu0 0.0
    %718 = vmatpush2.msra.mxu0 0.0
    %719 = vmatprep.subr.mxu0 0.0
    %720 = vmatpush2.msra.mxu0 0.0
    %721 = vmatprep.subr.mxu0 0.0
    %722 = vmatpush2.msra.mxu0 0.0
    %723 = vmatprep.subr.mxu0 0.0
    %724 = vmatpush2.msra.mxu0 0.0
    %725 = vmatprep.subr.mxu0 0.0
    %726 = vmatpush2.msra.mxu0 0.0
    %727 = vmatprep.subr.mxu0 0.0
    %728 = vmatpush2.msra.mxu0 0.0
    %729 = vmatprep.subr.mxu0 0.0
    %730 = vmatpush2.msra.mxu0 0.0
    %731 = vmatprep.subr.mxu0 0.0
    %732 = vmatpush2.msra.mxu0 0.0
    %733 = vmatprep.mubr.f32.mxu0 0.0
    %734 = vmatmul.mubr.f32.gmra.mxu0 %v667
    %v735 = vpop.f32.mrf.mxu0
    %v736 = vadd.f32 0.0, %v735
    %v737 = vpop.f32.mrf.mxu0
    %738 = vdwg.mxu0
    %v741 = vunpack.c.l.s4 1966171168
    %v742 = vunpack.c.0.s8 %v741
    %v743 = vlaneseq
    %v744 = vshrl.u32 %v743, 7
    %v745 = vsub.s32 %v742, %v744
    %v746 = vrot.slane %v736, %v745
    %v747 = vcombine.high %v746, %v746
    %v749 = vunpack.c.l.s4 1966171168
    %v750 = vunpack.c.0.s8 %v749
    %v751 = vlaneseq
    %v752 = vshrl.u32 %v751, 7
    %v753 = vsub.s32 %v750, %v752
    %v754 = vrot.slane %v746, %v753
    %v756 = vunpack.c.l.s4 1966171168
    %v757 = vunpack.c.0.s8 %v756
    %v758 = vlaneseq
    %v759 = vshrl.u32 %v758, 7
    %v760 = vsub.s32 %v757, %v759
    %v761 = vrot.slane %v747, %v760
    %v764 = vlaneseq
    %v765 = vshrl.u32 %v764, 7
    %v766 = vsub.s32 0, %v765
    %v767 = vrot.slane %v754, %v766
    %v768 = vlaneseq
    %v769 = vshrl.u32 %v768, 7
    %v770 = vsub.s32 0, %v769
    %v771 = vrot.slane %v761, %v770
    %772 = vrot.lane.b32.xlu0 %v767, 96
    %v773 = vpop.permute.xlu0 %772
    %774 = vrot.lane.b32.xlu0 %v771, 96
    %v775 = vpop.permute.xlu0 %774
    %778 = vrot.lane.b32.xlu0 %v767, 64
    %v779 = vpop.permute.xlu0 %778
    %780 = vrot.lane.b32.xlu0 %v771, 64
    %v781 = vpop.permute.xlu0 %780
    %vm784 = vcmask 1040384
    %v785 = vsel %vm784, %v754, %v773
    %v786 = vsel %vm784, %v761, %v775
    %vm787 = vcmask 1041408
    %v788 = vsel %vm787, %v785, %v779
    %v789 = vsel %vm787, %v786, %v781
    %v790 = vld [vmem:[%s5] sm:$0x3]
    %v793 = vunpack.c.l.s4 1966171168
    %v794 = vunpack.c.0.s8 %v793
    %v795 = vlaneseq
    %v796 = vshrl.u32 %v795, 7
    %v797 = vsub.s32 %v794, %v796
    %v798 = vrot.slane %v790, %v797
    %v799 = vcombine.high %v798, %v798
    %v801 = vunpack.c.l.s4 1966171168
    %v802 = vunpack.c.0.s8 %v801
    %v803 = vlaneseq
    %v804 = vshrl.u32 %v803, 7
    %v805 = vsub.s32 %v802, %v804
    %v806 = vrot.slane %v798, %v805
    %v808 = vunpack.c.l.s4 1966171168
    %v809 = vunpack.c.0.s8 %v808
    %v810 = vlaneseq
    %v811 = vshrl.u32 %v810, 7
    %v812 = vsub.s32 %v809, %v811
    %v813 = vrot.slane %v799, %v812
    %v814 = vlaneseq
    %v815 = vshrl.u32 %v814, 7
    %v816 = vsub.s32 0, %v815
    %v817 = vrot.slane %v806, %v816
    %v818 = vlaneseq
    %v819 = vshrl.u32 %v818, 7
    %v820 = vsub.s32 0, %v819
    %v821 = vrot.slane %v813, %v820
    %v825 = vsel %vm166, %v788, 0
    %v828 = vsel %vm166, %v74, 0
    %830 = vmatprep.subr.mxu0 0.0
    %831 = vmatpush1.xpose.msra.mxu0 0.0
    %832 = vmatprep.subr.mxu0 0.0
    %833 = vmatpush1.xpose.msra.mxu0 0.0
    %834 = vmatprep.subr.mxu0 0.0
    %835 = vmatpush1.xpose.msra.mxu0 0.0
    %836 = vmatprep.subr.mxu0 0.0
    %837 = vmatpush1.xpose.msra.mxu0 0.0
    %838 = vmatprep.subr.mxu0 0.0
    %839 = vmatpush1.xpose.msra.mxu0 0.0
    %840 = vmatprep.subr.mxu0 0.0
    %841 = vmatpush1.xpose.msra.mxu0 0.0
    %842 = vmatprep.subr.mxu0 0.0
    %843 = vmatpush1.xpose.msra.mxu0 0.0
    %844 = vmatprep.subr.mxu0 0.0
    %845 = vmatpush1.xpose.msra.mxu0 0.0
    %846 = vmatprep.subr.mxu0 0.0
    %847 = vmatpush1.xpose.msra.mxu0 0.0
    %848 = vmatprep.subr.mxu0 0.0
    %849 = vmatpush1.xpose.msra.mxu0 0.0
    %850 = vmatprep.subr.mxu0 0.0
    %851 = vmatpush1.xpose.msra.mxu0 0.0
    %852 = vmatprep.subr.mxu0 0.0
    %853 = vmatpush1.xpose.msra.mxu0 0.0
    %854 = vmatprep.subr.mxu0 0.0
    %855 = vmatpush1.xpose.msra.mxu0 0.0
    %856 = vmatprep.subr.mxu0 0.0
    %857 = vmatpush1.xpose.msra.mxu0 0.0
    %858 = vmatprep.subr.mxu0 0.0
    %859 = vmatpush1.xpose.msra.mxu0 0.0
    %860 = vmatprep.subr.mxu0 0.0
    %861 = vmatpush1.xpose.msra.mxu0 %v828
    %862 = vmatprep.subr.mxu0 0.0
    %863 = vmatpush2.xpose.msra.mxu0 0.0
    %864 = vmatprep.subr.mxu0 0.0
    %865 = vmatpush2.xpose.msra.mxu0 0.0
    %866 = vmatprep.subr.mxu0 0.0
    %867 = vmatpush2.xpose.msra.mxu0 0.0
    %868 = vmatprep.subr.mxu0 0.0
    %869 = vmatpush2.xpose.msra.mxu0 0.0
    %870 = vmatprep.subr.mxu0 0.0
    %871 = vmatpush2.xpose.msra.mxu0 0.0
    %872 = vmatprep.subr.mxu0 0.0
    %873 = vmatpush2.xpose.msra.mxu0 0.0
    %874 = vmatprep.subr.mxu0 0.0
    %875 = vmatpush2.xpose.msra.mxu0 0.0
    %876 = vmatprep.subr.mxu0 0.0
    %877 = vmatpush2.xpose.msra.mxu0 0.0
    %878 = vmatprep.subr.mxu0 0.0
    %879 = vmatpush2.xpose.msra.mxu0 0.0
    %880 = vmatprep.subr.mxu0 0.0
    %881 = vmatpush2.xpose.msra.mxu0 0.0
    %882 = vmatprep.subr.mxu0 0.0
    %883 = vmatpush2.xpose.msra.mxu0 0.0
    %884 = vmatprep.subr.mxu0 0.0
    %885 = vmatpush2.xpose.msra.mxu0 0.0
    %886 = vmatprep.subr.mxu0 0.0
    %887 = vmatpush2.xpose.msra.mxu0 0.0
    %888 = vmatprep.subr.mxu0 0.0
    %889 = vmatpush2.xpose.msra.mxu0 0.0
    %890 = vmatprep.subr.mxu0 0.0
    %891 = vmatpush2.xpose.msra.mxu0 0.0
    %892 = vmatprep.subr.mxu0 0.0
    %893 = vmatpush2.xpose.msra.mxu0 0.0
    %894 = vmatprep.mubr.f32.mxu0 0.0
    %895 = vmatmul.mubr.f32.gmra.mxu0 %v825
    %v896 = vpop.f32.mrf.mxu0
    %v897 = vadd.f32 %v817, %v896
    %v898 = vpop.f32.mrf.mxu0
    %899 = vdwg.mxu0
    %v901 = vsel %vm166, %v789, 0
    %v904 = vsel %vm166, %v75, 0
    %906 = vmatprep.subr.mxu0 0.0
    %907 = vmatpush1.xpose.msra.mxu0 0.0
    %908 = vmatprep.subr.mxu0 0.0
    %909 = vmatpush1.xpose.msra.mxu0 0.0
    %910 = vmatprep.subr.mxu0 0.0
    %911 = vmatpush1.xpose.msra.mxu0 0.0
    %912 = vmatprep.subr.mxu0 0.0
    %913 = vmatpush1.xpose.msra.mxu0 0.0
    %914 = vmatprep.subr.mxu0 0.0
    %915 = vmatpush1.xpose.msra.mxu0 0.0
    %916 = vmatprep.subr.mxu0 0.0
    %917 = vmatpush1.xpose.msra.mxu0 0.0
    %918 = vmatprep.subr.mxu0 0.0
    %919 = vmatpush1.xpose.msra.mxu0 0.0
    %920 = vmatprep.subr.mxu0 0.0
    %921 = vmatpush1.xpose.msra.mxu0 0.0
    %922 = vmatprep.subr.mxu0 0.0
    %923 = vmatpush1.xpose.msra.mxu0 0.0
    %924 = vmatprep.subr.mxu0 0.0
    %925 = vmatpush1.xpose.msra.mxu0 0.0
    %926 = vmatprep.subr.mxu0 0.0
    %927 = vmatpush1.xpose.msra.mxu0 0.0
    %928 = vmatprep.subr.mxu0 0.0
    %929 = vmatpush1.xpose.msra.mxu0 0.0
    %930 = vmatprep.subr.mxu0 0.0
    %931 = vmatpush1.xpose.msra.mxu0 0.0
    %932 = vmatprep.subr.mxu0 0.0
    %933 = vmatpush1.xpose.msra.mxu0 0.0
    %934 = vmatprep.subr.mxu0 0.0
    %935 = vmatpush1.xpose.msra.mxu0 0.0
    %936 = vmatprep.subr.mxu0 0.0
    %937 = vmatpush1.xpose.msra.mxu0 %v904
    %938 = vmatprep.subr.mxu0 0.0
    %939 = vmatpush2.xpose.msra.mxu0 0.0
    %940 = vmatprep.subr.mxu0 0.0
    %941 = vmatpush2.xpose.msra.mxu0 0.0
    %942 = vmatprep.subr.mxu0 0.0
    %943 = vmatpush2.xpose.msra.mxu0 0.0
    %944 = vmatprep.subr.mxu0 0.0
    %945 = vmatpush2.xpose.msra.mxu0 0.0
    %946 = vmatprep.subr.mxu0 0.0
    %947 = vmatpush2.xpose.msra.mxu0 0.0
    %948 = vmatprep.subr.mxu0 0.0
    %949 = vmatpush2.xpose.msra.mxu0 0.0
    %950 = vmatprep.subr.mxu0 0.0
    %951 = vmatpush2.xpose.msra.mxu0 0.0
    %952 = vmatprep.subr.mxu0 0.0
    %953 = vmatpush2.xpose.msra.mxu0 0.0
    %954 = vmatprep.subr.mxu0 0.0
    %955 = vmatpush2.xpose.msra.mxu0 0.0
    %956 = vmatprep.subr.mxu0 0.0
    %957 = vmatpush2.xpose.msra.mxu0 0.0
    %958 = vmatprep.subr.mxu0 0.0
    %959 = vmatpush2.xpose.msra.mxu0 0.0
    %960 = vmatprep.subr.mxu0 0.0
    %961 = vmatpush2.xpose.msra.mxu0 0.0
    %962 = vmatprep.subr.mxu0 0.0
    %963 = vmatpush2.xpose.msra.mxu0 0.0
    %964 = vmatprep.subr.mxu0 0.0
    %965 = vmatpush2.xpose.msra.mxu0 0.0
    %966 = vmatprep.subr.mxu0 0.0
    %967 = vmatpush2.xpose.msra.mxu0 0.0
    %968 = vmatprep.subr.mxu0 0.0
    %969 = vmatpush2.xpose.msra.mxu0 0.0
    %970 = vmatprep.mubr.f32.mxu0 0.0
    %971 = vmatmul.mubr.f32.gmra.mxu0 %v901
    %v972 = vpop.f32.mrf.mxu0
    %v973 = vadd.f32 %v821, %v972
    %v974 = vpop.f32.mrf.mxu0
    %975 = vdwg.mxu0
    %vm976 = vcmask 59392
    %v977 = vsel %vm976, %v897, -inf
    %978 = vmax.xlane.f32.xlu0 %v977
    %v979 = vpop.xlane.xlu0 %978
    %v980 = vsel %vm976, %v973, -inf
    %981 = vmax.xlane.f32.xlu0 %v980
    %v982 = vpop.xlane.xlu0 %981
    %v983 = vsub.f32 %v897, %v979
    %v984 = vsub.f32 %v973, %v982
    %v985 = vmul.f32 %v983, 1.442695
    %v986 = vpow.pop %v985
    %v987 = vmul.f32 %v984, 1.442695
    %v988 = vpow.pop %v987
    %v989 = vsel %vm976, %v986, 0.0
    %990 = vadd.xlane.f32.xlu0 %v989
    %v991 = vpop.xlane.xlu0 %990
    %v992 = vsel %vm976, %v988, 0.0
    %993 = vadd.xlane.f32.xlu0 %v992
    %v994 = vpop.xlane.xlu0 %993
    %v995 = vmax.f32 %v991, 1e-30
    %v996 = vmax.f32 %v994, 1e-30
    %v997 = vrcp.pop %v995
    %v998 = vrcp.pop %v996
    %v999 = vmul.f32 %v986, %v997
    %v1000 = vmul.f32 %v988, %v998
    %v1002 = vsel %vm85, %v999, 0
    %1004 = vmatprep.subr.mxu0 0.0
    %1005 = vmatpush1.msra.mxu0 0.0
    %1006 = vmatprep.subr.mxu0 0.0
    %1007 = vmatpush1.msra.mxu0 0.0
    %1008 = vmatprep.subr.mxu0 0.0
    %1009 = vmatpush1.msra.mxu0 0.0
    %1010 = vmatprep.subr.mxu0 0.0
    %1011 = vmatpush1.msra.mxu0 0.0
    %1012 = vmatprep.subr.mxu0 0.0
    %1013 = vmatpush1.msra.mxu0 0.0
    %1014 = vmatprep.subr.mxu0 0.0
    %1015 = vmatpush1.msra.mxu0 0.0
    %1016 = vmatprep.subr.mxu0 0.0
    %1017 = vmatpush1.msra.mxu0 0.0
    %1018 = vmatprep.subr.mxu0 0.0
    %1019 = vmatpush1.msra.mxu0 0.0
    %1020 = vmatprep.subr.mxu0 0.0
    %1021 = vmatpush1.msra.mxu0 0.0
    %1022 = vmatprep.subr.mxu0 0.0
    %1023 = vmatpush1.msra.mxu0 0.0
    %1024 = vmatprep.subr.mxu0 0.0
    %1025 = vmatpush1.msra.mxu0 0.0
    %1026 = vmatprep.subr.mxu0 0.0
    %1027 = vmatpush1.msra.mxu0 0.0
    %1028 = vmatprep.subr.mxu0 0.0
    %1029 = vmatpush1.msra.mxu0 0.0
    %1030 = vmatprep.subr.mxu0 0.0
    %1031 = vmatpush1.msra.mxu0 0.0
    %1032 = vmatprep.subr.mxu0 0.0
    %1033 = vmatpush1.msra.mxu0 0.0
    %1034 = vmatprep.subr.mxu0 0.0
    %1035 = vmatpush1.msra.mxu0 %v74
    %1036 = vmatprep.subr.mxu0 0.0
    %1037 = vmatpush2.msra.mxu0 0.0
    %1038 = vmatprep.subr.mxu0 0.0
    %1039 = vmatpush2.msra.mxu0 0.0
    %1040 = vmatprep.subr.mxu0 0.0
    %1041 = vmatpush2.msra.mxu0 0.0
    %1042 = vmatprep.subr.mxu0 0.0
    %1043 = vmatpush2.msra.mxu0 0.0
    %1044 = vmatprep.subr.mxu0 0.0
    %1045 = vmatpush2.msra.mxu0 0.0
    %1046 = vmatprep.subr.mxu0 0.0
    %1047 = vmatpush2.msra.mxu0 0.0
    %1048 = vmatprep.subr.mxu0 0.0
    %1049 = vmatpush2.msra.mxu0 0.0
    %1050 = vmatprep.subr.mxu0 0.0
    %1051 = vmatpush2.msra.mxu0 0.0
    %1052 = vmatprep.subr.mxu0 0.0
    %1053 = vmatpush2.msra.mxu0 0.0
    %1054 = vmatprep.subr.mxu0 0.0
    %1055 = vmatpush2.msra.mxu0 0.0
    %1056 = vmatprep.subr.mxu0 0.0
    %1057 = vmatpush2.msra.mxu0 0.0
    %1058 = vmatprep.subr.mxu0 0.0
    %1059 = vmatpush2.msra.mxu0 0.0
    %1060 = vmatprep.subr.mxu0 0.0
    %1061 = vmatpush2.msra.mxu0 0.0
    %1062 = vmatprep.subr.mxu0 0.0
    %1063 = vmatpush2.msra.mxu0 0.0
    %1064 = vmatprep.subr.mxu0 0.0
    %1065 = vmatpush2.msra.mxu0 0.0
    %1066 = vmatprep.subr.mxu0 0.0
    %1067 = vmatpush2.msra.mxu0 0.0
    %1068 = vmatprep.mubr.f32.mxu0 0.0
    %1069 = vmatmul.mubr.f32.gmra.mxu0 %v1002
    %v1070 = vpop.f32.mrf.mxu0
    %v1071 = vadd.f32 0.0, %v1070
    %v1072 = vpop.f32.mrf.mxu0
    %1073 = vdwg.mxu0
    %v1075 = vsel %vm85, %v1000, 0
    %1077 = vmatprep.subr.mxu0 0.0
    %1078 = vmatpush1.msra.mxu0 0.0
    %1079 = vmatprep.subr.mxu0 0.0
    %1080 = vmatpush1.msra.mxu0 0.0
    %1081 = vmatprep.subr.mxu0 0.0
    %1082 = vmatpush1.msra.mxu0 0.0
    %1083 = vmatprep.subr.mxu0 0.0
    %1084 = vmatpush1.msra.mxu0 0.0
    %1085 = vmatprep.subr.mxu0 0.0
    %1086 = vmatpush1.msra.mxu0 0.0
    %1087 = vmatprep.subr.mxu0 0.0
    %1088 = vmatpush1.msra.mxu0 0.0
    %1089 = vmatprep.subr.mxu0 0.0
    %1090 = vmatpush1.msra.mxu0 0.0
    %1091 = vmatprep.subr.mxu0 0.0
    %1092 = vmatpush1.msra.mxu0 0.0
    %1093 = vmatprep.subr.mxu0 0.0
    %1094 = vmatpush1.msra.mxu0 0.0
    %1095 = vmatprep.subr.mxu0 0.0
    %1096 = vmatpush1.msra.mxu0 0.0
    %1097 = vmatprep.subr.mxu0 0.0
    %1098 = vmatpush1.msra.mxu0 0.0
    %1099 = vmatprep.subr.mxu0 0.0
    %1100 = vmatpush1.msra.mxu0 0.0
    %1101 = vmatprep.subr.mxu0 0.0
    %1102 = vmatpush1.msra.mxu0 0.0
    %1103 = vmatprep.subr.mxu0 0.0
    %1104 = vmatpush1.msra.mxu0 0.0
    %1105 = vmatprep.subr.mxu0 0.0
    %1106 = vmatpush1.msra.mxu0 0.0
    %1107 = vmatprep.subr.mxu0 0.0
    %1108 = vmatpush1.msra.mxu0 %v75
    %1109 = vmatprep.subr.mxu0 0.0
    %1110 = vmatpush2.msra.mxu0 0.0
    %1111 = vmatprep.subr.mxu0 0.0
    %1112 = vmatpush2.msra.mxu0 0.0
    %1113 = vmatprep.subr.mxu0 0.0
    %1114 = vmatpush2.msra.mxu0 0.0
    %1115 = vmatprep.subr.mxu0 0.0
    %1116 = vmatpush2.msra.mxu0 0.0
    %1117 = vmatprep.subr.mxu0 0.0
    %1118 = vmatpush2.msra.mxu0 0.0
    %1119 = vmatprep.subr.mxu0 0.0
    %1120 = vmatpush2.msra.mxu0 0.0
    %1121 = vmatprep.subr.mxu0 0.0
    %1122 = vmatpush2.msra.mxu0 0.0
    %1123 = vmatprep.subr.mxu0 0.0
    %1124 = vmatpush2.msra.mxu0 0.0
    %1125 = vmatprep.subr.mxu0 0.0
    %1126 = vmatpush2.msra.mxu0 0.0
    %1127 = vmatprep.subr.mxu0 0.0
    %1128 = vmatpush2.msra.mxu0 0.0
    %1129 = vmatprep.subr.mxu0 0.0
    %1130 = vmatpush2.msra.mxu0 0.0
    %1131 = vmatprep.subr.mxu0 0.0
    %1132 = vmatpush2.msra.mxu0 0.0
    %1133 = vmatprep.subr.mxu0 0.0
    %1134 = vmatpush2.msra.mxu0 0.0
    %1135 = vmatprep.subr.mxu0 0.0
    %1136 = vmatpush2.msra.mxu0 0.0
    %1137 = vmatprep.subr.mxu0 0.0
    %1138 = vmatpush2.msra.mxu0 0.0
    %1139 = vmatprep.subr.mxu0 0.0
    %1140 = vmatpush2.msra.mxu0 0.0
    %1141 = vmatprep.mubr.f32.mxu0 0.0
    %1142 = vmatmul.mubr.f32.gmra.mxu0 %v1075
    %v1143 = vpop.f32.mrf.mxu0
    %v1144 = vadd.f32 0.0, %v1143
    %v1145 = vpop.f32.mrf.mxu0
    %1146 = vdwg.mxu0
    %vm1147 = vcmask 256000
    %1148 = vst.msk [vmem:[%s23] sm:$0x7] %vm1147, %v1071
    %1149 = vst.msk [vmem:[%s23 + $0x4] sm:$0x7] %vm1147, %v1144
    %v1150 = vsel %vm1147, %v1071, 0.0
    %v1151 = vrot.slane %v1150, 4
    %v1152 = vadd.f32 %v1150, %v1151
    %v1153 = vrot.slane %v1152, 2
    %v1154 = vadd.f32 %v1152, %v1153
    %v1155 = vrot.slane %v1154, 1
    %v1156 = vadd.f32 %v1154, %v1155
    %v1157 = vsel %vm1147, %v1144, 0.0
    %v1158 = vrot.slane %v1157, 4
    %v1159 = vadd.f32 %v1157, %v1158
    %v1160 = vrot.slane %v1159, 2
    %v1161 = vadd.f32 %v1159, %v1160
    %v1162 = vrot.slane %v1161, 1
    %v1163 = vadd.f32 %v1161, %v1162
    %v1164 = vrcp.pop 3.0
    %v1165 = vmul.f32 %v1156, %v1164
    %v1166 = vmul.f32 %v1163, %v1164
    %v1169 = vsel %vm294, %v1166, %v1165
    %1171 = vst.msk [vmem:[#allocation6] sm:$0x3] %vm656, %v1169
    %v1172 = vld [vmem:[%s14] sm:$0xff]
    %v1173 = vld [vmem:[%s14 + $0x8] sm:$0xff]
    %v1174 = vld [vmem:[%s14 + $0x10] sm:$0xff]
    %v1175 = vld [vmem:[%s14 + $0x18] sm:$0xff]
    %v1176 = vld [vmem:[%s15] sm:$0xff]
    %v1177 = vld [vmem:[%s15 + $0x8] sm:$0xff]
    %v1178 = vld [vmem:[%s15 + $0x10] sm:$0xff]
    %v1179 = vld [vmem:[%s15 + $0x18] sm:$0xff]
    %v1182 = vrot.slane %v1144, 7
    %v1183 = vsel %vm294, %v1182, %v1071
    %v1184 = vsel %vm166, %v1183, 0
    %1186 = vmatprep.subr.mxu0 0.0
    %1187 = vmatpush1.msra.mxu0 0.0
    %1188 = vmatprep.subr.mxu0 0.0
    %1189 = vmatpush1.msra.mxu0 0.0
    %1190 = vmatprep.subr.mxu0 0.0
    %1191 = vmatpush1.msra.mxu0 0.0
    %1192 = vmatprep.subr.mxu0 0.0
    %1193 = vmatpush1.msra.mxu0 0.0
    %1194 = vmatprep.subr.mxu0 0.0
    %1195 = vmatpush1.msra.mxu0 0.0
    %1196 = vmatprep.subr.mxu0 0.0
    %1197 = vmatpush1.msra.mxu0 0.0
    %1198 = vmatprep.subr.mxu0 0.0
    %1199 = vmatpush1.msra.mxu0 0.0
    %1200 = vmatprep.subr.mxu0 0.0
    %1201 = vmatpush1.msra.mxu0 0.0
    %1202 = vmatprep.subr.mxu0 0.0
    %1203 = vmatpush1.msra.mxu0 0.0
    %1204 = vmatprep.subr.mxu0 0.0
    %1205 = vmatpush1.msra.mxu0 0.0
    %1206 = vmatprep.subr.mxu0 0.0
    %1207 = vmatpush1.msra.mxu0 0.0
    %1208 = vmatprep.subr.mxu0 0.0
    %1209 = vmatpush1.msra.mxu0 0.0
    %1210 = vmatprep.subr.mxu0 0.0
    %1211 = vmatpush1.msra.mxu0 %v1179
    %1212 = vmatprep.subr.mxu0 0.0
    %1213 = vmatpush1.msra.mxu0 %v1178
    %1214 = vmatprep.subr.mxu0 0.0
    %1215 = vmatpush1.msra.mxu0 %v1177
    %1216 = vmatprep.subr.mxu0 0.0
    %1217 = vmatpush1.msra.mxu0 %v1176
    %1218 = vmatprep.subr.mxu0 0.0
    %1219 = vmatpush2.msra.mxu0 0.0
    %1220 = vmatprep.subr.mxu0 0.0
    %1221 = vmatpush2.msra.mxu0 0.0
    %1222 = vmatprep.subr.mxu0 0.0
    %1223 = vmatpush2.msra.mxu0 0.0
    %1224 = vmatprep.subr.mxu0 0.0
    %1225 = vmatpush2.msra.mxu0 0.0
    %1226 = vmatprep.subr.mxu0 0.0
    %1227 = vmatpush2.msra.mxu0 0.0
    %1228 = vmatprep.subr.mxu0 0.0
    %1229 = vmatpush2.msra.mxu0 0.0
    %1230 = vmatprep.subr.mxu0 0.0
    %1231 = vmatpush2.msra.mxu0 0.0
    %1232 = vmatprep.subr.mxu0 0.0
    %1233 = vmatpush2.msra.mxu0 0.0
    %1234 = vmatprep.subr.mxu0 0.0
    %1235 = vmatpush2.msra.mxu0 0.0
    %1236 = vmatprep.subr.mxu0 0.0
    %1237 = vmatpush2.msra.mxu0 0.0
    %1238 = vmatprep.subr.mxu0 0.0
    %1239 = vmatpush2.msra.mxu0 0.0
    %1240 = vmatprep.subr.mxu0 0.0
    %1241 = vmatpush2.msra.mxu0 0.0
    %1242 = vmatprep.subr.mxu0 0.0
    %1243 = vmatpush2.msra.mxu0 0.0
    %1244 = vmatprep.subr.mxu0 0.0
    %1245 = vmatpush2.msra.mxu0 0.0
    %1246 = vmatprep.subr.mxu0 0.0
    %1247 = vmatpush2.msra.mxu0 0.0
    %1248 = vmatprep.subr.mxu0 0.0
    %1249 = vmatpush2.msra.mxu0 0.0
    %1250 = vmatprep.mubr.f32.mxu0 0.0
    %1251 = vmatmul.mubr.f32.gmra.mxu0 %v1184
    %v1252 = vpop.f32.mrf.mxu0
    %v1253 = vadd.f32 0.0, %v1252
    %v1254 = vpop.f32.mrf.mxu0
    %1255 = vdwg.mxu0
    %v1256 = vrot.slane %v1071, 2
    %v1257 = vrot.slane %v1144, 1
    %v1258 = vsel %vm294, %v1257, %v1256
    %v1259 = vsel %vm166, %v1258, 0
    %1261 = vmatprep.subr.mxu0 0.0
    %1262 = vmatpush1.msra.mxu0 0.0
    %1263 = vmatprep.subr.mxu0 0.0
    %1264 = vmatpush1.msra.mxu0 0.0
    %1265 = vmatprep.subr.mxu0 0.0
    %1266 = vmatpush1.msra.mxu0 0.0
    %1267 = vmatprep.subr.mxu0 0.0
    %1268 = vmatpush1.msra.mxu0 0.0
    %1269 = vmatprep.subr.mxu0 0.0
    %1270 = vmatpush1.msra.mxu0 0.0
    %1271 = vmatprep.subr.mxu0 0.0
    %1272 = vmatpush1.msra.mxu0 0.0
    %1273 = vmatprep.subr.mxu0 0.0
    %1274 = vmatpush1.msra.mxu0 0.0
    %1275 = vmatprep.subr.mxu0 0.0
    %1276 = vmatpush1.msra.mxu0 0.0
    %1277 = vmatprep.subr.mxu0 0.0
    %1278 = vmatpush1.msra.mxu0 0.0
    %1279 = vmatprep.subr.mxu0 0.0
    %1280 = vmatpush1.msra.mxu0 0.0
    %1281 = vmatprep.subr.mxu0 0.0
    %1282 = vmatpush1.msra.mxu0 0.0
    %1283 = vmatprep.subr.mxu0 0.0
    %1284 = vmatpush1.msra.mxu0 0.0
    %1285 = vmatprep.subr.mxu0 0.0
    %1286 = vmatpush1.msra.mxu0 %v1175
    %1287 = vmatprep.subr.mxu0 0.0
    %1288 = vmatpush1.msra.mxu0 %v1174
    %1289 = vmatprep.subr.mxu0 0.0
    %1290 = vmatpush1.msra.mxu0 %v1173
    %1291 = vmatprep.subr.mxu0 0.0
    %1292 = vmatpush1.msra.mxu0 %v1172
    %1293 = vmatprep.subr.mxu0 0.0
    %1294 = vmatpush2.msra.mxu0 0.0
    %1295 = vmatprep.subr.mxu0 0.0
    %1296 = vmatpush2.msra.mxu0 0.0
    %1297 = vmatprep.subr.mxu0 0.0
    %1298 = vmatpush2.msra.mxu0 0.0
    %1299 = vmatprep.subr.mxu0 0.0
    %1300 = vmatpush2.msra.mxu0 0.0
    %1301 = vmatprep.subr.mxu0 0.0
    %1302 = vmatpush2.msra.mxu0 0.0
    %1303 = vmatprep.subr.mxu0 0.0
    %1304 = vmatpush2.msra.mxu0 0.0
    %1305 = vmatprep.subr.mxu0 0.0
    %1306 = vmatpush2.msra.mxu0 0.0
    %1307 = vmatprep.subr.mxu0 0.0
    %1308 = vmatpush2.msra.mxu0 0.0
    %1309 = vmatprep.subr.mxu0 0.0
    %1310 = vmatpush2.msra.mxu0 0.0
    %1311 = vmatprep.subr.mxu0 0.0
    %1312 = vmatpush2.msra.mxu0 0.0
    %1313 = vmatprep.subr.mxu0 0.0
    %1314 = vmatpush2.msra.mxu0 0.0
    %1315 = vmatprep.subr.mxu0 0.0
    %1316 = vmatpush2.msra.mxu0 0.0
    %1317 = vmatprep.subr.mxu0 0.0
    %1318 = vmatpush2.msra.mxu0 0.0
    %1319 = vmatprep.subr.mxu0 0.0
    %1320 = vmatpush2.msra.mxu0 0.0
    %1321 = vmatprep.subr.mxu0 0.0
    %1322 = vmatpush2.msra.mxu0 0.0
    %1323 = vmatprep.subr.mxu0 0.0
    %1324 = vmatpush2.msra.mxu0 0.0
    %1325 = vmatprep.mubr.f32.mxu0 0.0
    %1326 = vmatmul.mubr.f32.gmra.mxu0 %v1259
    %v1327 = vpop.f32.mrf.mxu0
    %v1328 = vadd.f32 %v1253, %v1327
    %v1329 = vpop.f32.mrf.mxu0
    %1330 = vdwg.mxu0
    %v1331 = vtanh.pop %v1328
    %s1332 = scalar_lea.vmem %s14, 32
    %v1333 = vld [vmem:[%s1332] sm:$0xff]
    %v1334 = vld [vmem:[%s1332 + $0x8] sm:$0xff]
    %v1335 = vld [vmem:[%s1332 + $0x10] sm:$0xff]
    %v1336 = vld [vmem:[%s1332 + $0x18] sm:$0xff]
    %s1337 = scalar_lea.vmem %s15, 32
    %v1338 = vld [vmem:[%s1337] sm:$0xff]
    %v1339 = vld [vmem:[%s1337 + $0x8] sm:$0xff]
    %v1340 = vld [vmem:[%s1337 + $0x10] sm:$0xff]
    %v1341 = vld [vmem:[%s1337 + $0x18] sm:$0xff]
    %v1342 = vrot.slane %v1071, 1
    %v1343 = vsel %vm294, %v1144, %v1342
    %v1344 = vsel %vm166, %v1343, 0
    %1346 = vmatprep.subr.mxu0 0.0
    %1347 = vmatpush1.msra.mxu0 0.0
    %1348 = vmatprep.subr.mxu0 0.0
    %1349 = vmatpush1.msra.mxu0 0.0
    %1350 = vmatprep.subr.mxu0 0.0
    %1351 = vmatpush1.msra.mxu0 0.0
    %1352 = vmatprep.subr.mxu0 0.0
    %1353 = vmatpush1.msra.mxu0 0.0
    %1354 = vmatprep.subr.mxu0 0.0
    %1355 = vmatpush1.msra.mxu0 0.0
    %1356 = vmatprep.subr.mxu0 0.0
    %1357 = vmatpush1.msra.mxu0 0.0
    %1358 = vmatprep.subr.mxu0 0.0
    %1359 = vmatpush1.msra.mxu0 0.0
    %1360 = vmatprep.subr.mxu0 0.0
    %1361 = vmatpush1.msra.mxu0 0.0
    %1362 = vmatprep.subr.mxu0 0.0
    %1363 = vmatpush1.msra.mxu0 0.0
    %1364 = vmatprep.subr.mxu0 0.0
    %1365 = vmatpush1.msra.mxu0 0.0
    %1366 = vmatprep.subr.mxu0 0.0
    %1367 = vmatpush1.msra.mxu0 0.0
    %1368 = vmatprep.subr.mxu0 0.0
    %1369 = vmatpush1.msra.mxu0 0.0
    %1370 = vmatprep.subr.mxu0 0.0
    %1371 = vmatpush1.msra.mxu0 %v1341
    %1372 = vmatprep.subr.mxu0 0.0
    %1373 = vmatpush1.msra.mxu0 %v1340
    %1374 = vmatprep.subr.mxu0 0.0
    %1375 = vmatpush1.msra.mxu0 %v1339
    %1376 = vmatprep.subr.mxu0 0.0
    %1377 = vmatpush1.msra.mxu0 %v1338
    %1378 = vmatprep.subr.mxu0 0.0
    %1379 = vmatpush2.msra.mxu0 0.0
    %1380 = vmatprep.subr.mxu0 0.0
    %1381 = vmatpush2.msra.mxu0 0.0
    %1382 = vmatprep.subr.mxu0 0.0
    %1383 = vmatpush2.msra.mxu0 0.0
    %1384 = vmatprep.subr.mxu0 0.0
    %1385 = vmatpush2.msra.mxu0 0.0
    %1386 = vmatprep.subr.mxu0 0.0
    %1387 = vmatpush2.msra.mxu0 0.0
    %1388 = vmatprep.subr.mxu0 0.0
    %1389 = vmatpush2.msra.mxu0 0.0
    %1390 = vmatprep.subr.mxu0 0.0
    %1391 = vmatpush2.msra.mxu0 0.0
    %1392 = vmatprep.subr.mxu0 0.0
    %1393 = vmatpush2.msra.mxu0 0.0
    %1394 = vmatprep.subr.mxu0 0.0
    %1395 = vmatpush2.msra.mxu0 0.0
    %1396 = vmatprep.subr.mxu0 0.0
    %1397 = vmatpush2.msra.mxu0 0.0
    %1398 = vmatprep.subr.mxu0 0.0
    %1399 = vmatpush2.msra.mxu0 0.0
    %1400 = vmatprep.subr.mxu0 0.0
    %1401 = vmatpush2.msra.mxu0 0.0
    %1402 = vmatprep.subr.mxu0 0.0
    %1403 = vmatpush2.msra.mxu0 0.0
    %1404 = vmatprep.subr.mxu0 0.0
    %1405 = vmatpush2.msra.mxu0 0.0
    %1406 = vmatprep.subr.mxu0 0.0
    %1407 = vmatpush2.msra.mxu0 0.0
    %1408 = vmatprep.subr.mxu0 0.0
    %1409 = vmatpush2.msra.mxu0 0.0
    %1410 = vmatprep.mubr.f32.mxu0 0.0
    %1411 = vmatmul.mubr.f32.gmra.mxu0 %v1344
    %v1412 = vpop.f32.mrf.mxu0
    %v1413 = vadd.f32 0.0, %v1412
    %v1414 = vpop.f32.mrf.mxu0
    %1415 = vdwg.mxu0
    %1416 = vmatprep.subr.mxu0 0.0
    %1417 = vmatpush1.msra.mxu0 0.0
    %1418 = vmatprep.subr.mxu0 0.0
    %1419 = vmatpush1.msra.mxu0 0.0
    %1420 = vmatprep.subr.mxu0 0.0
    %1421 = vmatpush1.msra.mxu0 0.0
    %1422 = vmatprep.subr.mxu0 0.0
    %1423 = vmatpush1.msra.mxu0 0.0
    %1424 = vmatprep.subr.mxu0 0.0
    %1425 = vmatpush1.msra.mxu0 0.0
    %1426 = vmatprep.subr.mxu0 0.0
    %1427 = vmatpush1.msra.mxu0 0.0
    %1428 = vmatprep.subr.mxu0 0.0
    %1429 = vmatpush1.msra.mxu0 0.0
    %1430 = vmatprep.subr.mxu0 0.0
    %1431 = vmatpush1.msra.mxu0 0.0
    %1432 = vmatprep.subr.mxu0 0.0
    %1433 = vmatpush1.msra.mxu0 0.0
    %1434 = vmatprep.subr.mxu0 0.0
    %1435 = vmatpush1.msra.mxu0 0.0
    %1436 = vmatprep.subr.mxu0 0.0
    %1437 = vmatpush1.msra.mxu0 0.0
    %1438 = vmatprep.subr.mxu0 0.0
    %1439 = vmatpush1.msra.mxu0 0.0
    %1440 = vmatprep.subr.mxu0 0.0
    %1441 = vmatpush1.msra.mxu0 %v1336
    %1442 = vmatprep.subr.mxu0 0.0
    %1443 = vmatpush1.msra.mxu0 %v1335
    %1444 = vmatprep.subr.mxu0 0.0
    %1445 = vmatpush1.msra.mxu0 %v1334
    %1446 = vmatprep.subr.mxu0 0.0
    %1447 = vmatpush1.msra.mxu0 %v1333
    %1448 = vmatprep.subr.mxu0 0.0
    %1449 = vmatpush2.msra.mxu0 0.0
    %1450 = vmatprep.subr.mxu0 0.0
    %1451 = vmatpush2.msra.mxu0 0.0
    %1452 = vmatprep.subr.mxu0 0.0
    %1453 = vmatpush2.msra.mxu0 0.0
    %1454 = vmatprep.subr.mxu0 0.0
    %1455 = vmatpush2.msra.mxu0 0.0
    %1456 = vmatprep.subr.mxu0 0.0
    %1457 = vmatpush2.msra.mxu0 0.0
    %1458 = vmatprep.subr.mxu0 0.0
    %1459 = vmatpush2.msra.mxu0 0.0
    %1460 = vmatprep.subr.mxu0 0.0
    %1461 = vmatpush2.msra.mxu0 0.0
    %1462 = vmatprep.subr.mxu0 0.0
    %1463 = vmatpush2.msra.mxu0 0.0
    %1464 = vmatprep.subr.mxu0 0.0
    %1465 = vmatpush2.msra.mxu0 0.0
    %1466 = vmatprep.subr.mxu0 0.0
    %1467 = vmatpush2.msra.mxu0 0.0
    %1468 = vmatprep.subr.mxu0 0.0
    %1469 = vmatpush2.msra.mxu0 0.0
    %1470 = vmatprep.subr.mxu0 0.0
    %1471 = vmatpush2.msra.mxu0 0.0
    %1472 = vmatprep.subr.mxu0 0.0
    %1473 = vmatpush2.msra.mxu0 0.0
    %1474 = vmatprep.subr.mxu0 0.0
    %1475 = vmatpush2.msra.mxu0 0.0
    %1476 = vmatprep.subr.mxu0 0.0
    %1477 = vmatpush2.msra.mxu0 0.0
    %1478 = vmatprep.subr.mxu0 0.0
    %1479 = vmatpush2.msra.mxu0 0.0
    %1480 = vmatprep.mubr.f32.mxu0 0.0
    %1481 = vmatmul.mubr.f32.gmra.mxu0 %v1184
    %v1482 = vpop.f32.mrf.mxu0
    %v1483 = vadd.f32 %v1413, %v1482
    %v1484 = vpop.f32.mrf.mxu0
    %1485 = vdwg.mxu0
    %v1486 = vtanh.pop %v1483
    %s1487 = scalar_lea.vmem %s14, 64
    %v1488 = vld [vmem:[%s1487] sm:$0xff]
    %v1489 = vld [vmem:[%s1487 + $0x8] sm:$0xff]
    %v1490 = vld [vmem:[%s1487 + $0x10] sm:$0xff]
    %v1491 = vld [vmem:[%s1487 + $0x18] sm:$0xff]
    %s1492 = scalar_lea.vmem %s15, 64
    %v1493 = vld [vmem:[%s1492] sm:$0xff]
    %v1494 = vld [vmem:[%s1492 + $0x8] sm:$0xff]
    %v1495 = vld [vmem:[%s1492 + $0x10] sm:$0xff]
    %v1496 = vld [vmem:[%s1492 + $0x18] sm:$0xff]
    %1497 = vmatprep.subr.mxu0 0.0
    %1498 = vmatpush1.msra.mxu0 0.0
    %1499 = vmatprep.subr.mxu0 0.0
    %1500 = vmatpush1.msra.mxu0 0.0
    %1501 = vmatprep.subr.mxu0 0.0
    %1502 = vmatpush1.msra.mxu0 0.0
    %1503 = vmatprep.subr.mxu0 0.0
    %1504 = vmatpush1.msra.mxu0 0.0
    %1505 = vmatprep.subr.mxu0 0.0
    %1506 = vmatpush1.msra.mxu0 0.0
    %1507 = vmatprep.subr.mxu0 0.0
    %1508 = vmatpush1.msra.mxu0 0.0
    %1509 = vmatprep.subr.mxu0 0.0
    %1510 = vmatpush1.msra.mxu0 0.0
    %1511 = vmatprep.subr.mxu0 0.0
    %1512 = vmatpush1.msra.mxu0 0.0
    %1513 = vmatprep.subr.mxu0 0.0
    %1514 = vmatpush1.msra.mxu0 0.0
    %1515 = vmatprep.subr.mxu0 0.0
    %1516 = vmatpush1.msra.mxu0 0.0
    %1517 = vmatprep.subr.mxu0 0.0
    %1518 = vmatpush1.msra.mxu0 0.0
    %1519 = vmatprep.subr.mxu0 0.0
    %1520 = vmatpush1.msra.mxu0 0.0
    %1521 = vmatprep.subr.mxu0 0.0
    %1522 = vmatpush1.msra.mxu0 %v1496
    %1523 = vmatprep.subr.mxu0 0.0
    %1524 = vmatpush1.msra.mxu0 %v1495
    %1525 = vmatprep.subr.mxu0 0.0
    %1526 = vmatpush1.msra.mxu0 %v1494
    %1527 = vmatprep.subr.mxu0 0.0
    %1528 = vmatpush1.msra.mxu0 %v1493
    %1529 = vmatprep.subr.mxu0 0.0
    %1530 = vmatpush2.msra.mxu0 0.0
    %1531 = vmatprep.subr.mxu0 0.0
    %1532 = vmatpush2.msra.mxu0 0.0
    %1533 = vmatprep.subr.mxu0 0.0
    %1534 = vmatpush2.msra.mxu0 0.0
    %1535 = vmatprep.subr.mxu0 0.0
    %1536 = vmatpush2.msra.mxu0 0.0
    %1537 = vmatprep.subr.mxu0 0.0
    %1538 = vmatpush2.msra.mxu0 0.0
    %1539 = vmatprep.subr.mxu0 0.0
    %1540 = vmatpush2.msra.mxu0 0.0
    %1541 = vmatprep.subr.mxu0 0.0
    %1542 = vmatpush2.msra.mxu0 0.0
    %1543 = vmatprep.subr.mxu0 0.0
    %1544 = vmatpush2.msra.mxu0 0.0
    %1545 = vmatprep.subr.mxu0 0.0
    %1546 = vmatpush2.msra.mxu0 0.0
    %1547 = vmatprep.subr.mxu0 0.0
    %1548 = vmatpush2.msra.mxu0 0.0
    %1549 = vmatprep.subr.mxu0 0.0
    %1550 = vmatpush2.msra.mxu0 0.0
    %1551 = vmatprep.subr.mxu0 0.0
    %1552 = vmatpush2.msra.mxu0 0.0
    %1553 = vmatprep.subr.mxu0 0.0
    %1554 = vmatpush2.msra.mxu0 0.0
    %1555 = vmatprep.subr.mxu0 0.0
    %1556 = vmatpush2.msra.mxu0 0.0
    %1557 = vmatprep.subr.mxu0 0.0
    %1558 = vmatpush2.msra.mxu0 0.0
    %1559 = vmatprep.subr.mxu0 0.0
    %1560 = vmatpush2.msra.mxu0 0.0
    %1561 = vmatprep.mubr.f32.mxu0 0.0
    %1562 = vmatmul.mubr.f32.gmra.mxu0 %v1259
    %v1563 = vpop.f32.mrf.mxu0
    %v1564 = vadd.f32 0.0, %v1563
    %v1565 = vpop.f32.mrf.mxu0
    %1566 = vdwg.mxu0
    %1567 = vmatprep.subr.mxu0 0.0
    %1568 = vmatpush1.msra.mxu0 0.0
    %1569 = vmatprep.subr.mxu0 0.0
    %1570 = vmatpush1.msra.mxu0 0.0
    %1571 = vmatprep.subr.mxu0 0.0
    %1572 = vmatpush1.msra.mxu0 0.0
    %1573 = vmatprep.subr.mxu0 0.0
    %1574 = vmatpush1.msra.mxu0 0.0
    %1575 = vmatprep.subr.mxu0 0.0
    %1576 = vmatpush1.msra.mxu0 0.0
    %1577 = vmatprep.subr.mxu0 0.0
    %1578 = vmatpush1.msra.mxu0 0.0
    %1579 = vmatprep.subr.mxu0 0.0
    %1580 = vmatpush1.msra.mxu0 0.0
    %1581 = vmatprep.subr.mxu0 0.0
    %1582 = vmatpush1.msra.mxu0 0.0
    %1583 = vmatprep.subr.mxu0 0.0
    %1584 = vmatpush1.msra.mxu0 0.0
    %1585 = vmatprep.subr.mxu0 0.0
    %1586 = vmatpush1.msra.mxu0 0.0
    %1587 = vmatprep.subr.mxu0 0.0
    %1588 = vmatpush1.msra.mxu0 0.0
    %1589 = vmatprep.subr.mxu0 0.0
    %1590 = vmatpush1.msra.mxu0 0.0
    %1591 = vmatprep.subr.mxu0 0.0
    %1592 = vmatpush1.msra.mxu0 %v1491
    %1593 = vmatprep.subr.mxu0 0.0
    %1594 = vmatpush1.msra.mxu0 %v1490
    %1595 = vmatprep.subr.mxu0 0.0
    %1596 = vmatpush1.msra.mxu0 %v1489
    %1597 = vmatprep.subr.mxu0 0.0
    %1598 = vmatpush1.msra.mxu0 %v1488
    %1599 = vmatprep.subr.mxu0 0.0
    %1600 = vmatpush2.msra.mxu0 0.0
    %1601 = vmatprep.subr.mxu0 0.0
    %1602 = vmatpush2.msra.mxu0 0.0
    %1603 = vmatprep.subr.mxu0 0.0
    %1604 = vmatpush2.msra.mxu0 0.0
    %1605 = vmatprep.subr.mxu0 0.0
    %1606 = vmatpush2.msra.mxu0 0.0
    %1607 = vmatprep.subr.mxu0 0.0
    %1608 = vmatpush2.msra.mxu0 0.0
    %1609 = vmatprep.subr.mxu0 0.0
    %1610 = vmatpush2.msra.mxu0 0.0
    %1611 = vmatprep.subr.mxu0 0.0
    %1612 = vmatpush2.msra.mxu0 0.0
    %1613 = vmatprep.subr.mxu0 0.0
    %1614 = vmatpush2.msra.mxu0 0.0
    %1615 = vmatprep.subr.mxu0 0.0
    %1616 = vmatpush2.msra.mxu0 0.0
    %1617 = vmatprep.subr.mxu0 0.0
    %1618 = vmatpush2.msra.mxu0 0.0
    %1619 = vmatprep.subr.mxu0 0.0
    %1620 = vmatpush2.msra.mxu0 0.0
    %1621 = vmatprep.subr.mxu0 0.0
    %1622 = vmatpush2.msra.mxu0 0.0
    %1623 = vmatprep.subr.mxu0 0.0
    %1624 = vmatpush2.msra.mxu0 0.0
    %1625 = vmatprep.subr.mxu0 0.0
    %1626 = vmatpush2.msra.mxu0 0.0
    %1627 = vmatprep.subr.mxu0 0.0
    %1628 = vmatpush2.msra.mxu0 0.0
    %1629 = vmatprep.subr.mxu0 0.0
    %1630 = vmatpush2.msra.mxu0 0.0
    %1631 = vmatprep.mubr.f32.mxu0 0.0
    %1632 = vmatmul.mubr.f32.gmra.mxu0 %v1344
    %v1633 = vpop.f32.mrf.mxu0
    %v1634 = vadd.f32 %v1564, %v1633
    %v1635 = vpop.f32.mrf.mxu0
    %1636 = vdwg.mxu0
    %v1637 = vtanh.pop %v1634
    %v1638 = vld [vmem:[%s16] sm:$0xff]
    %v1639 = vld [vmem:[%s16 + $0x8] sm:$0xff]
    %v1640 = vld [vmem:[%s16 + $0x10] sm:$0xff]
    %v1641 = vld [vmem:[%s16 + $0x18] sm:$0xff]
    %v1643 = vsel %vm166, %v1331, 0
    %1645 = vmatprep.subr.mxu0 0.0
    %1646 = vmatpush1.msra.mxu0 0.0
    %1647 = vmatprep.subr.mxu0 0.0
    %1648 = vmatpush1.msra.mxu0 0.0
    %1649 = vmatprep.subr.mxu0 0.0
    %1650 = vmatpush1.msra.mxu0 0.0
    %1651 = vmatprep.subr.mxu0 0.0
    %1652 = vmatpush1.msra.mxu0 0.0
    %1653 = vmatprep.subr.mxu0 0.0
    %1654 = vmatpush1.msra.mxu0 0.0
    %1655 = vmatprep.subr.mxu0 0.0
    %1656 = vmatpush1.msra.mxu0 0.0
    %1657 = vmatprep.subr.mxu0 0.0
    %1658 = vmatpush1.msra.mxu0 0.0
    %1659 = vmatprep.subr.mxu0 0.0
    %1660 = vmatpush1.msra.mxu0 0.0
    %1661 = vmatprep.subr.mxu0 0.0
    %1662 = vmatpush1.msra.mxu0 0.0
    %1663 = vmatprep.subr.mxu0 0.0
    %1664 = vmatpush1.msra.mxu0 0.0
    %1665 = vmatprep.subr.mxu0 0.0
    %1666 = vmatpush1.msra.mxu0 0.0
    %1667 = vmatprep.subr.mxu0 0.0
    %1668 = vmatpush1.msra.mxu0 0.0
    %1669 = vmatprep.subr.mxu0 0.0
    %1670 = vmatpush1.msra.mxu0 %v1641
    %1671 = vmatprep.subr.mxu0 0.0
    %1672 = vmatpush1.msra.mxu0 %v1640
    %1673 = vmatprep.subr.mxu0 0.0
    %1674 = vmatpush1.msra.mxu0 %v1639
    %1675 = vmatprep.subr.mxu0 0.0
    %1676 = vmatpush1.msra.mxu0 %v1638
    %1677 = vmatprep.subr.mxu0 0.0
    %1678 = vmatpush2.msra.mxu0 0.0
    %1679 = vmatprep.subr.mxu0 0.0
    %1680 = vmatpush2.msra.mxu0 0.0
    %1681 = vmatprep.subr.mxu0 0.0
    %1682 = vmatpush2.msra.mxu0 0.0
    %1683 = vmatprep.subr.mxu0 0.0
    %1684 = vmatpush2.msra.mxu0 0.0
    %1685 = vmatprep.subr.mxu0 0.0
    %1686 = vmatpush2.msra.mxu0 0.0
    %1687 = vmatprep.subr.mxu0 0.0
    %1688 = vmatpush2.msra.mxu0 0.0
    %1689 = vmatprep.subr.mxu0 0.0
    %1690 = vmatpush2.msra.mxu0 0.0
    %1691 = vmatprep.subr.mxu0 0.0
    %1692 = vmatpush2.msra.mxu0 0.0
    %1693 = vmatprep.subr.mxu0 0.0
    %1694 = vmatpush2.msra.mxu0 0.0
    %1695 = vmatprep.subr.mxu0 0.0
    %1696 = vmatpush2.msra.mxu0 0.0
    %1697 = vmatprep.subr.mxu0 0.0
    %1698 = vmatpush2.msra.mxu0 0.0
    %1699 = vmatprep.subr.mxu0 0.0
    %1700 = vmatpush2.msra.mxu0 0.0
    %1701 = vmatprep.subr.mxu0 0.0
    %1702 = vmatpush2.msra.mxu0 0.0
    %1703 = vmatprep.subr.mxu0 0.0
    %1704 = vmatpush2.msra.mxu0 0.0
    %1705 = vmatprep.subr.mxu0 0.0
    %1706 = vmatpush2.msra.mxu0 0.0
    %1707 = vmatprep.subr.mxu0 0.0
    %1708 = vmatpush2.msra.mxu0 0.0
    %1709 = vmatprep.mubr.f32.mxu0 0.0
    %1710 = vmatmul.mubr.f32.gmra.mxu0 %v1643
    %v1711 = vpop.f32.mrf.mxu0
    %v1712 = vadd.f32 0.0, %v1711
    %v1713 = vpop.f32.mrf.mxu0
    %1714 = vdwg.mxu0
    %s1715 = scalar_lea.vmem %s16, 32
    %v1716 = vld [vmem:[%s1715] sm:$0xff]
    %v1717 = vld [vmem:[%s1715 + $0x8] sm:$0xff]
    %v1718 = vld [vmem:[%s1715 + $0x10] sm:$0xff]
    %v1719 = vld [vmem:[%s1715 + $0x18] sm:$0xff]
    %v1721 = vsel %vm166, %v1486, 0
    %1723 = vmatprep.subr.mxu0 0.0
    %1724 = vmatpush1.msra.mxu0 0.0
    %1725 = vmatprep.subr.mxu0 0.0
    %1726 = vmatpush1.msra.mxu0 0.0
    %1727 = vmatprep.subr.mxu0 0.0
    %1728 = vmatpush1.msra.mxu0 0.0
    %1729 = vmatprep.subr.mxu0 0.0
    %1730 = vmatpush1.msra.mxu0 0.0
    %1731 = vmatprep.subr.mxu0 0.0
    %1732 = vmatpush1.msra.mxu0 0.0
    %1733 = vmatprep.subr.mxu0 0.0
    %1734 = vmatpush1.msra.mxu0 0.0
    %1735 = vmatprep.subr.mxu0 0.0
    %1736 = vmatpush1.msra.mxu0 0.0
    %1737 = vmatprep.subr.mxu0 0.0
    %1738 = vmatpush1.msra.mxu0 0.0
    %1739 = vmatprep.subr.mxu0 0.0
    %1740 = vmatpush1.msra.mxu0 0.0
    %1741 = vmatprep.subr.mxu0 0.0
    %1742 = vmatpush1.msra.mxu0 0.0
    %1743 = vmatprep.subr.mxu0 0.0
    %1744 = vmatpush1.msra.mxu0 0.0
    %1745 = vmatprep.subr.mxu0 0.0
    %1746 = vmatpush1.msra.mxu0 0.0
    %1747 = vmatprep.subr.mxu0 0.0
    %1748 = vmatpush1.msra.mxu0 %v1719
    %1749 = vmatprep.subr.mxu0 0.0
    %1750 = vmatpush1.msra.mxu0 %v1718
    %1751 = vmatprep.subr.mxu0 0.0
    %1752 = vmatpush1.msra.mxu0 %v1717
    %1753 = vmatprep.subr.mxu0 0.0
    %1754 = vmatpush1.msra.mxu0 %v1716
    %1755 = vmatprep.subr.mxu0 0.0
    %1756 = vmatpush2.msra.mxu0 0.0
    %1757 = vmatprep.subr.mxu0 0.0
    %1758 = vmatpush2.msra.mxu0 0.0
    %1759 = vmatprep.subr.mxu0 0.0
    %1760 = vmatpush2.msra.mxu0 0.0
    %1761 = vmatprep.subr.mxu0 0.0
    %1762 = vmatpush2.msra.mxu0 0.0
    %1763 = vmatprep.subr.mxu0 0.0
    %1764 = vmatpush2.msra.mxu0 0.0
    %1765 = vmatprep.subr.mxu0 0.0
    %1766 = vmatpush2.msra.mxu0 0.0
    %1767 = vmatprep.subr.mxu0 0.0
    %1768 = vmatpush2.msra.mxu0 0.0
    %1769 = vmatprep.subr.mxu0 0.0
    %1770 = vmatpush2.msra.mxu0 0.0
    %1771 = vmatprep.subr.mxu0 0.0
    %1772 = vmatpush2.msra.mxu0 0.0
    %1773 = vmatprep.subr.mxu0 0.0
    %1774 = vmatpush2.msra.mxu0 0.0
    %1775 = vmatprep.subr.mxu0 0.0
    %1776 = vmatpush2.msra.mxu0 0.0
    %1777 = vmatprep.subr.mxu0 0.0
    %1778 = vmatpush2.msra.mxu0 0.0
    %1779 = vmatprep.subr.mxu0 0.0
    %1780 = vmatpush2.msra.mxu0 0.0
    %1781 = vmatprep.subr.mxu0 0.0
    %1782 = vmatpush2.msra.mxu0 0.0
    %1783 = vmatprep.subr.mxu0 0.0
    %1784 = vmatpush2.msra.mxu0 0.0
    %1785 = vmatprep.subr.mxu0 0.0
    %1786 = vmatpush2.msra.mxu0 0.0
    %1787 = vmatprep.mubr.f32.mxu0 0.0
    %1788 = vmatmul.mubr.f32.gmra.mxu0 %v1721
    %v1789 = vpop.f32.mrf.mxu0
    %v1790 = vadd.f32 0.0, %v1789
    %v1791 = vpop.f32.mrf.mxu0
    %1792 = vdwg.mxu0
    %s1793 = scalar_lea.vmem %s16, 64
    %v1794 = vld [vmem:[%s1793] sm:$0xff]
    %v1795 = vld [vmem:[%s1793 + $0x8] sm:$0xff]
    %v1796 = vld [vmem:[%s1793 + $0x10] sm:$0xff]
    %v1797 = vld [vmem:[%s1793 + $0x18] sm:$0xff]
    %v1799 = vsel %vm166, %v1637, 0
    %1801 = vmatprep.subr.mxu0 0.0
    %1802 = vmatpush1.msra.mxu0 0.0
    %1803 = vmatprep.subr.mxu0 0.0
    %1804 = vmatpush1.msra.mxu0 0.0
    %1805 = vmatprep.subr.mxu0 0.0
    %1806 = vmatpush1.msra.mxu0 0.0
    %1807 = vmatprep.subr.mxu0 0.0
    %1808 = vmatpush1.msra.mxu0 0.0
    %1809 = vmatprep.subr.mxu0 0.0
    %1810 = vmatpush1.msra.mxu0 0.0
    %1811 = vmatprep.subr.mxu0 0.0
    %1812 = vmatpush1.msra.mxu0 0.0
    %1813 = vmatprep.subr.mxu0 0.0
    %1814 = vmatpush1.msra.mxu0 0.0
    %1815 = vmatprep.subr.mxu0 0.0
    %1816 = vmatpush1.msra.mxu0 0.0
    %1817 = vmatprep.subr.mxu0 0.0
    %1818 = vmatpush1.msra.mxu0 0.0
    %1819 = vmatprep.subr.mxu0 0.0
    %1820 = vmatpush1.msra.mxu0 0.0
    %1821 = vmatprep.subr.mxu0 0.0
    %1822 = vmatpush1.msra.mxu0 0.0
    %1823 = vmatprep.subr.mxu0 0.0
    %1824 = vmatpush1.msra.mxu0 0.0
    %1825 = vmatprep.subr.mxu0 0.0
    %1826 = vmatpush1.msra.mxu0 %v1797
    %1827 = vmatprep.subr.mxu0 0.0
    %1828 = vmatpush1.msra.mxu0 %v1796
    %1829 = vmatprep.subr.mxu0 0.0
    %1830 = vmatpush1.msra.mxu0 %v1795
    %1831 = vmatprep.subr.mxu0 0.0
    %1832 = vmatpush1.msra.mxu0 %v1794
    %1833 = vmatprep.subr.mxu0 0.0
    %1834 = vmatpush2.msra.mxu0 0.0
    %1835 = vmatprep.subr.mxu0 0.0
    %1836 = vmatpush2.msra.mxu0 0.0
    %1837 = vmatprep.subr.mxu0 0.0
    %1838 = vmatpush2.msra.mxu0 0.0
    %1839 = vmatprep.subr.mxu0 0.0
    %1840 = vmatpush2.msra.mxu0 0.0
    %1841 = vmatprep.subr.mxu0 0.0
    %1842 = vmatpush2.msra.mxu0 0.0
    %1843 = vmatprep.subr.mxu0 0.0
    %1844 = vmatpush2.msra.mxu0 0.0
    %1845 = vmatprep.subr.mxu0 0.0
    %1846 = vmatpush2.msra.mxu0 0.0
    %1847 = vmatprep.subr.mxu0 0.0
    %1848 = vmatpush2.msra.mxu0 0.0
    %1849 = vmatprep.subr.mxu0 0.0
    %1850 = vmatpush2.msra.mxu0 0.0
    %1851 = vmatprep.subr.mxu0 0.0
    %1852 = vmatpush2.msra.mxu0 0.0
    %1853 = vmatprep.subr.mxu0 0.0
    %1854 = vmatpush2.msra.mxu0 0.0
    %1855 = vmatprep.subr.mxu0 0.0
    %1856 = vmatpush2.msra.mxu0 0.0
    %1857 = vmatprep.subr.mxu0 0.0
    %1858 = vmatpush2.msra.mxu0 0.0
    %1859 = vmatprep.subr.mxu0 0.0
    %1860 = vmatpush2.msra.mxu0 0.0
    %1861 = vmatprep.subr.mxu0 0.0
    %1862 = vmatpush2.msra.mxu0 0.0
    %1863 = vmatprep.subr.mxu0 0.0
    %1864 = vmatpush2.msra.mxu0 0.0
    %1865 = vmatprep.mubr.f32.mxu0 0.0
    %1866 = vmatmul.mubr.f32.gmra.mxu0 %v1799
    %v1867 = vpop.f32.mrf.mxu0
    %v1868 = vadd.f32 0.0, %v1867
    %v1869 = vpop.f32.mrf.mxu0
    %1870 = vdwg.mxu0
    %v1873 = vunpack.c.l.s4 1966171168
    %v1874 = vunpack.c.0.s8 %v1873
    %v1875 = vlaneseq
    %v1876 = vshrl.u32 %v1875, 7
    %v1877 = vsub.s32 %v1874, %v1876
    %v1878 = vrot.slane %v1712, %v1877
    %v1879 = vcombine.high %v1878, %v1878
    %v1881 = vunpack.c.l.s4 1966171168
    %v1882 = vunpack.c.0.s8 %v1881
    %v1883 = vlaneseq
    %v1884 = vshrl.u32 %v1883, 7
    %v1885 = vsub.s32 %v1882, %v1884
    %v1886 = vrot.slane %v1878, %v1885
    %v1888 = vunpack.c.l.s4 1966171168
    %v1889 = vunpack.c.0.s8 %v1888
    %v1890 = vlaneseq
    %v1891 = vshrl.u32 %v1890, 7
    %v1892 = vsub.s32 %v1889, %v1891
    %v1893 = vrot.slane %v1879, %v1892
    %v1898 = vunpack.c.l.s4 1966171168
    %v1899 = vunpack.c.0.s8 %v1898
    %v1900 = vlaneseq
    %v1901 = vshrl.u32 %v1900, 7
    %v1902 = vsub.s32 %v1899, %v1901
    %v1903 = vrot.slane %v1790, %v1902
    %v1904 = vcombine.high %v1903, %v1903
    %v1906 = vunpack.c.l.s4 1966171168
    %v1907 = vunpack.c.0.s8 %v1906
    %v1908 = vlaneseq
    %v1909 = vshrl.u32 %v1908, 7
    %v1910 = vsub.s32 %v1907, %v1909
    %v1911 = vrot.slane %v1903, %v1910
    %v1913 = vunpack.c.l.s4 1966171168
    %v1914 = vunpack.c.0.s8 %v1913
    %v1915 = vlaneseq
    %v1916 = vshrl.u32 %v1915, 7
    %v1917 = vsub.s32 %v1914, %v1916
    %v1918 = vrot.slane %v1904, %v1917
    %v1921 = vunpack.c.l.s4 1966171168
    %v1922 = vunpack.c.0.s8 %v1921
    %v1923 = vlaneseq
    %v1924 = vshrl.u32 %v1923, 7
    %v1925 = vsub.s32 %v1922, %v1924
    %v1926 = vrot.slane %v1868, %v1925
    %v1927 = vcombine.high %v1926, %v1926
    %v1929 = vunpack.c.l.s4 1966171168
    %v1930 = vunpack.c.0.s8 %v1929
    %v1931 = vlaneseq
    %v1932 = vshrl.u32 %v1931, 7
    %v1933 = vsub.s32 %v1930, %v1932
    %v1934 = vrot.slane %v1926, %v1933
    %v1936 = vunpack.c.l.s4 1966171168
    %v1937 = vunpack.c.0.s8 %v1936
    %v1938 = vlaneseq
    %v1939 = vshrl.u32 %v1938, 7
    %v1940 = vsub.s32 %v1937, %v1939
    %v1941 = vrot.slane %v1927, %v1940
    %v1942 = vlaneseq
    %v1943 = vshrl.u32 %v1942, 7
    %v1944 = vsub.s32 0, %v1943
    %v1945 = vrot.slane %v1911, %v1944
    %v1946 = vlaneseq
    %v1947 = vshrl.u32 %v1946, 7
    %v1948 = vsub.s32 0, %v1947
    %v1949 = vrot.slane %v1918, %v1948
    %v1952 = vlaneseq
    %v1953 = vshrl.u32 %v1952, 7
    %v1954 = vsub.s32 0, %v1953
    %v1955 = vrot.slane %v1934, %v1954
    %v1956 = vlaneseq
    %v1957 = vshrl.u32 %v1956, 7
    %v1958 = vsub.s32 0, %v1957
    %v1959 = vrot.slane %v1941, %v1958
    %v1962 = vsel %vm784, %v1886, %v1945
    %v1963 = vsel %vm784, %v1893, %v1949
    %v1964 = vsel %vm787, %v1962, %v1955
    %v1965 = vsel %vm787, %v1963, %v1959
    %v1967 = vsel %vm166, %v1964, 0
    %1969 = vmatprep.subr.mxu0 0.0
    %1970 = vmatpush1.xpose.msra.mxu0 0.0
    %1971 = vmatprep.subr.mxu0 0.0
    %1972 = vmatpush1.xpose.msra.mxu0 0.0
    %1973 = vmatprep.subr.mxu0 0.0
    %1974 = vmatpush1.xpose.msra.mxu0 0.0
    %1975 = vmatprep.subr.mxu0 0.0
    %1976 = vmatpush1.xpose.msra.mxu0 0.0
    %1977 = vmatprep.subr.mxu0 0.0
    %1978 = vmatpush1.xpose.msra.mxu0 0.0
    %1979 = vmatprep.subr.mxu0 0.0
    %1980 = vmatpush1.xpose.msra.mxu0 0.0
    %1981 = vmatprep.subr.mxu0 0.0
    %1982 = vmatpush1.xpose.msra.mxu0 0.0
    %1983 = vmatprep.subr.mxu0 0.0
    %1984 = vmatpush1.xpose.msra.mxu0 0.0
    %1985 = vmatprep.subr.mxu0 0.0
    %1986 = vmatpush1.xpose.msra.mxu0 0.0
    %1987 = vmatprep.subr.mxu0 0.0
    %1988 = vmatpush1.xpose.msra.mxu0 0.0
    %1989 = vmatprep.subr.mxu0 0.0
    %1990 = vmatpush1.xpose.msra.mxu0 0.0
    %1991 = vmatprep.subr.mxu0 0.0
    %1992 = vmatpush1.xpose.msra.mxu0 0.0
    %1993 = vmatprep.subr.mxu0 0.0
    %1994 = vmatpush1.xpose.msra.mxu0 0.0
    %1995 = vmatprep.subr.mxu0 0.0
    %1996 = vmatpush1.xpose.msra.mxu0 0.0
    %1997 = vmatprep.subr.mxu0 0.0
    %1998 = vmatpush1.xpose.msra.mxu0 0.0
    %1999 = vmatprep.subr.mxu0 0.0
    %2000 = vmatpush1.xpose.msra.mxu0 %v828
    %2001 = vmatprep.subr.mxu0 0.0
    %2002 = vmatpush2.xpose.msra.mxu0 0.0
    %2003 = vmatprep.subr.mxu0 0.0
    %2004 = vmatpush2.xpose.msra.mxu0 0.0
    %2005 = vmatprep.subr.mxu0 0.0
    %2006 = vmatpush2.xpose.msra.mxu0 0.0
    %2007 = vmatprep.subr.mxu0 0.0
    %2008 = vmatpush2.xpose.msra.mxu0 0.0
    %2009 = vmatprep.subr.mxu0 0.0
    %2010 = vmatpush2.xpose.msra.mxu0 0.0
    %2011 = vmatprep.subr.mxu0 0.0
    %2012 = vmatpush2.xpose.msra.mxu0 0.0
    %2013 = vmatprep.subr.mxu0 0.0
    %2014 = vmatpush2.xpose.msra.mxu0 0.0
    %2015 = vmatprep.subr.mxu0 0.0
    %2016 = vmatpush2.xpose.msra.mxu0 0.0
    %2017 = vmatprep.subr.mxu0 0.0
    %2018 = vmatpush2.xpose.msra.mxu0 0.0
    %2019 = vmatprep.subr.mxu0 0.0
    %2020 = vmatpush2.xpose.msra.mxu0 0.0
    %2021 = vmatprep.subr.mxu0 0.0
    %2022 = vmatpush2.xpose.msra.mxu0 0.0
    %2023 = vmatprep.subr.mxu0 0.0
    %2024 = vmatpush2.xpose.msra.mxu0 0.0
    %2025 = vmatprep.subr.mxu0 0.0
    %2026 = vmatpush2.xpose.msra.mxu0 0.0
    %2027 = vmatprep.subr.mxu0 0.0
    %2028 = vmatpush2.xpose.msra.mxu0 0.0
    %2029 = vmatprep.subr.mxu0 0.0
    %2030 = vmatpush2.xpose.msra.mxu0 0.0
    %2031 = vmatprep.subr.mxu0 0.0
    %2032 = vmatpush2.xpose.msra.mxu0 0.0
    %2033 = vmatprep.mubr.f32.mxu0 0.0
    %2034 = vmatmul.mubr.f32.gmra.mxu0 %v1967
    %v2035 = vpop.f32.mrf.mxu0
    %v2036 = vadd.f32 0.0, %v2035
    %v2037 = vpop.f32.mrf.mxu0
    %2038 = vdwg.mxu0
    %v2040 = vsel %vm166, %v1965, 0
    %2042 = vmatprep.subr.mxu0 0.0
    %2043 = vmatpush1.xpose.msra.mxu0 0.0
    %2044 = vmatprep.subr.mxu0 0.0
    %2045 = vmatpush1.xpose.msra.mxu0 0.0
    %2046 = vmatprep.subr.mxu0 0.0
    %2047 = vmatpush1.xpose.msra.mxu0 0.0
    %2048 = vmatprep.subr.mxu0 0.0
    %2049 = vmatpush1.xpose.msra.mxu0 0.0
    %2050 = vmatprep.subr.mxu0 0.0
    %2051 = vmatpush1.xpose.msra.mxu0 0.0
    %2052 = vmatprep.subr.mxu0 0.0
    %2053 = vmatpush1.xpose.msra.mxu0 0.0
    %2054 = vmatprep.subr.mxu0 0.0
    %2055 = vmatpush1.xpose.msra.mxu0 0.0
    %2056 = vmatprep.subr.mxu0 0.0
    %2057 = vmatpush1.xpose.msra.mxu0 0.0
    %2058 = vmatprep.subr.mxu0 0.0
    %2059 = vmatpush1.xpose.msra.mxu0 0.0
    %2060 = vmatprep.subr.mxu0 0.0
    %2061 = vmatpush1.xpose.msra.mxu0 0.0
    %2062 = vmatprep.subr.mxu0 0.0
    %2063 = vmatpush1.xpose.msra.mxu0 0.0
    %2064 = vmatprep.subr.mxu0 0.0
    %2065 = vmatpush1.xpose.msra.mxu0 0.0
    %2066 = vmatprep.subr.mxu0 0.0
    %2067 = vmatpush1.xpose.msra.mxu0 0.0
    %2068 = vmatprep.subr.mxu0 0.0
    %2069 = vmatpush1.xpose.msra.mxu0 0.0
    %2070 = vmatprep.subr.mxu0 0.0
    %2071 = vmatpush1.xpose.msra.mxu0 0.0
    %2072 = vmatprep.subr.mxu0 0.0
    %2073 = vmatpush1.xpose.msra.mxu0 %v904
    %2074 = vmatprep.subr.mxu0 0.0
    %2075 = vmatpush2.xpose.msra.mxu0 0.0
    %2076 = vmatprep.subr.mxu0 0.0
    %2077 = vmatpush2.xpose.msra.mxu0 0.0
    %2078 = vmatprep.subr.mxu0 0.0
    %2079 = vmatpush2.xpose.msra.mxu0 0.0
    %2080 = vmatprep.subr.mxu0 0.0
    %2081 = vmatpush2.xpose.msra.mxu0 0.0
    %2082 = vmatprep.subr.mxu0 0.0
    %2083 = vmatpush2.xpose.msra.mxu0 0.0
    %2084 = vmatprep.subr.mxu0 0.0
    %2085 = vmatpush2.xpose.msra.mxu0 0.0
    %2086 = vmatprep.subr.mxu0 0.0
    %2087 = vmatpush2.xpose.msra.mxu0 0.0
    %2088 = vmatprep.subr.mxu0 0.0
    %2089 = vmatpush2.xpose.msra.mxu0 0.0
    %2090 = vmatprep.subr.mxu0 0.0
    %2091 = vmatpush2.xpose.msra.mxu0 0.0
    %2092 = vmatprep.subr.mxu0 0.0
    %2093 = vmatpush2.xpose.msra.mxu0 0.0
    %2094 = vmatprep.subr.mxu0 0.0
    %2095 = vmatpush2.xpose.msra.mxu0 0.0
    %2096 = vmatprep.subr.mxu0 0.0
    %2097 = vmatpush2.xpose.msra.mxu0 0.0
    %2098 = vmatprep.subr.mxu0 0.0
    %2099 = vmatpush2.xpose.msra.mxu0 0.0
    %2100 = vmatprep.subr.mxu0 0.0
    %2101 = vmatpush2.xpose.msra.mxu0 0.0
    %2102 = vmatprep.subr.mxu0 0.0
    %2103 = vmatpush2.xpose.msra.mxu0 0.0
    %2104 = vmatprep.subr.mxu0 0.0
    %2105 = vmatpush2.xpose.msra.mxu0 0.0
    %2106 = vmatprep.mubr.f32.mxu0 0.0
    %2107 = vmatmul.mubr.f32.gmra.mxu0 %v2040
    %v2108 = vpop.f32.mrf.mxu0
    %v2109 = vadd.f32 0.0, %v2108
    %v2110 = vpop.f32.mrf.mxu0
    %2111 = vdwg.mxu0
    %v2112 = vsel %vm976, %v2036, -inf
    %2113 = vmax.xlane.f32.xlu0 %v2112
    %v2114 = vpop.xlane.xlu0 %2113
    %v2115 = vsel %vm976, %v2109, -inf
    %2116 = vmax.xlane.f32.xlu0 %v2115
    %v2117 = vpop.xlane.xlu0 %2116
    %v2118 = vsub.f32 %v2036, %v2114
    %v2119 = vsub.f32 %v2109, %v2117
    %v2120 = vmul.f32 %v2118, 1.442695
    %v2121 = vpow.pop %v2120
    %v2122 = vmul.f32 %v2119, 1.442695
    %v2123 = vpow.pop %v2122
    %v2124 = vsel %vm976, %v2121, 0.0
    %2125 = vadd.xlane.f32.xlu0 %v2124
    %v2126 = vpop.xlane.xlu0 %2125
    %v2127 = vsel %vm976, %v2123, 0.0
    %2128 = vadd.xlane.f32.xlu0 %v2127
    %v2129 = vpop.xlane.xlu0 %2128
    %v2130 = vmax.f32 %v2126, 1e-30
    %v2131 = vmax.f32 %v2129, 1e-30
    %v2132 = vrcp.pop %v2130
    %v2133 = vrcp.pop %v2131
    %v2134 = vmul.f32 %v2121, %v2132
    %v2135 = vmul.f32 %v2123, %v2133
    %v2137 = vsel %vm85, %v2134, 0
    %2139 = vmatprep.subr.mxu0 0.0
    %2140 = vmatpush1.msra.mxu0 0.0
    %2141 = vmatprep.subr.mxu0 0.0
    %2142 = vmatpush1.msra.mxu0 0.0
    %2143 = vmatprep.subr.mxu0 0.0
    %2144 = vmatpush1.msra.mxu0 0.0
    %2145 = vmatprep.subr.mxu0 0.0
    %2146 = vmatpush1.msra.mxu0 0.0
    %2147 = vmatprep.subr.mxu0 0.0
    %2148 = vmatpush1.msra.mxu0 0.0
    %2149 = vmatprep.subr.mxu0 0.0
    %2150 = vmatpush1.msra.mxu0 0.0
    %2151 = vmatprep.subr.mxu0 0.0
    %2152 = vmatpush1.msra.mxu0 0.0
    %2153 = vmatprep.subr.mxu0 0.0
    %2154 = vmatpush1.msra.mxu0 0.0
    %2155 = vmatprep.subr.mxu0 0.0
    %2156 = vmatpush1.msra.mxu0 0.0
    %2157 = vmatprep.subr.mxu0 0.0
    %2158 = vmatpush1.msra.mxu0 0.0
    %2159 = vmatprep.subr.mxu0 0.0
    %2160 = vmatpush1.msra.mxu0 0.0
    %2161 = vmatprep.subr.mxu0 0.0
    %2162 = vmatpush1.msra.mxu0 0.0
    %2163 = vmatprep.subr.mxu0 0.0
    %2164 = vmatpush1.msra.mxu0 0.0
    %2165 = vmatprep.subr.mxu0 0.0
    %2166 = vmatpush1.msra.mxu0 0.0
    %2167 = vmatprep.subr.mxu0 0.0
    %2168 = vmatpush1.msra.mxu0 0.0
    %2169 = vmatprep.subr.mxu0 0.0
    %2170 = vmatpush1.msra.mxu0 %v74
    %2171 = vmatprep.subr.mxu0 0.0
    %2172 = vmatpush2.msra.mxu0 0.0
    %2173 = vmatprep.subr.mxu0 0.0
    %2174 = vmatpush2.msra.mxu0 0.0
    %2175 = vmatprep.subr.mxu0 0.0
    %2176 = vmatpush2.msra.mxu0 0.0
    %2177 = vmatprep.subr.mxu0 0.0
    %2178 = vmatpush2.msra.mxu0 0.0
    %2179 = vmatprep.subr.mxu0 0.0
    %2180 = vmatpush2.msra.mxu0 0.0
    %2181 = vmatprep.subr.mxu0 0.0
    %2182 = vmatpush2.msra.mxu0 0.0
    %2183 = vmatprep.subr.mxu0 0.0
    %2184 = vmatpush2.msra.mxu0 0.0
    %2185 = vmatprep.subr.mxu0 0.0
    %2186 = vmatpush2.msra.mxu0 0.0
    %2187 = vmatprep.subr.mxu0 0.0
    %2188 = vmatpush2.msra.mxu0 0.0
    %2189 = vmatprep.subr.mxu0 0.0
    %2190 = vmatpush2.msra.mxu0 0.0
    %2191 = vmatprep.subr.mxu0 0.0
    %2192 = vmatpush2.msra.mxu0 0.0
    %2193 = vmatprep.subr.mxu0 0.0
    %2194 = vmatpush2.msra.mxu0 0.0
    %2195 = vmatprep.subr.mxu0 0.0
    %2196 = vmatpush2.msra.mxu0 0.0
    %2197 = vmatprep.subr.mxu0 0.0
    %2198 = vmatpush2.msra.mxu0 0.0
    %2199 = vmatprep.subr.mxu0 0.0
    %2200 = vmatpush2.msra.mxu0 0.0
    %2201 = vmatprep.subr.mxu0 0.0
    %2202 = vmatpush2.msra.mxu0 0.0
    %2203 = vmatprep.mubr.f32.mxu0 0.0
    %2204 = vmatmul.mubr.f32.gmra.mxu0 %v2137
    %v2205 = vpop.f32.mrf.mxu0
    %v2206 = vadd.f32 0.0, %v2205
    %v2207 = vpop.f32.mrf.mxu0
    %2208 = vdwg.mxu0
    %v2210 = vsel %vm85, %v2135, 0
    %2212 = vmatprep.subr.mxu0 0.0
    %2213 = vmatpush1.msra.mxu0 0.0
    %2214 = vmatprep.subr.mxu0 0.0
    %2215 = vmatpush1.msra.mxu0 0.0
    %2216 = vmatprep.subr.mxu0 0.0
    %2217 = vmatpush1.msra.mxu0 0.0
    %2218 = vmatprep.subr.mxu0 0.0
    %2219 = vmatpush1.msra.mxu0 0.0
    %2220 = vmatprep.subr.mxu0 0.0
    %2221 = vmatpush1.msra.mxu0 0.0
    %2222 = vmatprep.subr.mxu0 0.0
    %2223 = vmatpush1.msra.mxu0 0.0
    %2224 = vmatprep.subr.mxu0 0.0
    %2225 = vmatpush1.msra.mxu0 0.0
    %2226 = vmatprep.subr.mxu0 0.0
    %2227 = vmatpush1.msra.mxu0 0.0
    %2228 = vmatprep.subr.mxu0 0.0
    %2229 = vmatpush1.msra.mxu0 0.0
    %2230 = vmatprep.subr.mxu0 0.0
    %2231 = vmatpush1.msra.mxu0 0.0
    %2232 = vmatprep.subr.mxu0 0.0
    %2233 = vmatpush1.msra.mxu0 0.0
    %2234 = vmatprep.subr.mxu0 0.0
    %2235 = vmatpush1.msra.mxu0 0.0
    %2236 = vmatprep.subr.mxu0 0.0
    %2237 = vmatpush1.msra.mxu0 0.0
    %2238 = vmatprep.subr.mxu0 0.0
    %2239 = vmatpush1.msra.mxu0 0.0
    %2240 = vmatprep.subr.mxu0 0.0
    %2241 = vmatpush1.msra.mxu0 0.0
    %2242 = vmatprep.subr.mxu0 0.0
    %2243 = vmatpush1.msra.mxu0 %v75
    %2244 = vmatprep.subr.mxu0 0.0
    %2245 = vmatpush2.msra.mxu0 0.0
    %2246 = vmatprep.subr.mxu0 0.0
    %2247 = vmatpush2.msra.mxu0 0.0
    %2248 = vmatprep.subr.mxu0 0.0
    %2249 = vmatpush2.msra.mxu0 0.0
    %2250 = vmatprep.subr.mxu0 0.0
    %2251 = vmatpush2.msra.mxu0 0.0
    %2252 = vmatprep.subr.mxu0 0.0
    %2253 = vmatpush2.msra.mxu0 0.0
    %2254 = vmatprep.subr.mxu0 0.0
    %2255 = vmatpush2.msra.mxu0 0.0
    %2256 = vmatprep.subr.mxu0 0.0
    %2257 = vmatpush2.msra.mxu0 0.0
    %2258 = vmatprep.subr.mxu0 0.0
    %2259 = vmatpush2.msra.mxu0 0.0
    %2260 = vmatprep.subr.mxu0 0.0
    %2261 = vmatpush2.msra.mxu0 0.0
    %2262 = vmatprep.subr.mxu0 0.0
    %2263 = vmatpush2.msra.mxu0 0.0
    %2264 = vmatprep.subr.mxu0 0.0
    %2265 = vmatpush2.msra.mxu0 0.0
    %2266 = vmatprep.subr.mxu0 0.0
    %2267 = vmatpush2.msra.mxu0 0.0
    %2268 = vmatprep.subr.mxu0 0.0
    %2269 = vmatpush2.msra.mxu0 0.0
    %2270 = vmatprep.subr.mxu0 0.0
    %2271 = vmatpush2.msra.mxu0 0.0
    %2272 = vmatprep.subr.mxu0 0.0
    %2273 = vmatpush2.msra.mxu0 0.0
    %2274 = vmatprep.subr.mxu0 0.0
    %2275 = vmatpush2.msra.mxu0 0.0
    %2276 = vmatprep.mubr.f32.mxu0 0.0
    %2277 = vmatmul.mubr.f32.gmra.mxu0 %v2210
    %v2278 = vpop.f32.mrf.mxu0
    %v2279 = vadd.f32 0.0, %v2278
    %v2280 = vpop.f32.mrf.mxu0
    %2281 = vdwg.mxu0
    %v2282 = vld [vmem:[%s17] sm:$0xff]
    %v2283 = vld [vmem:[%s17 + $0x8] sm:$0xff]
    %v2284 = vld [vmem:[%s17 + $0x10] sm:$0xff]
    %v2285 = vld [vmem:[%s17 + $0x18] sm:$0xff]
    %v2286 = vld [vmem:[%s18] sm:$0xff]
    %v2287 = vld [vmem:[%s18 + $0x8] sm:$0xff]
    %v2288 = vld [vmem:[%s18 + $0x10] sm:$0xff]
    %v2289 = vld [vmem:[%s18 + $0x18] sm:$0xff]
    %2290 = vmatprep.subr.mxu0 0.0
    %2291 = vmatpush1.msra.mxu0 0.0
    %2292 = vmatprep.subr.mxu0 0.0
    %2293 = vmatpush1.msra.mxu0 0.0
    %2294 = vmatprep.subr.mxu0 0.0
    %2295 = vmatpush1.msra.mxu0 0.0
    %2296 = vmatprep.subr.mxu0 0.0
    %2297 = vmatpush1.msra.mxu0 0.0
    %2298 = vmatprep.subr.mxu0 0.0
    %2299 = vmatpush1.msra.mxu0 0.0
    %2300 = vmatprep.subr.mxu0 0.0
    %2301 = vmatpush1.msra.mxu0 0.0
    %2302 = vmatprep.subr.mxu0 0.0
    %2303 = vmatpush1.msra.mxu0 0.0
    %2304 = vmatprep.subr.mxu0 0.0
    %2305 = vmatpush1.msra.mxu0 0.0
    %2306 = vmatprep.subr.mxu0 0.0
    %2307 = vmatpush1.msra.mxu0 0.0
    %2308 = vmatprep.subr.mxu0 0.0
    %2309 = vmatpush1.msra.mxu0 0.0
    %2310 = vmatprep.subr.mxu0 0.0
    %2311 = vmatpush1.msra.mxu0 0.0
    %2312 = vmatprep.subr.mxu0 0.0
    %2313 = vmatpush1.msra.mxu0 0.0
    %2314 = vmatprep.subr.mxu0 0.0
    %2315 = vmatpush1.msra.mxu0 %v2289
    %2316 = vmatprep.subr.mxu0 0.0
    %2317 = vmatpush1.msra.mxu0 %v2288
    %2318 = vmatprep.subr.mxu0 0.0
    %2319 = vmatpush1.msra.mxu0 %v2287
    %2320 = vmatprep.subr.mxu0 0.0
    %2321 = vmatpush1.msra.mxu0 %v2286
    %2322 = vmatprep.subr.mxu0 0.0
    %2323 = vmatpush2.msra.mxu0 0.0
    %2324 = vmatprep.subr.mxu0 0.0
    %2325 = vmatpush2.msra.mxu0 0.0
    %2326 = vmatprep.subr.mxu0 0.0
    %2327 = vmatpush2.msra.mxu0 0.0
    %2328 = vmatprep.subr.mxu0 0.0
    %2329 = vmatpush2.msra.mxu0 0.0
    %2330 = vmatprep.subr.mxu0 0.0
    %2331 = vmatpush2.msra.mxu0 0.0
    %2332 = vmatprep.subr.mxu0 0.0
    %2333 = vmatpush2.msra.mxu0 0.0
    %2334 = vmatprep.subr.mxu0 0.0
    %2335 = vmatpush2.msra.mxu0 0.0
    %2336 = vmatprep.subr.mxu0 0.0
    %2337 = vmatpush2.msra.mxu0 0.0
    %2338 = vmatprep.subr.mxu0 0.0
    %2339 = vmatpush2.msra.mxu0 0.0
    %2340 = vmatprep.subr.mxu0 0.0
    %2341 = vmatpush2.msra.mxu0 0.0
    %2342 = vmatprep.subr.mxu0 0.0
    %2343 = vmatpush2.msra.mxu0 0.0
    %2344 = vmatprep.subr.mxu0 0.0
    %2345 = vmatpush2.msra.mxu0 0.0
    %2346 = vmatprep.subr.mxu0 0.0
    %2347 = vmatpush2.msra.mxu0 0.0
    %2348 = vmatprep.subr.mxu0 0.0
    %2349 = vmatpush2.msra.mxu0 0.0
    %2350 = vmatprep.subr.mxu0 0.0
    %2351 = vmatpush2.msra.mxu0 0.0
    %2352 = vmatprep.subr.mxu0 0.0
    %2353 = vmatpush2.msra.mxu0 0.0
    %2354 = vmatprep.mubr.f32.mxu0 0.0
    %2355 = vmatmul.mubr.f32.gmra.mxu0 %v1643
    %v2356 = vpop.f32.mrf.mxu0
    %v2357 = vadd.f32 0.0, %v2356
    %v2358 = vpop.f32.mrf.mxu0
    %2359 = vdwg.mxu0
    %v2362 = vrot.slane %v2279, 7
    %v2363 = vsel %vm294, %v2362, %v2206
    %v2364 = vsel %vm166, %v2363, 0
    %2366 = vmatprep.subr.mxu0 0.0
    %2367 = vmatpush1.msra.mxu0 0.0
    %2368 = vmatprep.subr.mxu0 0.0
    %2369 = vmatpush1.msra.mxu0 0.0
    %2370 = vmatprep.subr.mxu0 0.0
    %2371 = vmatpush1.msra.mxu0 0.0
    %2372 = vmatprep.subr.mxu0 0.0
    %2373 = vmatpush1.msra.mxu0 0.0
    %2374 = vmatprep.subr.mxu0 0.0
    %2375 = vmatpush1.msra.mxu0 0.0
    %2376 = vmatprep.subr.mxu0 0.0
    %2377 = vmatpush1.msra.mxu0 0.0
    %2378 = vmatprep.subr.mxu0 0.0
    %2379 = vmatpush1.msra.mxu0 0.0
    %2380 = vmatprep.subr.mxu0 0.0
    %2381 = vmatpush1.msra.mxu0 0.0
    %2382 = vmatprep.subr.mxu0 0.0
    %2383 = vmatpush1.msra.mxu0 0.0
    %2384 = vmatprep.subr.mxu0 0.0
    %2385 = vmatpush1.msra.mxu0 0.0
    %2386 = vmatprep.subr.mxu0 0.0
    %2387 = vmatpush1.msra.mxu0 0.0
    %2388 = vmatprep.subr.mxu0 0.0
    %2389 = vmatpush1.msra.mxu0 0.0
    %2390 = vmatprep.subr.mxu0 0.0
    %2391 = vmatpush1.msra.mxu0 %v2285
    %2392 = vmatprep.subr.mxu0 0.0
    %2393 = vmatpush1.msra.mxu0 %v2284
    %2394 = vmatprep.subr.mxu0 0.0
    %2395 = vmatpush1.msra.mxu0 %v2283
    %2396 = vmatprep.subr.mxu0 0.0
    %2397 = vmatpush1.msra.mxu0 %v2282
    %2398 = vmatprep.subr.mxu0 0.0
    %2399 = vmatpush2.msra.mxu0 0.0
    %2400 = vmatprep.subr.mxu0 0.0
    %2401 = vmatpush2.msra.mxu0 0.0
    %2402 = vmatprep.subr.mxu0 0.0
    %2403 = vmatpush2.msra.mxu0 0.0
    %2404 = vmatprep.subr.mxu0 0.0
    %2405 = vmatpush2.msra.mxu0 0.0
    %2406 = vmatprep.subr.mxu0 0.0
    %2407 = vmatpush2.msra.mxu0 0.0
    %2408 = vmatprep.subr.mxu0 0.0
    %2409 = vmatpush2.msra.mxu0 0.0
    %2410 = vmatprep.subr.mxu0 0.0
    %2411 = vmatpush2.msra.mxu0 0.0
    %2412 = vmatprep.subr.mxu0 0.0
    %2413 = vmatpush2.msra.mxu0 0.0
    %2414 = vmatprep.subr.mxu0 0.0
    %2415 = vmatpush2.msra.mxu0 0.0
    %2416 = vmatprep.subr.mxu0 0.0
    %2417 = vmatpush2.msra.mxu0 0.0
    %2418 = vmatprep.subr.mxu0 0.0
    %2419 = vmatpush2.msra.mxu0 0.0
    %2420 = vmatprep.subr.mxu0 0.0
    %2421 = vmatpush2.msra.mxu0 0.0
    %2422 = vmatprep.subr.mxu0 0.0
    %2423 = vmatpush2.msra.mxu0 0.0
    %2424 = vmatprep.subr.mxu0 0.0
    %2425 = vmatpush2.msra.mxu0 0.0
    %2426 = vmatprep.subr.mxu0 0.0
    %2427 = vmatpush2.msra.mxu0 0.0
    %2428 = vmatprep.subr.mxu0 0.0
    %2429 = vmatpush2.msra.mxu0 0.0
    %2430 = vmatprep.mubr.f32.mxu0 0.0
    %2431 = vmatmul.mubr.f32.gmra.mxu0 %v2364
    %v2432 = vpop.f32.mrf.mxu0
    %v2433 = vadd.f32 %v2357, %v2432
    %v2434 = vpop.f32.mrf.mxu0
    %2435 = vdwg.mxu0
    %v2436 = vtanh.pop %v2433
    %s2437 = scalar_lea.vmem %s17, 32
    %v2438 = vld [vmem:[%s2437] sm:$0xff]
    %v2439 = vld [vmem:[%s2437 + $0x8] sm:$0xff]
    %v2440 = vld [vmem:[%s2437 + $0x10] sm:$0xff]
    %v2441 = vld [vmem:[%s2437 + $0x18] sm:$0xff]
    %s2442 = scalar_lea.vmem %s18, 32
    %v2443 = vld [vmem:[%s2442] sm:$0xff]
    %v2444 = vld [vmem:[%s2442 + $0x8] sm:$0xff]
    %v2445 = vld [vmem:[%s2442 + $0x10] sm:$0xff]
    %v2446 = vld [vmem:[%s2442 + $0x18] sm:$0xff]
    %2447 = vmatprep.subr.mxu0 0.0
    %2448 = vmatpush1.msra.mxu0 0.0
    %2449 = vmatprep.subr.mxu0 0.0
    %2450 = vmatpush1.msra.mxu0 0.0
    %2451 = vmatprep.subr.mxu0 0.0
    %2452 = vmatpush1.msra.mxu0 0.0
    %2453 = vmatprep.subr.mxu0 0.0
    %2454 = vmatpush1.msra.mxu0 0.0
    %2455 = vmatprep.subr.mxu0 0.0
    %2456 = vmatpush1.msra.mxu0 0.0
    %2457 = vmatprep.subr.mxu0 0.0
    %2458 = vmatpush1.msra.mxu0 0.0
    %2459 = vmatprep.subr.mxu0 0.0
    %2460 = vmatpush1.msra.mxu0 0.0
    %2461 = vmatprep.subr.mxu0 0.0
    %2462 = vmatpush1.msra.mxu0 0.0
    %2463 = vmatprep.subr.mxu0 0.0
    %2464 = vmatpush1.msra.mxu0 0.0
    %2465 = vmatprep.subr.mxu0 0.0
    %2466 = vmatpush1.msra.mxu0 0.0
    %2467 = vmatprep.subr.mxu0 0.0
    %2468 = vmatpush1.msra.mxu0 0.0
    %2469 = vmatprep.subr.mxu0 0.0
    %2470 = vmatpush1.msra.mxu0 0.0
    %2471 = vmatprep.subr.mxu0 0.0
    %2472 = vmatpush1.msra.mxu0 %v2446
    %2473 = vmatprep.subr.mxu0 0.0
    %2474 = vmatpush1.msra.mxu0 %v2445
    %2475 = vmatprep.subr.mxu0 0.0
    %2476 = vmatpush1.msra.mxu0 %v2444
    %2477 = vmatprep.subr.mxu0 0.0
    %2478 = vmatpush1.msra.mxu0 %v2443
    %2479 = vmatprep.subr.mxu0 0.0
    %2480 = vmatpush2.msra.mxu0 0.0
    %2481 = vmatprep.subr.mxu0 0.0
    %2482 = vmatpush2.msra.mxu0 0.0
    %2483 = vmatprep.subr.mxu0 0.0
    %2484 = vmatpush2.msra.mxu0 0.0
    %2485 = vmatprep.subr.mxu0 0.0
    %2486 = vmatpush2.msra.mxu0 0.0
    %2487 = vmatprep.subr.mxu0 0.0
    %2488 = vmatpush2.msra.mxu0 0.0
    %2489 = vmatprep.subr.mxu0 0.0
    %2490 = vmatpush2.msra.mxu0 0.0
    %2491 = vmatprep.subr.mxu0 0.0
    %2492 = vmatpush2.msra.mxu0 0.0
    %2493 = vmatprep.subr.mxu0 0.0
    %2494 = vmatpush2.msra.mxu0 0.0
    %2495 = vmatprep.subr.mxu0 0.0
    %2496 = vmatpush2.msra.mxu0 0.0
    %2497 = vmatprep.subr.mxu0 0.0
    %2498 = vmatpush2.msra.mxu0 0.0
    %2499 = vmatprep.subr.mxu0 0.0
    %2500 = vmatpush2.msra.mxu0 0.0
    %2501 = vmatprep.subr.mxu0 0.0
    %2502 = vmatpush2.msra.mxu0 0.0
    %2503 = vmatprep.subr.mxu0 0.0
    %2504 = vmatpush2.msra.mxu0 0.0
    %2505 = vmatprep.subr.mxu0 0.0
    %2506 = vmatpush2.msra.mxu0 0.0
    %2507 = vmatprep.subr.mxu0 0.0
    %2508 = vmatpush2.msra.mxu0 0.0
    %2509 = vmatprep.subr.mxu0 0.0
    %2510 = vmatpush2.msra.mxu0 0.0
    %2511 = vmatprep.mubr.f32.mxu0 0.0
    %2512 = vmatmul.mubr.f32.gmra.mxu0 %v1721
    %v2513 = vpop.f32.mrf.mxu0
    %v2514 = vadd.f32 0.0, %v2513
    %v2515 = vpop.f32.mrf.mxu0
    %2516 = vdwg.mxu0
    %v2517 = vrot.slane %v2206, 1
    %v2518 = vsel %vm294, %v2279, %v2517
    %v2519 = vsel %vm166, %v2518, 0
    %2521 = vmatprep.subr.mxu0 0.0
    %2522 = vmatpush1.msra.mxu0 0.0
    %2523 = vmatprep.subr.mxu0 0.0
    %2524 = vmatpush1.msra.mxu0 0.0
    %2525 = vmatprep.subr.mxu0 0.0
    %2526 = vmatpush1.msra.mxu0 0.0
    %2527 = vmatprep.subr.mxu0 0.0
    %2528 = vmatpush1.msra.mxu0 0.0
    %2529 = vmatprep.subr.mxu0 0.0
    %2530 = vmatpush1.msra.mxu0 0.0
    %2531 = vmatprep.subr.mxu0 0.0
    %2532 = vmatpush1.msra.mxu0 0.0
    %2533 = vmatprep.subr.mxu0 0.0
    %2534 = vmatpush1.msra.mxu0 0.0
    %2535 = vmatprep.subr.mxu0 0.0
    %2536 = vmatpush1.msra.mxu0 0.0
    %2537 = vmatprep.subr.mxu0 0.0
    %2538 = vmatpush1.msra.mxu0 0.0
    %2539 = vmatprep.subr.mxu0 0.0
    %2540 = vmatpush1.msra.mxu0 0.0
    %2541 = vmatprep.subr.mxu0 0.0
    %2542 = vmatpush1.msra.mxu0 0.0
    %2543 = vmatprep.subr.mxu0 0.0
    %2544 = vmatpush1.msra.mxu0 0.0
    %2545 = vmatprep.subr.mxu0 0.0
    %2546 = vmatpush1.msra.mxu0 %v2441
    %2547 = vmatprep.subr.mxu0 0.0
    %2548 = vmatpush1.msra.mxu0 %v2440
    %2549 = vmatprep.subr.mxu0 0.0
    %2550 = vmatpush1.msra.mxu0 %v2439
    %2551 = vmatprep.subr.mxu0 0.0
    %2552 = vmatpush1.msra.mxu0 %v2438
    %2553 = vmatprep.subr.mxu0 0.0
    %2554 = vmatpush2.msra.mxu0 0.0
    %2555 = vmatprep.subr.mxu0 0.0
    %2556 = vmatpush2.msra.mxu0 0.0
    %2557 = vmatprep.subr.mxu0 0.0
    %2558 = vmatpush2.msra.mxu0 0.0
    %2559 = vmatprep.subr.mxu0 0.0
    %2560 = vmatpush2.msra.mxu0 0.0
    %2561 = vmatprep.subr.mxu0 0.0
    %2562 = vmatpush2.msra.mxu0 0.0
    %2563 = vmatprep.subr.mxu0 0.0
    %2564 = vmatpush2.msra.mxu0 0.0
    %2565 = vmatprep.subr.mxu0 0.0
    %2566 = vmatpush2.msra.mxu0 0.0
    %2567 = vmatprep.subr.mxu0 0.0
    %2568 = vmatpush2.msra.mxu0 0.0
    %2569 = vmatprep.subr.mxu0 0.0
    %2570 = vmatpush2.msra.mxu0 0.0
    %2571 = vmatprep.subr.mxu0 0.0
    %2572 = vmatpush2.msra.mxu0 0.0
    %2573 = vmatprep.subr.mxu0 0.0
    %2574 = vmatpush2.msra.mxu0 0.0
    %2575 = vmatprep.subr.mxu0 0.0
    %2576 = vmatpush2.msra.mxu0 0.0
    %2577 = vmatprep.subr.mxu0 0.0
    %2578 = vmatpush2.msra.mxu0 0.0
    %2579 = vmatprep.subr.mxu0 0.0
    %2580 = vmatpush2.msra.mxu0 0.0
    %2581 = vmatprep.subr.mxu0 0.0
    %2582 = vmatpush2.msra.mxu0 0.0
    %2583 = vmatprep.subr.mxu0 0.0
    %2584 = vmatpush2.msra.mxu0 0.0
    %2585 = vmatprep.mubr.f32.mxu0 0.0
    %2586 = vmatmul.mubr.f32.gmra.mxu0 %v2519
    %v2587 = vpop.f32.mrf.mxu0
    %v2588 = vadd.f32 %v2514, %v2587
    %v2589 = vpop.f32.mrf.mxu0
    %2590 = vdwg.mxu0
    %v2591 = vtanh.pop %v2588
    %s2592 = scalar_lea.vmem %s17, 64
    %v2593 = vld [vmem:[%s2592] sm:$0xff]
    %v2594 = vld [vmem:[%s2592 + $0x8] sm:$0xff]
    %v2595 = vld [vmem:[%s2592 + $0x10] sm:$0xff]
    %v2596 = vld [vmem:[%s2592 + $0x18] sm:$0xff]
    %s2597 = scalar_lea.vmem %s18, 64
    %v2598 = vld [vmem:[%s2597] sm:$0xff]
    %v2599 = vld [vmem:[%s2597 + $0x8] sm:$0xff]
    %v2600 = vld [vmem:[%s2597 + $0x10] sm:$0xff]
    %v2601 = vld [vmem:[%s2597 + $0x18] sm:$0xff]
    %2602 = vmatprep.subr.mxu0 0.0
    %2603 = vmatpush1.msra.mxu0 0.0
    %2604 = vmatprep.subr.mxu0 0.0
    %2605 = vmatpush1.msra.mxu0 0.0
    %2606 = vmatprep.subr.mxu0 0.0
    %2607 = vmatpush1.msra.mxu0 0.0
    %2608 = vmatprep.subr.mxu0 0.0
    %2609 = vmatpush1.msra.mxu0 0.0
    %2610 = vmatprep.subr.mxu0 0.0
    %2611 = vmatpush1.msra.mxu0 0.0
    %2612 = vmatprep.subr.mxu0 0.0
    %2613 = vmatpush1.msra.mxu0 0.0
    %2614 = vmatprep.subr.mxu0 0.0
    %2615 = vmatpush1.msra.mxu0 0.0
    %2616 = vmatprep.subr.mxu0 0.0
    %2617 = vmatpush1.msra.mxu0 0.0
    %2618 = vmatprep.subr.mxu0 0.0
    %2619 = vmatpush1.msra.mxu0 0.0
    %2620 = vmatprep.subr.mxu0 0.0
    %2621 = vmatpush1.msra.mxu0 0.0
    %2622 = vmatprep.subr.mxu0 0.0
    %2623 = vmatpush1.msra.mxu0 0.0
    %2624 = vmatprep.subr.mxu0 0.0
    %2625 = vmatpush1.msra.mxu0 0.0
    %2626 = vmatprep.subr.mxu0 0.0
    %2627 = vmatpush1.msra.mxu0 %v2601
    %2628 = vmatprep.subr.mxu0 0.0
    %2629 = vmatpush1.msra.mxu0 %v2600
    %2630 = vmatprep.subr.mxu0 0.0
    %2631 = vmatpush1.msra.mxu0 %v2599
    %2632 = vmatprep.subr.mxu0 0.0
    %2633 = vmatpush1.msra.mxu0 %v2598
    %2634 = vmatprep.subr.mxu0 0.0
    %2635 = vmatpush2.msra.mxu0 0.0
    %2636 = vmatprep.subr.mxu0 0.0
    %2637 = vmatpush2.msra.mxu0 0.0
    %2638 = vmatprep.subr.mxu0 0.0
    %2639 = vmatpush2.msra.mxu0 0.0
    %2640 = vmatprep.subr.mxu0 0.0
    %2641 = vmatpush2.msra.mxu0 0.0
    %2642 = vmatprep.subr.mxu0 0.0
    %2643 = vmatpush2.msra.mxu0 0.0
    %2644 = vmatprep.subr.mxu0 0.0
    %2645 = vmatpush2.msra.mxu0 0.0
    %2646 = vmatprep.subr.mxu0 0.0
    %2647 = vmatpush2.msra.mxu0 0.0
    %2648 = vmatprep.subr.mxu0 0.0
    %2649 = vmatpush2.msra.mxu0 0.0
    %2650 = vmatprep.subr.mxu0 0.0
    %2651 = vmatpush2.msra.mxu0 0.0
    %2652 = vmatprep.subr.mxu0 0.0
    %2653 = vmatpush2.msra.mxu0 0.0
    %2654 = vmatprep.subr.mxu0 0.0
    %2655 = vmatpush2.msra.mxu0 0.0
    %2656 = vmatprep.subr.mxu0 0.0
    %2657 = vmatpush2.msra.mxu0 0.0
    %2658 = vmatprep.subr.mxu0 0.0
    %2659 = vmatpush2.msra.mxu0 0.0
    %2660 = vmatprep.subr.mxu0 0.0
    %2661 = vmatpush2.msra.mxu0 0.0
    %2662 = vmatprep.subr.mxu0 0.0
    %2663 = vmatpush2.msra.mxu0 0.0
    %2664 = vmatprep.subr.mxu0 0.0
    %2665 = vmatpush2.msra.mxu0 0.0
    %2666 = vmatprep.mubr.f32.mxu0 0.0
    %2667 = vmatmul.mubr.f32.gmra.mxu0 %v1799
    %v2668 = vpop.f32.mrf.mxu0
    %v2669 = vadd.f32 0.0, %v2668
    %v2670 = vpop.f32.mrf.mxu0
    %2671 = vdwg.mxu0
    %v2672 = vrot.slane %v2206, 2
    %v2673 = vrot.slane %v2279, 1
    %v2674 = vsel %vm294, %v2673, %v2672
    %v2675 = vsel %vm166, %v2674, 0
    %2677 = vmatprep.subr.mxu0 0.0
    %2678 = vmatpush1.msra.mxu0 0.0
    %2679 = vmatprep.subr.mxu0 0.0
    %2680 = vmatpush1.msra.mxu0 0.0
    %2681 = vmatprep.subr.mxu0 0.0
    %2682 = vmatpush1.msra.mxu0 0.0
    %2683 = vmatprep.subr.mxu0 0.0
    %2684 = vmatpush1.msra.mxu0 0.0
    %2685 = vmatprep.subr.mxu0 0.0
    %2686 = vmatpush1.msra.mxu0 0.0
    %2687 = vmatprep.subr.mxu0 0.0
    %2688 = vmatpush1.msra.mxu0 0.0
    %2689 = vmatprep.subr.mxu0 0.0
    %2690 = vmatpush1.msra.mxu0 0.0
    %2691 = vmatprep.subr.mxu0 0.0
    %2692 = vmatpush1.msra.mxu0 0.0
    %2693 = vmatprep.subr.mxu0 0.0
    %2694 = vmatpush1.msra.mxu0 0.0
    %2695 = vmatprep.subr.mxu0 0.0
    %2696 = vmatpush1.msra.mxu0 0.0
    %2697 = vmatprep.subr.mxu0 0.0
    %2698 = vmatpush1.msra.mxu0 0.0
    %2699 = vmatprep.subr.mxu0 0.0
    %2700 = vmatpush1.msra.mxu0 0.0
    %2701 = vmatprep.subr.mxu0 0.0
    %2702 = vmatpush1.msra.mxu0 %v2596
    %2703 = vmatprep.subr.mxu0 0.0
    %2704 = vmatpush1.msra.mxu0 %v2595
    %2705 = vmatprep.subr.mxu0 0.0
    %2706 = vmatpush1.msra.mxu0 %v2594
    %2707 = vmatprep.subr.mxu0 0.0
    %2708 = vmatpush1.msra.mxu0 %v2593
    %2709 = vmatprep.subr.mxu0 0.0
    %2710 = vmatpush2.msra.mxu0 0.0
    %2711 = vmatprep.subr.mxu0 0.0
    %2712 = vmatpush2.msra.mxu0 0.0
    %2713 = vmatprep.subr.mxu0 0.0
    %2714 = vmatpush2.msra.mxu0 0.0
    %2715 = vmatprep.subr.mxu0 0.0
    %2716 = vmatpush2.msra.mxu0 0.0
    %2717 = vmatprep.subr.mxu0 0.0
    %2718 = vmatpush2.msra.mxu0 0.0
    %2719 = vmatprep.subr.mxu0 0.0
    %2720 = vmatpush2.msra.mxu0 0.0
    %2721 = vmatprep.subr.mxu0 0.0
    %2722 = vmatpush2.msra.mxu0 0.0
    %2723 = vmatprep.subr.mxu0 0.0
    %2724 = vmatpush2.msra.mxu0 0.0
    %2725 = vmatprep.subr.mxu0 0.0
    %2726 = vmatpush2.msra.mxu0 0.0
    %2727 = vmatprep.subr.mxu0 0.0
    %2728 = vmatpush2.msra.mxu0 0.0
    %2729 = vmatprep.subr.mxu0 0.0
    %2730 = vmatpush2.msra.mxu0 0.0
    %2731 = vmatprep.subr.mxu0 0.0
    %2732 = vmatpush2.msra.mxu0 0.0
    %2733 = vmatprep.subr.mxu0 0.0
    %2734 = vmatpush2.msra.mxu0 0.0
    %2735 = vmatprep.subr.mxu0 0.0
    %2736 = vmatpush2.msra.mxu0 0.0
    %2737 = vmatprep.subr.mxu0 0.0
    %2738 = vmatpush2.msra.mxu0 0.0
    %2739 = vmatprep.subr.mxu0 0.0
    %2740 = vmatpush2.msra.mxu0 0.0
    %2741 = vmatprep.mubr.f32.mxu0 0.0
    %2742 = vmatmul.mubr.f32.gmra.mxu0 %v2675
    %v2743 = vpop.f32.mrf.mxu0
    %v2744 = vadd.f32 %v2669, %v2743
    %v2745 = vpop.f32.mrf.mxu0
    %2746 = vdwg.mxu0
    %v2747 = vtanh.pop %v2744
    %v2750 = vunpack.c.l.s4 1966171168
    %v2751 = vunpack.c.0.s8 %v2750
    %v2752 = vlaneseq
    %v2753 = vshrl.u32 %v2752, 7
    %v2754 = vsub.s32 %v2751, %v2753
    %v2755 = vrot.slane %v2436, %v2754
    %v2756 = vcombine.high %v2755, %v2755
    %v2758 = vunpack.c.l.s4 1966171168
    %v2759 = vunpack.c.0.s8 %v2758
    %v2760 = vlaneseq
    %v2761 = vshrl.u32 %v2760, 7
    %v2762 = vsub.s32 %v2759, %v2761
    %v2763 = vrot.slane %v2755, %v2762
    %v2765 = vunpack.c.l.s4 1966171168
    %v2766 = vunpack.c.0.s8 %v2765
    %v2767 = vlaneseq
    %v2768 = vshrl.u32 %v2767, 7
    %v2769 = vsub.s32 %v2766, %v2768
    %v2770 = vrot.slane %v2756, %v2769
    %v2775 = vunpack.c.l.s4 1966171168
    %v2776 = vunpack.c.0.s8 %v2775
    %v2777 = vlaneseq
    %v2778 = vshrl.u32 %v2777, 7
    %v2779 = vsub.s32 %v2776, %v2778
    %v2780 = vrot.slane %v2591, %v2779
    %v2781 = vcombine.high %v2780, %v2780
    %v2783 = vunpack.c.l.s4 1966171168
    %v2784 = vunpack.c.0.s8 %v2783
    %v2785 = vlaneseq
    %v2786 = vshrl.u32 %v2785, 7
    %v2787 = vsub.s32 %v2784, %v2786
    %v2788 = vrot.slane %v2780, %v2787
    %v2790 = vunpack.c.l.s4 1966171168
    %v2791 = vunpack.c.0.s8 %v2790
    %v2792 = vlaneseq
    %v2793 = vshrl.u32 %v2792, 7
    %v2794 = vsub.s32 %v2791, %v2793
    %v2795 = vrot.slane %v2781, %v2794
    %v2798 = vunpack.c.l.s4 1966171168
    %v2799 = vunpack.c.0.s8 %v2798
    %v2800 = vlaneseq
    %v2801 = vshrl.u32 %v2800, 7
    %v2802 = vsub.s32 %v2799, %v2801
    %v2803 = vrot.slane %v2747, %v2802
    %v2804 = vcombine.high %v2803, %v2803
    %v2806 = vunpack.c.l.s4 1966171168
    %v2807 = vunpack.c.0.s8 %v2806
    %v2808 = vlaneseq
    %v2809 = vshrl.u32 %v2808, 7
    %v2810 = vsub.s32 %v2807, %v2809
    %v2811 = vrot.slane %v2803, %v2810
    %v2813 = vunpack.c.l.s4 1966171168
    %v2814 = vunpack.c.0.s8 %v2813
    %v2815 = vlaneseq
    %v2816 = vshrl.u32 %v2815, 7
    %v2817 = vsub.s32 %v2814, %v2816
    %v2818 = vrot.slane %v2804, %v2817
    %v2819 = vlaneseq
    %v2820 = vshrl.u32 %v2819, 7
    %v2821 = vsub.s32 0, %v2820
    %v2822 = vrot.slane %v2788, %v2821
    %v2823 = vlaneseq
    %v2824 = vshrl.u32 %v2823, 7
    %v2825 = vsub.s32 0, %v2824
    %v2826 = vrot.slane %v2795, %v2825
    %v2829 = vlaneseq
    %v2830 = vshrl.u32 %v2829, 7
    %v2831 = vsub.s32 0, %v2830
    %v2832 = vrot.slane %v2811, %v2831
    %v2833 = vlaneseq
    %v2834 = vshrl.u32 %v2833, 7
    %v2835 = vsub.s32 0, %v2834
    %v2836 = vrot.slane %v2818, %v2835
    %v2839 = vsel %vm784, %v2763, %v2822
    %v2840 = vsel %vm784, %v2770, %v2826
    %v2841 = vsel %vm787, %v2839, %v2832
    %v2842 = vsel %vm787, %v2840, %v2836
    %2843 = vst.msk [vmem:[%s24] sm:$0x7] %vm1147, %v2841
    %2844 = vst.msk [vmem:[%s24 + $0x4] sm:$0x7] %vm1147, %v2842
    %v2845 = vld [vmem:[%s19] sm:$0xff]
    %v2846 = vld [vmem:[%s19 + $0x8] sm:$0xff]
    %v2847 = vld [vmem:[%s19 + $0x10] sm:$0xff]
    %v2848 = vld [vmem:[%s19 + $0x18] sm:$0xff]
    %v2849 = vld [vmem:[%s19 + $0x20] sm:$0xff]
    %v2850 = vld [vmem:[%s19 + $0x28] sm:$0xff]
    %v2851 = vld [vmem:[%s19 + $0x30] sm:$0xff]
    %v2852 = vld [vmem:[%s19 + $0x38] sm:$0xff]
    %v2853 = vld [vmem:[%s19 + $0x40] sm:$0xff]
    %v2854 = vld [vmem:[%s19 + $0x48] sm:$0xff]
    %v2855 = vld [vmem:[%s19 + $0x50] sm:$0xff]
    %v2856 = vld [vmem:[%s19 + $0x58] sm:$0xff]
    %2857 = vmatprep.subr.mxu0 0.0
    %2858 = vmatpush1.msra.mxu0 0.0
    %2859 = vmatprep.subr.mxu0 0.0
    %2860 = vmatpush1.msra.mxu0 0.0
    %2861 = vmatprep.subr.mxu0 0.0
    %2862 = vmatpush1.msra.mxu0 0.0
    %2863 = vmatprep.subr.mxu0 0.0
    %2864 = vmatpush1.msra.mxu0 0.0
    %2865 = vmatprep.subr.mxu0 0.0
    %2866 = vmatpush1.msra.mxu0 0.0
    %2867 = vmatprep.subr.mxu0 0.0
    %2868 = vmatpush1.msra.mxu0 0.0
    %2869 = vmatprep.subr.mxu0 0.0
    %2870 = vmatpush1.msra.mxu0 0.0
    %2871 = vmatprep.subr.mxu0 0.0
    %2872 = vmatpush1.msra.mxu0 0.0
    %2873 = vmatprep.subr.mxu0 0.0
    %2874 = vmatpush1.msra.mxu0 0.0
    %2875 = vmatprep.subr.mxu0 0.0
    %2876 = vmatpush1.msra.mxu0 0.0
    %2877 = vmatprep.subr.mxu0 0.0
    %2878 = vmatpush1.msra.mxu0 0.0
    %2879 = vmatprep.subr.mxu0 0.0
    %2880 = vmatpush1.msra.mxu0 0.0
    %2881 = vmatprep.subr.mxu0 %v2855
    %2882 = vmatpush1.msra.mxu0 %v2854
    %2883 = vmatprep.subr.mxu0 %v2852
    %2884 = vmatpush1.msra.mxu0 %v2851
    %2885 = vmatprep.subr.mxu0 %v2849
    %2886 = vmatpush1.msra.mxu0 %v2848
    %2887 = vmatprep.subr.mxu0 %v2846
    %2888 = vmatpush1.msra.mxu0 %v2845
    %2889 = vmatprep.subr.mxu0 0.0
    %2890 = vmatpush2.msra.mxu0 0.0
    %2891 = vmatprep.subr.mxu0 0.0
    %2892 = vmatpush2.msra.mxu0 0.0
    %2893 = vmatprep.subr.mxu0 0.0
    %2894 = vmatpush2.msra.mxu0 0.0
    %2895 = vmatprep.subr.mxu0 0.0
    %2896 = vmatpush2.msra.mxu0 0.0
    %2897 = vmatprep.subr.mxu0 0.0
    %2898 = vmatpush2.msra.mxu0 0.0
    %2899 = vmatprep.subr.mxu0 0.0
    %2900 = vmatpush2.msra.mxu0 0.0
    %2901 = vmatprep.subr.mxu0 0.0
    %2902 = vmatpush2.msra.mxu0 0.0
    %2903 = vmatprep.subr.mxu0 0.0
    %2904 = vmatpush2.msra.mxu0 0.0
    %2905 = vmatprep.subr.mxu0 0.0
    %2906 = vmatpush2.msra.mxu0 0.0
    %2907 = vmatprep.subr.mxu0 0.0
    %2908 = vmatpush2.msra.mxu0 0.0
    %2909 = vmatprep.subr.mxu0 0.0
    %2910 = vmatpush2.msra.mxu0 0.0
    %2911 = vmatprep.subr.mxu0 0.0
    %2912 = vmatpush2.msra.mxu0 0.0
    %2913 = vmatprep.subr.mxu0 0.0
    %2914 = vmatpush2.msra.mxu0 0.0
    %2915 = vmatprep.subr.mxu0 0.0
    %2916 = vmatpush2.msra.mxu0 0.0
    %2917 = vmatprep.subr.mxu0 0.0
    %2918 = vmatpush2.msra.mxu0 0.0
    %2919 = vmatprep.subr.mxu0 0.0
    %2920 = vmatpush2.msra.mxu0 0.0
    %2921 = vmatprep.mubr.f32.mxu0 0.0
    %2922 = vmatmul.mubr.f32.gmra.mxu0 %v1344
    %v2923 = vpop.f32.mrf.mxu0
    %v2924 = vadd.f32 0.0, %v2923
    %v2925 = vpop.f32.mrf.mxu0
    %v2926 = vadd.f32 0.0, %v2925
    %2927 = vdwg.mxu0
    %2928 = vmatprep.subr.mxu0 0.0
    %2929 = vmatpush1.msra.mxu0 0.0
    %2930 = vmatprep.subr.mxu0 0.0
    %2931 = vmatpush1.msra.mxu0 0.0
    %2932 = vmatprep.subr.mxu0 0.0
    %2933 = vmatpush1.msra.mxu0 0.0
    %2934 = vmatprep.subr.mxu0 0.0
    %2935 = vmatpush1.msra.mxu0 0.0
    %2936 = vmatprep.subr.mxu0 0.0
    %2937 = vmatpush1.msra.mxu0 0.0
    %2938 = vmatprep.subr.mxu0 0.0
    %2939 = vmatpush1.msra.mxu0 0.0
    %2940 = vmatprep.subr.mxu0 0.0
    %2941 = vmatpush1.msra.mxu0 0.0
    %2942 = vmatprep.subr.mxu0 0.0
    %2943 = vmatpush1.msra.mxu0 0.0
    %2944 = vmatprep.subr.mxu0 0.0
    %2945 = vmatpush1.msra.mxu0 0.0
    %2946 = vmatprep.subr.mxu0 0.0
    %2947 = vmatpush1.msra.mxu0 0.0
    %2948 = vmatprep.subr.mxu0 0.0
    %2949 = vmatpush1.msra.mxu0 0.0
    %2950 = vmatprep.subr.mxu0 0.0
    %2951 = vmatpush1.msra.mxu0 0.0
    %2952 = vmatprep.subr.mxu0 0.0
    %2953 = vmatpush1.msra.mxu0 %v2856
    %2954 = vmatprep.subr.mxu0 0.0
    %2955 = vmatpush1.msra.mxu0 %v2853
    %2956 = vmatprep.subr.mxu0 0.0
    %2957 = vmatpush1.msra.mxu0 %v2850
    %2958 = vmatprep.subr.mxu0 0.0
    %2959 = vmatpush1.msra.mxu0 %v2847
    %2960 = vmatprep.subr.mxu0 0.0
    %2961 = vmatpush2.msra.mxu0 0.0
    %2962 = vmatprep.subr.mxu0 0.0
    %2963 = vmatpush2.msra.mxu0 0.0
    %2964 = vmatprep.subr.mxu0 0.0
    %2965 = vmatpush2.msra.mxu0 0.0
    %2966 = vmatprep.subr.mxu0 0.0
    %2967 = vmatpush2.msra.mxu0 0.0
    %2968 = vmatprep.subr.mxu0 0.0
    %2969 = vmatpush2.msra.mxu0 0.0
    %2970 = vmatprep.subr.mxu0 0.0
    %2971 = vmatpush2.msra.mxu0 0.0
    %2972 = vmatprep.subr.mxu0 0.0
    %2973 = vmatpush2.msra.mxu0 0.0
    %2974 = vmatprep.subr.mxu0 0.0
    %2975 = vmatpush2.msra.mxu0 0.0
    %2976 = vmatprep.subr.mxu0 0.0
    %2977 = vmatpush2.msra.mxu0 0.0
    %2978 = vmatprep.subr.mxu0 0.0
    %2979 = vmatpush2.msra.mxu0 0.0
    %2980 = vmatprep.subr.mxu0 0.0
    %2981 = vmatpush2.msra.mxu0 0.0
    %2982 = vmatprep.subr.mxu0 0.0
    %2983 = vmatpush2.msra.mxu0 0.0
    %2984 = vmatprep.subr.mxu0 0.0
    %2985 = vmatpush2.msra.mxu0 0.0
    %2986 = vmatprep.subr.mxu0 0.0
    %2987 = vmatpush2.msra.mxu0 0.0
    %2988 = vmatprep.subr.mxu0 0.0
    %2989 = vmatpush2.msra.mxu0 0.0
    %2990 = vmatprep.subr.mxu0 0.0
    %2991 = vmatpush2.msra.mxu0 0.0
    %2992 = vmatprep.mubr.f32.mxu0 0.0
    %2993 = vmatmul.mubr.f32.gmra.mxu0 %v1344
    %v2994 = vpop.f32.mrf.mxu0
    %v2995 = vadd.f32 0.0, %v2994
    %v2996 = vpop.f32.mrf.mxu0
    %2997 = vdwg.mxu0
    %v3001 = vcombine.low %v2924, %v2926
    %v3003 = vunpack.c.l.s4 1983009808
    %v3004 = vunpack.c.0.s8 %v3003
    %v3005 = vlaneseq
    %v3006 = vshrl.u32 %v3005, 7
    %v3007 = vsub.s32 %v3004, %v3006
    %v3008 = vrot.slane %v3001, %v3007
    %v3010 = vunpack.c.l.s4 1983009808
    %v3011 = vunpack.c.0.s8 %v3010
    %v3012 = vlaneseq
    %v3013 = vshrl.u32 %v3012, 7
    %v3014 = vsub.s32 %v3011, %v3013
    %v3015 = vrot.slane %v2995, %v3014
    %v3016 = vcombine.low %v3008, %v3015
    %vm3018 = vcmask 1043458
    %vm3019 = vmor %vm3018, %vm787
    %vm3020 = vcmask 357380
    %vm3021 = vmor %vm3020, %vm3019
    %3022 = vst.msk [vmem:[%s25] sm:$0x3f] %vm3021, %v3016
    // Predicated region
    $region82: #{forward.2} parent=1 // pred_check
      _
    $region83: #{forward.2} parent=1 // pred_check_branch
      %3024 = sbr.rel (0) target = $region85
    $region84: #{forward.2} parent=1 // pred_region
      %s3026 = ssub.s32 32, 32
      %3027 = vsyncadd [#allocation3], %s3026
      %s3029 = sshll.u32 [#allocation2], 4
      %s3030 = int_to_ptr.vmem [resolvable:$true] %s3029
      %3032 = dma.vmem_to_hbm [thread:$0]  %s3030, 32, %s20, [#allocation3]
    $region85: #{forward.2} parent=1 // pred_fallthru
      _
    // Predicated region
    $region86: #{forward.2} parent=1 // pred_check
      _
    $region87: #{forward.2} parent=1 // pred_check_branch
      %3034 = sbr.rel (0) target = $region89
    $region88: #{forward.2} parent=1 // pred_region
      %s3036 = ssub.s32 32, 32
      %3037 = vsyncadd [#allocation5], %s3036
      %s3039 = sshll.u32 [#allocation4], 4
      %s3040 = int_to_ptr.vmem [resolvable:$true] %s3039
      %3042 = dma.vmem_to_hbm [thread:$0]  %s3040, 32, %s21, [#allocation5]
    $region89: #{forward.2} parent=1 // pred_fallthru
      _
    // Predicated region
    $region90: #{forward.2} parent=1 // pred_check
      _
    $region91: #{forward.2} parent=1 // pred_check_branch
      %3044 = sbr.rel (0) target = $region93
    $region92: #{forward.2} parent=1 // pred_region
      %s3046 = ssub.s32 32, 32
      %3047 = vsyncadd [#allocation5], %s3046
      %s3049 = sshll.u32 [#allocation6], 4
      %s3050 = int_to_ptr.vmem [resolvable:$true] %s3049
      %3052 = dma.vmem_to_hbm [thread:$0]  %s3050, 32, %s22, [#allocation5]
    $region93: #{forward.2} parent=1 // pred_fallthru
      _
    // Predicated region
    $region94: #{forward.2} parent=1 // pred_check
      _
    $region95: #{forward.2} parent=1 // pred_check_branch
      %3054 = sbr.rel (0) target = $region97
    $region96: #{forward.2} parent=1 // pred_region
      _
    $region97: #{forward.2} parent=1 // pred_fallthru
      _
    // Predicated region
    $region98: #{forward.2} parent=1 // pred_check
      _
    $region99: #{forward.2} parent=1 // pred_check_branch
      %3056 = sbr.rel (0) target = $region101
    $region100: #{forward.2} parent=1 // pred_region
      _
    $region101: #{forward.2} parent=1 // pred_fallthru
      _
    // Predicated region
    $region102: #{forward.2} parent=1 // pred_check
      _
    $region103: #{forward.2} parent=1 // pred_check_branch
      %3058 = sbr.rel (0) target = $region105
    $region104: #{forward.2} parent=1 // pred_region
      _
    $region105: #{forward.2} parent=1 // pred_fallthru
      _
    // Predicated region
    $region106: #{forward.2} parent=1 // pred_check
      _
    $region107: #{forward.2} parent=1 // pred_check_branch
      %3060 = sbr.rel (0) target = $region109
    $region108: #{forward.2} parent=1 // pred_region
      %3061 = dma.done [#allocation3], 32
    $region109: #{forward.2} parent=1 // pred_fallthru
      _
    // Predicated region
    $region110: #{forward.2} parent=1 // pred_check
      _
    $region111: #{forward.2} parent=1 // pred_check_branch
      %3063 = sbr.rel (0) target = $region113
    $region112: #{forward.2} parent=1 // pred_region
      %3064 = dma.done [#allocation5], 32
    $region113: #{forward.2} parent=1 // pred_fallthru
      _
    // Predicated region
    $region114: #{forward.2} parent=1 // pred_check
      _
    $region115: #{forward.2} parent=1 // pred_check_branch
      %3066 = sbr.rel (0) target = $region117
    $region116: #{forward.2} parent=1 // pred_region
      %3067 = dma.done [#allocation5], 32
    $region117: #{forward.2} parent=1 // pred_fallthru
      _
    // Predicated region
    $region118: #{forward.2} parent=1 // pred_check
      _
    $region119: #{forward.2} parent=1 // pred_check_branch
      %3069 = sbr.rel (0) target = $region121
    $region120: #{forward.2} parent=1 // pred_region
      _
    $region121: #{forward.2} parent=1 // pred_fallthru
      _
    // Predicated region
    $region122: #{forward.2} parent=1 // pred_check
      _
    $region123: #{forward.2} parent=1 // pred_check_branch
      %3071 = sbr.rel (0) target = $region125
    $region124: #{forward.2} parent=1 // pred_region
      _
    $region125: #{forward.2} parent=1 // pred_fallthru
      _
    // Predicated region
    $region126: #{forward.2} parent=1 // pred_check
      _
    $region127: #{forward.2} parent=1 // pred_check_branch
      %3073 = sbr.rel (0) target = $region129
    $region128: #{forward.2} parent=1 // pred_region
      _
    $region129: #{forward.2} parent=1 // pred_fallthru
      _
    %3074 = vsyncpa [#allocation3], 1
    %3075 = vsyncpa [#allocation5], 1

// kernel: forward.3
$region0: #{forward.3}
  #allocation0 [shape = 'u32[]', space=smem, size = 0x4, offset = 0x4, fixed_abs, tag = 'smem constant byte address 0x4 - core index']
  #allocation1 [shape = 'u32[144,128]{1,0:T(1,128)}', space=vmem, size = 0x12000, scoped, tag = 'internal scratch']
  %s0 = inlined_call_operand.vmem [shape: f32[8,56], index: 0, kind: input, shape index: {}]
  %s1 = inlined_call_operand.vmem [shape: f32[8,8], index: 1, kind: input, shape index: {}]
  %s2 = inlined_call_operand.vmem [shape: f32[8,5,300], index: 2, kind: input, shape index: {}]
  %s3 = inlined_call_operand.vmem [shape: f32[2,32], index: 3, kind: input, shape index: {}]
  %s4 = inlined_call_operand.vmem [shape: f32[2,3,32], index: 4, kind: input, shape index: {}]
  %s5 = inlined_call_operand.vmem [shape: f32[2,3,32], index: 5, kind: input, shape index: {}]
  %s6 = inlined_call_operand.vmem [shape: f32[2,300], index: 6, kind: input, shape index: {}]
  %s7 = inlined_call_operand.vmem [shape: f32[8,32], index: 7, kind: input, shape index: {}]
  %s8 = inlined_call_operand.vmem [shape: f32[56,32], index: 8, kind: input, shape index: {}]
  %s9 = inlined_call_operand.vmem [shape: f32[300,32], index: 9, kind: input, shape index: {}]
  %s10 = inlined_call_operand.vmem [shape: f32[32,32], index: 10, kind: input, shape index: {}]
  %s11 = inlined_call_operand.vmem [shape: f32[32,32], index: 11, kind: input, shape index: {}]
  %s12 = inlined_call_operand.vmem [shape: f32[3,32,32], index: 12, kind: input, shape index: {}]
  %s13 = inlined_call_operand.vmem [shape: f32[3,1,32], index: 13, kind: input, shape index: {}]
  %s14 = inlined_call_operand.vmem [shape: f32[3,32,32], index: 14, kind: input, shape index: {}]
  %s15 = inlined_call_operand.vmem [shape: f32[3,32,32], index: 15, kind: input, shape index: {}]
  %s16 = inlined_call_operand.vmem [shape: f32[3,1,32], index: 16, kind: input, shape index: {}]
  %s17 = inlined_call_operand.vmem [shape: f32[3,32,32], index: 17, kind: input, shape index: {}]
  %s18 = inlined_call_operand.vmem [shape: f32[3,32,32], index: 18, kind: input, shape index: {}]
  %s19 = inlined_call_operand.vmem [shape: f32[3,1,32], index: 19, kind: input, shape index: {}]
  %s20 = inlined_call_operand.vmem [shape: f32[8,1], index: 20, kind: output, shape index: {0}]
  %s21 = inlined_call_operand.hbm [shape: f32[8,32], index: 21, kind: output, shape index: {1}]
  %22 = xla_tuple %s20, %s21
  %s23 = sld [smem:[#allocation0]]
  $region98: #{forward.3} parent=0
    _
  %s25 = ssub.s32 1, %s23
  %s26 = scalar_select 0, %s25, %s23
  $region1: #{forward.3} parent=0
    #allocation2 [shape = 'u8[4096]{0}', space=vmem, size = 0x1000, scoped, tag = 'output window, operand 1, single buffered']
    #allocation3 [shape = 's32[1]{0}', space=sflag, size = 0x4, scoped, tag = 'scoped memory for forward.3']
    %27 = vsyncpa [#allocation3], 0
    // Predicated region
    $region2: #{forward.3} parent=1 // pred_check
      _
    $region3: #{forward.3} parent=1 // pred_check_branch
      %29 = sbr.rel (0) target = $region5
    $region4: #{forward.3} parent=1 // pred_region
      _
    $region5: #{forward.3} parent=1 // pred_fallthru
      _
    // Predicated region
    $region6: #{forward.3} parent=1 // pred_check
      _
    $region7: #{forward.3} parent=1 // pred_check_branch
      %31 = sbr.rel (0) target = $region9
    $region8: #{forward.3} parent=1 // pred_region
      _
    $region9: #{forward.3} parent=1 // pred_fallthru
      _
    // Predicated region
    $region10: #{forward.3} parent=1 // pred_check
      _
    $region11: #{forward.3} parent=1 // pred_check_branch
      %33 = sbr.rel (0) target = $region13
    $region12: #{forward.3} parent=1 // pred_region
      _
    $region13: #{forward.3} parent=1 // pred_fallthru
      _
    // Predicated region
    $region14: #{forward.3} parent=1 // pred_check
      _
    $region15: #{forward.3} parent=1 // pred_check_branch
      %35 = sbr.rel (0) target = $region17
    $region16: #{forward.3} parent=1 // pred_region
      _
    $region17: #{forward.3} parent=1 // pred_fallthru
      _
    // Predicated region
    $region18: #{forward.3} parent=1 // pred_check
      _
    $region19: #{forward.3} parent=1 // pred_check_branch
      %37 = sbr.rel (0) target = $region21
    $region20: #{forward.3} parent=1 // pred_region
      _
    $region21: #{forward.3} parent=1 // pred_fallthru
      _
    // Predicated region
    $region22: #{forward.3} parent=1 // pred_check
      _
    $region23: #{forward.3} parent=1 // pred_check_branch
      %39 = sbr.rel (0) target = $region25
    $region24: #{forward.3} parent=1 // pred_region
      _
    $region25: #{forward.3} parent=1 // pred_fallthru
      _
    // Predicated region
    $region26: #{forward.3} parent=1 // pred_check
      _
    $region27: #{forward.3} parent=1 // pred_check_branch
      %41 = sbr.rel (0) target = $region29
    $region28: #{forward.3} parent=1 // pred_region
      _
    $region29: #{forward.3} parent=1 // pred_fallthru
      _
    // Predicated region
    $region30: #{forward.3} parent=1 // pred_check
      _
    $region31: #{forward.3} parent=1 // pred_check_branch
      %43 = sbr.rel (0) target = $region33
    $region32: #{forward.3} parent=1 // pred_region
      _
    $region33: #{forward.3} parent=1 // pred_fallthru
      _
    // Predicated region
    $region34: #{forward.3} parent=1 // pred_check
      _
    $region35: #{forward.3} parent=1 // pred_check_branch
      %45 = sbr.rel (0) target = $region37
    $region36: #{forward.3} parent=1 // pred_region
      _
    $region37: #{forward.3} parent=1 // pred_fallthru
      _
    // Predicated region
    $region38: #{forward.3} parent=1 // pred_check
      _
    $region39: #{forward.3} parent=1 // pred_check_branch
      %47 = sbr.rel (0) target = $region41
    $region40: #{forward.3} parent=1 // pred_region
      _
    $region41: #{forward.3} parent=1 // pred_fallthru
      _
    // Predicated region
    $region42: #{forward.3} parent=1 // pred_check
      _
    $region43: #{forward.3} parent=1 // pred_check_branch
      %49 = sbr.rel (0) target = $region45
    $region44: #{forward.3} parent=1 // pred_region
      _
    $region45: #{forward.3} parent=1 // pred_fallthru
      _
    // Predicated region
    $region46: #{forward.3} parent=1 // pred_check
      _
    $region47: #{forward.3} parent=1 // pred_check_branch
      %51 = sbr.rel (0) target = $region49
    $region48: #{forward.3} parent=1 // pred_region
      _
    $region49: #{forward.3} parent=1 // pred_fallthru
      _
    // Predicated region
    $region50: #{forward.3} parent=1 // pred_check
      _
    $region51: #{forward.3} parent=1 // pred_check_branch
      %53 = sbr.rel (0) target = $region53
    $region52: #{forward.3} parent=1 // pred_region
      _
    $region53: #{forward.3} parent=1 // pred_fallthru
      _
    // Predicated region
    $region54: #{forward.3} parent=1 // pred_check
      _
    $region55: #{forward.3} parent=1 // pred_check_branch
      %55 = sbr.rel (0) target = $region57
    $region56: #{forward.3} parent=1 // pred_region
      _
    $region57: #{forward.3} parent=1 // pred_fallthru
      _
    // Predicated region
    $region58: #{forward.3} parent=1 // pred_check
      _
    $region59: #{forward.3} parent=1 // pred_check_branch
      %57 = sbr.rel (0) target = $region61
    $region60: #{forward.3} parent=1 // pred_region
      _
    $region61: #{forward.3} parent=1 // pred_fallthru
      _
    // Predicated region
    $region62: #{forward.3} parent=1 // pred_check
      _
    $region63: #{forward.3} parent=1 // pred_check_branch
      %59 = sbr.rel (0) target = $region65
    $region64: #{forward.3} parent=1 // pred_region
      _
    $region65: #{forward.3} parent=1 // pred_fallthru
      _
    // Predicated region
    $region66: #{forward.3} parent=1 // pred_check
      _
    $region67: #{forward.3} parent=1 // pred_check_branch
      %61 = sbr.rel (0) target = $region69
    $region68: #{forward.3} parent=1 // pred_region
      _
    $region69: #{forward.3} parent=1 // pred_fallthru
      _
    // Predicated region
    $region70: #{forward.3} parent=1 // pred_check
      _
    $region71: #{forward.3} parent=1 // pred_check_branch
      %63 = sbr.rel (0) target = $region73
    $region72: #{forward.3} parent=1 // pred_region
      _
    $region73: #{forward.3} parent=1 // pred_fallthru
      _
    // Predicated region
    $region74: #{forward.3} parent=1 // pred_check
      _
    $region75: #{forward.3} parent=1 // pred_check_branch
      %65 = sbr.rel (0) target = $region77
    $region76: #{forward.3} parent=1 // pred_region
      _
    $region77: #{forward.3} parent=1 // pred_fallthru
      _
    // Predicated region
    $region78: #{forward.3} parent=1 // pred_check
      _
    $region79: #{forward.3} parent=1 // pred_check_branch
      %67 = sbr.rel (0) target = $region81
    $region80: #{forward.3} parent=1 // pred_region
      _
    $region81: #{forward.3} parent=1 // pred_fallthru
      _
    %v68 = vld [vmem:[%s4] sm:$0x7]
    %v69 = vld [vmem:[%s4 + $0x4] sm:$0x7]
    %v70 = vld [vmem:[%s5] sm:$0x7]
    %v71 = vld [vmem:[%s5 + $0x4] sm:$0x7]
    %v72 = vlaneseq
    %v73 = vshrl.u32 %v72, 7
    %v74 = vsub.s32 0, %v73
    %v75 = vrot.slane %v68, %v74
    %v76 = vlaneseq
    %v77 = vshrl.u32 %v76, 7
    %v78 = vsub.s32 0, %v77
    %v79 = vrot.slane %v69, %v78
    %v80 = vlaneseq
    %v81 = vshrl.u32 %v80, 7
    %v82 = vsub.s32 1, %v81
    %v83 = vrot.slane %v68, %v82
    %v84 = vlaneseq
    %v85 = vshrl.u32 %v84, 7
    %v86 = vsub.s32 1, %v85
    %v87 = vrot.slane %v69, %v86
    %v88 = vlaneseq
    %v89 = vshrl.u32 %v88, 7
    %v90 = vsub.s32 2, %v89
    %v91 = vrot.slane %v68, %v90
    %v92 = vlaneseq
    %v93 = vshrl.u32 %v92, 7
    %v94 = vsub.s32 2, %v93
    %v95 = vrot.slane %v69, %v94
    %v96 = vlaneseq
    %v97 = vshrl.u32 %v96, 7
    %v98 = vsub.s32 0, %v97
    %v99 = vrot.slane %v70, %v98
    %v100 = vlaneseq
    %v101 = vshrl.u32 %v100, 7
    %v102 = vsub.s32 0, %v101
    %v103 = vrot.slane %v71, %v102
    %v104 = vlaneseq
    %v105 = vshrl.u32 %v104, 7
    %v106 = vsub.s32 1, %v105
    %v107 = vrot.slane %v70, %v106
    %v108 = vlaneseq
    %v109 = vshrl.u32 %v108, 7
    %v110 = vsub.s32 1, %v109
    %v111 = vrot.slane %v71, %v110
    %v112 = vlaneseq
    %v113 = vshrl.u32 %v112, 7
    %v114 = vsub.s32 2, %v113
    %v115 = vrot.slane %v70, %v114
    %v116 = vlaneseq
    %v117 = vshrl.u32 %v116, 7
    %v118 = vsub.s32 2, %v117
    %v119 = vrot.slane %v71, %v118
    %v120 = vld [vmem:[%s3] sm:$0x3]
    %v123 = vunpack.c.l.s4 1966171168
    %v124 = vunpack.c.0.s8 %v123
    %v125 = vlaneseq
    %v126 = vshrl.u32 %v125, 7
    %v127 = vsub.s32 %v124, %v126
    %v128 = vrot.slane %v120, %v127
    %v129 = vcombine.high %v128, %v128
    %v131 = vunpack.c.l.s4 1966171168
    %v132 = vunpack.c.0.s8 %v131
    %v133 = vlaneseq
    %v134 = vshrl.u32 %v133, 7
    %v135 = vsub.s32 %v132, %v134
    %v136 = vrot.slane %v128, %v135
    %v138 = vunpack.c.l.s4 1966171168
    %v139 = vunpack.c.0.s8 %v138
    %v140 = vlaneseq
    %v141 = vshrl.u32 %v140, 7
    %v142 = vsub.s32 %v139, %v141
    %v143 = vrot.slane %v129, %v142
    %v144 = vlaneseq
    %v145 = vshrl.u32 %v144, 7
    %v146 = vsub.s32 0, %v145
    %v147 = vrot.slane %v136, %v146
    %v148 = vlaneseq
    %v149 = vshrl.u32 %v148, 7
    %v150 = vsub.s32 0, %v149
    %v151 = vrot.slane %v143, %v150
    %v152 = vld [vmem:[%s6] sm:$0x3f]
    %v155 = vunpack.c.l.s4 1966171168
    %v156 = vunpack.c.0.s8 %v155
    %v157 = vlaneseq
    %v158 = vshrl.u32 %v157, 7
    %v159 = vsub.s32 %v156, %v158
    %v160 = vrot.slane %v152, %v159
    %v161 = vcombine.high %v160, %v160
    %v162 = vlaneseq
    %v163 = vshrl.u32 %v162, 7
    %v164 = vsub.s32 0, %v163
    %v165 = vrot.slane %v160, %v164
    %v166 = vlaneseq
    %v167 = vshrl.u32 %v166, 7
    %v168 = vsub.s32 1, %v167
    %v169 = vrot.slane %v160, %v168
    %v170 = vlaneseq
    %v171 = vshrl.u32 %v170, 7
    %v172 = vsub.s32 2, %v171
    %v173 = vrot.slane %v160, %v172
    %v174 = vlaneseq
    %v175 = vshrl.u32 %v174, 7
    %v176 = vsub.s32 0, %v175
    %v177 = vrot.slane %v161, %v176
    %v178 = vlaneseq
    %v179 = vshrl.u32 %v178, 7
    %v180 = vsub.s32 1, %v179
    %v181 = vrot.slane %v161, %v180
    %v182 = vlaneseq
    %v183 = vshrl.u32 %v182, 7
    %v184 = vsub.s32 2, %v183
    %v185 = vrot.slane %v161, %v184
    %v186 = vld [vmem:[%s2] sm:$0x1f]
    %v187 = vld [vmem:[%s2 + $0x8] sm:$0x1f]
    %v188 = vld [vmem:[%s2 + $0x10] sm:$0x1f]
    %v189 = vld [vmem:[%s2 + $0x18] sm:$0x1f]
    %v190 = vld [vmem:[%s2 + $0x20] sm:$0x1f]
    %v191 = vld [vmem:[%s2 + $0x28] sm:$0x1f]
    %v192 = vld [vmem:[%s2 + $0x30] sm:$0x1f]
    %v193 = vld [vmem:[%s2 + $0x38] sm:$0x1f]
    %v194 = vld [vmem:[%s2 + $0x40] sm:$0x1f]
    %v195 = vld [vmem:[%s2 + $0x48] sm:$0x1f]
    %v196 = vld [vmem:[%s2 + $0x50] sm:$0x1f]
    %v197 = vld [vmem:[%s2 + $0x58] sm:$0x1f]
    %v198 = vld [vmem:[%s2 + $0x60] sm:$0x1f]
    %v199 = vld [vmem:[%s2 + $0x68] sm:$0x1f]
    %v200 = vld [vmem:[%s2 + $0x70] sm:$0x1f]
    %v201 = vld [vmem:[%s2 + $0x78] sm:$0x1f]
    %v202 = vld [vmem:[%s2 + $0x80] sm:$0x1f]
    %v203 = vld [vmem:[%s2 + $0x88] sm:$0x1f]
    %v204 = vld [vmem:[%s2 + $0x90] sm:$0x1f]
    %v205 = vld [vmem:[%s2 + $0x98] sm:$0x1f]
    %v206 = vld [vmem:[%s2 + $0xa0] sm:$0x1f]
    %v207 = vld [vmem:[%s2 + $0xa8] sm:$0x1f]
    %v208 = vld [vmem:[%s2 + $0xb0] sm:$0x1f]
    %v209 = vld [vmem:[%s2 + $0xb8] sm:$0x1f]
    %v210 = vcombine.low %v165, %v169
    %v212 = vunpack.c.l.s4 1966171168
    %v213 = vunpack.c.0.s8 %v212
    %v214 = vlaneseq
    %v215 = vshrl.u32 %v214, 7
    %v216 = vsub.s32 %v213, %v215
    %v217 = vrot.slane %v210, %v216
    %v219 = vunpack.c.l.s4 1966171168
    %v220 = vunpack.c.0.s8 %v219
    %v221 = vlaneseq
    %v222 = vshrl.u32 %v221, 7
    %v223 = vsub.s32 %v220, %v222
    %v224 = vrot.slane %v173, %v223
    %v225 = vcombine.low %v217, %v224
    %v226 = vcombine.high %v217, %v224
    %v228 = vunpack.c.l.s4 1966171168
    %v229 = vunpack.c.0.s8 %v228
    %v230 = vlaneseq
    %v231 = vshrl.u32 %v230, 7
    %v232 = vsub.s32 %v229, %v231
    %v233 = vrot.slane %v225, %v232
    %v235 = vunpack.c.l.s4 1966171168
    %v236 = vunpack.c.0.s8 %v235
    %v237 = vlaneseq
    %v238 = vshrl.u32 %v237, 7
    %v239 = vsub.s32 %v236, %v238
    %v240 = vrot.slane %v226, %v239
    %v241 = vcombine.high %v233, %v233
    %v242 = vcombine.high %v240, %v240
    %v243 = vcombine.low %v177, %v181
    %v245 = vunpack.c.l.s4 1966171168
    %v246 = vunpack.c.0.s8 %v245
    %v247 = vlaneseq
    %v248 = vshrl.u32 %v247, 7
    %v249 = vsub.s32 %v246, %v248
    %v250 = vrot.slane %v243, %v249
    %v252 = vunpack.c.l.s4 1966171168
    %v253 = vunpack.c.0.s8 %v252
    %v254 = vlaneseq
    %v255 = vshrl.u32 %v254, 7
    %v256 = vsub.s32 %v253, %v255
    %v257 = vrot.slane %v185, %v256
    %v258 = vcombine.low %v250, %v257
    %v259 = vcombine.high %v250, %v257
    %v261 = vunpack.c.l.s4 1966171168
    %v262 = vunpack.c.0.s8 %v261
    %v263 = vlaneseq
    %v264 = vshrl.u32 %v263, 7
    %v265 = vsub.s32 %v262, %v264
    %v266 = vrot.slane %v258, %v265
    %v268 = vunpack.c.l.s4 1966171168
    %v269 = vunpack.c.0.s8 %v268
    %v270 = vlaneseq
    %v271 = vshrl.u32 %v270, 7
    %v272 = vsub.s32 %v269, %v271
    %v273 = vrot.slane %v259, %v272
    %v274 = vcombine.high %v266, %v266
    %v275 = vcombine.high %v273, %v273
    %v276 = vlaneseq
    %v277 = vshrl.u32 %v276, 7
    %v278 = vsub.s32 0, %v277
    %v279 = vrot.slane %v233, %v278
    %v280 = vlaneseq
    %v281 = vshrl.u32 %v280, 7
    %v282 = vsub.s32 1, %v281
    %v283 = vrot.slane %v233, %v282
    %v284 = vlaneseq
    %v285 = vshrl.u32 %v284, 7
    %v286 = vsub.s32 2, %v285
    %v287 = vrot.slane %v233, %v286
    %v288 = vlaneseq
    %v289 = vshrl.u32 %v288, 7
    %v290 = vsub.s32 0, %v289
    %v291 = vrot.slane %v240, %v290
    %v292 = vlaneseq
    %v293 = vshrl.u32 %v292, 7
    %v294 = vsub.s32 1, %v293
    %v295 = vrot.slane %v240, %v294
    %v296 = vlaneseq
    %v297 = vshrl.u32 %v296, 7
    %v298 = vsub.s32 2, %v297
    %v299 = vrot.slane %v240, %v298
    %v300 = vlaneseq
    %v301 = vshrl.u32 %v300, 7
    %v302 = vsub.s32 0, %v301
    %v303 = vrot.slane %v241, %v302
    %v304 = vlaneseq
    %v305 = vshrl.u32 %v304, 7
    %v306 = vsub.s32 1, %v305
    %v307 = vrot.slane %v241, %v306
    %v308 = vlaneseq
    %v309 = vshrl.u32 %v308, 7
    %v310 = vsub.s32 2, %v309
    %v311 = vrot.slane %v241, %v310
    %v312 = vlaneseq
    %v313 = vshrl.u32 %v312, 7
    %v314 = vsub.s32 0, %v313
    %v315 = vrot.slane %v242, %v314
    %v316 = vlaneseq
    %v317 = vshrl.u32 %v316, 7
    %v318 = vsub.s32 1, %v317
    %v319 = vrot.slane %v242, %v318
    %v320 = vlaneseq
    %v321 = vshrl.u32 %v320, 7
    %v322 = vsub.s32 2, %v321
    %v323 = vrot.slane %v242, %v322
    %v324 = vlaneseq
    %v325 = vshrl.u32 %v324, 7
    %v326 = vsub.s32 0, %v325
    %v327 = vrot.slane %v266, %v326
    %v328 = vlaneseq
    %v329 = vshrl.u32 %v328, 7
    %v330 = vsub.s32 1, %v329
    %v331 = vrot.slane %v266, %v330
    %v332 = vlaneseq
    %v333 = vshrl.u32 %v332, 7
    %v334 = vsub.s32 2, %v333
    %v335 = vrot.slane %v266, %v334
    %v336 = vlaneseq
    %v337 = vshrl.u32 %v336, 7
    %v338 = vsub.s32 0, %v337
    %v339 = vrot.slane %v273, %v338
    %v340 = vlaneseq
    %v341 = vshrl.u32 %v340, 7
    %v342 = vsub.s32 1, %v341
    %v343 = vrot.slane %v273, %v342
    %v344 = vlaneseq
    %v345 = vshrl.u32 %v344, 7
    %v346 = vsub.s32 2, %v345
    %v347 = vrot.slane %v273, %v346
    %v348 = vlaneseq
    %v349 = vshrl.u32 %v348, 7
    %v350 = vsub.s32 0, %v349
    %v351 = vrot.slane %v274, %v350
    %v352 = vlaneseq
    %v353 = vshrl.u32 %v352, 7
    %v354 = vsub.s32 1, %v353
    %v355 = vrot.slane %v274, %v354
    %v356 = vlaneseq
    %v357 = vshrl.u32 %v356, 7
    %v358 = vsub.s32 2, %v357
    %v359 = vrot.slane %v274, %v358
    %v360 = vlaneseq
    %v361 = vshrl.u32 %v360, 7
    %v362 = vsub.s32 0, %v361
    %v363 = vrot.slane %v275, %v362
    %v364 = vlaneseq
    %v365 = vshrl.u32 %v364, 7
    %v366 = vsub.s32 1, %v365
    %v367 = vrot.slane %v275, %v366
    %v368 = vlaneseq
    %v369 = vshrl.u32 %v368, 7
    %v370 = vsub.s32 2, %v369
    %v371 = vrot.slane %v275, %v370
    %v396 = vmul.f32 %v186, %v279
    %v397 = vmul.f32 %v187, %v283
    %v398 = vmul.f32 %v188, %v287
    %v399 = vmul.f32 %v189, %v291
    %v400 = vmul.f32 %v190, %v295
    %v401 = vmul.f32 %v191, %v299
    %v402 = vmul.f32 %v192, %v303
    %v403 = vmul.f32 %v193, %v307
    %v404 = vmul.f32 %v194, %v311
    %v405 = vmul.f32 %v195, %v315
    %v406 = vmul.f32 %v196, %v319
    %v407 = vmul.f32 %v197, %v323
    %v408 = vmul.f32 %v198, %v327
    %v409 = vmul.f32 %v199, %v331
    %v410 = vmul.f32 %v200, %v335
    %v411 = vmul.f32 %v201, %v339
    %v412 = vmul.f32 %v202, %v343
    %v413 = vmul.f32 %v203, %v347
    %v414 = vmul.f32 %v204, %v351
    %v415 = vmul.f32 %v205, %v355
    %v416 = vmul.f32 %v206, %v359
    %v417 = vmul.f32 %v207, %v363
    %v418 = vmul.f32 %v208, %v367
    %v419 = vmul.f32 %v209, %v371
    %vm420 = vcmask 1044480
    %v421 = vsel %vm420, %v396, 0.0
    %v422 = vsel %vm420, %v397, 0.0
    %v423 = vadd.f32 %v421, %v422
    %vm424 = vcmask 356352
    %v425 = vsel %vm424, %v398, 0.0
    %v426 = vadd.f32 %v423, %v425
    %427 = vadd.xlane.f32.xlu0 %v426
    %v428 = vpop.xlane.xlu0 %427
    %v429 = vsel %vm420, %v399, 0.0
    %v430 = vsel %vm420, %v400, 0.0
    %v431 = vadd.f32 %v429, %v430
    %v432 = vsel %vm424, %v401, 0.0
    %v433 = vadd.f32 %v431, %v432
    %434 = vadd.xlane.f32.xlu0 %v433
    %v435 = vpop.xlane.xlu0 %434
    %v436 = vsel %vm420, %v402, 0.0
    %v437 = vsel %vm420, %v403, 0.0
    %v438 = vadd.f32 %v436, %v437
    %v439 = vsel %vm424, %v404, 0.0
    %v440 = vadd.f32 %v438, %v439
    %441 = vadd.xlane.f32.xlu0 %v440
    %v442 = vpop.xlane.xlu0 %441
    %v443 = vsel %vm420, %v405, 0.0
    %v444 = vsel %vm420, %v406, 0.0
    %v445 = vadd.f32 %v443, %v444
    %v446 = vsel %vm424, %v407, 0.0
    %v447 = vadd.f32 %v445, %v446
    %448 = vadd.xlane.f32.xlu0 %v447
    %v449 = vpop.xlane.xlu0 %448
    %v450 = vsel %vm420, %v408, 0.0
    %v451 = vsel %vm420, %v409, 0.0
    %v452 = vadd.f32 %v450, %v451
    %v453 = vsel %vm424, %v410, 0.0
    %v454 = vadd.f32 %v452, %v453
    %455 = vadd.xlane.f32.xlu0 %v454
    %v456 = vpop.xlane.xlu0 %455
    %v457 = vsel %vm420, %v411, 0.0
    %v458 = vsel %vm420, %v412, 0.0
    %v459 = vadd.f32 %v457, %v458
    %v460 = vsel %vm424, %v413, 0.0
    %v461 = vadd.f32 %v459, %v460
    %462 = vadd.xlane.f32.xlu0 %v461
    %v463 = vpop.xlane.xlu0 %462
    %v464 = vsel %vm420, %v414, 0.0
    %v465 = vsel %vm420, %v415, 0.0
    %v466 = vadd.f32 %v464, %v465
    %v467 = vsel %vm424, %v416, 0.0
    %v468 = vadd.f32 %v466, %v467
    %469 = vadd.xlane.f32.xlu0 %v468
    %v470 = vpop.xlane.xlu0 %469
    %v471 = vsel %vm420, %v417, 0.0
    %v472 = vsel %vm420, %v418, 0.0
    %v473 = vadd.f32 %v471, %v472
    %v474 = vsel %vm424, %v419, 0.0
    %v475 = vadd.f32 %v473, %v474
    %476 = vadd.xlane.f32.xlu0 %v475
    %v477 = vpop.xlane.xlu0 %476
    %v486 = vlaneseq
    %v487 = vand.u32 %v486, 127
    %v488 = vlaneseq
    %v489 = vshrl.u32 %v488, 7
    %v490 = vsub.s32 %v487, %v489
    %v491 = vrot.slane %v428, %v490
    %v492 = vlaneseq
    %v493 = vshrl.u32 %v492, 7
    %v494 = vsub.s32 %v487, %v493
    %v495 = vrot.slane %v435, %v494
    %v496 = vlaneseq
    %v497 = vshrl.u32 %v496, 7
    %v498 = vsub.s32 %v487, %v497
    %v499 = vrot.slane %v442, %v498
    %v500 = vlaneseq
    %v501 = vshrl.u32 %v500, 7
    %v502 = vsub.s32 %v487, %v501
    %v503 = vrot.slane %v449, %v502
    %v504 = vlaneseq
    %v505 = vshrl.u32 %v504, 7
    %v506 = vsub.s32 %v487, %v505
    %v507 = vrot.slane %v456, %v506
    %v508 = vlaneseq
    %v509 = vshrl.u32 %v508, 7
    %v510 = vsub.s32 %v487, %v509
    %v511 = vrot.slane %v463, %v510
    %v512 = vlaneseq
    %v513 = vshrl.u32 %v512, 7
    %v514 = vsub.s32 %v487, %v513
    %v515 = vrot.slane %v470, %v514
    %v516 = vlaneseq
    %v517 = vshrl.u32 %v516, 7
    %v518 = vsub.s32 %v487, %v517
    %v519 = vrot.slane %v477, %v518
    %vm520 = vcmask 1041409
    %v521 = vsel %vm520, %v495, %v491
    %vm522 = vcmask 1042434
    %v523 = vsel %vm522, %v499, %v521
    %vm524 = vcmask 1043459
    %v525 = vsel %vm524, %v503, %v523
    %vm526 = vcmask 1044484
    %v527 = vsel %vm526, %v507, %v525
    %vm528 = vcmask 1045509
    %v529 = vsel %vm528, %v511, %v527
    %vm530 = vcmask 1046534
    %v531 = vsel %vm530, %v515, %v529
    %vm532 = vcmask 1047559
    %v533 = vsel %vm532, %v519, %v531
    %vm535 = vcmask 39936
    %v536 = vsel %vm535, %v533, -inf
    %537 = vmax.xlane.f32.xlu0 %v536
    %v538 = vpop.xlane.xlu0 %537
    %v540 = vlaneseq
    %v541 = vshrl.u32 %v540, 7
    %v542 = vsub.s32 0, %v541
    %v543 = vrot.slane %v538, %v542
    %v544 = vlaneseq
    %v545 = vshrl.u32 %v544, 7
    %v546 = vsub.s32 1, %v545
    %v547 = vrot.slane %v538, %v546
    %v548 = vlaneseq
    %v549 = vshrl.u32 %v548, 7
    %v550 = vsub.s32 2, %v549
    %v551 = vrot.slane %v538, %v550
    %v552 = vlaneseq
    %v553 = vshrl.u32 %v552, 7
    %v554 = vsub.s32 3, %v553
    %v555 = vrot.slane %v538, %v554
    %v556 = vlaneseq
    %v557 = vshrl.u32 %v556, 7
    %v558 = vsub.s32 4, %v557
    %v559 = vrot.slane %v538, %v558
    %v560 = vlaneseq
    %v561 = vshrl.u32 %v560, 7
    %v562 = vsub.s32 5, %v561
    %v563 = vrot.slane %v538, %v562
    %v564 = vlaneseq
    %v565 = vshrl.u32 %v564, 7
    %v566 = vsub.s32 6, %v565
    %v567 = vrot.slane %v538, %v566
    %v568 = vlaneseq
    %v569 = vshrl.u32 %v568, 7
    %v570 = vsub.s32 7, %v569
    %v571 = vrot.slane %v538, %v570
    %v580 = vsub.f32 %v428, %v543
    %v581 = vsub.f32 %v435, %v547
    %v582 = vsub.f32 %v442, %v551
    %v583 = vsub.f32 %v449, %v555
    %v584 = vsub.f32 %v456, %v559
    %v585 = vsub.f32 %v463, %v563
    %v586 = vsub.f32 %v470, %v567
    %v587 = vsub.f32 %v477, %v571
    %v588 = vmul.f32 %v580, 1.442695
    %v589 = vpow.pop %v588
    %v590 = vmul.f32 %v581, 1.442695
    %v591 = vpow.pop %v590
    %v592 = vmul.f32 %v582, 1.442695
    %v593 = vpow.pop %v592
    %v594 = vmul.f32 %v583, 1.442695
    %v595 = vpow.pop %v594
    %v596 = vmul.f32 %v584, 1.442695
    %v597 = vpow.pop %v596
    %v598 = vmul.f32 %v585, 1.442695
    %v599 = vpow.pop %v598
    %v600 = vmul.f32 %v586, 1.442695
    %v601 = vpow.pop %v600
    %v602 = vmul.f32 %v587, 1.442695
    %v603 = vpow.pop %v602
    %612 = vset.pattern.permute.xlu0 0
    %613 = vperm.xlu0 %612, %v589
    %v614 = vpop.permute.xlu0 %613
    %615 = vset.pattern.permute.xlu0 0
    %616 = vperm.xlu0 %615, %v591
    %v617 = vpop.permute.xlu0 %616
    %618 = vset.pattern.permute.xlu0 0
    %619 = vperm.xlu0 %618, %v593
    %v620 = vpop.permute.xlu0 %619
    %621 = vset.pattern.permute.xlu0 0
    %622 = vperm.xlu0 %621, %v595
    %v623 = vpop.permute.xlu0 %622
    %624 = vset.pattern.permute.xlu0 0
    %625 = vperm.xlu0 %624, %v597
    %v626 = vpop.permute.xlu0 %625
    %627 = vset.pattern.permute.xlu0 0
    %628 = vperm.xlu0 %627, %v599
    %v629 = vpop.permute.xlu0 %628
    %630 = vset.pattern.permute.xlu0 0
    %631 = vperm.xlu0 %630, %v601
    %v632 = vpop.permute.xlu0 %631
    %633 = vset.pattern.permute.xlu0 0
    %634 = vperm.xlu0 %633, %v603
    %v635 = vpop.permute.xlu0 %634
    %v636 = vlaneseq
    %v637 = vshrl.u32 %v636, 7
    %v638 = vsub.s32 %v487, %v637
    %v639 = vrot.slane %v614, %v638
    %v640 = vlaneseq
    %v641 = vshrl.u32 %v640, 7
    %v642 = vsub.s32 %v487, %v641
    %v643 = vrot.slane %v617, %v642
    %v644 = vlaneseq
    %v645 = vshrl.u32 %v644, 7
    %v646 = vsub.s32 %v487, %v645
    %v647 = vrot.slane %v620, %v646
    %v648 = vlaneseq
    %v649 = vshrl.u32 %v648, 7
    %v650 = vsub.s32 %v487, %v649
    %v651 = vrot.slane %v623, %v650
    %v652 = vlaneseq
    %v653 = vshrl.u32 %v652, 7
    %v654 = vsub.s32 %v487, %v653
    %v655 = vrot.slane %v626, %v654
    %v656 = vlaneseq
    %v657 = vshrl.u32 %v656, 7
    %v658 = vsub.s32 %v487, %v657
    %v659 = vrot.slane %v629, %v658
    %v660 = vlaneseq
    %v661 = vshrl.u32 %v660, 7
    %v662 = vsub.s32 %v487, %v661
    %v663 = vrot.slane %v632, %v662
    %v664 = vlaneseq
    %v665 = vshrl.u32 %v664, 7
    %v666 = vsub.s32 %v487, %v665
    %v667 = vrot.slane %v635, %v666
    %v668 = vsel %vm520, %v643, %v639
    %v669 = vsel %vm522, %v647, %v668
    %v670 = vsel %vm524, %v651, %v669
    %v671 = vsel %vm526, %v655, %v670
    %v672 = vsel %vm528, %v659, %v671
    %v673 = vsel %vm530, %v663, %v672
    %v674 = vsel %vm532, %v667, %v673
    %v676 = vsel %vm535, %v674, 0.0
    %677 = vadd.xlane.f32.xlu0 %v676
    %v678 = vpop.xlane.xlu0 %677
    %v679 = vmax.f32 %v678, 1e-30
    %v680 = vrcp.pop %v679
    %v682 = vlaneseq
    %v683 = vshrl.u32 %v682, 7
    %v684 = vsub.s32 0, %v683
    %v685 = vrot.slane %v680, %v684
    %v686 = vlaneseq
    %v687 = vshrl.u32 %v686, 7
    %v688 = vsub.s32 1, %v687
    %v689 = vrot.slane %v680, %v688
    %v690 = vlaneseq
    %v691 = vshrl.u32 %v690, 7
    %v692 = vsub.s32 2, %v691
    %v693 = vrot.slane %v680, %v692
    %v694 = vlaneseq
    %v695 = vshrl.u32 %v694, 7
    %v696 = vsub.s32 3, %v695
    %v697 = vrot.slane %v680, %v696
    %v698 = vlaneseq
    %v699 = vshrl.u32 %v698, 7
    %v700 = vsub.s32 4, %v699
    %v701 = vrot.slane %v680, %v700
    %v702 = vlaneseq
    %v703 = vshrl.u32 %v702, 7
    %v704 = vsub.s32 5, %v703
    %v705 = vrot.slane %v680, %v704
    %v706 = vlaneseq
    %v707 = vshrl.u32 %v706, 7
    %v708 = vsub.s32 6, %v707
    %v709 = vrot.slane %v680, %v708
    %v710 = vlaneseq
    %v711 = vshrl.u32 %v710, 7
    %v712 = vsub.s32 7, %v711
    %v713 = vrot.slane %v680, %v712
    %v722 = vmul.f32 %v589, %v685
    %v723 = vmul.f32 %v591, %v689
    %v724 = vmul.f32 %v593, %v693
    %v725 = vmul.f32 %v595, %v697
    %v726 = vmul.f32 %v597, %v701
    %v727 = vmul.f32 %v599, %v705
    %v728 = vmul.f32 %v601, %v709
    %v729 = vmul.f32 %v603, %v713
    %731 = vset.pattern.permute.xlu0 0
    %732 = vperm.xlu0 %731, %v722
    %v733 = vpop.permute.xlu0 %732
    %736 = vset.pattern.permute.xlu0 0
    %737 = vperm.xlu0 %736, %v723
    %v738 = vpop.permute.xlu0 %737
    %741 = vset.pattern.permute.xlu0 0
    %742 = vperm.xlu0 %741, %v724
    %v743 = vpop.permute.xlu0 %742
    %746 = vset.pattern.permute.xlu0 0
    %747 = vperm.xlu0 %746, %v725
    %v748 = vpop.permute.xlu0 %747
    %751 = vset.pattern.permute.xlu0 0
    %752 = vperm.xlu0 %751, %v726
    %v753 = vpop.permute.xlu0 %752
    %756 = vset.pattern.permute.xlu0 0
    %757 = vperm.xlu0 %756, %v727
    %v758 = vpop.permute.xlu0 %757
    %761 = vset.pattern.permute.xlu0 0
    %762 = vperm.xlu0 %761, %v728
    %v763 = vpop.permute.xlu0 %762
    %766 = vset.pattern.permute.xlu0 0
    %767 = vperm.xlu0 %766, %v729
    %v768 = vpop.permute.xlu0 %767
    %v770 = vmul.f32 %v733, %v186
    %v771 = vmul.f32 %v733, %v187
    %v772 = vmul.f32 %v733, %v188
    %v773 = vmul.f32 %v738, %v189
    %v774 = vmul.f32 %v738, %v190
    %v775 = vmul.f32 %v738, %v191
    %v776 = vmul.f32 %v743, %v192
    %v777 = vmul.f32 %v743, %v193
    %v778 = vmul.f32 %v743, %v194
    %v779 = vmul.f32 %v748, %v195
    %v780 = vmul.f32 %v748, %v196
    %v781 = vmul.f32 %v748, %v197
    %v782 = vmul.f32 %v753, %v198
    %v783 = vmul.f32 %v753, %v199
    %v784 = vmul.f32 %v753, %v200
    %v785 = vmul.f32 %v758, %v201
    %v786 = vmul.f32 %v758, %v202
    %v787 = vmul.f32 %v758, %v203
    %v788 = vmul.f32 %v763, %v204
    %v789 = vmul.f32 %v763, %v205
    %v790 = vmul.f32 %v763, %v206
    %v791 = vmul.f32 %v768, %v207
    %v792 = vmul.f32 %v768, %v208
    %v793 = vmul.f32 %v768, %v209
    %v794 = vsel %vm420, %v770, 0.0
    %v795 = vrot.slane %v794, 4
    %v796 = vadd.f32 %v794, %v795
    %v797 = vrot.slane %v796, 2
    %v798 = vadd.f32 %v796, %v797
    %v799 = vrot.slane %v798, 1
    %v800 = vadd.f32 %v798, %v799
    %v801 = vsel %vm420, %v771, 0.0
    %v802 = vrot.slane %v801, 4
    %v803 = vadd.f32 %v801, %v802
    %v804 = vrot.slane %v803, 2
    %v805 = vadd.f32 %v803, %v804
    %v806 = vrot.slane %v805, 1
    %v807 = vadd.f32 %v805, %v806
    %v808 = vsel %vm424, %v772, 0.0
    %v809 = vrot.slane %v808, 4
    %v810 = vadd.f32 %v808, %v809
    %v811 = vrot.slane %v810, 2
    %v812 = vadd.f32 %v810, %v811
    %v813 = vrot.slane %v812, 1
    %v814 = vadd.f32 %v812, %v813
    %v815 = vsel %vm420, %v773, 0.0
    %v816 = vrot.slane %v815, 4
    %v817 = vadd.f32 %v815, %v816
    %v818 = vrot.slane %v817, 2
    %v819 = vadd.f32 %v817, %v818
    %v820 = vrot.slane %v819, 1
    %v821 = vadd.f32 %v819, %v820
    %v822 = vsel %vm420, %v774, 0.0
    %v823 = vrot.slane %v822, 4
    %v824 = vadd.f32 %v822, %v823
    %v825 = vrot.slane %v824, 2
    %v826 = vadd.f32 %v824, %v825
    %v827 = vrot.slane %v826, 1
    %v828 = vadd.f32 %v826, %v827
    %v829 = vsel %vm424, %v775, 0.0
    %v830 = vrot.slane %v829, 4
    %v831 = vadd.f32 %v829, %v830
    %v832 = vrot.slane %v831, 2
    %v833 = vadd.f32 %v831, %v832
    %v834 = vrot.slane %v833, 1
    %v835 = vadd.f32 %v833, %v834
    %v836 = vsel %vm420, %v776, 0.0
    %v837 = vrot.slane %v836, 4
    %v838 = vadd.f32 %v836, %v837
    %v839 = vrot.slane %v838, 2
    %v840 = vadd.f32 %v838, %v839
    %v841 = vrot.slane %v840, 1
    %v842 = vadd.f32 %v840, %v841
    %v843 = vsel %vm420, %v777, 0.0
    %v844 = vrot.slane %v843, 4
    %v845 = vadd.f32 %v843, %v844
    %v846 = vrot.slane %v845, 2
    %v847 = vadd.f32 %v845, %v846
    %v848 = vrot.slane %v847, 1
    %v849 = vadd.f32 %v847, %v848
    %v850 = vsel %vm424, %v778, 0.0
    %v851 = vrot.slane %v850, 4
    %v852 = vadd.f32 %v850, %v851
    %v853 = vrot.slane %v852, 2
    %v854 = vadd.f32 %v852, %v853
    %v855 = vrot.slane %v854, 1
    %v856 = vadd.f32 %v854, %v855
    %v857 = vsel %vm420, %v779, 0.0
    %v858 = vrot.slane %v857, 4
    %v859 = vadd.f32 %v857, %v858
    %v860 = vrot.slane %v859, 2
    %v861 = vadd.f32 %v859, %v860
    %v862 = vrot.slane %v861, 1
    %v863 = vadd.f32 %v861, %v862
    %v864 = vsel %vm420, %v780, 0.0
    %v865 = vrot.slane %v864, 4
    %v866 = vadd.f32 %v864, %v865
    %v867 = vrot.slane %v866, 2
    %v868 = vadd.f32 %v866, %v867
    %v869 = vrot.slane %v868, 1
    %v870 = vadd.f32 %v868, %v869
    %v871 = vsel %vm424, %v781, 0.0
    %v872 = vrot.slane %v871, 4
    %v873 = vadd.f32 %v871, %v872
    %v874 = vrot.slane %v873, 2
    %v875 = vadd.f32 %v873, %v874
    %v876 = vrot.slane %v875, 1
    %v877 = vadd.f32 %v875, %v876
    %v878 = vsel %vm420, %v782, 0.0
    %v879 = vrot.slane %v878, 4
    %v880 = vadd.f32 %v878, %v879
    %v881 = vrot.slane %v880, 2
    %v882 = vadd.f32 %v880, %v881
    %v883 = vrot.slane %v882, 1
    %v884 = vadd.f32 %v882, %v883
    %v885 = vsel %vm420, %v783, 0.0
    %v886 = vrot.slane %v885, 4
    %v887 = vadd.f32 %v885, %v886
    %v888 = vrot.slane %v887, 2
    %v889 = vadd.f32 %v887, %v888
    %v890 = vrot.slane %v889, 1
    %v891 = vadd.f32 %v889, %v890
    %v892 = vsel %vm424, %v784, 0.0
    %v893 = vrot.slane %v892, 4
    %v894 = vadd.f32 %v892, %v893
    %v895 = vrot.slane %v894, 2
    %v896 = vadd.f32 %v894, %v895
    %v897 = vrot.slane %v896, 1
    %v898 = vadd.f32 %v896, %v897
    %v899 = vsel %vm420, %v785, 0.0
    %v900 = vrot.slane %v899, 4
    %v901 = vadd.f32 %v899, %v900
    %v902 = vrot.slane %v901, 2
    %v903 = vadd.f32 %v901, %v902
    %v904 = vrot.slane %v903, 1
    %v905 = vadd.f32 %v903, %v904
    %v906 = vsel %vm420, %v786, 0.0
    %v907 = vrot.slane %v906, 4
    %v908 = vadd.f32 %v906, %v907
    %v909 = vrot.slane %v908, 2
    %v910 = vadd.f32 %v908, %v909
    %v911 = vrot.slane %v910, 1
    %v912 = vadd.f32 %v910, %v911
    %v913 = vsel %vm424, %v787, 0.0
    %v914 = vrot.slane %v913, 4
    %v915 = vadd.f32 %v913, %v914
    %v916 = vrot.slane %v915, 2
    %v917 = vadd.f32 %v915, %v916
    %v918 = vrot.slane %v917, 1
    %v919 = vadd.f32 %v917, %v918
    %v920 = vsel %vm420, %v788, 0.0
    %v921 = vrot.slane %v920, 4
    %v922 = vadd.f32 %v920, %v921
    %v923 = vrot.slane %v922, 2
    %v924 = vadd.f32 %v922, %v923
    %v925 = vrot.slane %v924, 1
    %v926 = vadd.f32 %v924, %v925
    %v927 = vsel %vm420, %v789, 0.0
    %v928 = vrot.slane %v927, 4
    %v929 = vadd.f32 %v927, %v928
    %v930 = vrot.slane %v929, 2
    %v931 = vadd.f32 %v929, %v930
    %v932 = vrot.slane %v931, 1
    %v933 = vadd.f32 %v931, %v932
    %v934 = vsel %vm424, %v790, 0.0
    %v935 = vrot.slane %v934, 4
    %v936 = vadd.f32 %v934, %v935
    %v937 = vrot.slane %v936, 2
    %v938 = vadd.f32 %v936, %v937
    %v939 = vrot.slane %v938, 1
    %v940 = vadd.f32 %v938, %v939
    %v941 = vsel %vm420, %v791, 0.0
    %v942 = vrot.slane %v941, 4
    %v943 = vadd.f32 %v941, %v942
    %v944 = vrot.slane %v943, 2
    %v945 = vadd.f32 %v943, %v944
    %v946 = vrot.slane %v945, 1
    %v947 = vadd.f32 %v945, %v946
    %v948 = vsel %vm420, %v792, 0.0
    %v949 = vrot.slane %v948, 4
    %v950 = vadd.f32 %v948, %v949
    %v951 = vrot.slane %v950, 2
    %v952 = vadd.f32 %v950, %v951
    %v953 = vrot.slane %v952, 1
    %v954 = vadd.f32 %v952, %v953
    %v955 = vsel %vm424, %v793, 0.0
    %v956 = vrot.slane %v955, 4
    %v957 = vadd.f32 %v955, %v956
    %v958 = vrot.slane %v957, 2
    %v959 = vadd.f32 %v957, %v958
    %v960 = vrot.slane %v959, 1
    %v961 = vadd.f32 %v959, %v960
    %v962 = vld [vmem:[%s1] sm:$0xff]
    %v963 = vld [vmem:[%s7] sm:$0xff]
    %vm964 = vcmask 64512
    %v966 = vsel %vm964, %v962, 0
    %968 = vmatprep.subr.mxu0 0.0
    %969 = vmatpush1.msra.mxu0 0.0
    %970 = vmatprep.subr.mxu0 0.0
    %971 = vmatpush1.msra.mxu0 0.0
    %972 = vmatprep.subr.mxu0 0.0
    %973 = vmatpush1.msra.mxu0 0.0
    %974 = vmatprep.subr.mxu0 0.0
    %975 = vmatpush1.msra.mxu0 0.0
    %976 = vmatprep.subr.mxu0 0.0
    %977 = vmatpush1.msra.mxu0 0.0
    %978 = vmatprep.subr.mxu0 0.0
    %979 = vmatpush1.msra.mxu0 0.0
    %980 = vmatprep.subr.mxu0 0.0
    %981 = vmatpush1.msra.mxu0 0.0
    %982 = vmatprep.subr.mxu0 0.0
    %983 = vmatpush1.msra.mxu0 0.0
    %984 = vmatprep.subr.mxu0 0.0
    %985 = vmatpush1.msra.mxu0 0.0
    %986 = vmatprep.subr.mxu0 0.0
    %987 = vmatpush1.msra.mxu0 0.0
    %988 = vmatprep.subr.mxu0 0.0
    %989 = vmatpush1.msra.mxu0 0.0
    %990 = vmatprep.subr.mxu0 0.0
    %991 = vmatpush1.msra.mxu0 0.0
    %992 = vmatprep.subr.mxu0 0.0
    %993 = vmatpush1.msra.mxu0 0.0
    %994 = vmatprep.subr.mxu0 0.0
    %995 = vmatpush1.msra.mxu0 0.0
    %996 = vmatprep.subr.mxu0 0.0
    %997 = vmatpush1.msra.mxu0 0.0
    %998 = vmatprep.subr.mxu0 0.0
    %999 = vmatpush1.msra.mxu0 %v963
    %1000 = vmatprep.subr.mxu0 0.0
    %1001 = vmatpush2.msra.mxu0 0.0
    %1002 = vmatprep.subr.mxu0 0.0
    %1003 = vmatpush2.msra.mxu0 0.0
    %1004 = vmatprep.subr.mxu0 0.0
    %1005 = vmatpush2.msra.mxu0 0.0
    %1006 = vmatprep.subr.mxu0 0.0
    %1007 = vmatpush2.msra.mxu0 0.0
    %1008 = vmatprep.subr.mxu0 0.0
    %1009 = vmatpush2.msra.mxu0 0.0
    %1010 = vmatprep.subr.mxu0 0.0
    %1011 = vmatpush2.msra.mxu0 0.0
    %1012 = vmatprep.subr.mxu0 0.0
    %1013 = vmatpush2.msra.mxu0 0.0
    %1014 = vmatprep.subr.mxu0 0.0
    %1015 = vmatpush2.msra.mxu0 0.0
    %1016 = vmatprep.subr.mxu0 0.0
    %1017 = vmatpush2.msra.mxu0 0.0
    %1018 = vmatprep.subr.mxu0 0.0
    %1019 = vmatpush2.msra.mxu0 0.0
    %1020 = vmatprep.subr.mxu0 0.0
    %1021 = vmatpush2.msra.mxu0 0.0
    %1022 = vmatprep.subr.mxu0 0.0
    %1023 = vmatpush2.msra.mxu0 0.0
    %1024 = vmatprep.subr.mxu0 0.0
    %1025 = vmatpush2.msra.mxu0 0.0
    %1026 = vmatprep.subr.mxu0 0.0
    %1027 = vmatpush2.msra.mxu0 0.0
    %1028 = vmatprep.subr.mxu0 0.0
    %1029 = vmatpush2.msra.mxu0 0.0
    %1030 = vmatprep.subr.mxu0 0.0
    %1031 = vmatpush2.msra.mxu0 0.0
    %1032 = vmatprep.mubr.f32.mxu0 0.0
    %1033 = vmatmul.mubr.f32.gmra.mxu0 %v966
    %v1034 = vpop.f32.mrf.mxu0
    %v1035 = vadd.f32 0.0, %v1034
    %v1036 = vpop.f32.mrf.mxu0
    %1037 = vdwg.mxu0
    %v1038 = vtanh.pop %v1035
    %v1039 = vld [vmem:[%s0] sm:$0xff]
    %v1040 = vld [vmem:[%s8] sm:$0xff]
    %v1041 = vld [vmem:[%s8 + $0x8] sm:$0xff]
    %v1042 = vld [vmem:[%s8 + $0x10] sm:$0xff]
    %v1043 = vld [vmem:[%s8 + $0x18] sm:$0xff]
    %v1044 = vld [vmem:[%s8 + $0x20] sm:$0xff]
    %v1045 = vld [vmem:[%s8 + $0x28] sm:$0xff]
    %v1046 = vld [vmem:[%s8 + $0x30] sm:$0xff]
    %vm1047 = vcmask 457728
    %v1049 = vsel %vm1047, %v1039, 0
    %1051 = vmatprep.subr.mxu0 0.0
    %1052 = vmatpush1.msra.mxu0 0.0
    %1053 = vmatprep.subr.mxu0 0.0
    %1054 = vmatpush1.msra.mxu0 0.0
    %1055 = vmatprep.subr.mxu0 0.0
    %1056 = vmatpush1.msra.mxu0 0.0
    %1057 = vmatprep.subr.mxu0 0.0
    %1058 = vmatpush1.msra.mxu0 0.0
    %1059 = vmatprep.subr.mxu0 0.0
    %1060 = vmatpush1.msra.mxu0 0.0
    %1061 = vmatprep.subr.mxu0 0.0
    %1062 = vmatpush1.msra.mxu0 0.0
    %1063 = vmatprep.subr.mxu0 0.0
    %1064 = vmatpush1.msra.mxu0 0.0
    %1065 = vmatprep.subr.mxu0 0.0
    %1066 = vmatpush1.msra.mxu0 0.0
    %1067 = vmatprep.subr.mxu0 0.0
    %1068 = vmatpush1.msra.mxu0 0.0
    %1069 = vmatprep.subr.mxu0 0.0
    %1070 = vmatpush1.msra.mxu0 %v1046
    %1071 = vmatprep.subr.mxu0 0.0
    %1072 = vmatpush1.msra.mxu0 %v1045
    %1073 = vmatprep.subr.mxu0 0.0
    %1074 = vmatpush1.msra.mxu0 %v1044
    %1075 = vmatprep.subr.mxu0 0.0
    %1076 = vmatpush1.msra.mxu0 %v1043
    %1077 = vmatprep.subr.mxu0 0.0
    %1078 = vmatpush1.msra.mxu0 %v1042
    %1079 = vmatprep.subr.mxu0 0.0
    %1080 = vmatpush1.msra.mxu0 %v1041
    %1081 = vmatprep.subr.mxu0 0.0
    %1082 = vmatpush1.msra.mxu0 %v1040
    %1083 = vmatprep.subr.mxu0 0.0
    %1084 = vmatpush2.msra.mxu0 0.0
    %1085 = vmatprep.subr.mxu0 0.0
    %1086 = vmatpush2.msra.mxu0 0.0
    %1087 = vmatprep.subr.mxu0 0.0
    %1088 = vmatpush2.msra.mxu0 0.0
    %1089 = vmatprep.subr.mxu0 0.0
    %1090 = vmatpush2.msra.mxu0 0.0
    %1091 = vmatprep.subr.mxu0 0.0
    %1092 = vmatpush2.msra.mxu0 0.0
    %1093 = vmatprep.subr.mxu0 0.0
    %1094 = vmatpush2.msra.mxu0 0.0
    %1095 = vmatprep.subr.mxu0 0.0
    %1096 = vmatpush2.msra.mxu0 0.0
    %1097 = vmatprep.subr.mxu0 0.0
    %1098 = vmatpush2.msra.mxu0 0.0
    %1099 = vmatprep.subr.mxu0 0.0
    %1100 = vmatpush2.msra.mxu0 0.0
    %1101 = vmatprep.subr.mxu0 0.0
    %1102 = vmatpush2.msra.mxu0 0.0
    %1103 = vmatprep.subr.mxu0 0.0
    %1104 = vmatpush2.msra.mxu0 0.0
    %1105 = vmatprep.subr.mxu0 0.0
    %1106 = vmatpush2.msra.mxu0 0.0
    %1107 = vmatprep.subr.mxu0 0.0
    %1108 = vmatpush2.msra.mxu0 0.0
    %1109 = vmatprep.subr.mxu0 0.0
    %1110 = vmatpush2.msra.mxu0 0.0
    %1111 = vmatprep.subr.mxu0 0.0
    %1112 = vmatpush2.msra.mxu0 0.0
    %1113 = vmatprep.subr.mxu0 0.0
    %1114 = vmatpush2.msra.mxu0 0.0
    %1115 = vmatprep.mubr.f32.mxu0 0.0
    %1116 = vmatmul.mubr.f32.gmra.mxu0 %v1049
    %v1117 = vpop.f32.mrf.mxu0
    %v1118 = vadd.f32 0.0, %v1117
    %v1119 = vpop.f32.mrf.mxu0
    %1120 = vdwg.mxu0
    %v1121 = vtanh.pop %v1118
    %v1122 = vld [vmem:[%s9] sm:$0xff]
    %v1123 = vld [vmem:[%s9 + $0x8] sm:$0xff]
    %v1124 = vld [vmem:[%s9 + $0x10] sm:$0xff]
    %v1125 = vld [vmem:[%s9 + $0x18] sm:$0xff]
    %v1126 = vld [vmem:[%s9 + $0x20] sm:$0xff]
    %v1127 = vld [vmem:[%s9 + $0x28] sm:$0xff]
    %v1128 = vld [vmem:[%s9 + $0x30] sm:$0xff]
    %v1129 = vld [vmem:[%s9 + $0x38] sm:$0xff]
    %v1130 = vld [vmem:[%s9 + $0x40] sm:$0xff]
    %v1131 = vld [vmem:[%s9 + $0x48] sm:$0xff]
    %v1132 = vld [vmem:[%s9 + $0x50] sm:$0xff]
    %v1133 = vld [vmem:[%s9 + $0x58] sm:$0xff]
    %v1134 = vld [vmem:[%s9 + $0x60] sm:$0xff]
    %v1135 = vld [vmem:[%s9 + $0x68] sm:$0xff]
    %v1136 = vld [vmem:[%s9 + $0x70] sm:$0xff]
    %v1137 = vld [vmem:[%s9 + $0x78] sm:$0xff]
    %v1138 = vld [vmem:[%s9 + $0x80] sm:$0xff]
    %v1139 = vld [vmem:[%s9 + $0x88] sm:$0xff]
    %v1140 = vld [vmem:[%s9 + $0x90] sm:$0xff]
    %v1141 = vld [vmem:[%s9 + $0x98] sm:$0xff]
    %v1142 = vld [vmem:[%s9 + $0xa0] sm:$0xff]
    %v1143 = vld [vmem:[%s9 + $0xa8] sm:$0xff]
    %v1144 = vld [vmem:[%s9 + $0xb0] sm:$0xff]
    %v1145 = vld [vmem:[%s9 + $0xb8] sm:$0xff]
    %v1146 = vld [vmem:[%s9 + $0xc0] sm:$0xff]
    %v1147 = vld [vmem:[%s9 + $0xc8] sm:$0xff]
    %v1148 = vld [vmem:[%s9 + $0xd0] sm:$0xff]
    %v1149 = vld [vmem:[%s9 + $0xd8] sm:$0xff]
    %v1150 = vld [vmem:[%s9 + $0xe0] sm:$0xff]
    %v1151 = vld [vmem:[%s9 + $0xe8] sm:$0xff]
    %v1152 = vld [vmem:[%s9 + $0xf0] sm:$0xff]
    %v1153 = vld [vmem:[%s9 + $0xf8] sm:$0xff]
    %v1154 = vld [vmem:[%s9 + $0x100] sm:$0xff]
    %v1155 = vld [vmem:[%s9 + $0x108] sm:$0xff]
    %v1156 = vld [vmem:[%s9 + $0x110] sm:$0xff]
    %v1157 = vld [vmem:[%s9 + $0x118] sm:$0xff]
    %v1158 = vld [vmem:[%s9 + $0x120] sm:$0xff]
    %v1159 = vld [vmem:[%s9 + $0x128] sm:$0xf]
    %v1184 = vsel %vm520, %v821, %v800
    %v1185 = vsel %vm522, %v842, %v1184
    %v1186 = vsel %vm524, %v863, %v1185
    %v1187 = vsel %vm526, %v884, %v1186
    %v1188 = vsel %vm528, %v905, %v1187
    %v1189 = vsel %vm530, %v926, %v1188
    %v1190 = vsel %vm532, %v947, %v1189
    %v1191 = vsel %vm520, %v828, %v807
    %v1192 = vsel %vm522, %v849, %v1191
    %v1193 = vsel %vm524, %v870, %v1192
    %v1194 = vsel %vm526, %v891, %v1193
    %v1195 = vsel %vm528, %v912, %v1194
    %v1196 = vsel %vm530, %v933, %v1195
    %v1197 = vsel %vm532, %v954, %v1196
    %v1198 = vsel %vm520, %v835, %v814
    %v1199 = vsel %vm522, %v856, %v1198
    %v1200 = vsel %vm524, %v877, %v1199
    %v1201 = vsel %vm526, %v898, %v1200
    %v1202 = vsel %vm528, %v919, %v1201
    %v1203 = vsel %vm530, %v940, %v1202
    %v1204 = vsel %vm532, %v961, %v1203
    %vm1207 = vcmask 359424
    %v1208 = vsel %vm1207, %v1204, 0
    %vm1210 = vcmask 1043456
    %v1212 = vsel %vm1210, %v1159, 0
    %1214 = vmatprep.subr.mxu0 0.0
    %1215 = vmatpush1.msra.mxu0 %v1137
    %1216 = vmatprep.subr.mxu0 0.0
    %1217 = vmatpush1.msra.mxu0 %v1136
    %1218 = vmatprep.subr.mxu0 0.0
    %1219 = vmatpush1.msra.mxu0 %v1135
    %1220 = vmatprep.subr.mxu0 0.0
    %1221 = vmatpush1.msra.mxu0 %v1134
    %1222 = vmatprep.subr.mxu0 0.0
    %1223 = vmatpush1.msra.mxu0 %v1133
    %1224 = vmatprep.subr.mxu0 0.0
    %1225 = vmatpush1.msra.mxu0 %v1132
    %1226 = vmatprep.subr.mxu0 0.0
    %1227 = vmatpush1.msra.mxu0 %v1131
    %1228 = vmatprep.subr.mxu0 0.0
    %1229 = vmatpush1.msra.mxu0 %v1130
    %1230 = vmatprep.subr.mxu0 0.0
    %1231 = vmatpush1.msra.mxu0 %v1129
    %1232 = vmatprep.subr.mxu0 0.0
    %1233 = vmatpush1.msra.mxu0 %v1128
    %1234 = vmatprep.subr.mxu0 0.0
    %1235 = vmatpush1.msra.mxu0 %v1127
    %1236 = vmatprep.subr.mxu0 0.0
    %1237 = vmatpush1.msra.mxu0 %v1126
    %1238 = vmatprep.subr.mxu0 0.0
    %1239 = vmatpush1.msra.mxu0 %v1125
    %1240 = vmatprep.subr.mxu0 0.0
    %1241 = vmatpush1.msra.mxu0 %v1124
    %1242 = vmatprep.subr.mxu0 0.0
    %1243 = vmatpush1.msra.mxu0 %v1123
    %1244 = vmatprep.subr.mxu0 0.0
    %1245 = vmatpush1.msra.mxu0 %v1122
    %1246 = vmatprep.subr.mxu0 0.0
    %1247 = vmatpush2.msra.mxu0 %v1153
    %1248 = vmatprep.subr.mxu0 0.0
    %1249 = vmatpush2.msra.mxu0 %v1152
    %1250 = vmatprep.subr.mxu0 0.0
    %1251 = vmatpush2.msra.mxu0 %v1151
    %1252 = vmatprep.subr.mxu0 0.0
    %1253 = vmatpush2.msra.mxu0 %v1150
    %1254 = vmatprep.subr.mxu0 0.0
    %1255 = vmatpush2.msra.mxu0 %v1149
    %1256 = vmatprep.subr.mxu0 0.0
    %1257 = vmatpush2.msra.mxu0 %v1148
    %1258 = vmatprep.subr.mxu0 0.0
    %1259 = vmatpush2.msra.mxu0 %v1147
    %1260 = vmatprep.subr.mxu0 0.0
    %1261 = vmatpush2.msra.mxu0 %v1146
    %1262 = vmatprep.subr.mxu0 0.0
    %1263 = vmatpush2.msra.mxu0 %v1145
    %1264 = vmatprep.subr.mxu0 0.0
    %1265 = vmatpush2.msra.mxu0 %v1144
    %1266 = vmatprep.subr.mxu0 0.0
    %1267 = vmatpush2.msra.mxu0 %v1143
    %1268 = vmatprep.subr.mxu0 0.0
    %1269 = vmatpush2.msra.mxu0 %v1142
    %1270 = vmatprep.subr.mxu0 0.0
    %1271 = vmatpush2.msra.mxu0 %v1141
    %1272 = vmatprep.subr.mxu0 0.0
    %1273 = vmatpush2.msra.mxu0 %v1140
    %1274 = vmatprep.subr.mxu0 0.0
    %1275 = vmatpush2.msra.mxu0 %v1139
    %1276 = vmatprep.subr.mxu0 0.0
    %1277 = vmatpush2.msra.mxu0 %v1138
    %1278 = vmatprep.mubr.f32.mxu0 %v1197
    %1279 = vmatmul.mubr.f32.gmra.mxu0 %v1190
    %v1280 = vpop.f32.mrf.mxu0
    %v1281 = vadd.f32 0.0, %v1280
    %v1282 = vpop.f32.mrf.mxu0
    %1283 = vdwg.mxu0
    %1284 = vmatprep.subr.mxu0 0.0
    %1285 = vmatpush1.msra.mxu0 0.0
    %1286 = vmatprep.subr.mxu0 0.0
    %1287 = vmatpush1.msra.mxu0 0.0
    %1288 = vmatprep.subr.mxu0 0.0
    %1289 = vmatpush1.msra.mxu0 0.0
    %1290 = vmatprep.subr.mxu0 0.0
    %1291 = vmatpush1.msra.mxu0 0.0
    %1292 = vmatprep.subr.mxu0 0.0
    %1293 = vmatpush1.msra.mxu0 0.0
    %1294 = vmatprep.subr.mxu0 0.0
    %1295 = vmatpush1.msra.mxu0 0.0
    %1296 = vmatprep.subr.mxu0 0.0
    %1297 = vmatpush1.msra.mxu0 0.0
    %1298 = vmatprep.subr.mxu0 0.0
    %1299 = vmatpush1.msra.mxu0 0.0
    %1300 = vmatprep.subr.mxu0 0.0
    %1301 = vmatpush1.msra.mxu0 0.0
    %1302 = vmatprep.subr.mxu0 0.0
    %1303 = vmatpush1.msra.mxu0 0.0
    %1304 = vmatprep.subr.mxu0 0.0
    %1305 = vmatpush1.msra.mxu0 %v1212
    %1306 = vmatprep.subr.mxu0 0.0
    %1307 = vmatpush1.msra.mxu0 %v1158
    %1308 = vmatprep.subr.mxu0 0.0
    %1309 = vmatpush1.msra.mxu0 %v1157
    %1310 = vmatprep.subr.mxu0 0.0
    %1311 = vmatpush1.msra.mxu0 %v1156
    %1312 = vmatprep.subr.mxu0 0.0
    %1313 = vmatpush1.msra.mxu0 %v1155
    %1314 = vmatprep.subr.mxu0 0.0
    %1315 = vmatpush1.msra.mxu0 %v1154
    %1316 = vmatprep.subr.mxu0 0.0
    %1317 = vmatpush2.msra.mxu0 0.0
    %1318 = vmatprep.subr.mxu0 0.0
    %1319 = vmatpush2.msra.mxu0 0.0
    %1320 = vmatprep.subr.mxu0 0.0
    %1321 = vmatpush2.msra.mxu0 0.0
    %1322 = vmatprep.subr.mxu0 0.0
    %1323 = vmatpush2.msra.mxu0 0.0
    %1324 = vmatprep.subr.mxu0 0.0
    %1325 = vmatpush2.msra.mxu0 0.0
    %1326 = vmatprep.subr.mxu0 0.0
    %1327 = vmatpush2.msra.mxu0 0.0
    %1328 = vmatprep.subr.mxu0 0.0
    %1329 = vmatpush2.msra.mxu0 0.0
    %1330 = vmatprep.subr.mxu0 0.0
    %1331 = vmatpush2.msra.mxu0 0.0
    %1332 = vmatprep.subr.mxu0 0.0
    %1333 = vmatpush2.msra.mxu0 0.0
    %1334 = vmatprep.subr.mxu0 0.0
    %1335 = vmatpush2.msra.mxu0 0.0
    %1336 = vmatprep.subr.mxu0 0.0
    %1337 = vmatpush2.msra.mxu0 0.0
    %1338 = vmatprep.subr.mxu0 0.0
    %1339 = vmatpush2.msra.mxu0 0.0
    %1340 = vmatprep.subr.mxu0 0.0
    %1341 = vmatpush2.msra.mxu0 0.0
    %1342 = vmatprep.subr.mxu0 0.0
    %1343 = vmatpush2.msra.mxu0 0.0
    %1344 = vmatprep.subr.mxu0 0.0
    %1345 = vmatpush2.msra.mxu0 0.0
    %1346 = vmatprep.subr.mxu0 0.0
    %1347 = vmatpush2.msra.mxu0 0.0
    %1348 = vmatprep.mubr.f32.mxu0 0.0
    %1349 = vmatmul.mubr.f32.gmra.mxu0 %v1208
    %v1350 = vpop.f32.mrf.mxu0
    %v1351 = vadd.f32 %v1281, %v1350
    %v1352 = vpop.f32.mrf.mxu0
    %1353 = vdwg.mxu0
    %v1354 = vtanh.pop %v1351
    %v1355 = vld [vmem:[%s10] sm:$0xff]
    %v1356 = vld [vmem:[%s10 + $0x8] sm:$0xff]
    %v1357 = vld [vmem:[%s10 + $0x10] sm:$0xff]
    %v1358 = vld [vmem:[%s10 + $0x18] sm:$0xff]
    %v1359 = vld [vmem:[%s11] sm:$0xff]
    %v1360 = vld [vmem:[%s11 + $0x8] sm:$0xff]
    %v1361 = vld [vmem:[%s11 + $0x10] sm:$0xff]
    %v1362 = vld [vmem:[%s11 + $0x18] sm:$0xff]
    %vm1363 = vcmask 261120
    %v1365 = vsel %vm1363, %v1038, 0
    %1367 = vmatprep.subr.mxu0 0.0
    %1368 = vmatpush1.msra.mxu0 0.0
    %1369 = vmatprep.subr.mxu0 0.0
    %1370 = vmatpush1.msra.mxu0 0.0
    %1371 = vmatprep.subr.mxu0 0.0
    %1372 = vmatpush1.msra.mxu0 0.0
    %1373 = vmatprep.subr.mxu0 0.0
    %1374 = vmatpush1.msra.mxu0 0.0
    %1375 = vmatprep.subr.mxu0 0.0
    %1376 = vmatpush1.msra.mxu0 0.0
    %1377 = vmatprep.subr.mxu0 0.0
    %1378 = vmatpush1.msra.mxu0 0.0
    %1379 = vmatprep.subr.mxu0 0.0
    %1380 = vmatpush1.msra.mxu0 0.0
    %1381 = vmatprep.subr.mxu0 0.0
    %1382 = vmatpush1.msra.mxu0 0.0
    %1383 = vmatprep.subr.mxu0 0.0
    %1384 = vmatpush1.msra.mxu0 0.0
    %1385 = vmatprep.subr.mxu0 0.0
    %1386 = vmatpush1.msra.mxu0 0.0
    %1387 = vmatprep.subr.mxu0 0.0
    %1388 = vmatpush1.msra.mxu0 0.0
    %1389 = vmatprep.subr.mxu0 0.0
    %1390 = vmatpush1.msra.mxu0 0.0
    %1391 = vmatprep.subr.mxu0 0.0
    %1392 = vmatpush1.msra.mxu0 %v1362
    %1393 = vmatprep.subr.mxu0 0.0
    %1394 = vmatpush1.msra.mxu0 %v1361
    %1395 = vmatprep.subr.mxu0 0.0
    %1396 = vmatpush1.msra.mxu0 %v1360
    %1397 = vmatprep.subr.mxu0 0.0
    %1398 = vmatpush1.msra.mxu0 %v1359
    %1399 = vmatprep.subr.mxu0 0.0
    %1400 = vmatpush2.msra.mxu0 0.0
    %1401 = vmatprep.subr.mxu0 0.0
    %1402 = vmatpush2.msra.mxu0 0.0
    %1403 = vmatprep.subr.mxu0 0.0
    %1404 = vmatpush2.msra.mxu0 0.0
    %1405 = vmatprep.subr.mxu0 0.0
    %1406 = vmatpush2.msra.mxu0 0.0
    %1407 = vmatprep.subr.mxu0 0.0
    %1408 = vmatpush2.msra.mxu0 0.0
    %1409 = vmatprep.subr.mxu0 0.0
    %1410 = vmatpush2.msra.mxu0 0.0
    %1411 = vmatprep.subr.mxu0 0.0
    %1412 = vmatpush2.msra.mxu0 0.0
    %1413 = vmatprep.subr.mxu0 0.0
    %1414 = vmatpush2.msra.mxu0 0.0
    %1415 = vmatprep.subr.mxu0 0.0
    %1416 = vmatpush2.msra.mxu0 0.0
    %1417 = vmatprep.subr.mxu0 0.0
    %1418 = vmatpush2.msra.mxu0 0.0
    %1419 = vmatprep.subr.mxu0 0.0
    %1420 = vmatpush2.msra.mxu0 0.0
    %1421 = vmatprep.subr.mxu0 0.0
    %1422 = vmatpush2.msra.mxu0 0.0
    %1423 = vmatprep.subr.mxu0 0.0
    %1424 = vmatpush2.msra.mxu0 0.0
    %1425 = vmatprep.subr.mxu0 0.0
    %1426 = vmatpush2.msra.mxu0 0.0
    %1427 = vmatprep.subr.mxu0 0.0
    %1428 = vmatpush2.msra.mxu0 0.0
    %1429 = vmatprep.subr.mxu0 0.0
    %1430 = vmatpush2.msra.mxu0 0.0
    %1431 = vmatprep.mubr.f32.mxu0 0.0
    %1432 = vmatmul.mubr.f32.gmra.mxu0 %v1365
    %v1433 = vpop.f32.mrf.mxu0
    %v1434 = vadd.f32 0.0, %v1433
    %v1435 = vpop.f32.mrf.mxu0
    %1436 = vdwg.mxu0
    %v1437 = vcombine.low %v147, %v151
    %v1438 = vsel %vm1363, %v1437, 0
    %1440 = vmatprep.subr.mxu0 0.0
    %1441 = vmatpush1.msra.mxu0 0.0
    %1442 = vmatprep.subr.mxu0 0.0
    %1443 = vmatpush1.msra.mxu0 0.0
    %1444 = vmatprep.subr.mxu0 0.0
    %1445 = vmatpush1.msra.mxu0 0.0
    %1446 = vmatprep.subr.mxu0 0.0
    %1447 = vmatpush1.msra.mxu0 0.0
    %1448 = vmatprep.subr.mxu0 0.0
    %1449 = vmatpush1.msra.mxu0 0.0
    %1450 = vmatprep.subr.mxu0 0.0
    %1451 = vmatpush1.msra.mxu0 0.0
    %1452 = vmatprep.subr.mxu0 0.0
    %1453 = vmatpush1.msra.mxu0 0.0
    %1454 = vmatprep.subr.mxu0 0.0
    %1455 = vmatpush1.msra.mxu0 0.0
    %1456 = vmatprep.subr.mxu0 0.0
    %1457 = vmatpush1.msra.mxu0 0.0
    %1458 = vmatprep.subr.mxu0 0.0
    %1459 = vmatpush1.msra.mxu0 0.0
    %1460 = vmatprep.subr.mxu0 0.0
    %1461 = vmatpush1.msra.mxu0 0.0
    %1462 = vmatprep.subr.mxu0 0.0
    %1463 = vmatpush1.msra.mxu0 0.0
    %1464 = vmatprep.subr.mxu0 0.0
    %1465 = vmatpush1.msra.mxu0 %v1358
    %1466 = vmatprep.subr.mxu0 0.0
    %1467 = vmatpush1.msra.mxu0 %v1357
    %1468 = vmatprep.subr.mxu0 0.0
    %1469 = vmatpush1.msra.mxu0 %v1356
    %1470 = vmatprep.subr.mxu0 0.0
    %1471 = vmatpush1.msra.mxu0 %v1355
    %1472 = vmatprep.subr.mxu0 0.0
    %1473 = vmatpush2.msra.mxu0 0.0
    %1474 = vmatprep.subr.mxu0 0.0
    %1475 = vmatpush2.msra.mxu0 0.0
    %1476 = vmatprep.subr.mxu0 0.0
    %1477 = vmatpush2.msra.mxu0 0.0
    %1478 = vmatprep.subr.mxu0 0.0
    %1479 = vmatpush2.msra.mxu0 0.0
    %1480 = vmatprep.subr.mxu0 0.0
    %1481 = vmatpush2.msra.mxu0 0.0
    %1482 = vmatprep.subr.mxu0 0.0
    %1483 = vmatpush2.msra.mxu0 0.0
    %1484 = vmatprep.subr.mxu0 0.0
    %1485 = vmatpush2.msra.mxu0 0.0
    %1486 = vmatprep.subr.mxu0 0.0
    %1487 = vmatpush2.msra.mxu0 0.0
    %1488 = vmatprep.subr.mxu0 0.0
    %1489 = vmatpush2.msra.mxu0 0.0
    %1490 = vmatprep.subr.mxu0 0.0
    %1491 = vmatpush2.msra.mxu0 0.0
    %1492 = vmatprep.subr.mxu0 0.0
    %1493 = vmatpush2.msra.mxu0 0.0
    %1494 = vmatprep.subr.mxu0 0.0
    %1495 = vmatpush2.msra.mxu0 0.0
    %1496 = vmatprep.subr.mxu0 0.0
    %1497 = vmatpush2.msra.mxu0 0.0
    %1498 = vmatprep.subr.mxu0 0.0
    %1499 = vmatpush2.msra.mxu0 0.0
    %1500 = vmatprep.subr.mxu0 0.0
    %1501 = vmatpush2.msra.mxu0 0.0
    %1502 = vmatprep.subr.mxu0 0.0
    %1503 = vmatpush2.msra.mxu0 0.0
    %1504 = vmatprep.mubr.f32.mxu0 0.0
    %1505 = vmatmul.mubr.f32.gmra.mxu0 %v1438
    %v1506 = vpop.f32.mrf.mxu0
    %v1507 = vadd.f32 %v1434, %v1506
    %v1508 = vpop.f32.mrf.mxu0
    %1509 = vdwg.mxu0
    %v1510 = vtanh.pop %v1507
    %v1512 = vcombine.high %v1121, %v1121
    %v1514 = vmul.f32 %v75, %v1121
    %v1515 = vmul.f32 %v79, %v1512
    %v1516 = vld [vmem:[%s12] sm:$0xff]
    %v1517 = vld [vmem:[%s12 + $0x8] sm:$0xff]
    %v1518 = vld [vmem:[%s12 + $0x10] sm:$0xff]
    %v1519 = vld [vmem:[%s12 + $0x18] sm:$0xff]
    %v1520 = vld [vmem:[%s13] sm:$0x1]
    %v1522 = vlaneseq
    %v1523 = vshrl.u32 %v1522, 7
    %v1524 = vsub.s32 0, %v1523
    %v1525 = vrot.slane %v1520, %v1524
    %v1529 = vcombine.low %v1514, %v1515
    %v1530 = vsel %vm1363, %v1529, 0
    %1532 = vmatprep.subr.mxu0 0.0
    %1533 = vmatpush1.msra.mxu0 0.0
    %1534 = vmatprep.subr.mxu0 0.0
    %1535 = vmatpush1.msra.mxu0 0.0
    %1536 = vmatprep.subr.mxu0 0.0
    %1537 = vmatpush1.msra.mxu0 0.0
    %1538 = vmatprep.subr.mxu0 0.0
    %1539 = vmatpush1.msra.mxu0 0.0
    %1540 = vmatprep.subr.mxu0 0.0
    %1541 = vmatpush1.msra.mxu0 0.0
    %1542 = vmatprep.subr.mxu0 0.0
    %1543 = vmatpush1.msra.mxu0 0.0
    %1544 = vmatprep.subr.mxu0 0.0
    %1545 = vmatpush1.msra.mxu0 0.0
    %1546 = vmatprep.subr.mxu0 0.0
    %1547 = vmatpush1.msra.mxu0 0.0
    %1548 = vmatprep.subr.mxu0 0.0
    %1549 = vmatpush1.msra.mxu0 0.0
    %1550 = vmatprep.subr.mxu0 0.0
    %1551 = vmatpush1.msra.mxu0 0.0
    %1552 = vmatprep.subr.mxu0 0.0
    %1553 = vmatpush1.msra.mxu0 0.0
    %1554 = vmatprep.subr.mxu0 0.0
    %1555 = vmatpush1.msra.mxu0 0.0
    %1556 = vmatprep.subr.mxu0 0.0
    %1557 = vmatpush1.msra.mxu0 %v1519
    %1558 = vmatprep.subr.mxu0 0.0
    %1559 = vmatpush1.msra.mxu0 %v1518
    %1560 = vmatprep.subr.mxu0 0.0
    %1561 = vmatpush1.msra.mxu0 %v1517
    %1562 = vmatprep.subr.mxu0 0.0
    %1563 = vmatpush1.msra.mxu0 %v1516
    %1564 = vmatprep.subr.mxu0 0.0
    %1565 = vmatpush2.msra.mxu0 0.0
    %1566 = vmatprep.subr.mxu0 0.0
    %1567 = vmatpush2.msra.mxu0 0.0
    %1568 = vmatprep.subr.mxu0 0.0
    %1569 = vmatpush2.msra.mxu0 0.0
    %1570 = vmatprep.subr.mxu0 0.0
    %1571 = vmatpush2.msra.mxu0 0.0
    %1572 = vmatprep.subr.mxu0 0.0
    %1573 = vmatpush2.msra.mxu0 0.0
    %1574 = vmatprep.subr.mxu0 0.0
    %1575 = vmatpush2.msra.mxu0 0.0
    %1576 = vmatprep.subr.mxu0 0.0
    %1577 = vmatpush2.msra.mxu0 0.0
    %1578 = vmatprep.subr.mxu0 0.0
    %1579 = vmatpush2.msra.mxu0 0.0
    %1580 = vmatprep.subr.mxu0 0.0
    %1581 = vmatpush2.msra.mxu0 0.0
    %1582 = vmatprep.subr.mxu0 0.0
    %1583 = vmatpush2.msra.mxu0 0.0
    %1584 = vmatprep.subr.mxu0 0.0
    %1585 = vmatpush2.msra.mxu0 0.0
    %1586 = vmatprep.subr.mxu0 0.0
    %1587 = vmatpush2.msra.mxu0 0.0
    %1588 = vmatprep.subr.mxu0 0.0
    %1589 = vmatpush2.msra.mxu0 0.0
    %1590 = vmatprep.subr.mxu0 0.0
    %1591 = vmatpush2.msra.mxu0 0.0
    %1592 = vmatprep.subr.mxu0 0.0
    %1593 = vmatpush2.msra.mxu0 0.0
    %1594 = vmatprep.subr.mxu0 0.0
    %1595 = vmatpush2.msra.mxu0 0.0
    %1596 = vmatprep.mubr.f32.mxu0 0.0
    %1597 = vmatmul.mubr.f32.gmra.mxu0 %v1530
    %v1598 = vpop.f32.mrf.mxu0
    %v1599 = vadd.f32 %v1525, %v1598
    %v1600 = vpop.f32.mrf.mxu0
    %1601 = vdwg.mxu0
    %v1602 = vtanh.pop %v1599
    %v1604 = vcombine.high %v1354, %v1354
    %v1606 = vmul.f32 %v83, %v1354
    %v1607 = vmul.f32 %v87, %v1604
    %s1608 = scalar_lea.vmem %s12, 32
    %v1609 = vld [vmem:[%s1608] sm:$0xff]
    %v1610 = vld [vmem:[%s1608 + $0x8] sm:$0xff]
    %v1611 = vld [vmem:[%s1608 + $0x10] sm:$0xff]
    %v1612 = vld [vmem:[%s1608 + $0x18] sm:$0xff]
    %s1613 = scalar_lea.vmem %s13, 1
    %v1614 = vld [vmem:[%s1613] sm:$0x1]
    %v1616 = vlaneseq
    %v1617 = vshrl.u32 %v1616, 7
    %v1618 = vsub.s32 0, %v1617
    %v1619 = vrot.slane %v1614, %v1618
    %v1623 = vcombine.low %v1606, %v1607
    %v1624 = vsel %vm1363, %v1623, 0
    %1626 = vmatprep.subr.mxu0 0.0
    %1627 = vmatpush1.msra.mxu0 0.0
    %1628 = vmatprep.subr.mxu0 0.0
    %1629 = vmatpush1.msra.mxu0 0.0
    %1630 = vmatprep.subr.mxu0 0.0
    %1631 = vmatpush1.msra.mxu0 0.0
    %1632 = vmatprep.subr.mxu0 0.0
    %1633 = vmatpush1.msra.mxu0 0.0
    %1634 = vmatprep.subr.mxu0 0.0
    %1635 = vmatpush1.msra.mxu0 0.0
    %1636 = vmatprep.subr.mxu0 0.0
    %1637 = vmatpush1.msra.mxu0 0.0
    %1638 = vmatprep.subr.mxu0 0.0
    %1639 = vmatpush1.msra.mxu0 0.0
    %1640 = vmatprep.subr.mxu0 0.0
    %1641 = vmatpush1.msra.mxu0 0.0
    %1642 = vmatprep.subr.mxu0 0.0
    %1643 = vmatpush1.msra.mxu0 0.0
    %1644 = vmatprep.subr.mxu0 0.0
    %1645 = vmatpush1.msra.mxu0 0.0
    %1646 = vmatprep.subr.mxu0 0.0
    %1647 = vmatpush1.msra.mxu0 0.0
    %1648 = vmatprep.subr.mxu0 0.0
    %1649 = vmatpush1.msra.mxu0 0.0
    %1650 = vmatprep.subr.mxu0 0.0
    %1651 = vmatpush1.msra.mxu0 %v1612
    %1652 = vmatprep.subr.mxu0 0.0
    %1653 = vmatpush1.msra.mxu0 %v1611
    %1654 = vmatprep.subr.mxu0 0.0
    %1655 = vmatpush1.msra.mxu0 %v1610
    %1656 = vmatprep.subr.mxu0 0.0
    %1657 = vmatpush1.msra.mxu0 %v1609
    %1658 = vmatprep.subr.mxu0 0.0
    %1659 = vmatpush2.msra.mxu0 0.0
    %1660 = vmatprep.subr.mxu0 0.0
    %1661 = vmatpush2.msra.mxu0 0.0
    %1662 = vmatprep.subr.mxu0 0.0
    %1663 = vmatpush2.msra.mxu0 0.0
    %1664 = vmatprep.subr.mxu0 0.0
    %1665 = vmatpush2.msra.mxu0 0.0
    %1666 = vmatprep.subr.mxu0 0.0
    %1667 = vmatpush2.msra.mxu0 0.0
    %1668 = vmatprep.subr.mxu0 0.0
    %1669 = vmatpush2.msra.mxu0 0.0
    %1670 = vmatprep.subr.mxu0 0.0
    %1671 = vmatpush2.msra.mxu0 0.0
    %1672 = vmatprep.subr.mxu0 0.0
    %1673 = vmatpush2.msra.mxu0 0.0
    %1674 = vmatprep.subr.mxu0 0.0
    %1675 = vmatpush2.msra.mxu0 0.0
    %1676 = vmatprep.subr.mxu0 0.0
    %1677 = vmatpush2.msra.mxu0 0.0
    %1678 = vmatprep.subr.mxu0 0.0
    %1679 = vmatpush2.msra.mxu0 0.0
    %1680 = vmatprep.subr.mxu0 0.0
    %1681 = vmatpush2.msra.mxu0 0.0
    %1682 = vmatprep.subr.mxu0 0.0
    %1683 = vmatpush2.msra.mxu0 0.0
    %1684 = vmatprep.subr.mxu0 0.0
    %1685 = vmatpush2.msra.mxu0 0.0
    %1686 = vmatprep.subr.mxu0 0.0
    %1687 = vmatpush2.msra.mxu0 0.0
    %1688 = vmatprep.subr.mxu0 0.0
    %1689 = vmatpush2.msra.mxu0 0.0
    %1690 = vmatprep.mubr.f32.mxu0 0.0
    %1691 = vmatmul.mubr.f32.gmra.mxu0 %v1624
    %v1692 = vpop.f32.mrf.mxu0
    %v1693 = vadd.f32 %v1619, %v1692
    %v1694 = vpop.f32.mrf.mxu0
    %1695 = vdwg.mxu0
    %v1696 = vtanh.pop %v1693
    %v1698 = vcombine.high %v1510, %v1510
    %v1700 = vmul.f32 %v91, %v1510
    %v1701 = vmul.f32 %v95, %v1698
    %s1702 = scalar_lea.vmem %s12, 64
    %v1703 = vld [vmem:[%s1702] sm:$0xff]
    %v1704 = vld [vmem:[%s1702 + $0x8] sm:$0xff]
    %v1705 = vld [vmem:[%s1702 + $0x10] sm:$0xff]
    %v1706 = vld [vmem:[%s1702 + $0x18] sm:$0xff]
    %s1707 = scalar_lea.vmem %s13, 2
    %v1708 = vld [vmem:[%s1707] sm:$0x1]
    %v1710 = vlaneseq
    %v1711 = vshrl.u32 %v1710, 7
    %v1712 = vsub.s32 0, %v1711
    %v1713 = vrot.slane %v1708, %v1712
    %v1717 = vcombine.low %v1700, %v1701
    %v1718 = vsel %vm1363, %v1717, 0
    %1720 = vmatprep.subr.mxu0 0.0
    %1721 = vmatpush1.msra.mxu0 0.0
    %1722 = vmatprep.subr.mxu0 0.0
    %1723 = vmatpush1.msra.mxu0 0.0
    %1724 = vmatprep.subr.mxu0 0.0
    %1725 = vmatpush1.msra.mxu0 0.0
    %1726 = vmatprep.subr.mxu0 0.0
    %1727 = vmatpush1.msra.mxu0 0.0
    %1728 = vmatprep.subr.mxu0 0.0
    %1729 = vmatpush1.msra.mxu0 0.0
    %1730 = vmatprep.subr.mxu0 0.0
    %1731 = vmatpush1.msra.mxu0 0.0
    %1732 = vmatprep.subr.mxu0 0.0
    %1733 = vmatpush1.msra.mxu0 0.0
    %1734 = vmatprep.subr.mxu0 0.0
    %1735 = vmatpush1.msra.mxu0 0.0
    %1736 = vmatprep.subr.mxu0 0.0
    %1737 = vmatpush1.msra.mxu0 0.0
    %1738 = vmatprep.subr.mxu0 0.0
    %1739 = vmatpush1.msra.mxu0 0.0
    %1740 = vmatprep.subr.mxu0 0.0
    %1741 = vmatpush1.msra.mxu0 0.0
    %1742 = vmatprep.subr.mxu0 0.0
    %1743 = vmatpush1.msra.mxu0 0.0
    %1744 = vmatprep.subr.mxu0 0.0
    %1745 = vmatpush1.msra.mxu0 %v1706
    %1746 = vmatprep.subr.mxu0 0.0
    %1747 = vmatpush1.msra.mxu0 %v1705
    %1748 = vmatprep.subr.mxu0 0.0
    %1749 = vmatpush1.msra.mxu0 %v1704
    %1750 = vmatprep.subr.mxu0 0.0
    %1751 = vmatpush1.msra.mxu0 %v1703
    %1752 = vmatprep.subr.mxu0 0.0
    %1753 = vmatpush2.msra.mxu0 0.0
    %1754 = vmatprep.subr.mxu0 0.0
    %1755 = vmatpush2.msra.mxu0 0.0
    %1756 = vmatprep.subr.mxu0 0.0
    %1757 = vmatpush2.msra.mxu0 0.0
    %1758 = vmatprep.subr.mxu0 0.0
    %1759 = vmatpush2.msra.mxu0 0.0
    %1760 = vmatprep.subr.mxu0 0.0
    %1761 = vmatpush2.msra.mxu0 0.0
    %1762 = vmatprep.subr.mxu0 0.0
    %1763 = vmatpush2.msra.mxu0 0.0
    %1764 = vmatprep.subr.mxu0 0.0
    %1765 = vmatpush2.msra.mxu0 0.0
    %1766 = vmatprep.subr.mxu0 0.0
    %1767 = vmatpush2.msra.mxu0 0.0
    %1768 = vmatprep.subr.mxu0 0.0
    %1769 = vmatpush2.msra.mxu0 0.0
    %1770 = vmatprep.subr.mxu0 0.0
    %1771 = vmatpush2.msra.mxu0 0.0
    %1772 = vmatprep.subr.mxu0 0.0
    %1773 = vmatpush2.msra.mxu0 0.0
    %1774 = vmatprep.subr.mxu0 0.0
    %1775 = vmatpush2.msra.mxu0 0.0
    %1776 = vmatprep.subr.mxu0 0.0
    %1777 = vmatpush2.msra.mxu0 0.0
    %1778 = vmatprep.subr.mxu0 0.0
    %1779 = vmatpush2.msra.mxu0 0.0
    %1780 = vmatprep.subr.mxu0 0.0
    %1781 = vmatpush2.msra.mxu0 0.0
    %1782 = vmatprep.subr.mxu0 0.0
    %1783 = vmatpush2.msra.mxu0 0.0
    %1784 = vmatprep.mubr.f32.mxu0 0.0
    %1785 = vmatmul.mubr.f32.gmra.mxu0 %v1718
    %v1786 = vpop.f32.mrf.mxu0
    %v1787 = vadd.f32 %v1713, %v1786
    %v1788 = vpop.f32.mrf.mxu0
    %1789 = vdwg.mxu0
    %v1790 = vtanh.pop %v1787
    %v1791 = vld [vmem:[%s14] sm:$0xff]
    %v1792 = vld [vmem:[%s14 + $0x8] sm:$0xff]
    %v1793 = vld [vmem:[%s14 + $0x10] sm:$0xff]
    %v1794 = vld [vmem:[%s14 + $0x18] sm:$0xff]
    %v1795 = vld [vmem:[%s15] sm:$0xff]
    %v1796 = vld [vmem:[%s15 + $0x8] sm:$0xff]
    %v1797 = vld [vmem:[%s15 + $0x10] sm:$0xff]
    %v1798 = vld [vmem:[%s15 + $0x18] sm:$0xff]
    %v1799 = vld [vmem:[%s16] sm:$0x1]
    %v1801 = vsel %vm1363, %v1602, 0
    %1803 = vmatprep.subr.mxu0 0.0
    %1804 = vmatpush1.msra.mxu0 0.0
    %1805 = vmatprep.subr.mxu0 0.0
    %1806 = vmatpush1.msra.mxu0 0.0
    %1807 = vmatprep.subr.mxu0 0.0
    %1808 = vmatpush1.msra.mxu0 0.0
    %1809 = vmatprep.subr.mxu0 0.0
    %1810 = vmatpush1.msra.mxu0 0.0
    %1811 = vmatprep.subr.mxu0 0.0
    %1812 = vmatpush1.msra.mxu0 0.0
    %1813 = vmatprep.subr.mxu0 0.0
    %1814 = vmatpush1.msra.mxu0 0.0
    %1815 = vmatprep.subr.mxu0 0.0
    %1816 = vmatpush1.msra.mxu0 0.0
    %1817 = vmatprep.subr.mxu0 0.0
    %1818 = vmatpush1.msra.mxu0 0.0
    %1819 = vmatprep.subr.mxu0 0.0
    %1820 = vmatpush1.msra.mxu0 0.0
    %1821 = vmatprep.subr.mxu0 0.0
    %1822 = vmatpush1.msra.mxu0 0.0
    %1823 = vmatprep.subr.mxu0 0.0
    %1824 = vmatpush1.msra.mxu0 0.0
    %1825 = vmatprep.subr.mxu0 0.0
    %1826 = vmatpush1.msra.mxu0 0.0
    %1827 = vmatprep.subr.mxu0 0.0
    %1828 = vmatpush1.msra.mxu0 %v1798
    %1829 = vmatprep.subr.mxu0 0.0
    %1830 = vmatpush1.msra.mxu0 %v1797
    %1831 = vmatprep.subr.mxu0 0.0
    %1832 = vmatpush1.msra.mxu0 %v1796
    %1833 = vmatprep.subr.mxu0 0.0
    %1834 = vmatpush1.msra.mxu0 %v1795
    %1835 = vmatprep.subr.mxu0 0.0
    %1836 = vmatpush2.msra.mxu0 0.0
    %1837 = vmatprep.subr.mxu0 0.0
    %1838 = vmatpush2.msra.mxu0 0.0
    %1839 = vmatprep.subr.mxu0 0.0
    %1840 = vmatpush2.msra.mxu0 0.0
    %1841 = vmatprep.subr.mxu0 0.0
    %1842 = vmatpush2.msra.mxu0 0.0
    %1843 = vmatprep.subr.mxu0 0.0
    %1844 = vmatpush2.msra.mxu0 0.0
    %1845 = vmatprep.subr.mxu0 0.0
    %1846 = vmatpush2.msra.mxu0 0.0
    %1847 = vmatprep.subr.mxu0 0.0
    %1848 = vmatpush2.msra.mxu0 0.0
    %1849 = vmatprep.subr.mxu0 0.0
    %1850 = vmatpush2.msra.mxu0 0.0
    %1851 = vmatprep.subr.mxu0 0.0
    %1852 = vmatpush2.msra.mxu0 0.0
    %1853 = vmatprep.subr.mxu0 0.0
    %1854 = vmatpush2.msra.mxu0 0.0
    %1855 = vmatprep.subr.mxu0 0.0
    %1856 = vmatpush2.msra.mxu0 0.0
    %1857 = vmatprep.subr.mxu0 0.0
    %1858 = vmatpush2.msra.mxu0 0.0
    %1859 = vmatprep.subr.mxu0 0.0
    %1860 = vmatpush2.msra.mxu0 0.0
    %1861 = vmatprep.subr.mxu0 0.0
    %1862 = vmatpush2.msra.mxu0 0.0
    %1863 = vmatprep.subr.mxu0 0.0
    %1864 = vmatpush2.msra.mxu0 0.0
    %1865 = vmatprep.subr.mxu0 0.0
    %1866 = vmatpush2.msra.mxu0 0.0
    %1867 = vmatprep.mubr.f32.mxu0 0.0
    %1868 = vmatmul.mubr.f32.gmra.mxu0 %v1801
    %v1869 = vpop.f32.mrf.mxu0
    %v1870 = vadd.f32 0.0, %v1869
    %v1871 = vpop.f32.mrf.mxu0
    %1872 = vdwg.mxu0
    %v1874 = vsel %vm1363, %v1790, 0
    %1876 = vmatprep.subr.mxu0 0.0
    %1877 = vmatpush1.msra.mxu0 0.0
    %1878 = vmatprep.subr.mxu0 0.0
    %1879 = vmatpush1.msra.mxu0 0.0
    %1880 = vmatprep.subr.mxu0 0.0
    %1881 = vmatpush1.msra.mxu0 0.0
    %1882 = vmatprep.subr.mxu0 0.0
    %1883 = vmatpush1.msra.mxu0 0.0
    %1884 = vmatprep.subr.mxu0 0.0
    %1885 = vmatpush1.msra.mxu0 0.0
    %1886 = vmatprep.subr.mxu0 0.0
    %1887 = vmatpush1.msra.mxu0 0.0
    %1888 = vmatprep.subr.mxu0 0.0
    %1889 = vmatpush1.msra.mxu0 0.0
    %1890 = vmatprep.subr.mxu0 0.0
    %1891 = vmatpush1.msra.mxu0 0.0
    %1892 = vmatprep.subr.mxu0 0.0
    %1893 = vmatpush1.msra.mxu0 0.0
    %1894 = vmatprep.subr.mxu0 0.0
    %1895 = vmatpush1.msra.mxu0 0.0
    %1896 = vmatprep.subr.mxu0 0.0
    %1897 = vmatpush1.msra.mxu0 0.0
    %1898 = vmatprep.subr.mxu0 0.0
    %1899 = vmatpush1.msra.mxu0 0.0
    %1900 = vmatprep.subr.mxu0 0.0
    %1901 = vmatpush1.msra.mxu0 %v1794
    %1902 = vmatprep.subr.mxu0 0.0
    %1903 = vmatpush1.msra.mxu0 %v1793
    %1904 = vmatprep.subr.mxu0 0.0
    %1905 = vmatpush1.msra.mxu0 %v1792
    %1906 = vmatprep.subr.mxu0 0.0
    %1907 = vmatpush1.msra.mxu0 %v1791
    %1908 = vmatprep.subr.mxu0 0.0
    %1909 = vmatpush2.msra.mxu0 0.0
    %1910 = vmatprep.subr.mxu0 0.0
    %1911 = vmatpush2.msra.mxu0 0.0
    %1912 = vmatprep.subr.mxu0 0.0
    %1913 = vmatpush2.msra.mxu0 0.0
    %1914 = vmatprep.subr.mxu0 0.0
    %1915 = vmatpush2.msra.mxu0 0.0
    %1916 = vmatprep.subr.mxu0 0.0
    %1917 = vmatpush2.msra.mxu0 0.0
    %1918 = vmatprep.subr.mxu0 0.0
    %1919 = vmatpush2.msra.mxu0 0.0
    %1920 = vmatprep.subr.mxu0 0.0
    %1921 = vmatpush2.msra.mxu0 0.0
    %1922 = vmatprep.subr.mxu0 0.0
    %1923 = vmatpush2.msra.mxu0 0.0
    %1924 = vmatprep.subr.mxu0 0.0
    %1925 = vmatpush2.msra.mxu0 0.0
    %1926 = vmatprep.subr.mxu0 0.0
    %1927 = vmatpush2.msra.mxu0 0.0
    %1928 = vmatprep.subr.mxu0 0.0
    %1929 = vmatpush2.msra.mxu0 0.0
    %1930 = vmatprep.subr.mxu0 0.0
    %1931 = vmatpush2.msra.mxu0 0.0
    %1932 = vmatprep.subr.mxu0 0.0
    %1933 = vmatpush2.msra.mxu0 0.0
    %1934 = vmatprep.subr.mxu0 0.0
    %1935 = vmatpush2.msra.mxu0 0.0
    %1936 = vmatprep.subr.mxu0 0.0
    %1937 = vmatpush2.msra.mxu0 0.0
    %1938 = vmatprep.subr.mxu0 0.0
    %1939 = vmatpush2.msra.mxu0 0.0
    %1940 = vmatprep.mubr.f32.mxu0 0.0
    %1941 = vmatmul.mubr.f32.gmra.mxu0 %v1874
    %v1942 = vpop.f32.mrf.mxu0
    %v1943 = vadd.f32 %v1870, %v1942
    %v1944 = vpop.f32.mrf.mxu0
    %1945 = vdwg.mxu0
    %v1947 = vlaneseq
    %v1948 = vshrl.u32 %v1947, 7
    %v1949 = vsub.s32 0, %v1948
    %v1950 = vrot.slane %v1799, %v1949
    %v1952 = vadd.f32 %v1943, %v1950
    %v1953 = vtanh.pop %v1952
    %s1954 = scalar_lea.vmem %s14, 32
    %v1955 = vld [vmem:[%s1954] sm:$0xff]
    %v1956 = vld [vmem:[%s1954 + $0x8] sm:$0xff]
    %v1957 = vld [vmem:[%s1954 + $0x10] sm:$0xff]
    %v1958 = vld [vmem:[%s1954 + $0x18] sm:$0xff]
    %s1959 = scalar_lea.vmem %s15, 32
    %v1960 = vld [vmem:[%s1959] sm:$0xff]
    %v1961 = vld [vmem:[%s1959 + $0x8] sm:$0xff]
    %v1962 = vld [vmem:[%s1959 + $0x10] sm:$0xff]
    %v1963 = vld [vmem:[%s1959 + $0x18] sm:$0xff]
    %s1964 = scalar_lea.vmem %s16, 1
    %v1965 = vld [vmem:[%s1964] sm:$0x1]
    %1966 = vmatprep.subr.mxu0 0.0
    %1967 = vmatpush1.msra.mxu0 0.0
    %1968 = vmatprep.subr.mxu0 0.0
    %1969 = vmatpush1.msra.mxu0 0.0
    %1970 = vmatprep.subr.mxu0 0.0
    %1971 = vmatpush1.msra.mxu0 0.0
    %1972 = vmatprep.subr.mxu0 0.0
    %1973 = vmatpush1.msra.mxu0 0.0
    %1974 = vmatprep.subr.mxu0 0.0
    %1975 = vmatpush1.msra.mxu0 0.0
    %1976 = vmatprep.subr.mxu0 0.0
    %1977 = vmatpush1.msra.mxu0 0.0
    %1978 = vmatprep.subr.mxu0 0.0
    %1979 = vmatpush1.msra.mxu0 0.0
    %1980 = vmatprep.subr.mxu0 0.0
    %1981 = vmatpush1.msra.mxu0 0.0
    %1982 = vmatprep.subr.mxu0 0.0
    %1983 = vmatpush1.msra.mxu0 0.0
    %1984 = vmatprep.subr.mxu0 0.0
    %1985 = vmatpush1.msra.mxu0 0.0
    %1986 = vmatprep.subr.mxu0 0.0
    %1987 = vmatpush1.msra.mxu0 0.0
    %1988 = vmatprep.subr.mxu0 0.0
    %1989 = vmatpush1.msra.mxu0 0.0
    %1990 = vmatprep.subr.mxu0 0.0
    %1991 = vmatpush1.msra.mxu0 %v1963
    %1992 = vmatprep.subr.mxu0 0.0
    %1993 = vmatpush1.msra.mxu0 %v1962
    %1994 = vmatprep.subr.mxu0 0.0
    %1995 = vmatpush1.msra.mxu0 %v1961
    %1996 = vmatprep.subr.mxu0 0.0
    %1997 = vmatpush1.msra.mxu0 %v1960
    %1998 = vmatprep.subr.mxu0 0.0
    %1999 = vmatpush2.msra.mxu0 0.0
    %2000 = vmatprep.subr.mxu0 0.0
    %2001 = vmatpush2.msra.mxu0 0.0
    %2002 = vmatprep.subr.mxu0 0.0
    %2003 = vmatpush2.msra.mxu0 0.0
    %2004 = vmatprep.subr.mxu0 0.0
    %2005 = vmatpush2.msra.mxu0 0.0
    %2006 = vmatprep.subr.mxu0 0.0
    %2007 = vmatpush2.msra.mxu0 0.0
    %2008 = vmatprep.subr.mxu0 0.0
    %2009 = vmatpush2.msra.mxu0 0.0
    %2010 = vmatprep.subr.mxu0 0.0
    %2011 = vmatpush2.msra.mxu0 0.0
    %2012 = vmatprep.subr.mxu0 0.0
    %2013 = vmatpush2.msra.mxu0 0.0
    %2014 = vmatprep.subr.mxu0 0.0
    %2015 = vmatpush2.msra.mxu0 0.0
    %2016 = vmatprep.subr.mxu0 0.0
    %2017 = vmatpush2.msra.mxu0 0.0
    %2018 = vmatprep.subr.mxu0 0.0
    %2019 = vmatpush2.msra.mxu0 0.0
    %2020 = vmatprep.subr.mxu0 0.0
    %2021 = vmatpush2.msra.mxu0 0.0
    %2022 = vmatprep.subr.mxu0 0.0
    %2023 = vmatpush2.msra.mxu0 0.0
    %2024 = vmatprep.subr.mxu0 0.0
    %2025 = vmatpush2.msra.mxu0 0.0
    %2026 = vmatprep.subr.mxu0 0.0
    %2027 = vmatpush2.msra.mxu0 0.0
    %2028 = vmatprep.subr.mxu0 0.0
    %2029 = vmatpush2.msra.mxu0 0.0
    %2030 = vmatprep.mubr.f32.mxu0 0.0
    %2031 = vmatmul.mubr.f32.gmra.mxu0 %v1801
    %v2032 = vpop.f32.mrf.mxu0
    %v2033 = vadd.f32 0.0, %v2032
    %v2034 = vpop.f32.mrf.mxu0
    %2035 = vdwg.mxu0
    %v2037 = vsel %vm1363, %v1696, 0
    %2039 = vmatprep.subr.mxu0 0.0
    %2040 = vmatpush1.msra.mxu0 0.0
    %2041 = vmatprep.subr.mxu0 0.0
    %2042 = vmatpush1.msra.mxu0 0.0
    %2043 = vmatprep.subr.mxu0 0.0
    %2044 = vmatpush1.msra.mxu0 0.0
    %2045 = vmatprep.subr.mxu0 0.0
    %2046 = vmatpush1.msra.mxu0 0.0
    %2047 = vmatprep.subr.mxu0 0.0
    %2048 = vmatpush1.msra.mxu0 0.0
    %2049 = vmatprep.subr.mxu0 0.0
    %2050 = vmatpush1.msra.mxu0 0.0
    %2051 = vmatprep.subr.mxu0 0.0
    %2052 = vmatpush1.msra.mxu0 0.0
    %2053 = vmatprep.subr.mxu0 0.0
    %2054 = vmatpush1.msra.mxu0 0.0
    %2055 = vmatprep.subr.mxu0 0.0
    %2056 = vmatpush1.msra.mxu0 0.0
    %2057 = vmatprep.subr.mxu0 0.0
    %2058 = vmatpush1.msra.mxu0 0.0
    %2059 = vmatprep.subr.mxu0 0.0
    %2060 = vmatpush1.msra.mxu0 0.0
    %2061 = vmatprep.subr.mxu0 0.0
    %2062 = vmatpush1.msra.mxu0 0.0
    %2063 = vmatprep.subr.mxu0 0.0
    %2064 = vmatpush1.msra.mxu0 %v1958
    %2065 = vmatprep.subr.mxu0 0.0
    %2066 = vmatpush1.msra.mxu0 %v1957
    %2067 = vmatprep.subr.mxu0 0.0
    %2068 = vmatpush1.msra.mxu0 %v1956
    %2069 = vmatprep.subr.mxu0 0.0
    %2070 = vmatpush1.msra.mxu0 %v1955
    %2071 = vmatprep.subr.mxu0 0.0
    %2072 = vmatpush2.msra.mxu0 0.0
    %2073 = vmatprep.subr.mxu0 0.0
    %2074 = vmatpush2.msra.mxu0 0.0
    %2075 = vmatprep.subr.mxu0 0.0
    %2076 = vmatpush2.msra.mxu0 0.0
    %2077 = vmatprep.subr.mxu0 0.0
    %2078 = vmatpush2.msra.mxu0 0.0
    %2079 = vmatprep.subr.mxu0 0.0
    %2080 = vmatpush2.msra.mxu0 0.0
    %2081 = vmatprep.subr.mxu0 0.0
    %2082 = vmatpush2.msra.mxu0 0.0
    %2083 = vmatprep.subr.mxu0 0.0
    %2084 = vmatpush2.msra.mxu0 0.0
    %2085 = vmatprep.subr.mxu0 0.0
    %2086 = vmatpush2.msra.mxu0 0.0
    %2087 = vmatprep.subr.mxu0 0.0
    %2088 = vmatpush2.msra.mxu0 0.0
    %2089 = vmatprep.subr.mxu0 0.0
    %2090 = vmatpush2.msra.mxu0 0.0
    %2091 = vmatprep.subr.mxu0 0.0
    %2092 = vmatpush2.msra.mxu0 0.0
    %2093 = vmatprep.subr.mxu0 0.0
    %2094 = vmatpush2.msra.mxu0 0.0
    %2095 = vmatprep.subr.mxu0 0.0
    %2096 = vmatpush2.msra.mxu0 0.0
    %2097 = vmatprep.subr.mxu0 0.0
    %2098 = vmatpush2.msra.mxu0 0.0
    %2099 = vmatprep.subr.mxu0 0.0
    %2100 = vmatpush2.msra.mxu0 0.0
    %2101 = vmatprep.subr.mxu0 0.0
    %2102 = vmatpush2.msra.mxu0 0.0
    %2103 = vmatprep.mubr.f32.mxu0 0.0
    %2104 = vmatmul.mubr.f32.gmra.mxu0 %v2037
    %v2105 = vpop.f32.mrf.mxu0
    %v2106 = vadd.f32 %v2033, %v2105
    %v2107 = vpop.f32.mrf.mxu0
    %2108 = vdwg.mxu0
    %v2110 = vlaneseq
    %v2111 = vshrl.u32 %v2110, 7
    %v2112 = vsub.s32 0, %v2111
    %v2113 = vrot.slane %v1965, %v2112
    %v2115 = vadd.f32 %v2106, %v2113
    %v2116 = vtanh.pop %v2115
    %v2117 = vsel %vm1363, %v2116, 0.0
    %2118 = vadd.xlane.f32.xlu0 %v2117
    %v2119 = vpop.xlane.xlu0 %2118
    %v2120 = vrcp.pop 32.0
    %v2121 = vmul.f32 %v2119, %v2120
    %v2122 = vsub.f32 %v2116, %v2121
    %v2123 = vmul.f32 %v2122, %v2122
    %v2124 = vsel %vm1363, %v2123, 0.0
    %2125 = vadd.xlane.f32.xlu0 %v2124
    %v2126 = vpop.xlane.xlu0 %2125
    %v2127 = vmul.f32 %v2126, %v2120
    %v2128 = vadd.f32 %v2127, 1e-12
    %v2129 = vrsqrt.pop %v2128
    %v2130 = vmul.f32 %v2122, %v2129
    %v2133 = vcombine.low %v107, %v111
    %v2135 = vmul.f32 %v2130, %v2133
    %v2136 = vsel %vm1363, %v1953, 0.0
    %2137 = vadd.xlane.f32.xlu0 %v2136
    %v2138 = vpop.xlane.xlu0 %2137
    %v2139 = vmul.f32 %v2138, %v2120
    %v2140 = vsub.f32 %v1953, %v2139
    %v2141 = vmul.f32 %v2140, %v2140
    %v2142 = vsel %vm1363, %v2141, 0.0
    %2143 = vadd.xlane.f32.xlu0 %v2142
    %v2144 = vpop.xlane.xlu0 %2143
    %v2145 = vmul.f32 %v2144, %v2120
    %v2146 = vadd.f32 %v2145, 1e-12
    %v2147 = vrsqrt.pop %v2146
    %v2148 = vmul.f32 %v2140, %v2147
    %v2151 = vcombine.low %v99, %v103
    %v2153 = vmul.f32 %v2148, %v2151
    %v2154 = vld [vmem:[%s17] sm:$0xff]
    %v2155 = vld [vmem:[%s17 + $0x8] sm:$0xff]
    %v2156 = vld [vmem:[%s17 + $0x10] sm:$0xff]
    %v2157 = vld [vmem:[%s17 + $0x18] sm:$0xff]
    %v2158 = vld [vmem:[%s18] sm:$0xff]
    %v2159 = vld [vmem:[%s18 + $0x8] sm:$0xff]
    %v2160 = vld [vmem:[%s18 + $0x10] sm:$0xff]
    %v2161 = vld [vmem:[%s18 + $0x18] sm:$0xff]
    %v2163 = vsel %vm1363, %v2153, 0
    %2165 = vmatprep.subr.mxu0 0.0
    %2166 = vmatpush1.msra.mxu0 0.0
    %2167 = vmatprep.subr.mxu0 0.0
    %2168 = vmatpush1.msra.mxu0 0.0
    %2169 = vmatprep.subr.mxu0 0.0
    %2170 = vmatpush1.msra.mxu0 0.0
    %2171 = vmatprep.subr.mxu0 0.0
    %2172 = vmatpush1.msra.mxu0 0.0
    %2173 = vmatprep.subr.mxu0 0.0
    %2174 = vmatpush1.msra.mxu0 0.0
    %2175 = vmatprep.subr.mxu0 0.0
    %2176 = vmatpush1.msra.mxu0 0.0
    %2177 = vmatprep.subr.mxu0 0.0
    %2178 = vmatpush1.msra.mxu0 0.0
    %2179 = vmatprep.subr.mxu0 0.0
    %2180 = vmatpush1.msra.mxu0 0.0
    %2181 = vmatprep.subr.mxu0 0.0
    %2182 = vmatpush1.msra.mxu0 0.0
    %2183 = vmatprep.subr.mxu0 0.0
    %2184 = vmatpush1.msra.mxu0 0.0
    %2185 = vmatprep.subr.mxu0 0.0
    %2186 = vmatpush1.msra.mxu0 0.0
    %2187 = vmatprep.subr.mxu0 0.0
    %2188 = vmatpush1.msra.mxu0 0.0
    %2189 = vmatprep.subr.mxu0 0.0
    %2190 = vmatpush1.msra.mxu0 %v2161
    %2191 = vmatprep.subr.mxu0 0.0
    %2192 = vmatpush1.msra.mxu0 %v2160
    %2193 = vmatprep.subr.mxu0 0.0
    %2194 = vmatpush1.msra.mxu0 %v2159
    %2195 = vmatprep.subr.mxu0 0.0
    %2196 = vmatpush1.msra.mxu0 %v2158
    %2197 = vmatprep.subr.mxu0 0.0
    %2198 = vmatpush2.msra.mxu0 0.0
    %2199 = vmatprep.subr.mxu0 0.0
    %2200 = vmatpush2.msra.mxu0 0.0
    %2201 = vmatprep.subr.mxu0 0.0
    %2202 = vmatpush2.msra.mxu0 0.0
    %2203 = vmatprep.subr.mxu0 0.0
    %2204 = vmatpush2.msra.mxu0 0.0
    %2205 = vmatprep.subr.mxu0 0.0
    %2206 = vmatpush2.msra.mxu0 0.0
    %2207 = vmatprep.subr.mxu0 0.0
    %2208 = vmatpush2.msra.mxu0 0.0
    %2209 = vmatprep.subr.mxu0 0.0
    %2210 = vmatpush2.msra.mxu0 0.0
    %2211 = vmatprep.subr.mxu0 0.0
    %2212 = vmatpush2.msra.mxu0 0.0
    %2213 = vmatprep.subr.mxu0 0.0
    %2214 = vmatpush2.msra.mxu0 0.0
    %2215 = vmatprep.subr.mxu0 0.0
    %2216 = vmatpush2.msra.mxu0 0.0
    %2217 = vmatprep.subr.mxu0 0.0
    %2218 = vmatpush2.msra.mxu0 0.0
    %2219 = vmatprep.subr.mxu0 0.0
    %2220 = vmatpush2.msra.mxu0 0.0
    %2221 = vmatprep.subr.mxu0 0.0
    %2222 = vmatpush2.msra.mxu0 0.0
    %2223 = vmatprep.subr.mxu0 0.0
    %2224 = vmatpush2.msra.mxu0 0.0
    %2225 = vmatprep.subr.mxu0 0.0
    %2226 = vmatpush2.msra.mxu0 0.0
    %2227 = vmatprep.subr.mxu0 0.0
    %2228 = vmatpush2.msra.mxu0 0.0
    %2229 = vmatprep.mubr.f32.mxu0 0.0
    %2230 = vmatmul.mubr.f32.gmra.mxu0 %v2163
    %v2231 = vpop.f32.mrf.mxu0
    %v2232 = vadd.f32 0.0, %v2231
    %v2233 = vpop.f32.mrf.mxu0
    %2234 = vdwg.mxu0
    %v2236 = vsel %vm1363, %v2135, 0
    %2238 = vmatprep.subr.mxu0 0.0
    %2239 = vmatpush1.msra.mxu0 0.0
    %2240 = vmatprep.subr.mxu0 0.0
    %2241 = vmatpush1.msra.mxu0 0.0
    %2242 = vmatprep.subr.mxu0 0.0
    %2243 = vmatpush1.msra.mxu0 0.0
    %2244 = vmatprep.subr.mxu0 0.0
    %2245 = vmatpush1.msra.mxu0 0.0
    %2246 = vmatprep.subr.mxu0 0.0
    %2247 = vmatpush1.msra.mxu0 0.0
    %2248 = vmatprep.subr.mxu0 0.0
    %2249 = vmatpush1.msra.mxu0 0.0
    %2250 = vmatprep.subr.mxu0 0.0
    %2251 = vmatpush1.msra.mxu0 0.0
    %2252 = vmatprep.subr.mxu0 0.0
    %2253 = vmatpush1.msra.mxu0 0.0
    %2254 = vmatprep.subr.mxu0 0.0
    %2255 = vmatpush1.msra.mxu0 0.0
    %2256 = vmatprep.subr.mxu0 0.0
    %2257 = vmatpush1.msra.mxu0 0.0
    %2258 = vmatprep.subr.mxu0 0.0
    %2259 = vmatpush1.msra.mxu0 0.0
    %2260 = vmatprep.subr.mxu0 0.0
    %2261 = vmatpush1.msra.mxu0 0.0
    %2262 = vmatprep.subr.mxu0 0.0
    %2263 = vmatpush1.msra.mxu0 %v2157
    %2264 = vmatprep.subr.mxu0 0.0
    %2265 = vmatpush1.msra.mxu0 %v2156
    %2266 = vmatprep.subr.mxu0 0.0
    %2267 = vmatpush1.msra.mxu0 %v2155
    %2268 = vmatprep.subr.mxu0 0.0
    %2269 = vmatpush1.msra.mxu0 %v2154
    %2270 = vmatprep.subr.mxu0 0.0
    %2271 = vmatpush2.msra.mxu0 0.0
    %2272 = vmatprep.subr.mxu0 0.0
    %2273 = vmatpush2.msra.mxu0 0.0
    %2274 = vmatprep.subr.mxu0 0.0
    %2275 = vmatpush2.msra.mxu0 0.0
    %2276 = vmatprep.subr.mxu0 0.0
    %2277 = vmatpush2.msra.mxu0 0.0
    %2278 = vmatprep.subr.mxu0 0.0
    %2279 = vmatpush2.msra.mxu0 0.0
    %2280 = vmatprep.subr.mxu0 0.0
    %2281 = vmatpush2.msra.mxu0 0.0
    %2282 = vmatprep.subr.mxu0 0.0
    %2283 = vmatpush2.msra.mxu0 0.0
    %2284 = vmatprep.subr.mxu0 0.0
    %2285 = vmatpush2.msra.mxu0 0.0
    %2286 = vmatprep.subr.mxu0 0.0
    %2287 = vmatpush2.msra.mxu0 0.0
    %2288 = vmatprep.subr.mxu0 0.0
    %2289 = vmatpush2.msra.mxu0 0.0
    %2290 = vmatprep.subr.mxu0 0.0
    %2291 = vmatpush2.msra.mxu0 0.0
    %2292 = vmatprep.subr.mxu0 0.0
    %2293 = vmatpush2.msra.mxu0 0.0
    %2294 = vmatprep.subr.mxu0 0.0
    %2295 = vmatpush2.msra.mxu0 0.0
    %2296 = vmatprep.subr.mxu0 0.0
    %2297 = vmatpush2.msra.mxu0 0.0
    %2298 = vmatprep.subr.mxu0 0.0
    %2299 = vmatpush2.msra.mxu0 0.0
    %2300 = vmatprep.subr.mxu0 0.0
    %2301 = vmatpush2.msra.mxu0 0.0
    %2302 = vmatprep.mubr.f32.mxu0 0.0
    %2303 = vmatmul.mubr.f32.gmra.mxu0 %v2236
    %v2304 = vpop.f32.mrf.mxu0
    %v2305 = vadd.f32 %v2232, %v2304
    %v2306 = vpop.f32.mrf.mxu0
    %2307 = vdwg.mxu0
    %v2308 = vtanh.pop %v2305
    %v2309 = vadd.f32 %v2308, %v1602
    %2310 = vmatprep.subr.mxu0 0.0
    %2311 = vmatpush1.msra.mxu0 0.0
    %2312 = vmatprep.subr.mxu0 0.0
    %2313 = vmatpush1.msra.mxu0 0.0
    %2314 = vmatprep.subr.mxu0 0.0
    %2315 = vmatpush1.msra.mxu0 0.0
    %2316 = vmatprep.subr.mxu0 0.0
    %2317 = vmatpush1.msra.mxu0 0.0
    %2318 = vmatprep.subr.mxu0 0.0
    %2319 = vmatpush1.msra.mxu0 0.0
    %2320 = vmatprep.subr.mxu0 0.0
    %2321 = vmatpush1.msra.mxu0 0.0
    %2322 = vmatprep.subr.mxu0 0.0
    %2323 = vmatpush1.msra.mxu0 0.0
    %2324 = vmatprep.subr.mxu0 0.0
    %2325 = vmatpush1.msra.mxu0 0.0
    %2326 = vmatprep.subr.mxu0 0.0
    %2327 = vmatpush1.msra.mxu0 0.0
    %2328 = vmatprep.subr.mxu0 0.0
    %2329 = vmatpush1.msra.mxu0 0.0
    %2330 = vmatprep.subr.mxu0 0.0
    %2331 = vmatpush1.msra.mxu0 0.0
    %2332 = vmatprep.subr.mxu0 0.0
    %2333 = vmatpush1.msra.mxu0 0.0
    %2334 = vmatprep.subr.mxu0 0.0
    %2335 = vmatpush1.msra.mxu0 %v1963
    %2336 = vmatprep.subr.mxu0 0.0
    %2337 = vmatpush1.msra.mxu0 %v1962
    %2338 = vmatprep.subr.mxu0 0.0
    %2339 = vmatpush1.msra.mxu0 %v1961
    %2340 = vmatprep.subr.mxu0 0.0
    %2341 = vmatpush1.msra.mxu0 %v1960
    %2342 = vmatprep.subr.mxu0 0.0
    %2343 = vmatpush2.msra.mxu0 0.0
    %2344 = vmatprep.subr.mxu0 0.0
    %2345 = vmatpush2.msra.mxu0 0.0
    %2346 = vmatprep.subr.mxu0 0.0
    %2347 = vmatpush2.msra.mxu0 0.0
    %2348 = vmatprep.subr.mxu0 0.0
    %2349 = vmatpush2.msra.mxu0 0.0
    %2350 = vmatprep.subr.mxu0 0.0
    %2351 = vmatpush2.msra.mxu0 0.0
    %2352 = vmatprep.subr.mxu0 0.0
    %2353 = vmatpush2.msra.mxu0 0.0
    %2354 = vmatprep.subr.mxu0 0.0
    %2355 = vmatpush2.msra.mxu0 0.0
    %2356 = vmatprep.subr.mxu0 0.0
    %2357 = vmatpush2.msra.mxu0 0.0
    %2358 = vmatprep.subr.mxu0 0.0
    %2359 = vmatpush2.msra.mxu0 0.0
    %2360 = vmatprep.subr.mxu0 0.0
    %2361 = vmatpush2.msra.mxu0 0.0
    %2362 = vmatprep.subr.mxu0 0.0
    %2363 = vmatpush2.msra.mxu0 0.0
    %2364 = vmatprep.subr.mxu0 0.0
    %2365 = vmatpush2.msra.mxu0 0.0
    %2366 = vmatprep.subr.mxu0 0.0
    %2367 = vmatpush2.msra.mxu0 0.0
    %2368 = vmatprep.subr.mxu0 0.0
    %2369 = vmatpush2.msra.mxu0 0.0
    %2370 = vmatprep.subr.mxu0 0.0
    %2371 = vmatpush2.msra.mxu0 0.0
    %2372 = vmatprep.subr.mxu0 0.0
    %2373 = vmatpush2.msra.mxu0 0.0
    %2374 = vmatprep.mubr.f32.mxu0 0.0
    %2375 = vmatmul.mubr.f32.gmra.mxu0 %v2037
    %v2376 = vpop.f32.mrf.mxu0
    %v2377 = vadd.f32 0.0, %v2376
    %v2378 = vpop.f32.mrf.mxu0
    %2379 = vdwg.mxu0
    %2380 = vmatprep.subr.mxu0 0.0
    %2381 = vmatpush1.msra.mxu0 0.0
    %2382 = vmatprep.subr.mxu0 0.0
    %2383 = vmatpush1.msra.mxu0 0.0
    %2384 = vmatprep.subr.mxu0 0.0
    %2385 = vmatpush1.msra.mxu0 0.0
    %2386 = vmatprep.subr.mxu0 0.0
    %2387 = vmatpush1.msra.mxu0 0.0
    %2388 = vmatprep.subr.mxu0 0.0
    %2389 = vmatpush1.msra.mxu0 0.0
    %2390 = vmatprep.subr.mxu0 0.0
    %2391 = vmatpush1.msra.mxu0 0.0
    %2392 = vmatprep.subr.mxu0 0.0
    %2393 = vmatpush1.msra.mxu0 0.0
    %2394 = vmatprep.subr.mxu0 0.0
    %2395 = vmatpush1.msra.mxu0 0.0
    %2396 = vmatprep.subr.mxu0 0.0
    %2397 = vmatpush1.msra.mxu0 0.0
    %2398 = vmatprep.subr.mxu0 0.0
    %2399 = vmatpush1.msra.mxu0 0.0
    %2400 = vmatprep.subr.mxu0 0.0
    %2401 = vmatpush1.msra.mxu0 0.0
    %2402 = vmatprep.subr.mxu0 0.0
    %2403 = vmatpush1.msra.mxu0 0.0
    %2404 = vmatprep.subr.mxu0 0.0
    %2405 = vmatpush1.msra.mxu0 %v1958
    %2406 = vmatprep.subr.mxu0 0.0
    %2407 = vmatpush1.msra.mxu0 %v1957
    %2408 = vmatprep.subr.mxu0 0.0
    %2409 = vmatpush1.msra.mxu0 %v1956
    %2410 = vmatprep.subr.mxu0 0.0
    %2411 = vmatpush1.msra.mxu0 %v1955
    %2412 = vmatprep.subr.mxu0 0.0
    %2413 = vmatpush2.msra.mxu0 0.0
    %2414 = vmatprep.subr.mxu0 0.0
    %2415 = vmatpush2.msra.mxu0 0.0
    %2416 = vmatprep.subr.mxu0 0.0
    %2417 = vmatpush2.msra.mxu0 0.0
    %2418 = vmatprep.subr.mxu0 0.0
    %2419 = vmatpush2.msra.mxu0 0.0
    %2420 = vmatprep.subr.mxu0 0.0
    %2421 = vmatpush2.msra.mxu0 0.0
    %2422 = vmatprep.subr.mxu0 0.0
    %2423 = vmatpush2.msra.mxu0 0.0
    %2424 = vmatprep.subr.mxu0 0.0
    %2425 = vmatpush2.msra.mxu0 0.0
    %2426 = vmatprep.subr.mxu0 0.0
    %2427 = vmatpush2.msra.mxu0 0.0
    %2428 = vmatprep.subr.mxu0 0.0
    %2429 = vmatpush2.msra.mxu0 0.0
    %2430 = vmatprep.subr.mxu0 0.0
    %2431 = vmatpush2.msra.mxu0 0.0
    %2432 = vmatprep.subr.mxu0 0.0
    %2433 = vmatpush2.msra.mxu0 0.0
    %2434 = vmatprep.subr.mxu0 0.0
    %2435 = vmatpush2.msra.mxu0 0.0
    %2436 = vmatprep.subr.mxu0 0.0
    %2437 = vmatpush2.msra.mxu0 0.0
    %2438 = vmatprep.subr.mxu0 0.0
    %2439 = vmatpush2.msra.mxu0 0.0
    %2440 = vmatprep.subr.mxu0 0.0
    %2441 = vmatpush2.msra.mxu0 0.0
    %2442 = vmatprep.subr.mxu0 0.0
    %2443 = vmatpush2.msra.mxu0 0.0
    %2444 = vmatprep.mubr.f32.mxu0 0.0
    %2445 = vmatmul.mubr.f32.gmra.mxu0 %v1801
    %v2446 = vpop.f32.mrf.mxu0
    %v2447 = vadd.f32 %v2377, %v2446
    %v2448 = vpop.f32.mrf.mxu0
    %2449 = vdwg.mxu0
    %v2450 = vadd.f32 %v2447, %v2113
    %v2451 = vtanh.pop %v2450
    %s2452 = scalar_lea.vmem %s14, 64
    %v2453 = vld [vmem:[%s2452] sm:$0xff]
    %v2454 = vld [vmem:[%s2452 + $0x8] sm:$0xff]
    %v2455 = vld [vmem:[%s2452 + $0x10] sm:$0xff]
    %v2456 = vld [vmem:[%s2452 + $0x18] sm:$0xff]
    %s2457 = scalar_lea.vmem %s15, 64
    %v2458 = vld [vmem:[%s2457] sm:$0xff]
    %v2459 = vld [vmem:[%s2457 + $0x8] sm:$0xff]
    %v2460 = vld [vmem:[%s2457 + $0x10] sm:$0xff]
    %v2461 = vld [vmem:[%s2457 + $0x18] sm:$0xff]
    %s2462 = scalar_lea.vmem %s16, 2
    %v2463 = vld [vmem:[%s2462] sm:$0x1]
    %2464 = vmatprep.subr.mxu0 0.0
    %2465 = vmatpush1.msra.mxu0 0.0
    %2466 = vmatprep.subr.mxu0 0.0
    %2467 = vmatpush1.msra.mxu0 0.0
    %2468 = vmatprep.subr.mxu0 0.0
    %2469 = vmatpush1.msra.mxu0 0.0
    %2470 = vmatprep.subr.mxu0 0.0
    %2471 = vmatpush1.msra.mxu0 0.0
    %2472 = vmatprep.subr.mxu0 0.0
    %2473 = vmatpush1.msra.mxu0 0.0
    %2474 = vmatprep.subr.mxu0 0.0
    %2475 = vmatpush1.msra.mxu0 0.0
    %2476 = vmatprep.subr.mxu0 0.0
    %2477 = vmatpush1.msra.mxu0 0.0
    %2478 = vmatprep.subr.mxu0 0.0
    %2479 = vmatpush1.msra.mxu0 0.0
    %2480 = vmatprep.subr.mxu0 0.0
    %2481 = vmatpush1.msra.mxu0 0.0
    %2482 = vmatprep.subr.mxu0 0.0
    %2483 = vmatpush1.msra.mxu0 0.0
    %2484 = vmatprep.subr.mxu0 0.0
    %2485 = vmatpush1.msra.mxu0 0.0
    %2486 = vmatprep.subr.mxu0 0.0
    %2487 = vmatpush1.msra.mxu0 0.0
    %2488 = vmatprep.subr.mxu0 0.0
    %2489 = vmatpush1.msra.mxu0 %v2461
    %2490 = vmatprep.subr.mxu0 0.0
    %2491 = vmatpush1.msra.mxu0 %v2460
    %2492 = vmatprep.subr.mxu0 0.0
    %2493 = vmatpush1.msra.mxu0 %v2459
    %2494 = vmatprep.subr.mxu0 0.0
    %2495 = vmatpush1.msra.mxu0 %v2458
    %2496 = vmatprep.subr.mxu0 0.0
    %2497 = vmatpush2.msra.mxu0 0.0
    %2498 = vmatprep.subr.mxu0 0.0
    %2499 = vmatpush2.msra.mxu0 0.0
    %2500 = vmatprep.subr.mxu0 0.0
    %2501 = vmatpush2.msra.mxu0 0.0
    %2502 = vmatprep.subr.mxu0 0.0
    %2503 = vmatpush2.msra.mxu0 0.0
    %2504 = vmatprep.subr.mxu0 0.0
    %2505 = vmatpush2.msra.mxu0 0.0
    %2506 = vmatprep.subr.mxu0 0.0
    %2507 = vmatpush2.msra.mxu0 0.0
    %2508 = vmatprep.subr.mxu0 0.0
    %2509 = vmatpush2.msra.mxu0 0.0
    %2510 = vmatprep.subr.mxu0 0.0
    %2511 = vmatpush2.msra.mxu0 0.0
    %2512 = vmatprep.subr.mxu0 0.0
    %2513 = vmatpush2.msra.mxu0 0.0
    %2514 = vmatprep.subr.mxu0 0.0
    %2515 = vmatpush2.msra.mxu0 0.0
    %2516 = vmatprep.subr.mxu0 0.0
    %2517 = vmatpush2.msra.mxu0 0.0
    %2518 = vmatprep.subr.mxu0 0.0
    %2519 = vmatpush2.msra.mxu0 0.0
    %2520 = vmatprep.subr.mxu0 0.0
    %2521 = vmatpush2.msra.mxu0 0.0
    %2522 = vmatprep.subr.mxu0 0.0
    %2523 = vmatpush2.msra.mxu0 0.0
    %2524 = vmatprep.subr.mxu0 0.0
    %2525 = vmatpush2.msra.mxu0 0.0
    %2526 = vmatprep.subr.mxu0 0.0
    %2527 = vmatpush2.msra.mxu0 0.0
    %2528 = vmatprep.mubr.f32.mxu0 0.0
    %2529 = vmatmul.mubr.f32.gmra.mxu0 %v2037
    %v2530 = vpop.f32.mrf.mxu0
    %v2531 = vadd.f32 0.0, %v2530
    %v2532 = vpop.f32.mrf.mxu0
    %2533 = vdwg.mxu0
    %2534 = vmatprep.subr.mxu0 0.0
    %2535 = vmatpush1.msra.mxu0 0.0
    %2536 = vmatprep.subr.mxu0 0.0
    %2537 = vmatpush1.msra.mxu0 0.0
    %2538 = vmatprep.subr.mxu0 0.0
    %2539 = vmatpush1.msra.mxu0 0.0
    %2540 = vmatprep.subr.mxu0 0.0
    %2541 = vmatpush1.msra.mxu0 0.0
    %2542 = vmatprep.subr.mxu0 0.0
    %2543 = vmatpush1.msra.mxu0 0.0
    %2544 = vmatprep.subr.mxu0 0.0
    %2545 = vmatpush1.msra.mxu0 0.0
    %2546 = vmatprep.subr.mxu0 0.0
    %2547 = vmatpush1.msra.mxu0 0.0
    %2548 = vmatprep.subr.mxu0 0.0
    %2549 = vmatpush1.msra.mxu0 0.0
    %2550 = vmatprep.subr.mxu0 0.0
    %2551 = vmatpush1.msra.mxu0 0.0
    %2552 = vmatprep.subr.mxu0 0.0
    %2553 = vmatpush1.msra.mxu0 0.0
    %2554 = vmatprep.subr.mxu0 0.0
    %2555 = vmatpush1.msra.mxu0 0.0
    %2556 = vmatprep.subr.mxu0 0.0
    %2557 = vmatpush1.msra.mxu0 0.0
    %2558 = vmatprep.subr.mxu0 0.0
    %2559 = vmatpush1.msra.mxu0 %v2456
    %2560 = vmatprep.subr.mxu0 0.0
    %2561 = vmatpush1.msra.mxu0 %v2455
    %2562 = vmatprep.subr.mxu0 0.0
    %2563 = vmatpush1.msra.mxu0 %v2454
    %2564 = vmatprep.subr.mxu0 0.0
    %2565 = vmatpush1.msra.mxu0 %v2453
    %2566 = vmatprep.subr.mxu0 0.0
    %2567 = vmatpush2.msra.mxu0 0.0
    %2568 = vmatprep.subr.mxu0 0.0
    %2569 = vmatpush2.msra.mxu0 0.0
    %2570 = vmatprep.subr.mxu0 0.0
    %2571 = vmatpush2.msra.mxu0 0.0
    %2572 = vmatprep.subr.mxu0 0.0
    %2573 = vmatpush2.msra.mxu0 0.0
    %2574 = vmatprep.subr.mxu0 0.0
    %2575 = vmatpush2.msra.mxu0 0.0
    %2576 = vmatprep.subr.mxu0 0.0
    %2577 = vmatpush2.msra.mxu0 0.0
    %2578 = vmatprep.subr.mxu0 0.0
    %2579 = vmatpush2.msra.mxu0 0.0
    %2580 = vmatprep.subr.mxu0 0.0
    %2581 = vmatpush2.msra.mxu0 0.0
    %2582 = vmatprep.subr.mxu0 0.0
    %2583 = vmatpush2.msra.mxu0 0.0
    %2584 = vmatprep.subr.mxu0 0.0
    %2585 = vmatpush2.msra.mxu0 0.0
    %2586 = vmatprep.subr.mxu0 0.0
    %2587 = vmatpush2.msra.mxu0 0.0
    %2588 = vmatprep.subr.mxu0 0.0
    %2589 = vmatpush2.msra.mxu0 0.0
    %2590 = vmatprep.subr.mxu0 0.0
    %2591 = vmatpush2.msra.mxu0 0.0
    %2592 = vmatprep.subr.mxu0 0.0
    %2593 = vmatpush2.msra.mxu0 0.0
    %2594 = vmatprep.subr.mxu0 0.0
    %2595 = vmatpush2.msra.mxu0 0.0
    %2596 = vmatprep.subr.mxu0 0.0
    %2597 = vmatpush2.msra.mxu0 0.0
    %2598 = vmatprep.mubr.f32.mxu0 0.0
    %2599 = vmatmul.mubr.f32.gmra.mxu0 %v1874
    %v2600 = vpop.f32.mrf.mxu0
    %v2601 = vadd.f32 %v2531, %v2600
    %v2602 = vpop.f32.mrf.mxu0
    %2603 = vdwg.mxu0
    %v2605 = vlaneseq
    %v2606 = vshrl.u32 %v2605, 7
    %v2607 = vsub.s32 0, %v2606
    %v2608 = vrot.slane %v2463, %v2607
    %v2610 = vadd.f32 %v2601, %v2608
    %v2611 = vtanh.pop %v2610
    %v2612 = vsel %vm1363, %v2451, 0.0
    %2613 = vadd.xlane.f32.xlu0 %v2612
    %v2614 = vpop.xlane.xlu0 %2613
    %v2615 = vmul.f32 %v2614, %v2120
    %v2616 = vsub.f32 %v2451, %v2615
    %v2617 = vmul.f32 %v2616, %v2616
    %v2618 = vsel %vm1363, %v2617, 0.0
    %2619 = vadd.xlane.f32.xlu0 %v2618
    %v2620 = vpop.xlane.xlu0 %2619
    %v2621 = vmul.f32 %v2620, %v2120
    %v2622 = vadd.f32 %v2621, 1e-12
    %v2623 = vrsqrt.pop %v2622
    %v2624 = vmul.f32 %v2616, %v2623
    %v2625 = vmul.f32 %v2624, %v2133
    %v2626 = vsel %vm1363, %v2611, 0.0
    %2627 = vadd.xlane.f32.xlu0 %v2626
    %v2628 = vpop.xlane.xlu0 %2627
    %v2629 = vmul.f32 %v2628, %v2120
    %v2630 = vsub.f32 %v2611, %v2629
    %v2631 = vmul.f32 %v2630, %v2630
    %v2632 = vsel %vm1363, %v2631, 0.0
    %2633 = vadd.xlane.f32.xlu0 %v2632
    %v2634 = vpop.xlane.xlu0 %2633
    %v2635 = vmul.f32 %v2634, %v2120
    %v2636 = vadd.f32 %v2635, 1e-12
    %v2637 = vrsqrt.pop %v2636
    %v2638 = vmul.f32 %v2630, %v2637
    %v2641 = vcombine.low %v115, %v119
    %v2643 = vmul.f32 %v2638, %v2641
    %s2644 = scalar_lea.vmem %s17, 32
    %v2645 = vld [vmem:[%s2644] sm:$0xff]
    %v2646 = vld [vmem:[%s2644 + $0x8] sm:$0xff]
    %v2647 = vld [vmem:[%s2644 + $0x10] sm:$0xff]
    %v2648 = vld [vmem:[%s2644 + $0x18] sm:$0xff]
    %s2649 = scalar_lea.vmem %s18, 32
    %v2650 = vld [vmem:[%s2649] sm:$0xff]
    %v2651 = vld [vmem:[%s2649 + $0x8] sm:$0xff]
    %v2652 = vld [vmem:[%s2649 + $0x10] sm:$0xff]
    %v2653 = vld [vmem:[%s2649 + $0x18] sm:$0xff]
    %v2655 = vsel %vm1363, %v2643, 0
    %2657 = vmatprep.subr.mxu0 0.0
    %2658 = vmatpush1.msra.mxu0 0.0
    %2659 = vmatprep.subr.mxu0 0.0
    %2660 = vmatpush1.msra.mxu0 0.0
    %2661 = vmatprep.subr.mxu0 0.0
    %2662 = vmatpush1.msra.mxu0 0.0
    %2663 = vmatprep.subr.mxu0 0.0
    %2664 = vmatpush1.msra.mxu0 0.0
    %2665 = vmatprep.subr.mxu0 0.0
    %2666 = vmatpush1.msra.mxu0 0.0
    %2667 = vmatprep.subr.mxu0 0.0
    %2668 = vmatpush1.msra.mxu0 0.0
    %2669 = vmatprep.subr.mxu0 0.0
    %2670 = vmatpush1.msra.mxu0 0.0
    %2671 = vmatprep.subr.mxu0 0.0
    %2672 = vmatpush1.msra.mxu0 0.0
    %2673 = vmatprep.subr.mxu0 0.0
    %2674 = vmatpush1.msra.mxu0 0.0
    %2675 = vmatprep.subr.mxu0 0.0
    %2676 = vmatpush1.msra.mxu0 0.0
    %2677 = vmatprep.subr.mxu0 0.0
    %2678 = vmatpush1.msra.mxu0 0.0
    %2679 = vmatprep.subr.mxu0 0.0
    %2680 = vmatpush1.msra.mxu0 0.0
    %2681 = vmatprep.subr.mxu0 0.0
    %2682 = vmatpush1.msra.mxu0 %v2653
    %2683 = vmatprep.subr.mxu0 0.0
    %2684 = vmatpush1.msra.mxu0 %v2652
    %2685 = vmatprep.subr.mxu0 0.0
    %2686 = vmatpush1.msra.mxu0 %v2651
    %2687 = vmatprep.subr.mxu0 0.0
    %2688 = vmatpush1.msra.mxu0 %v2650
    %2689 = vmatprep.subr.mxu0 0.0
    %2690 = vmatpush2.msra.mxu0 0.0
    %2691 = vmatprep.subr.mxu0 0.0
    %2692 = vmatpush2.msra.mxu0 0.0
    %2693 = vmatprep.subr.mxu0 0.0
    %2694 = vmatpush2.msra.mxu0 0.0
    %2695 = vmatprep.subr.mxu0 0.0
    %2696 = vmatpush2.msra.mxu0 0.0
    %2697 = vmatprep.subr.mxu0 0.0
    %2698 = vmatpush2.msra.mxu0 0.0
    %2699 = vmatprep.subr.mxu0 0.0
    %2700 = vmatpush2.msra.mxu0 0.0
    %2701 = vmatprep.subr.mxu0 0.0
    %2702 = vmatpush2.msra.mxu0 0.0
    %2703 = vmatprep.subr.mxu0 0.0
    %2704 = vmatpush2.msra.mxu0 0.0
    %2705 = vmatprep.subr.mxu0 0.0
    %2706 = vmatpush2.msra.mxu0 0.0
    %2707 = vmatprep.subr.mxu0 0.0
    %2708 = vmatpush2.msra.mxu0 0.0
    %2709 = vmatprep.subr.mxu0 0.0
    %2710 = vmatpush2.msra.mxu0 0.0
    %2711 = vmatprep.subr.mxu0 0.0
    %2712 = vmatpush2.msra.mxu0 0.0
    %2713 = vmatprep.subr.mxu0 0.0
    %2714 = vmatpush2.msra.mxu0 0.0
    %2715 = vmatprep.subr.mxu0 0.0
    %2716 = vmatpush2.msra.mxu0 0.0
    %2717 = vmatprep.subr.mxu0 0.0
    %2718 = vmatpush2.msra.mxu0 0.0
    %2719 = vmatprep.subr.mxu0 0.0
    %2720 = vmatpush2.msra.mxu0 0.0
    %2721 = vmatprep.mubr.f32.mxu0 0.0
    %2722 = vmatmul.mubr.f32.gmra.mxu0 %v2655
    %v2723 = vpop.f32.mrf.mxu0
    %v2724 = vadd.f32 0.0, %v2723
    %v2725 = vpop.f32.mrf.mxu0
    %2726 = vdwg.mxu0
    %v2728 = vsel %vm1363, %v2625, 0
    %2730 = vmatprep.subr.mxu0 0.0
    %2731 = vmatpush1.msra.mxu0 0.0
    %2732 = vmatprep.subr.mxu0 0.0
    %2733 = vmatpush1.msra.mxu0 0.0
    %2734 = vmatprep.subr.mxu0 0.0
    %2735 = vmatpush1.msra.mxu0 0.0
    %2736 = vmatprep.subr.mxu0 0.0
    %2737 = vmatpush1.msra.mxu0 0.0
    %2738 = vmatprep.subr.mxu0 0.0
    %2739 = vmatpush1.msra.mxu0 0.0
    %2740 = vmatprep.subr.mxu0 0.0
    %2741 = vmatpush1.msra.mxu0 0.0
    %2742 = vmatprep.subr.mxu0 0.0
    %2743 = vmatpush1.msra.mxu0 0.0
    %2744 = vmatprep.subr.mxu0 0.0
    %2745 = vmatpush1.msra.mxu0 0.0
    %2746 = vmatprep.subr.mxu0 0.0
    %2747 = vmatpush1.msra.mxu0 0.0
    %2748 = vmatprep.subr.mxu0 0.0
    %2749 = vmatpush1.msra.mxu0 0.0
    %2750 = vmatprep.subr.mxu0 0.0
    %2751 = vmatpush1.msra.mxu0 0.0
    %2752 = vmatprep.subr.mxu0 0.0
    %2753 = vmatpush1.msra.mxu0 0.0
    %2754 = vmatprep.subr.mxu0 0.0
    %2755 = vmatpush1.msra.mxu0 %v2648
    %2756 = vmatprep.subr.mxu0 0.0
    %2757 = vmatpush1.msra.mxu0 %v2647
    %2758 = vmatprep.subr.mxu0 0.0
    %2759 = vmatpush1.msra.mxu0 %v2646
    %2760 = vmatprep.subr.mxu0 0.0
    %2761 = vmatpush1.msra.mxu0 %v2645
    %2762 = vmatprep.subr.mxu0 0.0
    %2763 = vmatpush2.msra.mxu0 0.0
    %2764 = vmatprep.subr.mxu0 0.0
    %2765 = vmatpush2.msra.mxu0 0.0
    %2766 = vmatprep.subr.mxu0 0.0
    %2767 = vmatpush2.msra.mxu0 0.0
    %2768 = vmatprep.subr.mxu0 0.0
    %2769 = vmatpush2.msra.mxu0 0.0
    %2770 = vmatprep.subr.mxu0 0.0
    %2771 = vmatpush2.msra.mxu0 0.0
    %2772 = vmatprep.subr.mxu0 0.0
    %2773 = vmatpush2.msra.mxu0 0.0
    %2774 = vmatprep.subr.mxu0 0.0
    %2775 = vmatpush2.msra.mxu0 0.0
    %2776 = vmatprep.subr.mxu0 0.0
    %2777 = vmatpush2.msra.mxu0 0.0
    %2778 = vmatprep.subr.mxu0 0.0
    %2779 = vmatpush2.msra.mxu0 0.0
    %2780 = vmatprep.subr.mxu0 0.0
    %2781 = vmatpush2.msra.mxu0 0.0
    %2782 = vmatprep.subr.mxu0 0.0
    %2783 = vmatpush2.msra.mxu0 0.0
    %2784 = vmatprep.subr.mxu0 0.0
    %2785 = vmatpush2.msra.mxu0 0.0
    %2786 = vmatprep.subr.mxu0 0.0
    %2787 = vmatpush2.msra.mxu0 0.0
    %2788 = vmatprep.subr.mxu0 0.0
    %2789 = vmatpush2.msra.mxu0 0.0
    %2790 = vmatprep.subr.mxu0 0.0
    %2791 = vmatpush2.msra.mxu0 0.0
    %2792 = vmatprep.subr.mxu0 0.0
    %2793 = vmatpush2.msra.mxu0 0.0
    %2794 = vmatprep.mubr.f32.mxu0 0.0
    %2795 = vmatmul.mubr.f32.gmra.mxu0 %v2728
    %v2796 = vpop.f32.mrf.mxu0
    %v2797 = vadd.f32 %v2724, %v2796
    %v2798 = vpop.f32.mrf.mxu0
    %2799 = vdwg.mxu0
    %v2800 = vtanh.pop %v2797
    %v2801 = vadd.f32 %v2800, %v1696
    %2802 = vmatprep.subr.mxu0 0.0
    %2803 = vmatpush1.msra.mxu0 0.0
    %2804 = vmatprep.subr.mxu0 0.0
    %2805 = vmatpush1.msra.mxu0 0.0
    %2806 = vmatprep.subr.mxu0 0.0
    %2807 = vmatpush1.msra.mxu0 0.0
    %2808 = vmatprep.subr.mxu0 0.0
    %2809 = vmatpush1.msra.mxu0 0.0
    %2810 = vmatprep.subr.mxu0 0.0
    %2811 = vmatpush1.msra.mxu0 0.0
    %2812 = vmatprep.subr.mxu0 0.0
    %2813 = vmatpush1.msra.mxu0 0.0
    %2814 = vmatprep.subr.mxu0 0.0
    %2815 = vmatpush1.msra.mxu0 0.0
    %2816 = vmatprep.subr.mxu0 0.0
    %2817 = vmatpush1.msra.mxu0 0.0
    %2818 = vmatprep.subr.mxu0 0.0
    %2819 = vmatpush1.msra.mxu0 0.0
    %2820 = vmatprep.subr.mxu0 0.0
    %2821 = vmatpush1.msra.mxu0 0.0
    %2822 = vmatprep.subr.mxu0 0.0
    %2823 = vmatpush1.msra.mxu0 0.0
    %2824 = vmatprep.subr.mxu0 0.0
    %2825 = vmatpush1.msra.mxu0 0.0
    %2826 = vmatprep.subr.mxu0 0.0
    %2827 = vmatpush1.msra.mxu0 %v2461
    %2828 = vmatprep.subr.mxu0 0.0
    %2829 = vmatpush1.msra.mxu0 %v2460
    %2830 = vmatprep.subr.mxu0 0.0
    %2831 = vmatpush1.msra.mxu0 %v2459
    %2832 = vmatprep.subr.mxu0 0.0
    %2833 = vmatpush1.msra.mxu0 %v2458
    %2834 = vmatprep.subr.mxu0 0.0
    %2835 = vmatpush2.msra.mxu0 0.0
    %2836 = vmatprep.subr.mxu0 0.0
    %2837 = vmatpush2.msra.mxu0 0.0
    %2838 = vmatprep.subr.mxu0 0.0
    %2839 = vmatpush2.msra.mxu0 0.0
    %2840 = vmatprep.subr.mxu0 0.0
    %2841 = vmatpush2.msra.mxu0 0.0
    %2842 = vmatprep.subr.mxu0 0.0
    %2843 = vmatpush2.msra.mxu0 0.0
    %2844 = vmatprep.subr.mxu0 0.0
    %2845 = vmatpush2.msra.mxu0 0.0
    %2846 = vmatprep.subr.mxu0 0.0
    %2847 = vmatpush2.msra.mxu0 0.0
    %2848 = vmatprep.subr.mxu0 0.0
    %2849 = vmatpush2.msra.mxu0 0.0
    %2850 = vmatprep.subr.mxu0 0.0
    %2851 = vmatpush2.msra.mxu0 0.0
    %2852 = vmatprep.subr.mxu0 0.0
    %2853 = vmatpush2.msra.mxu0 0.0
    %2854 = vmatprep.subr.mxu0 0.0
    %2855 = vmatpush2.msra.mxu0 0.0
    %2856 = vmatprep.subr.mxu0 0.0
    %2857 = vmatpush2.msra.mxu0 0.0
    %2858 = vmatprep.subr.mxu0 0.0
    %2859 = vmatpush2.msra.mxu0 0.0
    %2860 = vmatprep.subr.mxu0 0.0
    %2861 = vmatpush2.msra.mxu0 0.0
    %2862 = vmatprep.subr.mxu0 0.0
    %2863 = vmatpush2.msra.mxu0 0.0
    %2864 = vmatprep.subr.mxu0 0.0
    %2865 = vmatpush2.msra.mxu0 0.0
    %2866 = vmatprep.mubr.f32.mxu0 0.0
    %2867 = vmatmul.mubr.f32.gmra.mxu0 %v1874
    %v2868 = vpop.f32.mrf.mxu0
    %v2869 = vadd.f32 0.0, %v2868
    %v2870 = vpop.f32.mrf.mxu0
    %2871 = vdwg.mxu0
    %2872 = vmatprep.subr.mxu0 0.0
    %2873 = vmatpush1.msra.mxu0 0.0
    %2874 = vmatprep.subr.mxu0 0.0
    %2875 = vmatpush1.msra.mxu0 0.0
    %2876 = vmatprep.subr.mxu0 0.0
    %2877 = vmatpush1.msra.mxu0 0.0
    %2878 = vmatprep.subr.mxu0 0.0
    %2879 = vmatpush1.msra.mxu0 0.0
    %2880 = vmatprep.subr.mxu0 0.0
    %2881 = vmatpush1.msra.mxu0 0.0
    %2882 = vmatprep.subr.mxu0 0.0
    %2883 = vmatpush1.msra.mxu0 0.0
    %2884 = vmatprep.subr.mxu0 0.0
    %2885 = vmatpush1.msra.mxu0 0.0
    %2886 = vmatprep.subr.mxu0 0.0
    %2887 = vmatpush1.msra.mxu0 0.0
    %2888 = vmatprep.subr.mxu0 0.0
    %2889 = vmatpush1.msra.mxu0 0.0
    %2890 = vmatprep.subr.mxu0 0.0
    %2891 = vmatpush1.msra.mxu0 0.0
    %2892 = vmatprep.subr.mxu0 0.0
    %2893 = vmatpush1.msra.mxu0 0.0
    %2894 = vmatprep.subr.mxu0 0.0
    %2895 = vmatpush1.msra.mxu0 0.0
    %2896 = vmatprep.subr.mxu0 0.0
    %2897 = vmatpush1.msra.mxu0 %v2456
    %2898 = vmatprep.subr.mxu0 0.0
    %2899 = vmatpush1.msra.mxu0 %v2455
    %2900 = vmatprep.subr.mxu0 0.0
    %2901 = vmatpush1.msra.mxu0 %v2454
    %2902 = vmatprep.subr.mxu0 0.0
    %2903 = vmatpush1.msra.mxu0 %v2453
    %2904 = vmatprep.subr.mxu0 0.0
    %2905 = vmatpush2.msra.mxu0 0.0
    %2906 = vmatprep.subr.mxu0 0.0
    %2907 = vmatpush2.msra.mxu0 0.0
    %2908 = vmatprep.subr.mxu0 0.0
    %2909 = vmatpush2.msra.mxu0 0.0
    %2910 = vmatprep.subr.mxu0 0.0
    %2911 = vmatpush2.msra.mxu0 0.0
    %2912 = vmatprep.subr.mxu0 0.0
    %2913 = vmatpush2.msra.mxu0 0.0
    %2914 = vmatprep.subr.mxu0 0.0
    %2915 = vmatpush2.msra.mxu0 0.0
    %2916 = vmatprep.subr.mxu0 0.0
    %2917 = vmatpush2.msra.mxu0 0.0
    %2918 = vmatprep.subr.mxu0 0.0
    %2919 = vmatpush2.msra.mxu0 0.0
    %2920 = vmatprep.subr.mxu0 0.0
    %2921 = vmatpush2.msra.mxu0 0.0
    %2922 = vmatprep.subr.mxu0 0.0
    %2923 = vmatpush2.msra.mxu0 0.0
    %2924 = vmatprep.subr.mxu0 0.0
    %2925 = vmatpush2.msra.mxu0 0.0
    %2926 = vmatprep.subr.mxu0 0.0
    %2927 = vmatpush2.msra.mxu0 0.0
    %2928 = vmatprep.subr.mxu0 0.0
    %2929 = vmatpush2.msra.mxu0 0.0
    %2930 = vmatprep.subr.mxu0 0.0
    %2931 = vmatpush2.msra.mxu0 0.0
    %2932 = vmatprep.subr.mxu0 0.0
    %2933 = vmatpush2.msra.mxu0 0.0
    %2934 = vmatprep.subr.mxu0 0.0
    %2935 = vmatpush2.msra.mxu0 0.0
    %2936 = vmatprep.mubr.f32.mxu0 0.0
    %2937 = vmatmul.mubr.f32.gmra.mxu0 %v2037
    %v2938 = vpop.f32.mrf.mxu0
    %v2939 = vadd.f32 %v2869, %v2938
    %v2940 = vpop.f32.mrf.mxu0
    %2941 = vdwg.mxu0
    %v2942 = vadd.f32 %v2939, %v2608
    %v2943 = vtanh.pop %v2942
    %2944 = vmatprep.subr.mxu0 0.0
    %2945 = vmatpush1.msra.mxu0 0.0
    %2946 = vmatprep.subr.mxu0 0.0
    %2947 = vmatpush1.msra.mxu0 0.0
    %2948 = vmatprep.subr.mxu0 0.0
    %2949 = vmatpush1.msra.mxu0 0.0
    %2950 = vmatprep.subr.mxu0 0.0
    %2951 = vmatpush1.msra.mxu0 0.0
    %2952 = vmatprep.subr.mxu0 0.0
    %2953 = vmatpush1.msra.mxu0 0.0
    %2954 = vmatprep.subr.mxu0 0.0
    %2955 = vmatpush1.msra.mxu0 0.0
    %2956 = vmatprep.subr.mxu0 0.0
    %2957 = vmatpush1.msra.mxu0 0.0
    %2958 = vmatprep.subr.mxu0 0.0
    %2959 = vmatpush1.msra.mxu0 0.0
    %2960 = vmatprep.subr.mxu0 0.0
    %2961 = vmatpush1.msra.mxu0 0.0
    %2962 = vmatprep.subr.mxu0 0.0
    %2963 = vmatpush1.msra.mxu0 0.0
    %2964 = vmatprep.subr.mxu0 0.0
    %2965 = vmatpush1.msra.mxu0 0.0
    %2966 = vmatprep.subr.mxu0 0.0
    %2967 = vmatpush1.msra.mxu0 0.0
    %2968 = vmatprep.subr.mxu0 0.0
    %2969 = vmatpush1.msra.mxu0 %v1798
    %2970 = vmatprep.subr.mxu0 0.0
    %2971 = vmatpush1.msra.mxu0 %v1797
    %2972 = vmatprep.subr.mxu0 0.0
    %2973 = vmatpush1.msra.mxu0 %v1796
    %2974 = vmatprep.subr.mxu0 0.0
    %2975 = vmatpush1.msra.mxu0 %v1795
    %2976 = vmatprep.subr.mxu0 0.0
    %2977 = vmatpush2.msra.mxu0 0.0
    %2978 = vmatprep.subr.mxu0 0.0
    %2979 = vmatpush2.msra.mxu0 0.0
    %2980 = vmatprep.subr.mxu0 0.0
    %2981 = vmatpush2.msra.mxu0 0.0
    %2982 = vmatprep.subr.mxu0 0.0
    %2983 = vmatpush2.msra.mxu0 0.0
    %2984 = vmatprep.subr.mxu0 0.0
    %2985 = vmatpush2.msra.mxu0 0.0
    %2986 = vmatprep.subr.mxu0 0.0
    %2987 = vmatpush2.msra.mxu0 0.0
    %2988 = vmatprep.subr.mxu0 0.0
    %2989 = vmatpush2.msra.mxu0 0.0
    %2990 = vmatprep.subr.mxu0 0.0
    %2991 = vmatpush2.msra.mxu0 0.0
    %2992 = vmatprep.subr.mxu0 0.0
    %2993 = vmatpush2.msra.mxu0 0.0
    %2994 = vmatprep.subr.mxu0 0.0
    %2995 = vmatpush2.msra.mxu0 0.0
    %2996 = vmatprep.subr.mxu0 0.0
    %2997 = vmatpush2.msra.mxu0 0.0
    %2998 = vmatprep.subr.mxu0 0.0
    %2999 = vmatpush2.msra.mxu0 0.0
    %3000 = vmatprep.subr.mxu0 0.0
    %3001 = vmatpush2.msra.mxu0 0.0
    %3002 = vmatprep.subr.mxu0 0.0
    %3003 = vmatpush2.msra.mxu0 0.0
    %3004 = vmatprep.subr.mxu0 0.0
    %3005 = vmatpush2.msra.mxu0 0.0
    %3006 = vmatprep.subr.mxu0 0.0
    %3007 = vmatpush2.msra.mxu0 0.0
    %3008 = vmatprep.mubr.f32.mxu0 0.0
    %3009 = vmatmul.mubr.f32.gmra.mxu0 %v1874
    %v3010 = vpop.f32.mrf.mxu0
    %v3011 = vadd.f32 0.0, %v3010
    %v3012 = vpop.f32.mrf.mxu0
    %3013 = vdwg.mxu0
    %3014 = vmatprep.subr.mxu0 0.0
    %3015 = vmatpush1.msra.mxu0 0.0
    %3016 = vmatprep.subr.mxu0 0.0
    %3017 = vmatpush1.msra.mxu0 0.0
    %3018 = vmatprep.subr.mxu0 0.0
    %3019 = vmatpush1.msra.mxu0 0.0
    %3020 = vmatprep.subr.mxu0 0.0
    %3021 = vmatpush1.msra.mxu0 0.0
    %3022 = vmatprep.subr.mxu0 0.0
    %3023 = vmatpush1.msra.mxu0 0.0
    %3024 = vmatprep.subr.mxu0 0.0
    %3025 = vmatpush1.msra.mxu0 0.0
    %3026 = vmatprep.subr.mxu0 0.0
    %3027 = vmatpush1.msra.mxu0 0.0
    %3028 = vmatprep.subr.mxu0 0.0
    %3029 = vmatpush1.msra.mxu0 0.0
    %3030 = vmatprep.subr.mxu0 0.0
    %3031 = vmatpush1.msra.mxu0 0.0
    %3032 = vmatprep.subr.mxu0 0.0
    %3033 = vmatpush1.msra.mxu0 0.0
    %3034 = vmatprep.subr.mxu0 0.0
    %3035 = vmatpush1.msra.mxu0 0.0
    %3036 = vmatprep.subr.mxu0 0.0
    %3037 = vmatpush1.msra.mxu0 0.0
    %3038 = vmatprep.subr.mxu0 0.0
    %3039 = vmatpush1.msra.mxu0 %v1794
    %3040 = vmatprep.subr.mxu0 0.0
    %3041 = vmatpush1.msra.mxu0 %v1793
    %3042 = vmatprep.subr.mxu0 0.0
    %3043 = vmatpush1.msra.mxu0 %v1792
    %3044 = vmatprep.subr.mxu0 0.0
    %3045 = vmatpush1.msra.mxu0 %v1791
    %3046 = vmatprep.subr.mxu0 0.0
    %3047 = vmatpush2.msra.mxu0 0.0
    %3048 = vmatprep.subr.mxu0 0.0
    %3049 = vmatpush2.msra.mxu0 0.0
    %3050 = vmatprep.subr.mxu0 0.0
    %3051 = vmatpush2.msra.mxu0 0.0
    %3052 = vmatprep.subr.mxu0 0.0
    %3053 = vmatpush2.msra.mxu0 0.0
    %3054 = vmatprep.subr.mxu0 0.0
    %3055 = vmatpush2.msra.mxu0 0.0
    %3056 = vmatprep.subr.mxu0 0.0
    %3057 = vmatpush2.msra.mxu0 0.0
    %3058 = vmatprep.subr.mxu0 0.0
    %3059 = vmatpush2.msra.mxu0 0.0
    %3060 = vmatprep.subr.mxu0 0.0
    %3061 = vmatpush2.msra.mxu0 0.0
    %3062 = vmatprep.subr.mxu0 0.0
    %3063 = vmatpush2.msra.mxu0 0.0
    %3064 = vmatprep.subr.mxu0 0.0
    %3065 = vmatpush2.msra.mxu0 0.0
    %3066 = vmatprep.subr.mxu0 0.0
    %3067 = vmatpush2.msra.mxu0 0.0
    %3068 = vmatprep.subr.mxu0 0.0
    %3069 = vmatpush2.msra.mxu0 0.0
    %3070 = vmatprep.subr.mxu0 0.0
    %3071 = vmatpush2.msra.mxu0 0.0
    %3072 = vmatprep.subr.mxu0 0.0
    %3073 = vmatpush2.msra.mxu0 0.0
    %3074 = vmatprep.subr.mxu0 0.0
    %3075 = vmatpush2.msra.mxu0 0.0
    %3076 = vmatprep.subr.mxu0 0.0
    %3077 = vmatpush2.msra.mxu0 0.0
    %3078 = vmatprep.mubr.f32.mxu0 0.0
    %3079 = vmatmul.mubr.f32.gmra.mxu0 %v1801
    %v3080 = vpop.f32.mrf.mxu0
    %v3081 = vadd.f32 %v3011, %v3080
    %v3082 = vpop.f32.mrf.mxu0
    %3083 = vdwg.mxu0
    %v3084 = vadd.f32 %v3081, %v1950
    %v3085 = vtanh.pop %v3084
    %v3086 = vsel %vm1363, %v2943, 0.0
    %3087 = vadd.xlane.f32.xlu0 %v3086
    %v3088 = vpop.xlane.xlu0 %3087
    %v3089 = vmul.f32 %v3088, %v2120
    %v3090 = vsub.f32 %v2943, %v3089
    %v3091 = vmul.f32 %v3090, %v3090
    %v3092 = vsel %vm1363, %v3091, 0.0
    %3093 = vadd.xlane.f32.xlu0 %v3092
    %v3094 = vpop.xlane.xlu0 %3093
    %v3095 = vmul.f32 %v3094, %v2120
    %v3096 = vadd.f32 %v3095, 1e-12
    %v3097 = vrsqrt.pop %v3096
    %v3098 = vmul.f32 %v3090, %v3097
    %v3099 = vmul.f32 %v3098, %v2641
    %v3100 = vsel %vm1363, %v3085, 0.0
    %3101 = vadd.xlane.f32.xlu0 %v3100
    %v3102 = vpop.xlane.xlu0 %3101
    %v3103 = vmul.f32 %v3102, %v2120
    %v3104 = vsub.f32 %v3085, %v3103
    %v3105 = vmul.f32 %v3104, %v3104
    %v3106 = vsel %vm1363, %v3105, 0.0
    %3107 = vadd.xlane.f32.xlu0 %v3106
    %v3108 = vpop.xlane.xlu0 %3107
    %v3109 = vmul.f32 %v3108, %v2120
    %v3110 = vadd.f32 %v3109, 1e-12
    %v3111 = vrsqrt.pop %v3110
    %v3112 = vmul.f32 %v3104, %v3111
    %v3113 = vmul.f32 %v3112, %v2151
    %s3114 = scalar_lea.vmem %s17, 64
    %v3115 = vld [vmem:[%s3114] sm:$0xff]
    %v3116 = vld [vmem:[%s3114 + $0x8] sm:$0xff]
    %v3117 = vld [vmem:[%s3114 + $0x10] sm:$0xff]
    %v3118 = vld [vmem:[%s3114 + $0x18] sm:$0xff]
    %s3119 = scalar_lea.vmem %s18, 64
    %v3120 = vld [vmem:[%s3119] sm:$0xff]
    %v3121 = vld [vmem:[%s3119 + $0x8] sm:$0xff]
    %v3122 = vld [vmem:[%s3119 + $0x10] sm:$0xff]
    %v3123 = vld [vmem:[%s3119 + $0x18] sm:$0xff]
    %v3125 = vsel %vm1363, %v3113, 0
    %3127 = vmatprep.subr.mxu0 0.0
    %3128 = vmatpush1.msra.mxu0 0.0
    %3129 = vmatprep.subr.mxu0 0.0
    %3130 = vmatpush1.msra.mxu0 0.0
    %3131 = vmatprep.subr.mxu0 0.0
    %3132 = vmatpush1.msra.mxu0 0.0
    %3133 = vmatprep.subr.mxu0 0.0
    %3134 = vmatpush1.msra.mxu0 0.0
    %3135 = vmatprep.subr.mxu0 0.0
    %3136 = vmatpush1.msra.mxu0 0.0
    %3137 = vmatprep.subr.mxu0 0.0
    %3138 = vmatpush1.msra.mxu0 0.0
    %3139 = vmatprep.subr.mxu0 0.0
    %3140 = vmatpush1.msra.mxu0 0.0
    %3141 = vmatprep.subr.mxu0 0.0
    %3142 = vmatpush1.msra.mxu0 0.0
    %3143 = vmatprep.subr.mxu0 0.0
    %3144 = vmatpush1.msra.mxu0 0.0
    %3145 = vmatprep.subr.mxu0 0.0
    %3146 = vmatpush1.msra.mxu0 0.0
    %3147 = vmatprep.subr.mxu0 0.0
    %3148 = vmatpush1.msra.mxu0 0.0
    %3149 = vmatprep.subr.mxu0 0.0
    %3150 = vmatpush1.msra.mxu0 0.0
    %3151 = vmatprep.subr.mxu0 0.0
    %3152 = vmatpush1.msra.mxu0 %v3123
    %3153 = vmatprep.subr.mxu0 0.0
    %3154 = vmatpush1.msra.mxu0 %v3122
    %3155 = vmatprep.subr.mxu0 0.0
    %3156 = vmatpush1.msra.mxu0 %v3121
    %3157 = vmatprep.subr.mxu0 0.0
    %3158 = vmatpush1.msra.mxu0 %v3120
    %3159 = vmatprep.subr.mxu0 0.0
    %3160 = vmatpush2.msra.mxu0 0.0
    %3161 = vmatprep.subr.mxu0 0.0
    %3162 = vmatpush2.msra.mxu0 0.0
    %3163 = vmatprep.subr.mxu0 0.0
    %3164 = vmatpush2.msra.mxu0 0.0
    %3165 = vmatprep.subr.mxu0 0.0
    %3166 = vmatpush2.msra.mxu0 0.0
    %3167 = vmatprep.subr.mxu0 0.0
    %3168 = vmatpush2.msra.mxu0 0.0
    %3169 = vmatprep.subr.mxu0 0.0
    %3170 = vmatpush2.msra.mxu0 0.0
    %3171 = vmatprep.subr.mxu0 0.0
    %3172 = vmatpush2.msra.mxu0 0.0
    %3173 = vmatprep.subr.mxu0 0.0
    %3174 = vmatpush2.msra.mxu0 0.0
    %3175 = vmatprep.subr.mxu0 0.0
    %3176 = vmatpush2.msra.mxu0 0.0
    %3177 = vmatprep.subr.mxu0 0.0
    %3178 = vmatpush2.msra.mxu0 0.0
    %3179 = vmatprep.subr.mxu0 0.0
    %3180 = vmatpush2.msra.mxu0 0.0
    %3181 = vmatprep.subr.mxu0 0.0
    %3182 = vmatpush2.msra.mxu0 0.0
    %3183 = vmatprep.subr.mxu0 0.0
    %3184 = vmatpush2.msra.mxu0 0.0
    %3185 = vmatprep.subr.mxu0 0.0
    %3186 = vmatpush2.msra.mxu0 0.0
    %3187 = vmatprep.subr.mxu0 0.0
    %3188 = vmatpush2.msra.mxu0 0.0
    %3189 = vmatprep.subr.mxu0 0.0
    %3190 = vmatpush2.msra.mxu0 0.0
    %3191 = vmatprep.mubr.f32.mxu0 0.0
    %3192 = vmatmul.mubr.f32.gmra.mxu0 %v3125
    %v3193 = vpop.f32.mrf.mxu0
    %v3194 = vadd.f32 0.0, %v3193
    %v3195 = vpop.f32.mrf.mxu0
    %3196 = vdwg.mxu0
    %v3198 = vsel %vm1363, %v3099, 0
    %3200 = vmatprep.subr.mxu0 0.0
    %3201 = vmatpush1.msra.mxu0 0.0
    %3202 = vmatprep.subr.mxu0 0.0
    %3203 = vmatpush1.msra.mxu0 0.0
    %3204 = vmatprep.subr.mxu0 0.0
    %3205 = vmatpush1.msra.mxu0 0.0
    %3206 = vmatprep.subr.mxu0 0.0
    %3207 = vmatpush1.msra.mxu0 0.0
    %3208 = vmatprep.subr.mxu0 0.0
    %3209 = vmatpush1.msra.mxu0 0.0
    %3210 = vmatprep.subr.mxu0 0.0
    %3211 = vmatpush1.msra.mxu0 0.0
    %3212 = vmatprep.subr.mxu0 0.0
    %3213 = vmatpush1.msra.mxu0 0.0
    %3214 = vmatprep.subr.mxu0 0.0
    %3215 = vmatpush1.msra.mxu0 0.0
    %3216 = vmatprep.subr.mxu0 0.0
    %3217 = vmatpush1.msra.mxu0 0.0
    %3218 = vmatprep.subr.mxu0 0.0
    %3219 = vmatpush1.msra.mxu0 0.0
    %3220 = vmatprep.subr.mxu0 0.0
    %3221 = vmatpush1.msra.mxu0 0.0
    %3222 = vmatprep.subr.mxu0 0.0
    %3223 = vmatpush1.msra.mxu0 0.0
    %3224 = vmatprep.subr.mxu0 0.0
    %3225 = vmatpush1.msra.mxu0 %v3118
    %3226 = vmatprep.subr.mxu0 0.0
    %3227 = vmatpush1.msra.mxu0 %v3117
    %3228 = vmatprep.subr.mxu0 0.0
    %3229 = vmatpush1.msra.mxu0 %v3116
    %3230 = vmatprep.subr.mxu0 0.0
    %3231 = vmatpush1.msra.mxu0 %v3115
    %3232 = vmatprep.subr.mxu0 0.0
    %3233 = vmatpush2.msra.mxu0 0.0
    %3234 = vmatprep.subr.mxu0 0.0
    %3235 = vmatpush2.msra.mxu0 0.0
    %3236 = vmatprep.subr.mxu0 0.0
    %3237 = vmatpush2.msra.mxu0 0.0
    %3238 = vmatprep.subr.mxu0 0.0
    %3239 = vmatpush2.msra.mxu0 0.0
    %3240 = vmatprep.subr.mxu0 0.0
    %3241 = vmatpush2.msra.mxu0 0.0
    %3242 = vmatprep.subr.mxu0 0.0
    %3243 = vmatpush2.msra.mxu0 0.0
    %3244 = vmatprep.subr.mxu0 0.0
    %3245 = vmatpush2.msra.mxu0 0.0
    %3246 = vmatprep.subr.mxu0 0.0
    %3247 = vmatpush2.msra.mxu0 0.0
    %3248 = vmatprep.subr.mxu0 0.0
    %3249 = vmatpush2.msra.mxu0 0.0
    %3250 = vmatprep.subr.mxu0 0.0
    %3251 = vmatpush2.msra.mxu0 0.0
    %3252 = vmatprep.subr.mxu0 0.0
    %3253 = vmatpush2.msra.mxu0 0.0
    %3254 = vmatprep.subr.mxu0 0.0
    %3255 = vmatpush2.msra.mxu0 0.0
    %3256 = vmatprep.subr.mxu0 0.0
    %3257 = vmatpush2.msra.mxu0 0.0
    %3258 = vmatprep.subr.mxu0 0.0
    %3259 = vmatpush2.msra.mxu0 0.0
    %3260 = vmatprep.subr.mxu0 0.0
    %3261 = vmatpush2.msra.mxu0 0.0
    %3262 = vmatprep.subr.mxu0 0.0
    %3263 = vmatpush2.msra.mxu0 0.0
    %3264 = vmatprep.mubr.f32.mxu0 0.0
    %3265 = vmatmul.mubr.f32.gmra.mxu0 %v3198
    %v3266 = vpop.f32.mrf.mxu0
    %v3267 = vadd.f32 %v3194, %v3266
    %v3268 = vpop.f32.mrf.mxu0
    %3269 = vdwg.mxu0
    %v3270 = vtanh.pop %v3267
    %v3271 = vadd.f32 %v3270, %v1790
    %v3272 = vld [vmem:[%s19] sm:$0x1]
    %v3274 = vlaneseq
    %v3275 = vshrl.u32 %v3274, 7
    %v3276 = vsub.s32 0, %v3275
    %v3277 = vrot.slane %v3272, %v3276
    %v3279 = vmul.f32 %v2309, %v3277
    %s3280 = scalar_lea.vmem %s19, 1
    %v3281 = vld [vmem:[%s3280] sm:$0x1]
    %v3283 = vlaneseq
    %v3284 = vshrl.u32 %v3283, 7
    %v3285 = vsub.s32 0, %v3284
    %v3286 = vrot.slane %v3281, %v3285
    %v3288 = vmul.f32 %v2801, %v3286
    %v3289 = vadd.f32 %v3279, %v3288
    %s3290 = scalar_lea.vmem %s19, 2
    %v3291 = vld [vmem:[%s3290] sm:$0x1]
    %v3293 = vlaneseq
    %v3294 = vshrl.u32 %v3293, 7
    %v3295 = vsub.s32 0, %v3294
    %v3296 = vrot.slane %v3291, %v3295
    %v3298 = vmul.f32 %v3271, %v3296
    %v3299 = vadd.f32 %v3289, %v3298
    %v3300 = vsel %vm1363, %v3299, 0.0
    %3301 = vadd.xlane.f32.xlu0 %v3300
    %v3302 = vpop.xlane.xlu0 %3301
    %vm3303 = vcmask 7168
    %3304 = vst.msk [vmem:[%s20] sm:$0xff] %vm3303, %v3302
    %3305 = vst.msk [vmem:[#allocation2] sm:$0xff] %vm1363, %v3271
    // Predicated region
    $region82: #{forward.3} parent=1 // pred_check
      _
    $region83: #{forward.3} parent=1 // pred_check_branch
      %3307 = sbr.rel (0) target = $region85
    $region84: #{forward.3} parent=1 // pred_region
      _
    $region85: #{forward.3} parent=1 // pred_fallthru
      _
    // Predicated region
    $region86: #{forward.3} parent=1 // pred_check
      _
    $region87: #{forward.3} parent=1 // pred_check_branch
      %3309 = sbr.rel (0) target = $region89
    $region88: #{forward.3} parent=1 // pred_region
      %s3311 = ssub.s32 128, 128
      %3312 = vsyncadd [#allocation3], %s3311
      %s3314 = sshll.u32 [#allocation2], 4
      %s3315 = int_to_ptr.vmem [resolvable:$true] %s3314
      %3317 = dma.vmem_to_hbm [thread:$0]  %s3315, 128, %s21, [#allocation3]
    $region89: #{forward.3} parent=1 // pred_fallthru
      _
    // Predicated region
    $region90: #{forward.3} parent=1 // pred_check
      _
    $region91: #{forward.3} parent=1 // pred_check_branch
      %3319 = sbr.rel (0) target = $region93
    $region92: #{forward.3} parent=1 // pred_region
      _
    $region93: #{forward.3} parent=1 // pred_fallthru
      _
    // Predicated region
    $region94: #{forward.3} parent=1 // pred_check
      _
    $region95: #{forward.3} parent=1 // pred_check_branch
      %3321 = sbr.rel (0) target = $region97
    $region96: #{forward.3} parent=1 // pred_region
      %3322 = dma.done [#allocation3], 128
    $region97: #{forward.3} parent=1 // pred_fallthru
      _
    %3323 = vsyncpa [#allocation3], 1

</llo_original>
